<compile_context>
chip_gen: v6e
topology: v6e:2x2x1
jax: 0.10.0
libtpu: 0.0.40
codegen_flags: <defaults>
</compile_context>

<pallas_src>
import numpy as np
import jax
import jax.numpy as jnp
from jax import lax
from jax.experimental import pallas as pl
from jax.experimental.pallas import tpu as pltpu

ISTFT_HOP = 512
FFT_SIZES = [256, 512, 1024]
HOP_SIZES = [64, 128, 256]
WIN_LENGTHS = [256, 512, 1024]   # == FFT_SIZES -> rectangular (ones) windows

_VMEM_LIMIT_BYTES = 48 * 1024 * 1024   # > v5e 16 MiB scoped default, < v7x 64 MiB physical


def _round_up(x, m):
    return ((x + m - 1) // m) * m


def _tiles(m, cap):
    """Row tile + padded row count.  bf16 LHS -> tm multiple of 16; grid length is
    kept even (>=2) so the 1-D parallel grid can shard across v7x's 2 TensorCores."""
    tm = min(cap, _round_up(m, 16))
    m_pad = _round_up(m, tm)
    if (m_pad // tm) % 2 == 1:
        m_pad += tm
    return tm, m_pad


# ---------------------------------------------------------------------------
# DFT basis matrices (float64 construction, bf16 storage for the MXU)
# ---------------------------------------------------------------------------
def _fused_irfft_basis(n_fft):
    """(n_fft, n_fft) basis B with irfft(X) == [Xr | Xi[:, 1:n_fft//2]] @ B."""
    nb = n_fft // 2 + 1
    k = np.arange(nb, dtype=np.float64)[:, None]
    n = np.arange(n_fft, dtype=np.float64)[None, :]
    ang = 2.0 * np.pi * k * n / n_fft
    w = np.full((nb, 1), 2.0)
    w[0, 0] = 1.0
    w[-1, 0] = 1.0
    cr = (w * np.cos(ang)) / n_fft                      # (nb, n_fft)
    ci = (-w * np.sin(ang)) / n_fft                     # rows 0, nb-1 are 0 (dropped)
    fused = np.concatenate([cr, ci[1:nb - 1]], axis=0)  # (n_fft, n_fft)
    return jnp.asarray(fused, jnp.bfloat16)


def _packed_rfft_basis(n_fft):
    """(n_fft, n_fft) packed basis: frames @ B = [Re 0..h-1 | Nyq-Re, Im 1..h-1].

    Columns 0..h-1       : cos for bins 0..h-1            (real parts)
    Column  h            : cos for the Nyquist bin h      (its imag part is 0)
    Columns h+1..n_fft-1 : -sin for bins 1..h-1           (imag parts)
    No zero-padded columns -> no wasted MXU FLOPs.
    """
    h = n_fft // 2
    n = np.arange(n_fft, dtype=np.float64)[:, None]
    k = np.arange(h + 1, dtype=np.float64)[None, :]
    ang = 2.0 * np.pi * n * k / n_fft
    cos_m = np.cos(ang)                                  # (n_fft, h+1)
    sin_m = -np.sin(ang)                                 # (n_fft, h+1)
    packed = np.concatenate([cos_m[:, :h],               # Re bins 0..h-1
                             cos_m[:, h:h + 1],          # Nyquist real (Im-half lane 0)
                             sin_m[:, 1:h]], axis=1)     # Im bins 1..h-1
    return jnp.asarray(packed, jnp.bfloat16)


# ---------------------------------------------------------------------------
# Pallas kernels
# ---------------------------------------------------------------------------
def _istft_frames_kernel(x_ref, b_ref, o_ref):
    # (TM, n_fft) bf16 @ (n_fft, n_fft) bf16 -> bf16 frames (halved HBM writeback).
    o_ref[...] = jnp.dot(x_ref[...], b_ref[...],
                         preferred_element_type=jnp.float32).astype(o_ref.dtype)


def _stft_l1_partial_kernel(fpt_ref, b_ref, o_ref):
    tm = fpt_ref.shape[1]
    n_fft = fpt_ref.shape[2]
    h = n_fft // 2
    # One stacked (2*tm, n_fft) LHS -> a single MXU weight-push per tile
    # (leading-dim collapse of the bf16 block is layout-preserving: tm % 16 == 0).
    lhs = fpt_ref[...].reshape(2 * tm, n_fft)
    out = jnp.dot(lhs, b_ref[...], preferred_element_type=jnp.float32)  # (2*tm, n_fft)
    re_p, im_p = out[:tm, :h], out[:tm, h:]
    re_t, im_t = out[tm:, :h], out[tm:, h:]

    lane0 = lax.broadcasted_iota(jnp.int32, (tm, h), 1) == 0
    # Bins 0..h-1: lane 0 is the DC bin (imag == 0) -> |Re|; others -> sqrt(Re^2+Im^2).
    mag_p = jnp.where(lane0, jnp.abs(re_p), jnp.sqrt(re_p * re_p + im_p * im_p))
    mag_t = jnp.where(lane0, jnp.abs(re_t), jnp.sqrt(re_t * re_t + im_t * im_t))
    d = jnp.abs(mag_p - mag_t)                                          # (tm, h) f32
    # Nyquist bin (imag == 0) lives in lane 0 of the Im half; add its |.|-diff there.
    d_nyq = jnp.abs(jnp.abs(im_p[:, 0:1]) - jnp.abs(im_t[:, 0:1]))      # (tm, 1)
    d = d + jnp.where(lane0, d_nyq, 0.0)
    # Fold rows in groups of 8 sublanes (free reshape, VPU-only vreg adds); final
    # scalar collapse is deferred to the wrapper.
    o_ref[...] = jnp.sum(d.reshape(tm // 8, 8, h), axis=0, keepdims=True)


# ---------------------------------------------------------------------------
# pallas_call wrappers (row-tiled 1-D grids)
# ---------------------------------------------------------------------------
def _istft_frames(x_fused, basis, tm):
    m, n_fft = x_fused.shape
    flops = 2 * m * n_fft * n_fft
    bytes_acc = x_fused.size * 2 + basis.size * 2 + m * n_fft * 2
    return pl.pallas_call(
        _istft_frames_kernel,
        out_shape=jax.ShapeDtypeStruct((m, n_fft), jnp.bfloat16),
        grid_spec=pltpu.PrefetchScalarGridSpec(
            num_scalar_prefetch=0,
            grid=(m // tm,),
            in_specs=[pl.BlockSpec((tm, n_fft), lambda i: (i, 0)),
                      pl.BlockSpec((n_fft, n_fft), lambda i: (0, 0))],
            out_specs=pl.BlockSpec((tm, n_fft), lambda i: (i, 0)),
        ),
        compiler_params=pltpu.CompilerParams(
            dimension_semantics=("parallel",),
            vmem_limit_bytes=_VMEM_LIMIT_BYTES),
        cost_estimate=pl.CostEstimate(flops=int(flops), transcendentals=0,
                                      bytes_accessed=int(bytes_acc)),
    )(x_fused, basis)


def _stft_l1_sum(fpt, basis, tm):
    _, m, n_fft = fpt.shape
    h = n_fft // 2
    ntiles = m // tm
    flops = 2 * (2 * m) * n_fft * n_fft
    bytes_acc = fpt.size * 2 + basis.size * 2 + ntiles * 8 * h * 4
    partials = pl.pallas_call(
        _stft_l1_partial_kernel,
        out_shape=jax.ShapeDtypeStruct((ntiles, 8, h), jnp.float32),
        grid_spec=pltpu.PrefetchScalarGridSpec(
            num_scalar_prefetch=0,
            grid=(ntiles,),
            in_specs=[pl.BlockSpec((2, tm, n_fft), lambda i: (0, i, 0)),
                      pl.BlockSpec((n_fft, n_fft), lambda i: (0, 0))],
            out_specs=pl.BlockSpec((1, 8, h), lambda i: (i, 0, 0)),
        ),
        compiler_params=pltpu.CompilerParams(
            dimension_semantics=("parallel",),
            vmem_limit_bytes=_VMEM_LIMIT_BYTES),
        cost_estimate=pl.CostEstimate(flops=int(flops),
                                      transcendentals=int(2 * m * h),
                                      bytes_accessed=int(bytes_acc)),
    )(fpt, basis)
    return jnp.sum(partials)


# ---------------------------------------------------------------------------
# Glue: istft (fused irfft + 2-term overlap-add), stft framing, loss assembly
# ---------------------------------------------------------------------------
def _istft_pair(pred_r, pred_i, target_r, target_i, length):
    """torch.istft(X, n_fft=1024, hop=512, window=ones, center=True, length=length)
    for pred and target at once (one stacked matmul -> one weight push per tile)."""
    B, T, nb = pred_r.shape
    n_fft = (nb - 1) * 2
    half = n_fft // 2
    M = B * T

    def fuse(xr, xi):
        xr = xr.reshape(M, nb)
        xi = xi.reshape(M, nb)
        # Fused LHS [Xr | Xi[:,1:nb-1]] -> K = n_fft exactly (imag rows 0, nb-1 are 0).
        return jnp.concatenate([xr, xi[:, 1:nb - 1]], axis=1)

    x_fused = jnp.concatenate([fuse(pred_r, pred_i),
                               fuse(target_r, target_i)], axis=0).astype(jnp.bfloat16)

    tm, m_pad = _tiles(2 * M, 512)
    if m_pad != 2 * M:
        x_fused = jnp.pad(x_fused, ((0, m_pad - 2 * M), (0, 0)))

    basis = _fused_irfft_basis(n_fft)
    frames = _istft_frames(x_fused, basis, tm)[:2 * M].reshape(2, B, T, n_fft)

    # Overlap-add: hop = n_fft/2 -> exactly two overlapping frames per 512 segment.
    h0 = frames[..., :half].astype(jnp.float32)
    h1 = frames[..., half:].astype(jnp.float32)
    y = (jnp.pad(h0, ((0, 0), (0, 0), (0, 1), (0, 0)))
         + jnp.pad(h1, ((0, 0), (0, 0), (1, 0), (0, 0)))).reshape(2, B, (T + 1) * half)

    # Rectangular-window overlap-add envelope (window**2 == 1) per 512 segment.
    env_seg = np.ones((T + 1,), np.float64)
    env_seg[1:T] = 2.0
    env = np.repeat(env_seg, half)
    start = n_fft // 2
    end = start + length
    # TODO(synk): torch.istft zero-pads the tail when (T-1)*hop + n_fft < n_fft//2 + length
    # (only possible for T == 1 here); not handled.
    inv_env = jnp.asarray(1.0 / env[start:end], jnp.float32)[None, None, :]
    y = y[:, :, start:end] * inv_env
    return y[0], y[1]


def _frame(wav, n_fft, hop):
    """torch.stft framing: center=True reflect pad, rectangular window. Returns bf16."""
    B, L = wav.shape
    pad = n_fft // 2
    padded = jnp.pad(wav, ((0, 0), (pad, pad)), mode="reflect").astype(jnp.bfloat16)
    n_frames = 1 + (L + 2 * pad - n_fft) // hop
    # TODO(synk): this gather materializes a ~(n_fft/hop)x inflated frame slab; an
    # in-kernel hop-chunk decomposition (4 sub-matmuls over an "arbitrary" grid axis)
    # would avoid it, but it is negligible at this module's 513-sample waveforms.
    idx = np.arange(n_frames)[:, None] * hop + np.arange(n_fft)[None, :]
    frames = padded[:, idx]                     # (B, n_frames, n_fft) bf16
    return frames.reshape(B * n_frames, n_fft), n_frames


@jax.jit
def multi_resolution_stft_loss(pred, target):
    """pred/target: (B, 2, T, 513) — channel 0 = real, 1 = imag of an n_fft=1024 STFT."""
    length = target.shape[-1]
    B = pred.shape[0]

    pred_wav, target_wav = _istft_pair(
        pred[:, 0].astype(jnp.float32), pred[:, 1].astype(jnp.float32),
        target[:, 0].astype(jnp.float32), target[:, 1].astype(jnp.float32),
        length)

    loss = jnp.float32(0.0)
    for n_fft, hop, _win in zip(FFT_SIZES, HOP_SIZES, WIN_LENGTHS):
        nb = n_fft // 2 + 1
        basis = _packed_rfft_basis(n_fft)

        fp, n_frames = _frame(pred_wav, n_fft, hop)
        ft, _ = _frame(target_wav, n_fft, hop)

        M = fp.shape[0]
        # ~1 MiB of bf16 LHS per stream per tile, 512..2048 rows, grid kept even.
        cap = min(2048, max(512, (512 * 1024) // n_fft))
        tm, m_pad = _tiles(M, cap)
        if m_pad != M:                            # zero rows -> zero contribution, exact
            fp = jnp.pad(fp, ((0, m_pad - M), (0, 0)))
            ft = jnp.pad(ft, ((0, m_pad - M), (0, 0)))
        fpt = jnp.stack([fp, ft], axis=0)         # (2, m_pad, n_fft) bf16 stacked LHS

        numel = B * nb * n_frames                 # L1Loss 'mean' denominator
        loss = loss + _stft_l1_sum(fpt, basis, tm) / numel
    return loss


if __name__ == "__main__":
    key = jax.random.PRNGKey(0)
    k1, k2 = jax.random.split(key)
    B, T, NB = 2, 4, 513        # NB must be n_fft//2+1 = 513 for the istft stage
    pred = jax.random.normal(k1, (B, 2, T, NB), jnp.float32)
    target = jax.random.normal(k2, (B, 2, T, NB), jnp.float32)

    loss = multi_resolution_stft_loss(pred, target)
    jax.block_until_ready(loss)
    assert loss.shape == () and jnp.isfinite(loss)
    print("KERNEL_OK")
</pallas_src>

<mosaic_0001>
module attributes {stable_mosaic.version = 11 : i64} {
  func.func @_istft_frames_kernel(%arg0: i32, %arg1: memref<16x1024xbf16, #tpu.memory_space<vmem>>, %arg2: memref<1024x1024xbf16, #tpu.memory_space<vmem>>, %arg3: memref<16x1024xbf16, #tpu.memory_space<vmem>>) attributes {dimension_semantics = [#tpu.dimension_semantics<parallel>], iteration_bounds = array<i64: 2>, scalar_prefetch = 0 : i64, scratch_operands = 0 : i64, tpu.core_type = #tpu.core_type<tc>, window_params = [{transform_indices = @transform_0, window_bounds = array<i64: 16, 1024>}, {pipeline_mode = #tpu.pipeline_mode<synchronous>, transform_indices = @transform_1, window_bounds = array<i64: 1024, 1024>}, {transform_indices = @transform_2, window_bounds = array<i64: 16, 1024>}]} {
    %c0 = arith.constant 0 : index
    %c0_0 = arith.constant 0 : index
    %0 = vector.load %arg1[%c0, %c0_0] : memref<16x1024xbf16, #tpu.memory_space<vmem>>, vector<16x1024xbf16>
    %c0_1 = arith.constant 0 : index
    %c0_2 = arith.constant 0 : index
    %1 = vector.load %arg2[%c0_1, %c0_2] : memref<1024x1024xbf16, #tpu.memory_space<vmem>>, vector<1024x1024xbf16>
    %cst = arith.constant dense<0.000000e+00> : vector<16x1024xf32>
    %2 = tpu.matmul %0, %1, %cst {dimension_numbers = #tpu.dot_dimension_numbers<[1], [0], [0], [1], [0, 0, 1, 1], [], []>} : vector<16x1024xbf16>, vector<1024x1024xbf16>, vector<16x1024xf32> -> vector<16x1024xf32>
    %3 = arith.truncf %2 : vector<16x1024xf32> to vector<16x1024xbf16>
    %c0_3 = arith.constant 0 : index
    %c0_4 = arith.constant 0 : index
    %4 = vector.load %arg3[%c0_3, %c0_4] : memref<16x1024xbf16, #tpu.memory_space<vmem>>, vector<16x1024xbf16>
    tpu.vector_store %arg3[%c0_3, %c0_4], %3 {strides = array<i32>} : memref<16x1024xbf16, #tpu.memory_space<vmem>>, vector<16x1024xbf16>,
    return
  }
  func.func @transform_0(%arg0: i32) -> (i32, i32) {
    %c0_i32 = arith.constant 0 : i32
    %c0_i32_0 = arith.constant 0 : i32
    return %arg0, %c0_i32 : i32, i32
  }
  func.func @transform_1(%arg0: i32) -> (i32, i32) {
    %c0_i32 = arith.constant 0 : i32
    %c0_i32_0 = arith.constant 0 : i32
    %c0_i32_1 = arith.constant 0 : i32
    return %c0_i32, %c0_i32_0 : i32, i32
  }
  func.func @transform_2(%arg0: i32) -> (i32, i32) {
    %c0_i32 = arith.constant 0 : i32
    %c0_i32_0 = arith.constant 0 : i32
    return %arg0, %c0_i32 : i32, i32
  }
}

module attributes {stable_mosaic.version = 11 : i64} {
  func.func @_stft_l1_partial_kernel(%arg0: i32, %arg1: memref<2x32x256xbf16, #tpu.memory_space<vmem>>, %arg2: memref<256x256xbf16, #tpu.memory_space<vmem>>, %arg3: memref<1x8x128xf32, #tpu.memory_space<vmem>>) attributes {dimension_semantics = [#tpu.dimension_semantics<parallel>], iteration_bounds = array<i64: 2>, scalar_prefetch = 0 : i64, scratch_operands = 0 : i64, tpu.core_type = #tpu.core_type<tc>, window_params = [{transform_indices = @transform_0, window_bounds = array<i64: 2, 32, 256>}, {pipeline_mode = #tpu.pipeline_mode<synchronous>, transform_indices = @transform_1, window_bounds = array<i64: 256, 256>}, {transform_indices = @transform_2, window_bounds = array<i64: 1, 8, 128>}]} {
    %c0 = arith.constant 0 : index
    %c0_0 = arith.constant 0 : index
    %c0_1 = arith.constant 0 : index
    %0 = vector.load %arg1[%c0, %c0_0, %c0_1] : memref<2x32x256xbf16, #tpu.memory_space<vmem>>, vector<2x32x256xbf16>
    %1 = vector.shape_cast %0 : vector<2x32x256xbf16> to vector<64x256xbf16>
    %c0_2 = arith.constant 0 : index
    %c0_3 = arith.constant 0 : index
    %2 = vector.load %arg2[%c0_2, %c0_3] : memref<256x256xbf16, #tpu.memory_space<vmem>>, vector<256x256xbf16>
    %cst = arith.constant dense<0.000000e+00> : vector<64x256xf32>
    %3 = tpu.matmul %1, %2, %cst {dimension_numbers = #tpu.dot_dimension_numbers<[1], [0], [0], [1], [0, 0, 1, 1], [], []>} : vector<64x256xbf16>, vector<256x256xbf16>, vector<64x256xf32> -> vector<64x256xf32>
    %4 = vector.extract_strided_slice %3 {offsets = [0, 0], sizes = [32, 128], strides = [1, 1]} : vector<64x256xf32> to vector<32x128xf32>
    %5 = vector.extract_strided_slice %3 {offsets = [0, 128], sizes = [32, 128], strides = [1, 1]} : vector<64x256xf32> to vector<32x128xf32>
    %6 = vector.extract_strided_slice %3 {offsets = [32, 0], sizes = [32, 128], strides = [1, 1]} : vector<64x256xf32> to vector<32x128xf32>
    %7 = vector.extract_strided_slice %3 {offsets = [32, 128], sizes = [32, 128], strides = [1, 1]} : vector<64x256xf32> to vector<32x128xf32>
    %8 = tpu.iota {dimensions = array<i32: 1>} : vector<32x128xi32>
    %c0_i32 = arith.constant 0 : i32
    %9 = vector.broadcast %c0_i32 : i32 to vector<32x128xi32>
    %10 = arith.cmpi eq, %8, %9 : vector<32x128xi32>
    %11 = math.absf %4 : vector<32x128xf32>
    %12 = arith.mulf %4, %4 : vector<32x128xf32>
    %13 = arith.mulf %5, %5 : vector<32x128xf32>
    %14 = arith.addf %12, %13 : vector<32x128xf32>
    %15 = math.sqrt %14 : vector<32x128xf32>
    %16 = arith.select %10, %11, %15 : vector<32x128xi1>, vector<32x128xf32>
    %17 = math.absf %6 : vector<32x128xf32>
    %18 = arith.mulf %6, %6 : vector<32x128xf32>
    %19 = arith.mulf %7, %7 : vector<32x128xf32>
    %20 = arith.addf %18, %19 : vector<32x128xf32>
    %21 = math.sqrt %20 : vector<32x128xf32>
    %22 = arith.select %10, %17, %21 : vector<32x128xi1>, vector<32x128xf32>
    %23 = arith.subf %16, %22 : vector<32x128xf32>
    %24 = math.absf %23 : vector<32x128xf32>
    %25 = vector.extract_strided_slice %5 {offsets = [0, 0], sizes = [32, 1], strides = [1, 1]} : vector<32x128xf32> to vector<32x1xf32>
    %26 = math.absf %25 : vector<32x1xf32>
    %27 = vector.extract_strided_slice %7 {offsets = [0, 0], sizes = [32, 1], strides = [1, 1]} : vector<32x128xf32> to vector<32x1xf32>
    %28 = math.absf %27 : vector<32x1xf32>
    %29 = arith.subf %26, %28 : vector<32x1xf32>
    %30 = math.absf %29 : vector<32x1xf32>
    %cst_4 = arith.constant 0.000000e+00 : f32
    %31 = vector.shape_cast %30 : vector<32x1xf32> to vector<32x1xf32>
    %32 = vector.broadcast %31 : vector<32x1xf32> to vector<32x128xf32>
    %33 = vector.broadcast %cst_4 : f32 to vector<32x128xf32>
    %34 = arith.select %10, %32, %33 : vector<32x128xi1>, vector<32x128xf32>
    %35 = arith.addf %24, %34 : vector<32x128xf32>
    %36 = vector.shape_cast %35 : vector<32x128xf32> to vector<4x8x128xf32>
    %cst_5 = arith.constant dense<0.000000e+00> : vector<8x128xf32>
    %37 = vector.multi_reduction <add>, %36, %cst_5 [0] : vector<4x8x128xf32> to vector<8x128xf32>
    %38 = vector.shape_cast %37 : vector<8x128xf32> to vector<1x8x128xf32>
    %c0_6 = arith.constant 0 : index
    %c0_7 = arith.constant 0 : index
    %c0_8 = arith.constant 0 : index
    %39 = vector.load %arg3[%c0_6, %c0_7, %c0_8] : memref<1x8x128xf32, #tpu.memory_space<vmem>>, vector<1x8x128xf32>
    tpu.vector_store %arg3[%c0_6, %c0_7, %c0_8], %38 {strides = array<i32>} : memref<1x8x128xf32, #tpu.memory_space<vmem>>, vector<1x8x128xf32>,
    return
  }
  func.func @transform_0(%arg0: i32) -> (i32, i32, i32) {
    %c0_i32 = arith.constant 0 : i32
    %c0_i32_0 = arith.constant 0 : i32
    %c0_i32_1 = arith.constant 0 : i32
    return %c0_i32, %arg0, %c0_i32_0 : i32, i32, i32
  }
  func.func @transform_1(%arg0: i32) -> (i32, i32) {
    %c0_i32 = arith.constant 0 : i32
    %c0_i32_0 = arith.constant 0 : i32
    %c0_i32_1 = arith.constant 0 : i32
    return %c0_i32, %c0_i32_0 : i32, i32
  }
  func.func @transform_2(%arg0: i32) -> (i32, i32, i32) {
    %c0_i32 = arith.constant 0 : i32
    %c0_i32_0 = arith.constant 0 : i32
    %c0_i32_1 = arith.constant 0 : i32
    return %arg0, %c0_i32, %c0_i32_0 : i32, i32, i32
  }
}

module attributes {stable_mosaic.version = 11 : i64} {
  func.func @_stft_l1_partial_kernel(%arg0: i32, %arg1: memref<2x16x512xbf16, #tpu.memory_space<vmem>>, %arg2: memref<512x512xbf16, #tpu.memory_space<vmem>>, %arg3: memref<1x8x256xf32, #tpu.memory_space<vmem>>) attributes {dimension_semantics = [#tpu.dimension_semantics<parallel>], iteration_bounds = array<i64: 2>, scalar_prefetch = 0 : i64, scratch_operands = 0 : i64, tpu.core_type = #tpu.core_type<tc>, window_params = [{transform_indices = @transform_0, window_bounds = array<i64: 2, 16, 512>}, {pipeline_mode = #tpu.pipeline_mode<synchronous>, transform_indices = @transform_1, window_bounds = array<i64: 512, 512>}, {transform_indices = @transform_2, window_bounds = array<i64: 1, 8, 256>}]} {
    %c0 = arith.constant 0 : index
    %c0_0 = arith.constant 0 : index
    %c0_1 = arith.constant 0 : index
    %0 = vector.load %arg1[%c0, %c0_0, %c0_1] : memref<2x16x512xbf16, #tpu.memory_space<vmem>>, vector<2x16x512xbf16>
    %1 = vector.shape_cast %0 : vector<2x16x512xbf16> to vector<32x512xbf16>
    %c0_2 = arith.constant 0 : index
    %c0_3 = arith.constant 0 : index
    %2 = vector.load %arg2[%c0_2, %c0_3] : memref<512x512xbf16, #tpu.memory_space<vmem>>, vector<512x512xbf16>
    %cst = arith.constant dense<0.000000e+00> : vector<32x512xf32>
    %3 = tpu.matmul %1, %2, %cst {dimension_numbers = #tpu.dot_dimension_numbers<[1], [0], [0], [1], [0, 0, 1, 1], [], []>} : vector<32x512xbf16>, vector<512x512xbf16>, vector<32x512xf32> -> vector<32x512xf32>
    %4 = vector.extract_strided_slice %3 {offsets = [0, 0], sizes = [16, 256], strides = [1, 1]} : vector<32x512xf32> to vector<16x256xf32>
    %5 = vector.extract_strided_slice %3 {offsets = [0, 256], sizes = [16, 256], strides = [1, 1]} : vector<32x512xf32> to vector<16x256xf32>
    %6 = vector.extract_strided_slice %3 {offsets = [16, 0], sizes = [16, 256], strides = [1, 1]} : vector<32x512xf32> to vector<16x256xf32>
    %7 = vector.extract_strided_slice %3 {offsets = [16, 256], sizes = [16, 256], strides = [1, 1]} : vector<32x512xf32> to vector<16x256xf32>
    %8 = tpu.iota {dimensions = array<i32: 1>} : vector<16x256xi32>
    %c0_i32 = arith.constant 0 : i32
    %9 = vector.broadcast %c0_i32 : i32 to vector<16x256xi32>
    %10 = arith.cmpi eq, %8, %9 : vector<16x256xi32>
    %11 = math.absf %4 : vector<16x256xf32>
    %12 = arith.mulf %4, %4 : vector<16x256xf32>
    %13 = arith.mulf %5, %5 : vector<16x256xf32>
    %14 = arith.addf %12, %13 : vector<16x256xf32>
    %15 = math.sqrt %14 : vector<16x256xf32>
    %16 = arith.select %10, %11, %15 : vector<16x256xi1>, vector<16x256xf32>
    %17 = math.absf %6 : vector<16x256xf32>
    %18 = arith.mulf %6, %6 : vector<16x256xf32>
    %19 = arith.mulf %7, %7 : vector<16x256xf32>
    %20 = arith.addf %18, %19 : vector<16x256xf32>
    %21 = math.sqrt %20 : vector<16x256xf32>
    %22 = arith.select %10, %17, %21 : vector<16x256xi1>, vector<16x256xf32>
    %23 = arith.subf %16, %22 : vector<16x256xf32>
    %24 = math.absf %23 : vector<16x256xf32>
    %25 = vector.extract_strided_slice %5 {offsets = [0, 0], sizes = [16, 1], strides = [1, 1]} : vector<16x256xf32> to vector<16x1xf32>
    %26 = math.absf %25 : vector<16x1xf32>
    %27 = vector.extract_strided_slice %7 {offsets = [0, 0], sizes = [16, 1], strides = [1, 1]} : vector<16x256xf32> to vector<16x1xf32>
    %28 = math.absf %27 : vector<16x1xf32>
    %29 = arith.subf %26, %28 : vector<16x1xf32>
    %30 = math.absf %29 : vector<16x1xf32>
    %cst_4 = arith.constant 0.000000e+00 : f32
    %31 = vector.shape_cast %30 : vector<16x1xf32> to vector<16x1xf32>
    %32 = vector.broadcast %31 : vector<16x1xf32> to vector<16x256xf32>
    %33 = vector.broadcast %cst_4 : f32 to vector<16x256xf32>
    %34 = arith.select %10, %32, %33 : vector<16x256xi1>, vector<16x256xf32>
    %35 = arith.addf %24, %34 : vector<16x256xf32>
    %36 = vector.shape_cast %35 : vector<16x256xf32> to vector<2x8x256xf32>
    %cst_5 = arith.constant dense<0.000000e+00> : vector<8x256xf32>
    %37 = vector.multi_reduction <add>, %36, %cst_5 [0] : vector<2x8x256xf32> to vector<8x256xf32>
    %38 = vector.shape_cast %37 : vector<8x256xf32> to vector<1x8x256xf32>
    %c0_6 = arith.constant 0 : index
    %c0_7 = arith.constant 0 : index
    %c0_8 = arith.constant 0 : index
    %39 = vector.load %arg3[%c0_6, %c0_7, %c0_8] : memref<1x8x256xf32, #tpu.memory_space<vmem>>, vector<1x8x256xf32>
    tpu.vector_store %arg3[%c0_6, %c0_7, %c0_8], %38 {strides = array<i32>} : memref<1x8x256xf32, #tpu.memory_space<vmem>>, vector<1x8x256xf32>,
    return
  }
  func.func @transform_0(%arg0: i32) -> (i32, i32, i32) {
    %c0_i32 = arith.constant 0 : i32
    %c0_i32_0 = arith.constant 0 : i32
    %c0_i32_1 = arith.constant 0 : i32
    return %c0_i32, %arg0, %c0_i32_0 : i32, i32, i32
  }
  func.func @transform_1(%arg0: i32) -> (i32, i32) {
    %c0_i32 = arith.constant 0 : i32
    %c0_i32_0 = arith.constant 0 : i32
    %c0_i32_1 = arith.constant 0 : i32
    return %c0_i32, %c0_i32_0 : i32, i32
  }
  func.func @transform_2(%arg0: i32) -> (i32, i32, i32) {
    %c0_i32 = arith.constant 0 : i32
    %c0_i32_0 = arith.constant 0 : i32
    %c0_i32_1 = arith.constant 0 : i32
    return %arg0, %c0_i32, %c0_i32_0 : i32, i32, i32
  }
}

module attributes {stable_mosaic.version = 11 : i64} {
  func.func @_stft_l1_partial_kernel(%arg0: i32, %arg1: memref<2x16x1024xbf16, #tpu.memory_space<vmem>>, %arg2: memref<1024x1024xbf16, #tpu.memory_space<vmem>>, %arg3: memref<1x8x512xf32, #tpu.memory_space<vmem>>) attributes {dimension_semantics = [#tpu.dimension_semantics<parallel>], iteration_bounds = array<i64: 2>, scalar_prefetch = 0 : i64, scratch_operands = 0 : i64, tpu.core_type = #tpu.core_type<tc>, window_params = [{transform_indices = @transform_0, window_bounds = array<i64: 2, 16, 1024>}, {pipeline_mode = #tpu.pipeline_mode<synchronous>, transform_indices = @transform_1, window_bounds = array<i64: 1024, 1024>}, {transform_indices = @transform_2, window_bounds = array<i64: 1, 8, 512>}]} {
    %c0 = arith.constant 0 : index
    %c0_0 = arith.constant 0 : index
    %c0_1 = arith.constant 0 : index
    %0 = vector.load %arg1[%c0, %c0_0, %c0_1] : memref<2x16x1024xbf16, #tpu.memory_space<vmem>>, vector<2x16x1024xbf16>
    %1 = vector.shape_cast %0 : vector<2x16x1024xbf16> to vector<32x1024xbf16>
    %c0_2 = arith.constant 0 : index
    %c0_3 = arith.constant 0 : index
    %2 = vector.load %arg2[%c0_2, %c0_3] : memref<1024x1024xbf16, #tpu.memory_space<vmem>>, vector<1024x1024xbf16>
    %cst = arith.constant dense<0.000000e+00> : vector<32x1024xf32>
    %3 = tpu.matmul %1, %2, %cst {dimension_numbers = #tpu.dot_dimension_numbers<[1], [0], [0], [1], [0, 0, 1, 1], [], []>} : vector<32x1024xbf16>, vector<1024x1024xbf16>, vector<32x1024xf32> -> vector<32x1024xf32>
    %4 = vector.extract_strided_slice %3 {offsets = [0, 0], sizes = [16, 512], strides = [1, 1]} : vector<32x1024xf32> to vector<16x512xf32>
    %5 = vector.extract_strided_slice %3 {offsets = [0, 512], sizes = [16, 512], strides = [1, 1]} : vector<32x1024xf32> to vector<16x512xf32>
    %6 = vector.extract_strided_slice %3 {offsets = [16, 0], sizes = [16, 512], strides = [1, 1]} : vector<32x1024xf32> to vector<16x512xf32>
    %7 = vector.extract_strided_slice %3 {offsets = [16, 512], sizes = [16, 512], strides = [1, 1]} : vector<32x1024xf32> to vector<16x512xf32>
    %8 = tpu.iota {dimensions = array<i32: 1>} : vector<16x512xi32>
    %c0_i32 = arith.constant 0 : i32
    %9 = vector.broadcast %c0_i32 : i32 to vector<16x512xi32>
    %10 = arith.cmpi eq, %8, %9 : vector<16x512xi32>
    %11 = math.absf %4 : vector<16x512xf32>
    %12 = arith.mulf %4, %4 : vector<16x512xf32>
    %13 = arith.mulf %5, %5 : vector<16x512xf32>
    %14 = arith.addf %12, %13 : vector<16x512xf32>
    %15 = math.sqrt %14 : vector<16x512xf32>
    %16 = arith.select %10, %11, %15 : vector<16x512xi1>, vector<16x512xf32>
    %17 = math.absf %6 : vector<16x512xf32>
    %18 = arith.mulf %6, %6 : vector<16x512xf32>
    %19 = arith.mulf %7, %7 : vector<16x512xf32>
    %20 = arith.addf %18, %19 : vector<16x512xf32>
    %21 = math.sqrt %20 : vector<16x512xf32>
    %22 = arith.select %10, %17, %21 : vector<16x512xi1>, vector<16x512xf32>
    %23 = arith.subf %16, %22 : vector<16x512xf32>
    %24 = math.absf %23 : vector<16x512xf32>
    %25 = vector.extract_strided_slice %5 {offsets = [0, 0], sizes = [16, 1], strides = [1, 1]} : vector<16x512xf32> to vector<16x1xf32>
    %26 = math.absf %25 : vector<16x1xf32>
    %27 = vector.extract_strided_slice %7 {offsets = [0, 0], sizes = [16, 1], strides = [1, 1]} : vector<16x512xf32> to vector<16x1xf32>
    %28 = math.absf %27 : vector<16x1xf32>
    %29 = arith.subf %26, %28 : vector<16x1xf32>
    %30 = math.absf %29 : vector<16x1xf32>
    %cst_4 = arith.constant 0.000000e+00 : f32
    %31 = vector.shape_cast %30 : vector<16x1xf32> to vector<16x1xf32>
    %32 = vector.broadcast %31 : vector<16x1xf32> to vector<16x512xf32>
    %33 = vector.broadcast %cst_4 : f32 to vector<16x512xf32>
    %34 = arith.select %10, %32, %33 : vector<16x512xi1>, vector<16x512xf32>
    %35 = arith.addf %24, %34 : vector<16x512xf32>
    %36 = vector.shape_cast %35 : vector<16x512xf32> to vector<2x8x512xf32>
    %cst_5 = arith.constant dense<0.000000e+00> : vector<8x512xf32>
    %37 = vector.multi_reduction <add>, %36, %cst_5 [0] : vector<2x8x512xf32> to vector<8x512xf32>
    %38 = vector.shape_cast %37 : vector<8x512xf32> to vector<1x8x512xf32>
    %c0_6 = arith.constant 0 : index
    %c0_7 = arith.constant 0 : index
    %c0_8 = arith.constant 0 : index
    %39 = vector.load %arg3[%c0_6, %c0_7, %c0_8] : memref<1x8x512xf32, #tpu.memory_space<vmem>>, vector<1x8x512xf32>
    tpu.vector_store %arg3[%c0_6, %c0_7, %c0_8], %38 {strides = array<i32>} : memref<1x8x512xf32, #tpu.memory_space<vmem>>, vector<1x8x512xf32>,
    return
  }
  func.func @transform_0(%arg0: i32) -> (i32, i32, i32) {
    %c0_i32 = arith.constant 0 : i32
    %c0_i32_0 = arith.constant 0 : i32
    %c0_i32_1 = arith.constant 0 : i32
    return %c0_i32, %arg0, %c0_i32_0 : i32, i32, i32
  }
  func.func @transform_1(%arg0: i32) -> (i32, i32) {
    %c0_i32 = arith.constant 0 : i32
    %c0_i32_0 = arith.constant 0 : i32
    %c0_i32_1 = arith.constant 0 : i32
    return %c0_i32, %c0_i32_0 : i32, i32
  }
  func.func @transform_2(%arg0: i32) -> (i32, i32, i32) {
    %c0_i32 = arith.constant 0 : i32
    %c0_i32_0 = arith.constant 0 : i32
    %c0_i32_1 = arith.constant 0 : i32
    return %arg0, %c0_i32, %c0_i32_0 : i32, i32, i32
  }
}

</mosaic_0001>

<llo_original>
// kernel: squeeze.0
$region0: #{squeeze.0}
  %s0 = inlined_call_operand.vmem [shape: bf16[2,1,4,513], index: 0, kind: input, shape index: {}]
  %s1 = inlined_call_operand.vmem [shape: bf16[8,513], index: 1, kind: output, shape index: {}]
  $region1: #{squeeze.0} parent=0
    #allocation0 [shape = 'u8[20480]{0}', space=vmem, size = 0x5000, scoped, tag = 'scoped mem for output reshape']
    #allocation1 [shape = 'u8[40960]{0}', space=vmem, size = 0xa000, scoped, tag = 'scoped mem for input reshape']
    %s3 = smul.u32 2, 2
    %s4 = sshll.u32 1, %s3
    %s5 = ssub.s32 %s4, 1
    %s6 = smul.addr 2, 9
    %s7 = scalar_lea.vmem %s0, %s6
    %s8 = sshrl.u32 %s5, 1
    %s9 = sor.u32 %s5, %s8
    %s10 = sand.u32 %s9, 85
    %s11 = sshrl.u32 %s10, 1
    %s12 = sor.u32 %s10, %s11
    %s13 = sand.u32 51, %s12
    %s14 = sshrl.u32 %s13, 2
    %s15 = sor.u32 %s13, %s14
    %s16 = sand.u32 15, %s15
    %v17 = vld [vmem:[%s7] sm:%s16]
    %v18 = vunpack.c.l.bf16 %v17
    %v19 = vunpack.c.h.bf16 %v17
    %s20 = scalar_lea.vmem [#allocation1], 72
    %21 = vst [vmem:[%s20] sm:%s5] %v18
    %s22 = smul.addr 2, 8
    %s23 = scalar_lea.vmem %s0, %s22
    %s24 = sshrl.u32 %s5, 1
    %s25 = sor.u32 %s5, %s24
    %s26 = sand.u32 %s25, 85
    %s27 = sshrl.u32 %s26, 1
    %s28 = sor.u32 %s26, %s27
    %s29 = sand.u32 51, %s28
    %s30 = sshrl.u32 %s29, 2
    %s31 = sor.u32 %s29, %s30
    %s32 = sand.u32 15, %s31
    %v33 = vld [vmem:[%s23] sm:%s32]
    %v34 = vunpack.c.l.bf16 %v33
    %v35 = vunpack.c.h.bf16 %v33
    %s36 = scalar_lea.vmem [#allocation1], 64
    %37 = vst [vmem:[%s36] sm:%s5] %v34
    %s38 = smul.addr 2, 7
    %s39 = scalar_lea.vmem %s0, %s38
    %s40 = sshrl.u32 %s5, 1
    %s41 = sor.u32 %s5, %s40
    %s42 = sand.u32 %s41, 85
    %s43 = sshrl.u32 %s42, 1
    %s44 = sor.u32 %s42, %s43
    %s45 = sand.u32 51, %s44
    %s46 = sshrl.u32 %s45, 2
    %s47 = sor.u32 %s45, %s46
    %s48 = sand.u32 15, %s47
    %v49 = vld [vmem:[%s39] sm:%s48]
    %v50 = vunpack.c.l.bf16 %v49
    %v51 = vunpack.c.h.bf16 %v49
    %s52 = scalar_lea.vmem [#allocation1], 56
    %53 = vst [vmem:[%s52] sm:%s5] %v50
    %s54 = smul.addr 2, 6
    %s55 = scalar_lea.vmem %s0, %s54
    %s56 = sshrl.u32 %s5, 1
    %s57 = sor.u32 %s5, %s56
    %s58 = sand.u32 %s57, 85
    %s59 = sshrl.u32 %s58, 1
    %s60 = sor.u32 %s58, %s59
    %s61 = sand.u32 51, %s60
    %s62 = sshrl.u32 %s61, 2
    %s63 = sor.u32 %s61, %s62
    %s64 = sand.u32 15, %s63
    %v65 = vld [vmem:[%s55] sm:%s64]
    %v66 = vunpack.c.l.bf16 %v65
    %v67 = vunpack.c.h.bf16 %v65
    %s68 = scalar_lea.vmem [#allocation1], 48
    %69 = vst [vmem:[%s68] sm:%s5] %v66
    %s70 = smul.addr 2, 5
    %s71 = scalar_lea.vmem %s0, %s70
    %s72 = sshrl.u32 %s5, 1
    %s73 = sor.u32 %s5, %s72
    %s74 = sand.u32 %s73, 85
    %s75 = sshrl.u32 %s74, 1
    %s76 = sor.u32 %s74, %s75
    %s77 = sand.u32 51, %s76
    %s78 = sshrl.u32 %s77, 2
    %s79 = sor.u32 %s77, %s78
    %s80 = sand.u32 15, %s79
    %v81 = vld [vmem:[%s71] sm:%s80]
    %v82 = vunpack.c.l.bf16 %v81
    %v83 = vunpack.c.h.bf16 %v81
    %s84 = scalar_lea.vmem [#allocation1], 40
    %85 = vst [vmem:[%s84] sm:%s5] %v82
    %s86 = smul.addr 2, 4
    %s87 = scalar_lea.vmem %s0, %s86
    %s88 = sshrl.u32 %s5, 1
    %s89 = sor.u32 %s5, %s88
    %s90 = sand.u32 %s89, 85
    %s91 = sshrl.u32 %s90, 1
    %s92 = sor.u32 %s90, %s91
    %s93 = sand.u32 51, %s92
    %s94 = sshrl.u32 %s93, 2
    %s95 = sor.u32 %s93, %s94
    %s96 = sand.u32 15, %s95
    %v97 = vld [vmem:[%s87] sm:%s96]
    %v98 = vunpack.c.l.bf16 %v97
    %v99 = vunpack.c.h.bf16 %v97
    %s100 = scalar_lea.vmem [#allocation1], 32
    %101 = vst [vmem:[%s100] sm:%s5] %v98
    %s102 = smul.addr 2, 3
    %s103 = scalar_lea.vmem %s0, %s102
    %s104 = sshrl.u32 %s5, 1
    %s105 = sor.u32 %s5, %s104
    %s106 = sand.u32 %s105, 85
    %s107 = sshrl.u32 %s106, 1
    %s108 = sor.u32 %s106, %s107
    %s109 = sand.u32 51, %s108
    %s110 = sshrl.u32 %s109, 2
    %s111 = sor.u32 %s109, %s110
    %s112 = sand.u32 15, %s111
    %v113 = vld [vmem:[%s103] sm:%s112]
    %v114 = vunpack.c.l.bf16 %v113
    %v115 = vunpack.c.h.bf16 %v113
    %s116 = scalar_lea.vmem [#allocation1], 24
    %117 = vst [vmem:[%s116] sm:%s5] %v114
    %s118 = smul.addr 2, 2
    %s119 = scalar_lea.vmem %s0, %s118
    %s120 = sshrl.u32 %s5, 1
    %s121 = sor.u32 %s5, %s120
    %s122 = sand.u32 %s121, 85
    %s123 = sshrl.u32 %s122, 1
    %s124 = sor.u32 %s122, %s123
    %s125 = sand.u32 51, %s124
    %s126 = sshrl.u32 %s125, 2
    %s127 = sor.u32 %s125, %s126
    %s128 = sand.u32 15, %s127
    %v129 = vld [vmem:[%s119] sm:%s128]
    %v130 = vunpack.c.l.bf16 %v129
    %v131 = vunpack.c.h.bf16 %v129
    %s132 = scalar_lea.vmem [#allocation1], 16
    %133 = vst [vmem:[%s132] sm:%s5] %v130
    %s134 = scalar_lea.vmem %s0, 2
    %s135 = sshrl.u32 %s5, 1
    %s136 = sor.u32 %s5, %s135
    %s137 = sand.u32 %s136, 85
    %s138 = sshrl.u32 %s137, 1
    %s139 = sor.u32 %s137, %s138
    %s140 = sand.u32 51, %s139
    %s141 = sshrl.u32 %s140, 2
    %s142 = sor.u32 %s140, %s141
    %s143 = sand.u32 15, %s142
    %v144 = vld [vmem:[%s134] sm:%s143]
    %v145 = vunpack.c.l.bf16 %v144
    %v146 = vunpack.c.h.bf16 %v144
    %s147 = scalar_lea.vmem [#allocation1], 8
    %148 = vst [vmem:[%s147] sm:%s5] %v145
    %s149 = sshrl.u32 %s5, 1
    %s150 = sor.u32 %s5, %s149
    %s151 = sand.u32 %s150, 85
    %s152 = sshrl.u32 %s151, 1
    %s153 = sor.u32 %s151, %s152
    %s154 = sand.u32 51, %s153
    %s155 = sshrl.u32 %s154, 2
    %s156 = sor.u32 %s154, %s155
    %s157 = sand.u32 15, %s156
    %v158 = vld [vmem:[%s0] sm:%s157]
    %v159 = vunpack.c.l.bf16 %v158
    %v160 = vunpack.c.h.bf16 %v158
    %161 = vst [vmem:[#allocation1] sm:%s5] %v159
    %s162 = scalar_lea.vmem [#allocation1], 32
    %v163 = vld [vmem:[%s162] sm:$0xf]
    %vm164 = vcmask 7168
    %s165 = scalar_lea.vmem [#allocation0], 32
    %166 = vst.msk [vmem:[%s165] sm:$0xf] %vm164, %v163
    %s167 = scalar_lea.vmem [#allocation1], 72
    %v168 = vld [vmem:[%s167] sm:$0xf]
    %vm169 = vcmask 7168
    %s170 = scalar_lea.vmem [#allocation0], 36
    %171 = vst.msk [vmem:[%s170] sm:$0xf] %vm169, %v168
    %v172 = vld [vmem:[#allocation1] sm:$0xf]
    %173 = vst [vmem:[#allocation0] sm:$0xf] %v172
    %s174 = scalar_lea.vmem [#allocation1], 8
    %v175 = vld [vmem:[%s174] sm:$0xf]
    %s176 = scalar_lea.vmem [#allocation0], 8
    %177 = vst [vmem:[%s176] sm:$0xf] %v175
    %s178 = scalar_lea.vmem [#allocation1], 16
    %v179 = vld [vmem:[%s178] sm:$0xf]
    %s180 = scalar_lea.vmem [#allocation0], 16
    %181 = vst [vmem:[%s180] sm:$0xf] %v179
    %s182 = scalar_lea.vmem [#allocation1], 24
    %v183 = vld [vmem:[%s182] sm:$0xf]
    %s184 = scalar_lea.vmem [#allocation0], 24
    %185 = vst [vmem:[%s184] sm:$0xf] %v183
    %s186 = scalar_lea.vmem [#allocation1], 40
    %v187 = vld [vmem:[%s186] sm:$0xf]
    %s188 = scalar_lea.vmem [#allocation0], 4
    %189 = vst [vmem:[%s188] sm:$0xf] %v187
    %s190 = scalar_lea.vmem [#allocation1], 48
    %v191 = vld [vmem:[%s190] sm:$0xf]
    %s192 = scalar_lea.vmem [#allocation0], 12
    %193 = vst [vmem:[%s192] sm:$0xf] %v191
    %s194 = scalar_lea.vmem [#allocation1], 56
    %v195 = vld [vmem:[%s194] sm:$0xf]
    %s196 = scalar_lea.vmem [#allocation0], 20
    %197 = vst [vmem:[%s196] sm:$0xf] %v195
    %s198 = scalar_lea.vmem [#allocation1], 64
    %v199 = vld [vmem:[%s198] sm:$0xf]
    %s200 = scalar_lea.vmem [#allocation0], 28
    %201 = vst [vmem:[%s200] sm:$0xf] %v199
    %s203 = smul.u32 4, 2
    %s204 = sshll.u32 1, %s203
    %s205 = ssub.s32 %s204, 1
    %s206 = sshrl.u32 %s203, 1
    %v207 = vld [vmem:[#allocation0] sm:%s205]
    %v208 = vpack.c.bf16 0.0, %v207
    %s209 = sshll.u32 1, %s206
    %s210 = ssub.s32 %s209, 1
    %211 = vst [vmem:[%s1] sm:%s210] %v208
    %s212 = scalar_lea.vmem [#allocation0], 8
    %v213 = vld [vmem:[%s212] sm:%s205]
    %v214 = vpack.c.bf16 0.0, %v213
    %s215 = sshll.u32 1, %s206
    %s216 = ssub.s32 %s215, 1
    %s217 = scalar_lea.vmem %s1, 4
    %218 = vst [vmem:[%s217] sm:%s216] %v214
    %s219 = scalar_lea.vmem [#allocation0], 16
    %v220 = vld [vmem:[%s219] sm:%s205]
    %v221 = vpack.c.bf16 0.0, %v220
    %s222 = sshll.u32 1, %s206
    %s223 = ssub.s32 %s222, 1
    %s224 = smul.addr 4, 2
    %s225 = scalar_lea.vmem %s1, %s224
    %226 = vst [vmem:[%s225] sm:%s223] %v221
    %s227 = scalar_lea.vmem [#allocation0], 24
    %v228 = vld [vmem:[%s227] sm:%s205]
    %v229 = vpack.c.bf16 0.0, %v228
    %s230 = sshll.u32 1, %s206
    %s231 = ssub.s32 %s230, 1
    %s232 = smul.addr 4, 3
    %s233 = scalar_lea.vmem %s1, %s232
    %234 = vst [vmem:[%s233] sm:%s231] %v229
    %s235 = scalar_lea.vmem [#allocation0], 32
    %v236 = vld [vmem:[%s235] sm:%s205]
    %v237 = vpack.c.bf16 0.0, %v236
    %s238 = sshll.u32 1, %s206
    %s239 = ssub.s32 %s238, 1
    %s240 = smul.addr 4, 4
    %s241 = scalar_lea.vmem %s1, %s240
    %242 = vst [vmem:[%s241] sm:%s239] %v237

// kernel: multi_resolution_stft_loss.5
$region0: #{multi_resolution_stft_loss.5}
  #allocation0 [shape = 'u32[]', space=smem, size = 0x4, offset = 0x4, fixed_abs, tag = 'smem constant byte address 0x4 - core index']
  #allocation1 [shape = 'u32[144,128]{1,0:T(1,128)}', space=vmem, size = 0x12000, scoped, tag = 'internal scratch']
  %s0 = inlined_call_operand.vmem [shape: bf16[2,64,256], index: 0, kind: input, shape index: {}]
  %s1 = inlined_call_operand.vmem [shape: bf16[256,256], index: 1, kind: input, shape index: {}]
  %s2 = inlined_call_operand.vmem [shape: f32[2,8,128], index: 2, kind: output, shape index: {}]
  %s3 = sld [smem:[#allocation0]]
  $region79: #{multi_resolution_stft_loss.5} parent=0
    _
  %s5 = ssub.s32 1, %s3
  %s6 = scalar_select 0, %s5, %s3
  $region1: #{multi_resolution_stft_loss.5} parent=0
    #allocation2 [shape = 'u8[65536]{0}', space=vmem, size = 0x10000, scoped, tag = 'input window, operand 0']
    loop: start=0, step=1, limit=4
    $region2: #{multi_resolution_stft_loss.5} parent=1 // loop_pre_header
      _
    $region3: #{multi_resolution_stft_loss.5} parent=1 // loop_header
      %s8 = sphi 0, %s12
      %p9 = scmp.ge.s32.totalorder %s8, 4
      %s18 = sphi 0, %s20
      %s21 = sphi 0, %s18
      %s22 = sphi 0, %s21
      %s38 = sphi 0, %s22
      %s42 = sphi 0, %s42
      %s44 = sphi 0, %s42
      %s45 = sphi 0, %s44
      %s59 = sphi 0, %s45
      %s65 = sphi 0, %s67
      %s68 = sphi 0, %s65
      %s69 = sphi 0, %s68
      %s85 = sphi 0, %s69
    $region4: #{multi_resolution_stft_loss.5} parent=1 // loop_header_branch
      %11 = sbr.rel (%p9) target = $region8
    $region5: #{multi_resolution_stft_loss.5} parent=1 // loop_body
      %s13 = ssub.s32 %s8, 1
      %s14 = ssub.s32 %s8, 2
      %s15 = sadd.s32 %s8, 1
      %s16 = ssub.s32 %s8, %s15
      %p17 = scmp.eq.s32.totalorder %s16, 0
      %s19 = sadd.s32 %s18, 1
      %s20 = scalar_select %p17, %s18, %s19
      %p23 = pneg %p17
      %p24 = scmp.eq.s32.totalorder %s8, 1
      %p25 = por %p23, %p24
      %p26 = scmp.ne.s32.totalorder %s18, %s21
      %p27 = scmp.eq.s32.totalorder %s8, 0
      %p28 = por %p26, %p27
      %p29 = scmp.ne.s32.totalorder %s18, %s21
      %p30 = scmp.eq.s32.totalorder %s13, 1
      %p31 = por %p29, %p30
      %p32 = scmp.ne.s32.totalorder %s21, %s22
      %p33 = scmp.eq.s32.totalorder %s13, 0
      %p34 = por %p32, %p33
      %p35 = scmp.ne.s32.totalorder %s21, %s22
      %p36 = scmp.eq.s32.totalorder %s14, 1
      %p37 = por %p35, %p36
      %p39 = scmp.ne.s32.totalorder %s22, %s38
      %p40 = scmp.eq.s32.totalorder %s14, 0
      %p41 = por %p39, %p40
      %s43 = sadd.s32 %s42, 1
      %p46 = scmp.eq.s32.totalorder %s8, 1
      %p47 = scmp.ne.s32.totalorder %s42, %s44
      %p48 = scmp.eq.s32.totalorder %s8, 0
      %p49 = por %p47, %p48
      %p50 = scmp.ne.s32.totalorder %s42, %s44
      %p51 = scmp.eq.s32.totalorder %s13, 1
      %p52 = por %p50, %p51
      %p53 = scmp.ne.s32.totalorder %s44, %s45
      %p54 = scmp.eq.s32.totalorder %s13, 0
      %p55 = por %p53, %p54
      %p56 = scmp.ne.s32.totalorder %s44, %s45
      %p57 = scmp.eq.s32.totalorder %s14, 1
      %p58 = por %p56, %p57
      %p60 = scmp.ne.s32.totalorder %s45, %s59
      %p61 = scmp.eq.s32.totalorder %s14, 0
      %p62 = por %p60, %p61
      %s63 = ssub.s32 %s8, %s15
      %p64 = scmp.eq.s32.totalorder %s63, 0
      %s66 = sadd.s32 %s65, 1
      %s67 = scalar_select %p64, %s65, %s66
      %p70 = pneg %p64
      %p71 = scmp.eq.s32.totalorder %s8, 1
      %p72 = por %p70, %p71
      %p73 = scmp.ne.s32.totalorder %s65, %s68
      %p74 = scmp.eq.s32.totalorder %s8, 0
      %p75 = por %p73, %p74
      %p76 = scmp.ne.s32.totalorder %s65, %s68
      %p77 = scmp.eq.s32.totalorder %s13, 1
      %p78 = por %p76, %p77
      %p79 = scmp.ne.s32.totalorder %s68, %s69
      %p80 = scmp.eq.s32.totalorder %s13, 0
      %p81 = por %p79, %p80
      %p82 = scmp.ne.s32.totalorder %s68, %s69
      %p83 = scmp.eq.s32.totalorder %s14, 1
      %p84 = por %p82, %p83
      %p86 = scmp.ne.s32.totalorder %s69, %s85
      %p87 = scmp.eq.s32.totalorder %s14, 0
      %p88 = por %p86, %p87
      %p89 = scmp.le.s32.totalorder 1, %s8
      %p90 = scmp.lt.s32.totalorder %s8, 3
      %p91 = pnand %p89, %p90
      %p92 = pneg %p91
      // Predicated region
      $region9: #{multi_resolution_stft_loss.5} parent=5 // pred_check
        _
      $region10: #{multi_resolution_stft_loss.5} parent=5 // pred_check_branch
        %94 = sbr.rel (%p91) target = $region12
      $region11: #{multi_resolution_stft_loss.5} parent=5 // pred_region
        %s95 = ssub.s32 %s8, 1
        // Predicated region
        $region13: #{multi_resolution_stft_loss.5} parent=11 // pred_check
          %p96 = pneg %p55
        $region14: #{multi_resolution_stft_loss.5} parent=11 // pred_check_branch
          %98 = sbr.rel (%p96) target = $region16
        $region15: #{multi_resolution_stft_loss.5} parent=11 // pred_region
          _
        $region16: #{multi_resolution_stft_loss.5} parent=11 // pred_fallthru
          _
      $region12: #{multi_resolution_stft_loss.5} parent=5 // pred_fallthru
        _
      %p99 = scmp.lt.s32.totalorder %s8, 2
      // Predicated region
      $region17: #{multi_resolution_stft_loss.5} parent=5 // pred_check
        %p100 = pneg %p99
      $region18: #{multi_resolution_stft_loss.5} parent=5 // pred_check_branch
        %102 = sbr.rel (%p100) target = $region20
      $region19: #{multi_resolution_stft_loss.5} parent=5 // pred_region
        // Predicated region
        $region21: #{multi_resolution_stft_loss.5} parent=19 // pred_check
          %p103 = pneg %p28
        $region22: #{multi_resolution_stft_loss.5} parent=19 // pred_check_branch
          %105 = sbr.rel (%p103) target = $region24
        $region23: #{multi_resolution_stft_loss.5} parent=19 // pred_region
          %s106 = sand.u32 %s18, 1
          %s107 = sand.u32 %s18, 1
          %s108 = smul.addr %s107, 64
          %s109 = scalar_lea.vmem [#allocation2], %s108
          %s110 = smul.u32 4, %s8
          %s111 = smul.addr %s110, 2
          %s112 = smul.addr %s111, 4
          %s113 = scalar_lea.vmem %s0, %s112
          // Predicated region
          $region25: #{multi_resolution_stft_loss.5} parent=23 // pred_check
            _
          $region26: #{multi_resolution_stft_loss.5} parent=23 // pred_check_branch
            %115 = sbr.rel (0) target = $region28
          $region27: #{multi_resolution_stft_loss.5} parent=23 // pred_region
            // Predicated region
            $region29: #{multi_resolution_stft_loss.5} parent=27 // pred_check
              _
            $region30: #{multi_resolution_stft_loss.5} parent=27 // pred_check_branch
              %117 = sbr.rel (0) target = $region32
            $region31: #{multi_resolution_stft_loss.5} parent=27 // pred_region
              // Predicated region
              $region44: #{multi_resolution_stft_loss.5} parent=31 // pred_check
                _
              $region45: #{multi_resolution_stft_loss.5} parent=31 // pred_check_branch
                %147 = sbr.rel (0) target = $region47
              $region46: #{multi_resolution_stft_loss.5} parent=31 // pred_region
                loop: start=0, step=1, limit=1
                $region48: #{multi_resolution_stft_loss.5} parent=46 // loop_pre_header
                  _
                $region49: #{multi_resolution_stft_loss.5} parent=46 // loop_header
                  %s149 = sphi 0, %s153
                  %p150 = scmp.ge.s32.totalorder %s149, 1
                  %s154 = sphi %s113, %s113
                  %s155 = sphi %s109, %s109
                $region50: #{multi_resolution_stft_loss.5} parent=46 // loop_header_branch
                  %152 = sbr.rel (%p150) target = $region54
                $region51: #{multi_resolution_stft_loss.5} parent=46 // loop_body
                  %v156 = vld [vmem:[%s154] sm:$0xff]
                  %157 = vst [vmem:[%s155] sm:$0xff] %v156
                  %v158 = vld [vmem:[%s154 + $0x8] sm:$0xff]
                  %159 = vst [vmem:[%s155 + $0x8] sm:$0xff] %v158
                  %v160 = vld [vmem:[%s154 + $0x10] sm:$0xff]
                  %161 = vst [vmem:[%s155 + $0x10] sm:$0xff] %v160
                  %v162 = vld [vmem:[%s154 + $0x18] sm:$0xff]
                  %163 = vst [vmem:[%s155 + $0x18] sm:$0xff] %v162
                  %v164 = vld [vmem:[%s154 + $0x40] sm:$0xff]
                  %165 = vst [vmem:[%s155 + $0x20] sm:$0xff] %v164
                  %v166 = vld [vmem:[%s154 + $0x48] sm:$0xff]
                  %167 = vst [vmem:[%s155 + $0x28] sm:$0xff] %v166
                  %v168 = vld [vmem:[%s154 + $0x50] sm:$0xff]
                  %169 = vst [vmem:[%s155 + $0x30] sm:$0xff] %v168
                  %v170 = vld [vmem:[%s154 + $0x58] sm:$0xff]
                  %171 = vst [vmem:[%s155 + $0x38] sm:$0xff] %v170
                $region52: #{multi_resolution_stft_loss.5} parent=46 // loop_footer
                  %s153 = sadd.s32 1, %s149
                $region53: #{multi_resolution_stft_loss.5} parent=46 // loop_footer_branch
                  %148 = sbr.rel target = $region49
                $region54: #{multi_resolution_stft_loss.5} parent=46 // loop_exit
                  _
              $region47: #{multi_resolution_stft_loss.5} parent=31 // pred_fallthru
                _
              // Predicated region
              $region55: #{multi_resolution_stft_loss.5} parent=31 // pred_check
                _
              $region56: #{multi_resolution_stft_loss.5} parent=31 // pred_check_branch
                %173 = sbr.rel target = $region58
              $region57: #{multi_resolution_stft_loss.5} parent=31 // pred_region
                _
              $region58: #{multi_resolution_stft_loss.5} parent=31 // pred_fallthru
                _
            $region32: #{multi_resolution_stft_loss.5} parent=27 // pred_fallthru
              _
            // Predicated region
            $region33: #{multi_resolution_stft_loss.5} parent=27 // pred_check
              _
            $region34: #{multi_resolution_stft_loss.5} parent=27 // pred_check_branch
              %119 = sbr.rel target = $region36
            $region35: #{multi_resolution_stft_loss.5} parent=27 // pred_region
              %s121 = ssub.s32 256, 1
              loop: start=0, step=1, limit=1
              $region37: #{multi_resolution_stft_loss.5} parent=35 // loop_pre_header
                _
              $region38: #{multi_resolution_stft_loss.5} parent=35 // loop_header
                %s123 = sphi 0, %s127
                %p124 = scmp.ge.s32.totalorder %s123, 1
                %s128 = sphi %s113, %s113
                %s129 = sphi %s109, %s109
              $region39: #{multi_resolution_stft_loss.5} parent=35 // loop_header_branch
                %126 = sbr.rel (%p124) target = $region43
              $region40: #{multi_resolution_stft_loss.5} parent=35 // loop_body
                %v130 = vld [vmem:[%s128] sm:%s121]
                %131 = vst [vmem:[%s129] sm:%s121] %v130
                %v132 = vld [vmem:[%s128 + $0x8] sm:%s121]
                %133 = vst [vmem:[%s129 + $0x8] sm:%s121] %v132
                %v134 = vld [vmem:[%s128 + $0x10] sm:%s121]
                %135 = vst [vmem:[%s129 + $0x10] sm:%s121] %v134
                %v136 = vld [vmem:[%s128 + $0x18] sm:%s121]
                %137 = vst [vmem:[%s129 + $0x18] sm:%s121] %v136
                %v138 = vld [vmem:[%s128 + $0x40] sm:%s121]
                %139 = vst [vmem:[%s129 + $0x20] sm:%s121] %v138
                %v140 = vld [vmem:[%s128 + $0x48] sm:%s121]
                %141 = vst [vmem:[%s129 + $0x28] sm:%s121] %v140
                %v142 = vld [vmem:[%s128 + $0x50] sm:%s121]
                %143 = vst [vmem:[%s129 + $0x30] sm:%s121] %v142
                %v144 = vld [vmem:[%s128 + $0x58] sm:%s121]
                %145 = vst [vmem:[%s129 + $0x38] sm:%s121] %v144
              $region41: #{multi_resolution_stft_loss.5} parent=35 // loop_footer
                %s127 = sadd.s32 1, %s123
              $region42: #{multi_resolution_stft_loss.5} parent=35 // loop_footer_branch
                %122 = sbr.rel target = $region38
              $region43: #{multi_resolution_stft_loss.5} parent=35 // loop_exit
                _
            $region36: #{multi_resolution_stft_loss.5} parent=27 // pred_fallthru
              _
          $region28: #{multi_resolution_stft_loss.5} parent=23 // pred_fallthru
            _
          %174 = vnop
        $region24: #{multi_resolution_stft_loss.5} parent=19 // pred_fallthru
          _
      $region20: #{multi_resolution_stft_loss.5} parent=5 // pred_fallthru
        _
      %p175 = scmp.le.s32.totalorder 1, %s8
      %p176 = scmp.lt.s32.totalorder %s8, 3
      %p177 = pnand %p175, %p176
      %p178 = pneg %p177
      // Predicated region
      $region59: #{multi_resolution_stft_loss.5} parent=5 // pred_check
        _
      $region60: #{multi_resolution_stft_loss.5} parent=5 // pred_check_branch
        %180 = sbr.rel (%p177) target = $region62
      $region61: #{multi_resolution_stft_loss.5} parent=5 // pred_region
        %s181 = ssub.s32 %s8, 1
        %s182 = sand.u32 %s21, 1
        %s183 = sand.u32 %s21, 1
        %s184 = smul.addr %s183, 64
        %s185 = scalar_lea.vmem [#allocation2], %s184
        // Predicated region
        $region63: #{multi_resolution_stft_loss.5} parent=61 // pred_check
          %p186 = pneg %p34
        $region64: #{multi_resolution_stft_loss.5} parent=61 // pred_check_branch
          %188 = sbr.rel (%p186) target = $region66
        $region65: #{multi_resolution_stft_loss.5} parent=61 // pred_region
          _
        $region66: #{multi_resolution_stft_loss.5} parent=61 // pred_fallthru
          _
        %s189 = sand.u32 %s21, 1
        %s190 = sand.u32 %s21, 1
        %s191 = smul.addr %s190, 64
        %s192 = scalar_lea.vmem [#allocation2], %s191
        %p193 = pneg %p34
        %p194 = pneg %p31
        %p195 = pneg %p55
        %p196 = pneg %p52
        %p197 = pneg %p81
        %p198 = pneg %p78
        %p199 = scmp.lt.s32.totalorder %s13, 1
        %s200 = scalar_select %p199, %s13, 1
        %s201 = smul.addr %s200, 8
        %s202 = scalar_lea.vmem %s2, %s201
        %s203 = smul.u32 4, %s13
        %p204 = scmp.lt.s32.totalorder %s13, 1
        %s205 = scalar_select %p204, %s13, 1
        %s206 = smul.addr %s205, 8
        %s207 = scalar_lea.vmem %s2, %s206
        %v208 = vld [vmem:[%s185] sm:$0xff]
        %v209 = vld [vmem:[%s185 + $0x8] sm:$0xff]
        %v210 = vld [vmem:[%s185 + $0x10] sm:$0xff]
        %v211 = vld [vmem:[%s185 + $0x18] sm:$0xff]
        %v212 = vld [vmem:[%s185 + $0x20] sm:$0xff]
        %v213 = vld [vmem:[%s185 + $0x28] sm:$0xff]
        %v214 = vld [vmem:[%s185 + $0x30] sm:$0xff]
        %v215 = vld [vmem:[%s185 + $0x38] sm:$0xff]
        %v216 = vld [vmem:[%s1] sm:$0xff]
        %v217 = vld [vmem:[%s1 + $0x8] sm:$0xff]
        %v218 = vld [vmem:[%s1 + $0x10] sm:$0xff]
        %v219 = vld [vmem:[%s1 + $0x18] sm:$0xff]
        %v220 = vld [vmem:[%s1 + $0x20] sm:$0xff]
        %v221 = vld [vmem:[%s1 + $0x28] sm:$0xff]
        %v222 = vld [vmem:[%s1 + $0x30] sm:$0xff]
        %v223 = vld [vmem:[%s1 + $0x38] sm:$0xff]
        %v224 = vld [vmem:[%s1 + $0x40] sm:$0xff]
        %v225 = vld [vmem:[%s1 + $0x48] sm:$0xff]
        %v226 = vld [vmem:[%s1 + $0x50] sm:$0xff]
        %v227 = vld [vmem:[%s1 + $0x58] sm:$0xff]
        %v228 = vld [vmem:[%s1 + $0x60] sm:$0xff]
        %v229 = vld [vmem:[%s1 + $0x68] sm:$0xff]
        %v230 = vld [vmem:[%s1 + $0x70] sm:$0xff]
        %v231 = vld [vmem:[%s1 + $0x78] sm:$0xff]
        %v232 = vld [vmem:[%s1 + $0x80] sm:$0xff]
        %v233 = vld [vmem:[%s1 + $0x88] sm:$0xff]
        %v234 = vld [vmem:[%s1 + $0x90] sm:$0xff]
        %v235 = vld [vmem:[%s1 + $0x98] sm:$0xff]
        %v236 = vld [vmem:[%s1 + $0xa0] sm:$0xff]
        %v237 = vld [vmem:[%s1 + $0xa8] sm:$0xff]
        %v238 = vld [vmem:[%s1 + $0xb0] sm:$0xff]
        %v239 = vld [vmem:[%s1 + $0xb8] sm:$0xff]
        %v240 = vld [vmem:[%s1 + $0xc0] sm:$0xff]
        %v241 = vld [vmem:[%s1 + $0xc8] sm:$0xff]
        %v242 = vld [vmem:[%s1 + $0xd0] sm:$0xff]
        %v243 = vld [vmem:[%s1 + $0xd8] sm:$0xff]
        %v244 = vld [vmem:[%s1 + $0xe0] sm:$0xff]
        %v245 = vld [vmem:[%s1 + $0xe8] sm:$0xff]
        %v246 = vld [vmem:[%s1 + $0xf0] sm:$0xff]
        %v247 = vld [vmem:[%s1 + $0xf8] sm:$0xff]
        %v256 = vunpack.c.l.b16 %v208
        %v257 = vunpack.c.h.b16 %v208
        %v258 = vunpack.c.l.b16 %v209
        %v259 = vunpack.c.h.b16 %v209
        %v260 = vunpack.c.l.b16 %v210
        %v261 = vunpack.c.h.b16 %v210
        %v262 = vunpack.c.l.b16 %v211
        %v263 = vunpack.c.h.b16 %v211
        %v264 = vunpack.c.l.b16 %v212
        %v265 = vunpack.c.h.b16 %v212
        %v266 = vunpack.c.l.b16 %v213
        %v267 = vunpack.c.h.b16 %v213
        %v268 = vunpack.c.l.b16 %v214
        %v269 = vunpack.c.h.b16 %v214
        %v270 = vunpack.c.l.b16 %v215
        %v271 = vunpack.c.h.b16 %v215
        %v272 = vpack.c.b16 %v258, %v256
        %v273 = vpack.c.b16 %v259, %v257
        %v274 = vpack.c.b16 %v262, %v260
        %v275 = vpack.c.b16 %v263, %v261
        %v276 = vpack.c.b16 %v266, %v264
        %v277 = vpack.c.b16 %v267, %v265
        %v278 = vpack.c.b16 %v270, %v268
        %v279 = vpack.c.b16 %v271, %v269
        %v320 = vunpack.c.l.b16 %v216
        %v321 = vunpack.c.h.b16 %v216
        %v322 = vunpack.c.l.b16 %v217
        %v323 = vunpack.c.h.b16 %v217
        %v324 = vunpack.c.l.b16 %v218
        %v325 = vunpack.c.h.b16 %v218
        %v326 = vunpack.c.l.b16 %v219
        %v327 = vunpack.c.h.b16 %v219
        %v328 = vunpack.c.l.b16 %v220
        %v329 = vunpack.c.h.b16 %v220
        %v330 = vunpack.c.l.b16 %v221
        %v331 = vunpack.c.h.b16 %v221
        %v332 = vunpack.c.l.b16 %v222
        %v333 = vunpack.c.h.b16 %v222
        %v334 = vunpack.c.l.b16 %v223
        %v335 = vunpack.c.h.b16 %v223
        %v336 = vunpack.c.l.b16 %v224
        %v337 = vunpack.c.h.b16 %v224
        %v338 = vunpack.c.l.b16 %v225
        %v339 = vunpack.c.h.b16 %v225
        %v340 = vunpack.c.l.b16 %v226
        %v341 = vunpack.c.h.b16 %v226
        %v342 = vunpack.c.l.b16 %v227
        %v343 = vunpack.c.h.b16 %v227
        %v344 = vunpack.c.l.b16 %v228
        %v345 = vunpack.c.h.b16 %v228
        %v346 = vunpack.c.l.b16 %v229
        %v347 = vunpack.c.h.b16 %v229
        %v348 = vunpack.c.l.b16 %v230
        %v349 = vunpack.c.h.b16 %v230
        %v350 = vunpack.c.l.b16 %v231
        %v351 = vunpack.c.h.b16 %v231
        %v352 = vunpack.c.l.b16 %v232
        %v353 = vunpack.c.h.b16 %v232
        %v354 = vunpack.c.l.b16 %v233
        %v355 = vunpack.c.h.b16 %v233
        %v356 = vunpack.c.l.b16 %v234
        %v357 = vunpack.c.h.b16 %v234
        %v358 = vunpack.c.l.b16 %v235
        %v359 = vunpack.c.h.b16 %v235
        %v360 = vunpack.c.l.b16 %v236
        %v361 = vunpack.c.h.b16 %v236
        %v362 = vunpack.c.l.b16 %v237
        %v363 = vunpack.c.h.b16 %v237
        %v364 = vunpack.c.l.b16 %v238
        %v365 = vunpack.c.h.b16 %v238
        %v366 = vunpack.c.l.b16 %v239
        %v367 = vunpack.c.h.b16 %v239
        %v368 = vunpack.c.l.b16 %v240
        %v369 = vunpack.c.h.b16 %v240
        %v370 = vunpack.c.l.b16 %v241
        %v371 = vunpack.c.h.b16 %v241
        %v372 = vunpack.c.l.b16 %v242
        %v373 = vunpack.c.h.b16 %v242
        %v374 = vunpack.c.l.b16 %v243
        %v375 = vunpack.c.h.b16 %v243
        %v376 = vunpack.c.l.b16 %v244
        %v377 = vunpack.c.h.b16 %v244
        %v378 = vunpack.c.l.b16 %v245
        %v379 = vunpack.c.h.b16 %v245
        %v380 = vunpack.c.l.b16 %v246
        %v381 = vunpack.c.h.b16 %v246
        %v382 = vunpack.c.l.b16 %v247
        %v383 = vunpack.c.h.b16 %v247
        %v384 = vpack.c.b16 %v322, %v320
        %v385 = vpack.c.b16 %v323, %v321
        %v386 = vpack.c.b16 %v326, %v324
        %v387 = vpack.c.b16 %v327, %v325
        %v388 = vpack.c.b16 %v330, %v328
        %v389 = vpack.c.b16 %v331, %v329
        %v390 = vpack.c.b16 %v334, %v332
        %v391 = vpack.c.b16 %v335, %v333
        %v392 = vpack.c.b16 %v338, %v336
        %v393 = vpack.c.b16 %v339, %v337
        %v394 = vpack.c.b16 %v342, %v340
        %v395 = vpack.c.b16 %v343, %v341
        %v396 = vpack.c.b16 %v346, %v344
        %v397 = vpack.c.b16 %v347, %v345
        %v398 = vpack.c.b16 %v350, %v348
        %v399 = vpack.c.b16 %v351, %v349
        %v400 = vpack.c.b16 %v354, %v352
        %v401 = vpack.c.b16 %v355, %v353
        %v402 = vpack.c.b16 %v358, %v356
        %v403 = vpack.c.b16 %v359, %v357
        %v404 = vpack.c.b16 %v362, %v360
        %v405 = vpack.c.b16 %v363, %v361
        %v406 = vpack.c.b16 %v366, %v364
        %v407 = vpack.c.b16 %v367, %v365
        %v408 = vpack.c.b16 %v370, %v368
        %v409 = vpack.c.b16 %v371, %v369
        %v410 = vpack.c.b16 %v374, %v372
        %v411 = vpack.c.b16 %v375, %v373
        %v412 = vpack.c.b16 %v378, %v376
        %v413 = vpack.c.b16 %v379, %v377
        %v414 = vpack.c.b16 %v382, %v380
        %v415 = vpack.c.b16 %v383, %v381
        %448 = vmatprep.subr.bf16.mxu0 %v399
        %449 = vmatpush1.bf16.msra.mxu0 %v398
        %450 = vmatprep.subr.bf16.mxu0 %v397
        %451 = vmatpush1.bf16.msra.mxu0 %v396
        %452 = vmatprep.subr.bf16.mxu0 %v395
        %453 = vmatpush1.bf16.msra.mxu0 %v394
        %454 = vmatprep.subr.bf16.mxu0 %v393
        %455 = vmatpush1.bf16.msra.mxu0 %v392
        %456 = vmatprep.subr.bf16.mxu0 %v391
        %457 = vmatpush1.bf16.msra.mxu0 %v390
        %458 = vmatprep.subr.bf16.mxu0 %v389
        %459 = vmatpush1.bf16.msra.mxu0 %v388
        %460 = vmatprep.subr.bf16.mxu0 %v387
        %461 = vmatpush1.bf16.msra.mxu0 %v386
        %462 = vmatprep.subr.bf16.mxu0 %v385
        %463 = vmatpush1.bf16.msra.mxu0 %v384
        %464 = vmatprep.subr.bf16.mxu0 %v415
        %465 = vmatpush2.bf16.msra.mxu0 %v414
        %466 = vmatprep.subr.bf16.mxu0 %v413
        %467 = vmatpush2.bf16.msra.mxu0 %v412
        %468 = vmatprep.subr.bf16.mxu0 %v411
        %469 = vmatpush2.bf16.msra.mxu0 %v410
        %470 = vmatprep.subr.bf16.mxu0 %v409
        %471 = vmatpush2.bf16.msra.mxu0 %v408
        %472 = vmatprep.subr.bf16.mxu0 %v407
        %473 = vmatpush2.bf16.msra.mxu0 %v406
        %474 = vmatprep.subr.bf16.mxu0 %v405
        %475 = vmatpush2.bf16.msra.mxu0 %v404
        %476 = vmatprep.subr.bf16.mxu0 %v403
        %477 = vmatpush2.bf16.msra.mxu0 %v402
        %478 = vmatprep.subr.bf16.mxu0 %v401
        %479 = vmatpush2.bf16.msra.mxu0 %v400
        %480 = vmatprep.mubr.bf16.mxu0 %v273
        %481 = vmatmul.mubr.bf16.gmra.mxu0 %v272
        %v482 = vpop.f32.mrf.mxu0
        %v483 = vadd.f32 0.0, %v482
        %v484 = vpop.f32.mrf.mxu0
        %v485 = vadd.f32 0.0, %v484
        %v486 = vpop.f32.mrf.mxu0
        %v487 = vadd.f32 0.0, %v486
        %v488 = vpop.f32.mrf.mxu0
        %v489 = vadd.f32 0.0, %v488
        %490 = vmatprep.mubr.bf16.mxu0 %v275
        %491 = vmatmul.mubr.bf16.gmra.mxu0 %v274
        %v492 = vpop.f32.mrf.mxu0
        %v493 = vadd.f32 0.0, %v492
        %v494 = vpop.f32.mrf.mxu0
        %v495 = vadd.f32 0.0, %v494
        %v496 = vpop.f32.mrf.mxu0
        %v497 = vadd.f32 0.0, %v496
        %v498 = vpop.f32.mrf.mxu0
        %v499 = vadd.f32 0.0, %v498
        %500 = vmatprep.mubr.bf16.mxu0 %v277
        %501 = vmatmul.mubr.bf16.gmra.mxu0 %v276
        %v502 = vpop.f32.mrf.mxu0
        %v503 = vadd.f32 0.0, %v502
        %v504 = vpop.f32.mrf.mxu0
        %v505 = vadd.f32 0.0, %v504
        %v506 = vpop.f32.mrf.mxu0
        %v507 = vadd.f32 0.0, %v506
        %v508 = vpop.f32.mrf.mxu0
        %v509 = vadd.f32 0.0, %v508
        %510 = vmatprep.mubr.bf16.mxu0 %v279
        %511 = vmatmul.mubr.bf16.gmra.mxu0 %v278
        %v512 = vpop.f32.mrf.mxu0
        %v513 = vadd.f32 0.0, %v512
        %v514 = vpop.f32.mrf.mxu0
        %v515 = vadd.f32 0.0, %v514
        %v516 = vpop.f32.mrf.mxu0
        %v517 = vadd.f32 0.0, %v516
        %v518 = vpop.f32.mrf.mxu0
        %v519 = vadd.f32 0.0, %v518
        %520 = vdwg.mxu0
        %v521 = vlaneseq
        %v522 = vand.u32 %v521, 127
        %vm523 = vcmp.eq.s32.totalorder %v522, 0
        %v524 = vand.u32 2147483647, %v483
        %v525 = vand.u32 2147483647, %v487
        %v526 = vand.u32 2147483647, %v493
        %v527 = vand.u32 2147483647, %v497
        %v528 = vmul.f32 %v483, %v483
        %v529 = vmul.f32 %v487, %v487
        %v530 = vmul.f32 %v493, %v493
        %v531 = vmul.f32 %v497, %v497
        %v532 = vmul.f32 %v485, %v485
        %v533 = vmul.f32 %v489, %v489
        %v534 = vmul.f32 %v495, %v495
        %v535 = vmul.f32 %v499, %v499
        %v536 = vadd.f32 %v528, %v532
        %v537 = vadd.f32 %v529, %v533
        %v538 = vadd.f32 %v530, %v534
        %v539 = vadd.f32 %v531, %v535
        %v540 = vrsqrt.pop %v536
        %v541 = vmul.f32 %v536, %v540
        %vm542 = vcmp.eq.f32.partialorder %v536, inf
        %v543 = vsel %vm542, %v536, %v541
        %vm544 = vcmp.eq.f32.partialorder %v536, 0.0
        %v545 = vand.u32 %v536, 2147483648
        %v546 = vsel %vm544, %v545, %v543
        %v547 = vrsqrt.pop %v537
        %v548 = vmul.f32 %v537, %v547
        %vm549 = vcmp.eq.f32.partialorder %v537, inf
        %v550 = vsel %vm549, %v537, %v548
        %vm551 = vcmp.eq.f32.partialorder %v537, 0.0
        %v552 = vand.u32 %v537, 2147483648
        %v553 = vsel %vm551, %v552, %v550
        %v554 = vrsqrt.pop %v538
        %v555 = vmul.f32 %v538, %v554
        %vm556 = vcmp.eq.f32.partialorder %v538, inf
        %v557 = vsel %vm556, %v538, %v555
        %vm558 = vcmp.eq.f32.partialorder %v538, 0.0
        %v559 = vand.u32 %v538, 2147483648
        %v560 = vsel %vm558, %v559, %v557
        %v561 = vrsqrt.pop %v539
        %v562 = vmul.f32 %v539, %v561
        %vm563 = vcmp.eq.f32.partialorder %v539, inf
        %v564 = vsel %vm563, %v539, %v562
        %vm565 = vcmp.eq.f32.partialorder %v539, 0.0
        %v566 = vand.u32 %v539, 2147483648
        %v567 = vsel %vm565, %v566, %v564
        %v568 = vsel %vm523, %v524, %v546
        %v569 = vsel %vm523, %v525, %v553
        %v570 = vsel %vm523, %v526, %v560
        %v571 = vsel %vm523, %v527, %v567
        %v572 = vand.u32 2147483647, %v503
        %v573 = vand.u32 2147483647, %v507
        %v574 = vand.u32 2147483647, %v513
        %v575 = vand.u32 2147483647, %v517
        %v576 = vmul.f32 %v503, %v503
        %v577 = vmul.f32 %v507, %v507
        %v578 = vmul.f32 %v513, %v513
        %v579 = vmul.f32 %v517, %v517
        %v580 = vmul.f32 %v505, %v505
        %v581 = vmul.f32 %v509, %v509
        %v582 = vmul.f32 %v515, %v515
        %v583 = vmul.f32 %v519, %v519
        %v584 = vadd.f32 %v576, %v580
        %v585 = vadd.f32 %v577, %v581
        %v586 = vadd.f32 %v578, %v582
        %v587 = vadd.f32 %v579, %v583
        %v588 = vrsqrt.pop %v584
        %v589 = vmul.f32 %v584, %v588
        %vm590 = vcmp.eq.f32.partialorder %v584, inf
        %v591 = vsel %vm590, %v584, %v589
        %vm592 = vcmp.eq.f32.partialorder %v584, 0.0
        %v593 = vand.u32 %v584, 2147483648
        %v594 = vsel %vm592, %v593, %v591
        %v595 = vrsqrt.pop %v585
        %v596 = vmul.f32 %v585, %v595
        %vm597 = vcmp.eq.f32.partialorder %v585, inf
        %v598 = vsel %vm597, %v585, %v596
        %vm599 = vcmp.eq.f32.partialorder %v585, 0.0
        %v600 = vand.u32 %v585, 2147483648
        %v601 = vsel %vm599, %v600, %v598
        %v602 = vrsqrt.pop %v586
        %v603 = vmul.f32 %v586, %v602
        %vm604 = vcmp.eq.f32.partialorder %v586, inf
        %v605 = vsel %vm604, %v586, %v603
        %vm606 = vcmp.eq.f32.partialorder %v586, 0.0
        %v607 = vand.u32 %v586, 2147483648
        %v608 = vsel %vm606, %v607, %v605
        %v609 = vrsqrt.pop %v587
        %v610 = vmul.f32 %v587, %v609
        %vm611 = vcmp.eq.f32.partialorder %v587, inf
        %v612 = vsel %vm611, %v587, %v610
        %vm613 = vcmp.eq.f32.partialorder %v587, 0.0
        %v614 = vand.u32 %v587, 2147483648
        %v615 = vsel %vm613, %v614, %v612
        %v616 = vsel %vm523, %v572, %v594
        %v617 = vsel %vm523, %v573, %v601
        %v618 = vsel %vm523, %v574, %v608
        %v619 = vsel %vm523, %v575, %v615
        %v620 = vsub.f32 %v568, %v616
        %v621 = vsub.f32 %v569, %v617
        %v622 = vsub.f32 %v570, %v618
        %v623 = vsub.f32 %v571, %v619
        %v624 = vand.u32 2147483647, %v620
        %v625 = vand.u32 2147483647, %v621
        %v626 = vand.u32 2147483647, %v622
        %v627 = vand.u32 2147483647, %v623
        %v628 = vand.u32 2147483647, %v485
        %v629 = vand.u32 2147483647, %v489
        %v630 = vand.u32 2147483647, %v495
        %v631 = vand.u32 2147483647, %v499
        %v632 = vand.u32 2147483647, %v505
        %v633 = vand.u32 2147483647, %v509
        %v634 = vand.u32 2147483647, %v515
        %v635 = vand.u32 2147483647, %v519
        %v636 = vsub.f32 %v628, %v632
        %v637 = vsub.f32 %v629, %v633
        %v638 = vsub.f32 %v630, %v634
        %v639 = vsub.f32 %v631, %v635
        %v640 = vand.u32 2147483647, %v636
        %v641 = vand.u32 2147483647, %v637
        %v642 = vand.u32 2147483647, %v638
        %v643 = vand.u32 2147483647, %v639
        %645 = vset.pattern.permute.xlu0 0
        %646 = vperm.xlu0 %645, %v640
        %v647 = vpop.permute.xlu0 %646
        %650 = vset.pattern.permute.xlu0 0
        %651 = vperm.xlu0 %650, %v641
        %v652 = vpop.permute.xlu0 %651
        %655 = vset.pattern.permute.xlu0 0
        %656 = vperm.xlu0 %655, %v642
        %v657 = vpop.permute.xlu0 %656
        %660 = vset.pattern.permute.xlu0 0
        %661 = vperm.xlu0 %660, %v643
        %v662 = vpop.permute.xlu0 %661
        %v664 = vsel %vm523, %v647, 0.0
        %v665 = vsel %vm523, %v652, 0.0
        %v666 = vsel %vm523, %v657, 0.0
        %v667 = vsel %vm523, %v662, 0.0
        %v668 = vadd.f32 %v624, %v664
        %v669 = vadd.f32 %v625, %v665
        %v670 = vadd.f32 %v626, %v666
        %v671 = vadd.f32 %v627, %v667
        %v672 = vadd.f32 %v668, %v669
        %v673 = vadd.f32 %v672, %v670
        %v674 = vadd.f32 %v673, %v671
        %675 = vst [vmem:[%s207] sm:$0xff] %v674
        %p676 = scmp.lt.s32.totalorder %s13, 1
        %s677 = scalar_select %p676, %s13, 1
        %s678 = smul.addr %s677, 8
        %s679 = scalar_lea.vmem %s2, %s678
        // Predicated region
        $region67: #{multi_resolution_stft_loss.5} parent=61 // pred_check
          %p680 = pneg %p78
        $region68: #{multi_resolution_stft_loss.5} parent=61 // pred_check_branch
          %682 = sbr.rel (%p680) target = $region70
        $region69: #{multi_resolution_stft_loss.5} parent=61 // pred_region
          _
        $region70: #{multi_resolution_stft_loss.5} parent=61 // pred_fallthru
          _
      $region62: #{multi_resolution_stft_loss.5} parent=5 // pred_fallthru
        _
      %p683 = scmp.le.s32.totalorder 2, %s8
      // Predicated region
      $region71: #{multi_resolution_stft_loss.5} parent=5 // pred_check
        %p684 = pneg %p683
      $region72: #{multi_resolution_stft_loss.5} parent=5 // pred_check_branch
        %686 = sbr.rel (%p684) target = $region74
      $region73: #{multi_resolution_stft_loss.5} parent=5 // pred_region
        %s687 = ssub.s32 %s8, 2
        // Predicated region
        $region75: #{multi_resolution_stft_loss.5} parent=73 // pred_check
          %p688 = pneg %p84
        $region76: #{multi_resolution_stft_loss.5} parent=73 // pred_check_branch
          %690 = sbr.rel (%p688) target = $region78
        $region77: #{multi_resolution_stft_loss.5} parent=73 // pred_region
          %p691 = scmp.lt.s32.totalorder %s14, 1
          %s692 = scalar_select %p691, %s14, 1
          %s693 = smul.addr %s692, 8
          %s694 = scalar_lea.vmem %s2, %s693
        $region78: #{multi_resolution_stft_loss.5} parent=73 // pred_fallthru
          _
      $region74: #{multi_resolution_stft_loss.5} parent=5 // pred_fallthru
        _
    $region6: #{multi_resolution_stft_loss.5} parent=1 // loop_footer
      %s12 = sadd.s32 1, %s8
    $region7: #{multi_resolution_stft_loss.5} parent=1 // loop_footer_branch
      %7 = sbr.rel target = $region3
    $region8: #{multi_resolution_stft_loss.5} parent=1 // loop_exit
      _

// kernel: multi_resolution_stft_loss.4
$region0: #{multi_resolution_stft_loss.4}
  #allocation0 [shape = 'u32[]', space=smem, size = 0x4, offset = 0x4, fixed_abs, tag = 'smem constant byte address 0x4 - core index']
  #allocation1 [shape = 'u32[144,128]{1,0:T(1,128)}', space=vmem, size = 0x12000, scoped, tag = 'internal scratch']
  %s0 = inlined_call_operand.vmem [shape: bf16[32,1024], index: 0, kind: input, shape index: {}]
  %s1 = inlined_call_operand.hbm [shape: bf16[1024,1024], index: 1, kind: input, shape index: {}]
  %s2 = inlined_call_operand.vmem [shape: bf16[32,1024], index: 2, kind: output, shape index: {}]
  %s3 = sld [smem:[#allocation0]]
  $region45: #{multi_resolution_stft_loss.4} parent=0
    _
  %s5 = ssub.s32 1, %s3
  %s6 = scalar_select 0, %s5, %s3
  $region1: #{multi_resolution_stft_loss.4} parent=0
    #allocation2 [shape = 'u8[2097152]{0}', space=vmem, size = 0x200000, scoped, tag = 'input window, operand 1, single buffered']
    #allocation3 [shape = 's32[2]{0}', space=sflag, size = 0x8, scoped, tag = 'scoped memory for multi_resolution_stft_loss.4']
    %7 = vsyncpa [#allocation3], 0
    loop: start=0, step=1, limit=4
    $region2: #{multi_resolution_stft_loss.4} parent=1 // loop_pre_header
      _
    $region3: #{multi_resolution_stft_loss.4} parent=1 // loop_header
      %s9 = sphi 0, %s13
      %p10 = scmp.ge.s32.totalorder %s9, 4
      %s19 = sphi 0, %s21
      %s22 = sphi 0, %s19
      %s23 = sphi 0, %s22
      %s39 = sphi 0, %s23
      %s43 = sphi 0, %s43
      %s45 = sphi 0, %s43
      %s46 = sphi 0, %s45
      %s60 = sphi 0, %s46
      %s66 = sphi 0, %s68
      %s69 = sphi 0, %s66
      %s70 = sphi 0, %s69
      %s86 = sphi 0, %s70
    $region4: #{multi_resolution_stft_loss.4} parent=1 // loop_header_branch
      %12 = sbr.rel (%p10) target = $region8
    $region5: #{multi_resolution_stft_loss.4} parent=1 // loop_body
      %s14 = ssub.s32 %s9, 1
      %s15 = ssub.s32 %s9, 2
      %s16 = sadd.s32 %s9, 1
      %s17 = ssub.s32 %s9, %s16
      %p18 = scmp.eq.s32.totalorder %s17, 0
      %s20 = sadd.s32 %s19, 1
      %s21 = scalar_select %p18, %s19, %s20
      %p24 = pneg %p18
      %p25 = scmp.eq.s32.totalorder %s9, 1
      %p26 = por %p24, %p25
      %p27 = scmp.ne.s32.totalorder %s19, %s22
      %p28 = scmp.eq.s32.totalorder %s9, 0
      %p29 = por %p27, %p28
      %p30 = scmp.ne.s32.totalorder %s19, %s22
      %p31 = scmp.eq.s32.totalorder %s14, 1
      %p32 = por %p30, %p31
      %p33 = scmp.ne.s32.totalorder %s22, %s23
      %p34 = scmp.eq.s32.totalorder %s14, 0
      %p35 = por %p33, %p34
      %p36 = scmp.ne.s32.totalorder %s22, %s23
      %p37 = scmp.eq.s32.totalorder %s15, 1
      %p38 = por %p36, %p37
      %p40 = scmp.ne.s32.totalorder %s23, %s39
      %p41 = scmp.eq.s32.totalorder %s15, 0
      %p42 = por %p40, %p41
      %s44 = sadd.s32 %s43, 1
      %p47 = scmp.eq.s32.totalorder %s9, 1
      %p48 = scmp.ne.s32.totalorder %s43, %s45
      %p49 = scmp.eq.s32.totalorder %s9, 0
      %p50 = por %p48, %p49
      %p51 = scmp.ne.s32.totalorder %s43, %s45
      %p52 = scmp.eq.s32.totalorder %s14, 1
      %p53 = por %p51, %p52
      %p54 = scmp.ne.s32.totalorder %s45, %s46
      %p55 = scmp.eq.s32.totalorder %s14, 0
      %p56 = por %p54, %p55
      %p57 = scmp.ne.s32.totalorder %s45, %s46
      %p58 = scmp.eq.s32.totalorder %s15, 1
      %p59 = por %p57, %p58
      %p61 = scmp.ne.s32.totalorder %s46, %s60
      %p62 = scmp.eq.s32.totalorder %s15, 0
      %p63 = por %p61, %p62
      %s64 = ssub.s32 %s9, %s16
      %p65 = scmp.eq.s32.totalorder %s64, 0
      %s67 = sadd.s32 %s66, 1
      %s68 = scalar_select %p65, %s66, %s67
      %p71 = pneg %p65
      %p72 = scmp.eq.s32.totalorder %s9, 1
      %p73 = por %p71, %p72
      %p74 = scmp.ne.s32.totalorder %s66, %s69
      %p75 = scmp.eq.s32.totalorder %s9, 0
      %p76 = por %p74, %p75
      %p77 = scmp.ne.s32.totalorder %s66, %s69
      %p78 = scmp.eq.s32.totalorder %s14, 1
      %p79 = por %p77, %p78
      %p80 = scmp.ne.s32.totalorder %s69, %s70
      %p81 = scmp.eq.s32.totalorder %s14, 0
      %p82 = por %p80, %p81
      %p83 = scmp.ne.s32.totalorder %s69, %s70
      %p84 = scmp.eq.s32.totalorder %s15, 1
      %p85 = por %p83, %p84
      %p87 = scmp.ne.s32.totalorder %s70, %s86
      %p88 = scmp.eq.s32.totalorder %s15, 0
      %p89 = por %p87, %p88
      %p90 = scmp.le.s32.totalorder 1, %s9
      %p91 = scmp.lt.s32.totalorder %s9, 3
      %p92 = pnand %p90, %p91
      %p93 = pneg %p92
      // Predicated region
      $region9: #{multi_resolution_stft_loss.4} parent=5 // pred_check
        _
      $region10: #{multi_resolution_stft_loss.4} parent=5 // pred_check_branch
        %95 = sbr.rel (%p92) target = $region12
      $region11: #{multi_resolution_stft_loss.4} parent=5 // pred_region
        %s96 = ssub.s32 %s9, 1
        // Predicated region
        $region13: #{multi_resolution_stft_loss.4} parent=11 // pred_check
          %p97 = pneg %p56
        $region14: #{multi_resolution_stft_loss.4} parent=11 // pred_check_branch
          %99 = sbr.rel (%p97) target = $region16
        $region15: #{multi_resolution_stft_loss.4} parent=11 // pred_region
          %s101 = ssub.s32 65536, 65536
          %102 = vsyncadd [#allocation3], %s101
          %s103 = sshll.u32 [#allocation2], 4
          %s104 = int_to_ptr.vmem [resolvable:$true] %s103
          %109 = dma.hbm_to_vmem [thread:$0]  %s1, 65536, %s104, [#allocation3], 512, 512, 32
        $region16: #{multi_resolution_stft_loss.4} parent=11 // pred_fallthru
          _
      $region12: #{multi_resolution_stft_loss.4} parent=5 // pred_fallthru
        _
      %p110 = scmp.lt.s32.totalorder %s9, 2
      // Predicated region
      $region17: #{multi_resolution_stft_loss.4} parent=5 // pred_check
        %p111 = pneg %p110
      $region18: #{multi_resolution_stft_loss.4} parent=5 // pred_check_branch
        %113 = sbr.rel (%p111) target = $region20
      $region19: #{multi_resolution_stft_loss.4} parent=5 // pred_region
        // Predicated region
        $region21: #{multi_resolution_stft_loss.4} parent=19 // pred_check
          %p114 = pneg %p29
        $region22: #{multi_resolution_stft_loss.4} parent=19 // pred_check_branch
          %116 = sbr.rel (%p114) target = $region24
        $region23: #{multi_resolution_stft_loss.4} parent=19 // pred_region
          %s117 = smul.u32 2, %s9
          %p118 = scmp.lt.s32.totalorder %s117, 3
          %s119 = scalar_select %p118, %s117, 3
          %s120 = smul.addr %s119, 8
          %s121 = smul.addr %s120, 4
          %s122 = scalar_lea.vmem %s0, %s121
          %s123 = smul.u32 2, %s9
        $region24: #{multi_resolution_stft_loss.4} parent=19 // pred_fallthru
          _
      $region20: #{multi_resolution_stft_loss.4} parent=5 // pred_fallthru
        _
      %p124 = scmp.le.s32.totalorder 1, %s9
      %p125 = scmp.lt.s32.totalorder %s9, 3
      %p126 = pnand %p124, %p125
      %p127 = pneg %p126
      // Predicated region
      $region25: #{multi_resolution_stft_loss.4} parent=5 // pred_check
        _
      $region26: #{multi_resolution_stft_loss.4} parent=5 // pred_check_branch
        %129 = sbr.rel (%p126) target = $region28
      $region27: #{multi_resolution_stft_loss.4} parent=5 // pred_region
        %s130 = ssub.s32 %s9, 1
        // Predicated region
        $region29: #{multi_resolution_stft_loss.4} parent=27 // pred_check
          %p131 = pneg %p56
        $region30: #{multi_resolution_stft_loss.4} parent=27 // pred_check_branch
          %133 = sbr.rel (%p131) target = $region32
        $region31: #{multi_resolution_stft_loss.4} parent=27 // pred_region
          %134 = dma.done [#allocation3], 65536
        $region32: #{multi_resolution_stft_loss.4} parent=27 // pred_fallthru
          _
        %s135 = smul.u32 2, %s14
        %p136 = scmp.lt.s32.totalorder %s135, 3
        %s137 = scalar_select %p136, %s135, 3
        %s138 = smul.addr %s137, 8
        %s139 = smul.addr %s138, 4
        %s140 = scalar_lea.vmem %s0, %s139
        %p141 = pneg %p35
        %p142 = pneg %p32
        %p143 = pneg %p56
        %p144 = pneg %p53
        %p145 = pneg %p82
        %p146 = pneg %p79
        %s147 = smul.u32 2, %s14
        %p148 = scmp.lt.s32.totalorder %s147, 3
        %s149 = scalar_select %p148, %s147, 3
        %s150 = smul.addr %s149, 8
        %s151 = smul.addr %s150, 4
        %s152 = scalar_lea.vmem %s2, %s151
        %s153 = smul.u32 2, %s14
        %p154 = scmp.lt.s32.totalorder %s153, 3
        %s155 = scalar_select %p154, %s153, 3
        %s156 = smul.addr %s155, 8
        %s157 = smul.addr %s156, 4
        %s158 = scalar_lea.vmem %s0, %s157
        %s159 = smul.u32 2, %s14
        %s160 = smul.u32 2, %s14
        %p161 = scmp.lt.s32.totalorder %s160, 3
        %s162 = scalar_select %p161, %s160, 3
        %s163 = smul.addr %s162, 8
        %s164 = smul.addr %s163, 4
        %s165 = scalar_lea.vmem %s2, %s164
        %s166 = smul.u32 2, %s14
        %v167 = vld [vmem:[%s158] sm:$0xff]
        %v168 = vld [vmem:[%s158 + $0x8] sm:$0xff]
        %v169 = vld [vmem:[%s158 + $0x10] sm:$0xff]
        %v170 = vld [vmem:[%s158 + $0x18] sm:$0xff]
        %v171 = vld [vmem:[%s158 + $0x20] sm:$0xff]
        %v172 = vld [vmem:[%s158 + $0x28] sm:$0xff]
        %v173 = vld [vmem:[%s158 + $0x30] sm:$0xff]
        %v174 = vld [vmem:[%s158 + $0x38] sm:$0xff]
        %v175 = vld [vmem:[#allocation2] sm:$0xff]
        %v176 = vld [vmem:[#allocation2 + $0x8] sm:$0xff]
        %v177 = vld [vmem:[#allocation2 + $0x10] sm:$0xff]
        %v178 = vld [vmem:[#allocation2 + $0x18] sm:$0xff]
        %v179 = vld [vmem:[#allocation2 + $0x20] sm:$0xff]
        %v180 = vld [vmem:[#allocation2 + $0x28] sm:$0xff]
        %v181 = vld [vmem:[#allocation2 + $0x30] sm:$0xff]
        %v182 = vld [vmem:[#allocation2 + $0x38] sm:$0xff]
        %v183 = vld [vmem:[#allocation2 + $0x40] sm:$0xff]
        %v184 = vld [vmem:[#allocation2 + $0x48] sm:$0xff]
        %v185 = vld [vmem:[#allocation2 + $0x50] sm:$0xff]
        %v186 = vld [vmem:[#allocation2 + $0x58] sm:$0xff]
        %v187 = vld [vmem:[#allocation2 + $0x60] sm:$0xff]
        %v188 = vld [vmem:[#allocation2 + $0x68] sm:$0xff]
        %v189 = vld [vmem:[#allocation2 + $0x70] sm:$0xff]
        %v190 = vld [vmem:[#allocation2 + $0x78] sm:$0xff]
        %v191 = vld [vmem:[#allocation2 + $0x80] sm:$0xff]
        %v192 = vld [vmem:[#allocation2 + $0x88] sm:$0xff]
        %v193 = vld [vmem:[#allocation2 + $0x90] sm:$0xff]
        %v194 = vld [vmem:[#allocation2 + $0x98] sm:$0xff]
        %v195 = vld [vmem:[#allocation2 + $0xa0] sm:$0xff]
        %v196 = vld [vmem:[#allocation2 + $0xa8] sm:$0xff]
        %v197 = vld [vmem:[#allocation2 + $0xb0] sm:$0xff]
        %v198 = vld [vmem:[#allocation2 + $0xb8] sm:$0xff]
        %v199 = vld [vmem:[#allocation2 + $0xc0] sm:$0xff]
        %v200 = vld [vmem:[#allocation2 + $0xc8] sm:$0xff]
        %v201 = vld [vmem:[#allocation2 + $0xd0] sm:$0xff]
        %v202 = vld [vmem:[#allocation2 + $0xd8] sm:$0xff]
        %v203 = vld [vmem:[#allocation2 + $0xe0] sm:$0xff]
        %v204 = vld [vmem:[#allocation2 + $0xe8] sm:$0xff]
        %v205 = vld [vmem:[#allocation2 + $0xf0] sm:$0xff]
        %v206 = vld [vmem:[#allocation2 + $0xf8] sm:$0xff]
        %v207 = vld [vmem:[#allocation2 + $0x100] sm:$0xff]
        %v208 = vld [vmem:[#allocation2 + $0x108] sm:$0xff]
        %v209 = vld [vmem:[#allocation2 + $0x110] sm:$0xff]
        %v210 = vld [vmem:[#allocation2 + $0x118] sm:$0xff]
        %v211 = vld [vmem:[#allocation2 + $0x120] sm:$0xff]
        %v212 = vld [vmem:[#allocation2 + $0x128] sm:$0xff]
        %v213 = vld [vmem:[#allocation2 + $0x130] sm:$0xff]
        %v214 = vld [vmem:[#allocation2 + $0x138] sm:$0xff]
        %v215 = vld [vmem:[#allocation2 + $0x140] sm:$0xff]
        %v216 = vld [vmem:[#allocation2 + $0x148] sm:$0xff]
        %v217 = vld [vmem:[#allocation2 + $0x150] sm:$0xff]
        %v218 = vld [vmem:[#allocation2 + $0x158] sm:$0xff]
        %v219 = vld [vmem:[#allocation2 + $0x160] sm:$0xff]
        %v220 = vld [vmem:[#allocation2 + $0x168] sm:$0xff]
        %v221 = vld [vmem:[#allocation2 + $0x170] sm:$0xff]
        %v222 = vld [vmem:[#allocation2 + $0x178] sm:$0xff]
        %v223 = vld [vmem:[#allocation2 + $0x180] sm:$0xff]
        %v224 = vld [vmem:[#allocation2 + $0x188] sm:$0xff]
        %v225 = vld [vmem:[#allocation2 + $0x190] sm:$0xff]
        %v226 = vld [vmem:[#allocation2 + $0x198] sm:$0xff]
        %v227 = vld [vmem:[#allocation2 + $0x1a0] sm:$0xff]
        %v228 = vld [vmem:[#allocation2 + $0x1a8] sm:$0xff]
        %v229 = vld [vmem:[#allocation2 + $0x1b0] sm:$0xff]
        %v230 = vld [vmem:[#allocation2 + $0x1b8] sm:$0xff]
        %v231 = vld [vmem:[#allocation2 + $0x1c0] sm:$0xff]
        %v232 = vld [vmem:[#allocation2 + $0x1c8] sm:$0xff]
        %v233 = vld [vmem:[#allocation2 + $0x1d0] sm:$0xff]
        %v234 = vld [vmem:[#allocation2 + $0x1d8] sm:$0xff]
        %v235 = vld [vmem:[#allocation2 + $0x1e0] sm:$0xff]
        %v236 = vld [vmem:[#allocation2 + $0x1e8] sm:$0xff]
        %v237 = vld [vmem:[#allocation2 + $0x1f0] sm:$0xff]
        %v238 = vld [vmem:[#allocation2 + $0x1f8] sm:$0xff]
        %v239 = vld [vmem:[#allocation2 + $0x200] sm:$0xff]
        %v240 = vld [vmem:[#allocation2 + $0x208] sm:$0xff]
        %v241 = vld [vmem:[#allocation2 + $0x210] sm:$0xff]
        %v242 = vld [vmem:[#allocation2 + $0x218] sm:$0xff]
        %v243 = vld [vmem:[#allocation2 + $0x220] sm:$0xff]
        %v244 = vld [vmem:[#allocation2 + $0x228] sm:$0xff]
        %v245 = vld [vmem:[#allocation2 + $0x230] sm:$0xff]
        %v246 = vld [vmem:[#allocation2 + $0x238] sm:$0xff]
        %v247 = vld [vmem:[#allocation2 + $0x240] sm:$0xff]
        %v248 = vld [vmem:[#allocation2 + $0x248] sm:$0xff]
        %v249 = vld [vmem:[#allocation2 + $0x250] sm:$0xff]
        %v250 = vld [vmem:[#allocation2 + $0x258] sm:$0xff]
        %v251 = vld [vmem:[#allocation2 + $0x260] sm:$0xff]
        %v252 = vld [vmem:[#allocation2 + $0x268] sm:$0xff]
        %v253 = vld [vmem:[#allocation2 + $0x270] sm:$0xff]
        %v254 = vld [vmem:[#allocation2 + $0x278] sm:$0xff]
        %v255 = vld [vmem:[#allocation2 + $0x280] sm:$0xff]
        %v256 = vld [vmem:[#allocation2 + $0x288] sm:$0xff]
        %v257 = vld [vmem:[#allocation2 + $0x290] sm:$0xff]
        %v258 = vld [vmem:[#allocation2 + $0x298] sm:$0xff]
        %v259 = vld [vmem:[#allocation2 + $0x2a0] sm:$0xff]
        %v260 = vld [vmem:[#allocation2 + $0x2a8] sm:$0xff]
        %v261 = vld [vmem:[#allocation2 + $0x2b0] sm:$0xff]
        %v262 = vld [vmem:[#allocation2 + $0x2b8] sm:$0xff]
        %v263 = vld [vmem:[#allocation2 + $0x2c0] sm:$0xff]
        %v264 = vld [vmem:[#allocation2 + $0x2c8] sm:$0xff]
        %v265 = vld [vmem:[#allocation2 + $0x2d0] sm:$0xff]
        %v266 = vld [vmem:[#allocation2 + $0x2d8] sm:$0xff]
        %v267 = vld [vmem:[#allocation2 + $0x2e0] sm:$0xff]
        %v268 = vld [vmem:[#allocation2 + $0x2e8] sm:$0xff]
        %v269 = vld [vmem:[#allocation2 + $0x2f0] sm:$0xff]
        %v270 = vld [vmem:[#allocation2 + $0x2f8] sm:$0xff]
        %v271 = vld [vmem:[#allocation2 + $0x300] sm:$0xff]
        %v272 = vld [vmem:[#allocation2 + $0x308] sm:$0xff]
        %v273 = vld [vmem:[#allocation2 + $0x310] sm:$0xff]
        %v274 = vld [vmem:[#allocation2 + $0x318] sm:$0xff]
        %v275 = vld [vmem:[#allocation2 + $0x320] sm:$0xff]
        %v276 = vld [vmem:[#allocation2 + $0x328] sm:$0xff]
        %v277 = vld [vmem:[#allocation2 + $0x330] sm:$0xff]
        %v278 = vld [vmem:[#allocation2 + $0x338] sm:$0xff]
        %v279 = vld [vmem:[#allocation2 + $0x340] sm:$0xff]
        %v280 = vld [vmem:[#allocation2 + $0x348] sm:$0xff]
        %v281 = vld [vmem:[#allocation2 + $0x350] sm:$0xff]
        %v282 = vld [vmem:[#allocation2 + $0x358] sm:$0xff]
        %v283 = vld [vmem:[#allocation2 + $0x360] sm:$0xff]
        %v284 = vld [vmem:[#allocation2 + $0x368] sm:$0xff]
        %v285 = vld [vmem:[#allocation2 + $0x370] sm:$0xff]
        %v286 = vld [vmem:[#allocation2 + $0x378] sm:$0xff]
        %v287 = vld [vmem:[#allocation2 + $0x380] sm:$0xff]
        %v288 = vld [vmem:[#allocation2 + $0x388] sm:$0xff]
        %v289 = vld [vmem:[#allocation2 + $0x390] sm:$0xff]
        %v290 = vld [vmem:[#allocation2 + $0x398] sm:$0xff]
        %v291 = vld [vmem:[#allocation2 + $0x3a0] sm:$0xff]
        %v292 = vld [vmem:[#allocation2 + $0x3a8] sm:$0xff]
        %v293 = vld [vmem:[#allocation2 + $0x3b0] sm:$0xff]
        %v294 = vld [vmem:[#allocation2 + $0x3b8] sm:$0xff]
        %v295 = vld [vmem:[#allocation2 + $0x3c0] sm:$0xff]
        %v296 = vld [vmem:[#allocation2 + $0x3c8] sm:$0xff]
        %v297 = vld [vmem:[#allocation2 + $0x3d0] sm:$0xff]
        %v298 = vld [vmem:[#allocation2 + $0x3d8] sm:$0xff]
        %v299 = vld [vmem:[#allocation2 + $0x3e0] sm:$0xff]
        %v300 = vld [vmem:[#allocation2 + $0x3e8] sm:$0xff]
        %v301 = vld [vmem:[#allocation2 + $0x3f0] sm:$0xff]
        %v302 = vld [vmem:[#allocation2 + $0x3f8] sm:$0xff]
        %v303 = vld [vmem:[#allocation2 + $0x400] sm:$0xff]
        %v304 = vld [vmem:[#allocation2 + $0x408] sm:$0xff]
        %v305 = vld [vmem:[#allocation2 + $0x410] sm:$0xff]
        %v306 = vld [vmem:[#allocation2 + $0x418] sm:$0xff]
        %v307 = vld [vmem:[#allocation2 + $0x420] sm:$0xff]
        %v308 = vld [vmem:[#allocation2 + $0x428] sm:$0xff]
        %v309 = vld [vmem:[#allocation2 + $0x430] sm:$0xff]
        %v310 = vld [vmem:[#allocation2 + $0x438] sm:$0xff]
        %v311 = vld [vmem:[#allocation2 + $0x440] sm:$0xff]
        %v312 = vld [vmem:[#allocation2 + $0x448] sm:$0xff]
        %v313 = vld [vmem:[#allocation2 + $0x450] sm:$0xff]
        %v314 = vld [vmem:[#allocation2 + $0x458] sm:$0xff]
        %v315 = vld [vmem:[#allocation2 + $0x460] sm:$0xff]
        %v316 = vld [vmem:[#allocation2 + $0x468] sm:$0xff]
        %v317 = vld [vmem:[#allocation2 + $0x470] sm:$0xff]
        %v318 = vld [vmem:[#allocation2 + $0x478] sm:$0xff]
        %v319 = vld [vmem:[#allocation2 + $0x480] sm:$0xff]
        %v320 = vld [vmem:[#allocation2 + $0x488] sm:$0xff]
        %v321 = vld [vmem:[#allocation2 + $0x490] sm:$0xff]
        %v322 = vld [vmem:[#allocation2 + $0x498] sm:$0xff]
        %v323 = vld [vmem:[#allocation2 + $0x4a0] sm:$0xff]
        %v324 = vld [vmem:[#allocation2 + $0x4a8] sm:$0xff]
        %v325 = vld [vmem:[#allocation2 + $0x4b0] sm:$0xff]
        %v326 = vld [vmem:[#allocation2 + $0x4b8] sm:$0xff]
        %v327 = vld [vmem:[#allocation2 + $0x4c0] sm:$0xff]
        %v328 = vld [vmem:[#allocation2 + $0x4c8] sm:$0xff]
        %v329 = vld [vmem:[#allocation2 + $0x4d0] sm:$0xff]
        %v330 = vld [vmem:[#allocation2 + $0x4d8] sm:$0xff]
        %v331 = vld [vmem:[#allocation2 + $0x4e0] sm:$0xff]
        %v332 = vld [vmem:[#allocation2 + $0x4e8] sm:$0xff]
        %v333 = vld [vmem:[#allocation2 + $0x4f0] sm:$0xff]
        %v334 = vld [vmem:[#allocation2 + $0x4f8] sm:$0xff]
        %v335 = vld [vmem:[#allocation2 + $0x500] sm:$0xff]
        %v336 = vld [vmem:[#allocation2 + $0x508] sm:$0xff]
        %v337 = vld [vmem:[#allocation2 + $0x510] sm:$0xff]
        %v338 = vld [vmem:[#allocation2 + $0x518] sm:$0xff]
        %v339 = vld [vmem:[#allocation2 + $0x520] sm:$0xff]
        %v340 = vld [vmem:[#allocation2 + $0x528] sm:$0xff]
        %v341 = vld [vmem:[#allocation2 + $0x530] sm:$0xff]
        %v342 = vld [vmem:[#allocation2 + $0x538] sm:$0xff]
        %v343 = vld [vmem:[#allocation2 + $0x540] sm:$0xff]
        %v344 = vld [vmem:[#allocation2 + $0x548] sm:$0xff]
        %v345 = vld [vmem:[#allocation2 + $0x550] sm:$0xff]
        %v346 = vld [vmem:[#allocation2 + $0x558] sm:$0xff]
        %v347 = vld [vmem:[#allocation2 + $0x560] sm:$0xff]
        %v348 = vld [vmem:[#allocation2 + $0x568] sm:$0xff]
        %v349 = vld [vmem:[#allocation2 + $0x570] sm:$0xff]
        %v350 = vld [vmem:[#allocation2 + $0x578] sm:$0xff]
        %v351 = vld [vmem:[#allocation2 + $0x580] sm:$0xff]
        %v352 = vld [vmem:[#allocation2 + $0x588] sm:$0xff]
        %v353 = vld [vmem:[#allocation2 + $0x590] sm:$0xff]
        %v354 = vld [vmem:[#allocation2 + $0x598] sm:$0xff]
        %v355 = vld [vmem:[#allocation2 + $0x5a0] sm:$0xff]
        %v356 = vld [vmem:[#allocation2 + $0x5a8] sm:$0xff]
        %v357 = vld [vmem:[#allocation2 + $0x5b0] sm:$0xff]
        %v358 = vld [vmem:[#allocation2 + $0x5b8] sm:$0xff]
        %v359 = vld [vmem:[#allocation2 + $0x5c0] sm:$0xff]
        %v360 = vld [vmem:[#allocation2 + $0x5c8] sm:$0xff]
        %v361 = vld [vmem:[#allocation2 + $0x5d0] sm:$0xff]
        %v362 = vld [vmem:[#allocation2 + $0x5d8] sm:$0xff]
        %v363 = vld [vmem:[#allocation2 + $0x5e0] sm:$0xff]
        %v364 = vld [vmem:[#allocation2 + $0x5e8] sm:$0xff]
        %v365 = vld [vmem:[#allocation2 + $0x5f0] sm:$0xff]
        %v366 = vld [vmem:[#allocation2 + $0x5f8] sm:$0xff]
        %v367 = vld [vmem:[#allocation2 + $0x600] sm:$0xff]
        %v368 = vld [vmem:[#allocation2 + $0x608] sm:$0xff]
        %v369 = vld [vmem:[#allocation2 + $0x610] sm:$0xff]
        %v370 = vld [vmem:[#allocation2 + $0x618] sm:$0xff]
        %v371 = vld [vmem:[#allocation2 + $0x620] sm:$0xff]
        %v372 = vld [vmem:[#allocation2 + $0x628] sm:$0xff]
        %v373 = vld [vmem:[#allocation2 + $0x630] sm:$0xff]
        %v374 = vld [vmem:[#allocation2 + $0x638] sm:$0xff]
        %v375 = vld [vmem:[#allocation2 + $0x640] sm:$0xff]
        %v376 = vld [vmem:[#allocation2 + $0x648] sm:$0xff]
        %v377 = vld [vmem:[#allocation2 + $0x650] sm:$0xff]
        %v378 = vld [vmem:[#allocation2 + $0x658] sm:$0xff]
        %v379 = vld [vmem:[#allocation2 + $0x660] sm:$0xff]
        %v380 = vld [vmem:[#allocation2 + $0x668] sm:$0xff]
        %v381 = vld [vmem:[#allocation2 + $0x670] sm:$0xff]
        %v382 = vld [vmem:[#allocation2 + $0x678] sm:$0xff]
        %v383 = vld [vmem:[#allocation2 + $0x680] sm:$0xff]
        %v384 = vld [vmem:[#allocation2 + $0x688] sm:$0xff]
        %v385 = vld [vmem:[#allocation2 + $0x690] sm:$0xff]
        %v386 = vld [vmem:[#allocation2 + $0x698] sm:$0xff]
        %v387 = vld [vmem:[#allocation2 + $0x6a0] sm:$0xff]
        %v388 = vld [vmem:[#allocation2 + $0x6a8] sm:$0xff]
        %v389 = vld [vmem:[#allocation2 + $0x6b0] sm:$0xff]
        %v390 = vld [vmem:[#allocation2 + $0x6b8] sm:$0xff]
        %v391 = vld [vmem:[#allocation2 + $0x6c0] sm:$0xff]
        %v392 = vld [vmem:[#allocation2 + $0x6c8] sm:$0xff]
        %v393 = vld [vmem:[#allocation2 + $0x6d0] sm:$0xff]
        %v394 = vld [vmem:[#allocation2 + $0x6d8] sm:$0xff]
        %v395 = vld [vmem:[#allocation2 + $0x6e0] sm:$0xff]
        %v396 = vld [vmem:[#allocation2 + $0x6e8] sm:$0xff]
        %v397 = vld [vmem:[#allocation2 + $0x6f0] sm:$0xff]
        %v398 = vld [vmem:[#allocation2 + $0x6f8] sm:$0xff]
        %v399 = vld [vmem:[#allocation2 + $0x700] sm:$0xff]
        %v400 = vld [vmem:[#allocation2 + $0x708] sm:$0xff]
        %v401 = vld [vmem:[#allocation2 + $0x710] sm:$0xff]
        %v402 = vld [vmem:[#allocation2 + $0x718] sm:$0xff]
        %v403 = vld [vmem:[#allocation2 + $0x720] sm:$0xff]
        %v404 = vld [vmem:[#allocation2 + $0x728] sm:$0xff]
        %v405 = vld [vmem:[#allocation2 + $0x730] sm:$0xff]
        %v406 = vld [vmem:[#allocation2 + $0x738] sm:$0xff]
        %v407 = vld [vmem:[#allocation2 + $0x740] sm:$0xff]
        %v408 = vld [vmem:[#allocation2 + $0x748] sm:$0xff]
        %v409 = vld [vmem:[#allocation2 + $0x750] sm:$0xff]
        %v410 = vld [vmem:[#allocation2 + $0x758] sm:$0xff]
        %v411 = vld [vmem:[#allocation2 + $0x760] sm:$0xff]
        %v412 = vld [vmem:[#allocation2 + $0x768] sm:$0xff]
        %v413 = vld [vmem:[#allocation2 + $0x770] sm:$0xff]
        %v414 = vld [vmem:[#allocation2 + $0x778] sm:$0xff]
        %v415 = vld [vmem:[#allocation2 + $0x780] sm:$0xff]
        %v416 = vld [vmem:[#allocation2 + $0x788] sm:$0xff]
        %v417 = vld [vmem:[#allocation2 + $0x790] sm:$0xff]
        %v418 = vld [vmem:[#allocation2 + $0x798] sm:$0xff]
        %v419 = vld [vmem:[#allocation2 + $0x7a0] sm:$0xff]
        %v420 = vld [vmem:[#allocation2 + $0x7a8] sm:$0xff]
        %v421 = vld [vmem:[#allocation2 + $0x7b0] sm:$0xff]
        %v422 = vld [vmem:[#allocation2 + $0x7b8] sm:$0xff]
        %v423 = vld [vmem:[#allocation2 + $0x7c0] sm:$0xff]
        %v424 = vld [vmem:[#allocation2 + $0x7c8] sm:$0xff]
        %v425 = vld [vmem:[#allocation2 + $0x7d0] sm:$0xff]
        %v426 = vld [vmem:[#allocation2 + $0x7d8] sm:$0xff]
        %v427 = vld [vmem:[#allocation2 + $0x7e0] sm:$0xff]
        %v428 = vld [vmem:[#allocation2 + $0x7e8] sm:$0xff]
        %v429 = vld [vmem:[#allocation2 + $0x7f0] sm:$0xff]
        %v430 = vld [vmem:[#allocation2 + $0x7f8] sm:$0xff]
        %v431 = vld [vmem:[#allocation2 + $0x800] sm:$0xff]
        %v432 = vld [vmem:[#allocation2 + $0x808] sm:$0xff]
        %v433 = vld [vmem:[#allocation2 + $0x810] sm:$0xff]
        %v434 = vld [vmem:[#allocation2 + $0x818] sm:$0xff]
        %v435 = vld [vmem:[#allocation2 + $0x820] sm:$0xff]
        %v436 = vld [vmem:[#allocation2 + $0x828] sm:$0xff]
        %v437 = vld [vmem:[#allocation2 + $0x830] sm:$0xff]
        %v438 = vld [vmem:[#allocation2 + $0x838] sm:$0xff]
        %v439 = vld [vmem:[#allocation2 + $0x840] sm:$0xff]
        %v440 = vld [vmem:[#allocation2 + $0x848] sm:$0xff]
        %v441 = vld [vmem:[#allocation2 + $0x850] sm:$0xff]
        %v442 = vld [vmem:[#allocation2 + $0x858] sm:$0xff]
        %v443 = vld [vmem:[#allocation2 + $0x860] sm:$0xff]
        %v444 = vld [vmem:[#allocation2 + $0x868] sm:$0xff]
        %v445 = vld [vmem:[#allocation2 + $0x870] sm:$0xff]
        %v446 = vld [vmem:[#allocation2 + $0x878] sm:$0xff]
        %v447 = vld [vmem:[#allocation2 + $0x880] sm:$0xff]
        %v448 = vld [vmem:[#allocation2 + $0x888] sm:$0xff]
        %v449 = vld [vmem:[#allocation2 + $0x890] sm:$0xff]
        %v450 = vld [vmem:[#allocation2 + $0x898] sm:$0xff]
        %v451 = vld [vmem:[#allocation2 + $0x8a0] sm:$0xff]
        %v452 = vld [vmem:[#allocation2 + $0x8a8] sm:$0xff]
        %v453 = vld [vmem:[#allocation2 + $0x8b0] sm:$0xff]
        %v454 = vld [vmem:[#allocation2 + $0x8b8] sm:$0xff]
        %v455 = vld [vmem:[#allocation2 + $0x8c0] sm:$0xff]
        %v456 = vld [vmem:[#allocation2 + $0x8c8] sm:$0xff]
        %v457 = vld [vmem:[#allocation2 + $0x8d0] sm:$0xff]
        %v458 = vld [vmem:[#allocation2 + $0x8d8] sm:$0xff]
        %v459 = vld [vmem:[#allocation2 + $0x8e0] sm:$0xff]
        %v460 = vld [vmem:[#allocation2 + $0x8e8] sm:$0xff]
        %v461 = vld [vmem:[#allocation2 + $0x8f0] sm:$0xff]
        %v462 = vld [vmem:[#allocation2 + $0x8f8] sm:$0xff]
        %v463 = vld [vmem:[#allocation2 + $0x900] sm:$0xff]
        %v464 = vld [vmem:[#allocation2 + $0x908] sm:$0xff]
        %v465 = vld [vmem:[#allocation2 + $0x910] sm:$0xff]
        %v466 = vld [vmem:[#allocation2 + $0x918] sm:$0xff]
        %v467 = vld [vmem:[#allocation2 + $0x920] sm:$0xff]
        %v468 = vld [vmem:[#allocation2 + $0x928] sm:$0xff]
        %v469 = vld [vmem:[#allocation2 + $0x930] sm:$0xff]
        %v470 = vld [vmem:[#allocation2 + $0x938] sm:$0xff]
        %v471 = vld [vmem:[#allocation2 + $0x940] sm:$0xff]
        %v472 = vld [vmem:[#allocation2 + $0x948] sm:$0xff]
        %v473 = vld [vmem:[#allocation2 + $0x950] sm:$0xff]
        %v474 = vld [vmem:[#allocation2 + $0x958] sm:$0xff]
        %v475 = vld [vmem:[#allocation2 + $0x960] sm:$0xff]
        %v476 = vld [vmem:[#allocation2 + $0x968] sm:$0xff]
        %v477 = vld [vmem:[#allocation2 + $0x970] sm:$0xff]
        %v478 = vld [vmem:[#allocation2 + $0x978] sm:$0xff]
        %v479 = vld [vmem:[#allocation2 + $0x980] sm:$0xff]
        %v480 = vld [vmem:[#allocation2 + $0x988] sm:$0xff]
        %v481 = vld [vmem:[#allocation2 + $0x990] sm:$0xff]
        %v482 = vld [vmem:[#allocation2 + $0x998] sm:$0xff]
        %v483 = vld [vmem:[#allocation2 + $0x9a0] sm:$0xff]
        %v484 = vld [vmem:[#allocation2 + $0x9a8] sm:$0xff]
        %v485 = vld [vmem:[#allocation2 + $0x9b0] sm:$0xff]
        %v486 = vld [vmem:[#allocation2 + $0x9b8] sm:$0xff]
        %v487 = vld [vmem:[#allocation2 + $0x9c0] sm:$0xff]
        %v488 = vld [vmem:[#allocation2 + $0x9c8] sm:$0xff]
        %v489 = vld [vmem:[#allocation2 + $0x9d0] sm:$0xff]
        %v490 = vld [vmem:[#allocation2 + $0x9d8] sm:$0xff]
        %v491 = vld [vmem:[#allocation2 + $0x9e0] sm:$0xff]
        %v492 = vld [vmem:[#allocation2 + $0x9e8] sm:$0xff]
        %v493 = vld [vmem:[#allocation2 + $0x9f0] sm:$0xff]
        %v494 = vld [vmem:[#allocation2 + $0x9f8] sm:$0xff]
        %v495 = vld [vmem:[#allocation2 + $0xa00] sm:$0xff]
        %v496 = vld [vmem:[#allocation2 + $0xa08] sm:$0xff]
        %v497 = vld [vmem:[#allocation2 + $0xa10] sm:$0xff]
        %v498 = vld [vmem:[#allocation2 + $0xa18] sm:$0xff]
        %v499 = vld [vmem:[#allocation2 + $0xa20] sm:$0xff]
        %v500 = vld [vmem:[#allocation2 + $0xa28] sm:$0xff]
        %v501 = vld [vmem:[#allocation2 + $0xa30] sm:$0xff]
        %v502 = vld [vmem:[#allocation2 + $0xa38] sm:$0xff]
        %v503 = vld [vmem:[#allocation2 + $0xa40] sm:$0xff]
        %v504 = vld [vmem:[#allocation2 + $0xa48] sm:$0xff]
        %v505 = vld [vmem:[#allocation2 + $0xa50] sm:$0xff]
        %v506 = vld [vmem:[#allocation2 + $0xa58] sm:$0xff]
        %v507 = vld [vmem:[#allocation2 + $0xa60] sm:$0xff]
        %v508 = vld [vmem:[#allocation2 + $0xa68] sm:$0xff]
        %v509 = vld [vmem:[#allocation2 + $0xa70] sm:$0xff]
        %v510 = vld [vmem:[#allocation2 + $0xa78] sm:$0xff]
        %v511 = vld [vmem:[#allocation2 + $0xa80] sm:$0xff]
        %v512 = vld [vmem:[#allocation2 + $0xa88] sm:$0xff]
        %v513 = vld [vmem:[#allocation2 + $0xa90] sm:$0xff]
        %v514 = vld [vmem:[#allocation2 + $0xa98] sm:$0xff]
        %v515 = vld [vmem:[#allocation2 + $0xaa0] sm:$0xff]
        %v516 = vld [vmem:[#allocation2 + $0xaa8] sm:$0xff]
        %v517 = vld [vmem:[#allocation2 + $0xab0] sm:$0xff]
        %v518 = vld [vmem:[#allocation2 + $0xab8] sm:$0xff]
        %v519 = vld [vmem:[#allocation2 + $0xac0] sm:$0xff]
        %v520 = vld [vmem:[#allocation2 + $0xac8] sm:$0xff]
        %v521 = vld [vmem:[#allocation2 + $0xad0] sm:$0xff]
        %v522 = vld [vmem:[#allocation2 + $0xad8] sm:$0xff]
        %v523 = vld [vmem:[#allocation2 + $0xae0] sm:$0xff]
        %v524 = vld [vmem:[#allocation2 + $0xae8] sm:$0xff]
        %v525 = vld [vmem:[#allocation2 + $0xaf0] sm:$0xff]
        %v526 = vld [vmem:[#allocation2 + $0xaf8] sm:$0xff]
        %v527 = vld [vmem:[#allocation2 + $0xb00] sm:$0xff]
        %v528 = vld [vmem:[#allocation2 + $0xb08] sm:$0xff]
        %v529 = vld [vmem:[#allocation2 + $0xb10] sm:$0xff]
        %v530 = vld [vmem:[#allocation2 + $0xb18] sm:$0xff]
        %v531 = vld [vmem:[#allocation2 + $0xb20] sm:$0xff]
        %v532 = vld [vmem:[#allocation2 + $0xb28] sm:$0xff]
        %v533 = vld [vmem:[#allocation2 + $0xb30] sm:$0xff]
        %v534 = vld [vmem:[#allocation2 + $0xb38] sm:$0xff]
        %v535 = vld [vmem:[#allocation2 + $0xb40] sm:$0xff]
        %v536 = vld [vmem:[#allocation2 + $0xb48] sm:$0xff]
        %v537 = vld [vmem:[#allocation2 + $0xb50] sm:$0xff]
        %v538 = vld [vmem:[#allocation2 + $0xb58] sm:$0xff]
        %v539 = vld [vmem:[#allocation2 + $0xb60] sm:$0xff]
        %v540 = vld [vmem:[#allocation2 + $0xb68] sm:$0xff]
        %v541 = vld [vmem:[#allocation2 + $0xb70] sm:$0xff]
        %v542 = vld [vmem:[#allocation2 + $0xb78] sm:$0xff]
        %v543 = vld [vmem:[#allocation2 + $0xb80] sm:$0xff]
        %v544 = vld [vmem:[#allocation2 + $0xb88] sm:$0xff]
        %v545 = vld [vmem:[#allocation2 + $0xb90] sm:$0xff]
        %v546 = vld [vmem:[#allocation2 + $0xb98] sm:$0xff]
        %v547 = vld [vmem:[#allocation2 + $0xba0] sm:$0xff]
        %v548 = vld [vmem:[#allocation2 + $0xba8] sm:$0xff]
        %v549 = vld [vmem:[#allocation2 + $0xbb0] sm:$0xff]
        %v550 = vld [vmem:[#allocation2 + $0xbb8] sm:$0xff]
        %v551 = vld [vmem:[#allocation2 + $0xbc0] sm:$0xff]
        %v552 = vld [vmem:[#allocation2 + $0xbc8] sm:$0xff]
        %v553 = vld [vmem:[#allocation2 + $0xbd0] sm:$0xff]
        %v554 = vld [vmem:[#allocation2 + $0xbd8] sm:$0xff]
        %v555 = vld [vmem:[#allocation2 + $0xbe0] sm:$0xff]
        %v556 = vld [vmem:[#allocation2 + $0xbe8] sm:$0xff]
        %v557 = vld [vmem:[#allocation2 + $0xbf0] sm:$0xff]
        %v558 = vld [vmem:[#allocation2 + $0xbf8] sm:$0xff]
        %v559 = vld [vmem:[#allocation2 + $0xc00] sm:$0xff]
        %v560 = vld [vmem:[#allocation2 + $0xc08] sm:$0xff]
        %v561 = vld [vmem:[#allocation2 + $0xc10] sm:$0xff]
        %v562 = vld [vmem:[#allocation2 + $0xc18] sm:$0xff]
        %v563 = vld [vmem:[#allocation2 + $0xc20] sm:$0xff]
        %v564 = vld [vmem:[#allocation2 + $0xc28] sm:$0xff]
        %v565 = vld [vmem:[#allocation2 + $0xc30] sm:$0xff]
        %v566 = vld [vmem:[#allocation2 + $0xc38] sm:$0xff]
        %v567 = vld [vmem:[#allocation2 + $0xc40] sm:$0xff]
        %v568 = vld [vmem:[#allocation2 + $0xc48] sm:$0xff]
        %v569 = vld [vmem:[#allocation2 + $0xc50] sm:$0xff]
        %v570 = vld [vmem:[#allocation2 + $0xc58] sm:$0xff]
        %v571 = vld [vmem:[#allocation2 + $0xc60] sm:$0xff]
        %v572 = vld [vmem:[#allocation2 + $0xc68] sm:$0xff]
        %v573 = vld [vmem:[#allocation2 + $0xc70] sm:$0xff]
        %v574 = vld [vmem:[#allocation2 + $0xc78] sm:$0xff]
        %v575 = vld [vmem:[#allocation2 + $0xc80] sm:$0xff]
        %v576 = vld [vmem:[#allocation2 + $0xc88] sm:$0xff]
        %v577 = vld [vmem:[#allocation2 + $0xc90] sm:$0xff]
        %v578 = vld [vmem:[#allocation2 + $0xc98] sm:$0xff]
        %v579 = vld [vmem:[#allocation2 + $0xca0] sm:$0xff]
        %v580 = vld [vmem:[#allocation2 + $0xca8] sm:$0xff]
        %v581 = vld [vmem:[#allocation2 + $0xcb0] sm:$0xff]
        %v582 = vld [vmem:[#allocation2 + $0xcb8] sm:$0xff]
        %v583 = vld [vmem:[#allocation2 + $0xcc0] sm:$0xff]
        %v584 = vld [vmem:[#allocation2 + $0xcc8] sm:$0xff]
        %v585 = vld [vmem:[#allocation2 + $0xcd0] sm:$0xff]
        %v586 = vld [vmem:[#allocation2 + $0xcd8] sm:$0xff]
        %v587 = vld [vmem:[#allocation2 + $0xce0] sm:$0xff]
        %v588 = vld [vmem:[#allocation2 + $0xce8] sm:$0xff]
        %v589 = vld [vmem:[#allocation2 + $0xcf0] sm:$0xff]
        %v590 = vld [vmem:[#allocation2 + $0xcf8] sm:$0xff]
        %v591 = vld [vmem:[#allocation2 + $0xd00] sm:$0xff]
        %v592 = vld [vmem:[#allocation2 + $0xd08] sm:$0xff]
        %v593 = vld [vmem:[#allocation2 + $0xd10] sm:$0xff]
        %v594 = vld [vmem:[#allocation2 + $0xd18] sm:$0xff]
        %v595 = vld [vmem:[#allocation2 + $0xd20] sm:$0xff]
        %v596 = vld [vmem:[#allocation2 + $0xd28] sm:$0xff]
        %v597 = vld [vmem:[#allocation2 + $0xd30] sm:$0xff]
        %v598 = vld [vmem:[#allocation2 + $0xd38] sm:$0xff]
        %v599 = vld [vmem:[#allocation2 + $0xd40] sm:$0xff]
        %v600 = vld [vmem:[#allocation2 + $0xd48] sm:$0xff]
        %v601 = vld [vmem:[#allocation2 + $0xd50] sm:$0xff]
        %v602 = vld [vmem:[#allocation2 + $0xd58] sm:$0xff]
        %v603 = vld [vmem:[#allocation2 + $0xd60] sm:$0xff]
        %v604 = vld [vmem:[#allocation2 + $0xd68] sm:$0xff]
        %v605 = vld [vmem:[#allocation2 + $0xd70] sm:$0xff]
        %v606 = vld [vmem:[#allocation2 + $0xd78] sm:$0xff]
        %v607 = vld [vmem:[#allocation2 + $0xd80] sm:$0xff]
        %v608 = vld [vmem:[#allocation2 + $0xd88] sm:$0xff]
        %v609 = vld [vmem:[#allocation2 + $0xd90] sm:$0xff]
        %v610 = vld [vmem:[#allocation2 + $0xd98] sm:$0xff]
        %v611 = vld [vmem:[#allocation2 + $0xda0] sm:$0xff]
        %v612 = vld [vmem:[#allocation2 + $0xda8] sm:$0xff]
        %v613 = vld [vmem:[#allocation2 + $0xdb0] sm:$0xff]
        %v614 = vld [vmem:[#allocation2 + $0xdb8] sm:$0xff]
        %v615 = vld [vmem:[#allocation2 + $0xdc0] sm:$0xff]
        %v616 = vld [vmem:[#allocation2 + $0xdc8] sm:$0xff]
        %v617 = vld [vmem:[#allocation2 + $0xdd0] sm:$0xff]
        %v618 = vld [vmem:[#allocation2 + $0xdd8] sm:$0xff]
        %v619 = vld [vmem:[#allocation2 + $0xde0] sm:$0xff]
        %v620 = vld [vmem:[#allocation2 + $0xde8] sm:$0xff]
        %v621 = vld [vmem:[#allocation2 + $0xdf0] sm:$0xff]
        %v622 = vld [vmem:[#allocation2 + $0xdf8] sm:$0xff]
        %v623 = vld [vmem:[#allocation2 + $0xe00] sm:$0xff]
        %v624 = vld [vmem:[#allocation2 + $0xe08] sm:$0xff]
        %v625 = vld [vmem:[#allocation2 + $0xe10] sm:$0xff]
        %v626 = vld [vmem:[#allocation2 + $0xe18] sm:$0xff]
        %v627 = vld [vmem:[#allocation2 + $0xe20] sm:$0xff]
        %v628 = vld [vmem:[#allocation2 + $0xe28] sm:$0xff]
        %v629 = vld [vmem:[#allocation2 + $0xe30] sm:$0xff]
        %v630 = vld [vmem:[#allocation2 + $0xe38] sm:$0xff]
        %v631 = vld [vmem:[#allocation2 + $0xe40] sm:$0xff]
        %v632 = vld [vmem:[#allocation2 + $0xe48] sm:$0xff]
        %v633 = vld [vmem:[#allocation2 + $0xe50] sm:$0xff]
        %v634 = vld [vmem:[#allocation2 + $0xe58] sm:$0xff]
        %v635 = vld [vmem:[#allocation2 + $0xe60] sm:$0xff]
        %v636 = vld [vmem:[#allocation2 + $0xe68] sm:$0xff]
        %v637 = vld [vmem:[#allocation2 + $0xe70] sm:$0xff]
        %v638 = vld [vmem:[#allocation2 + $0xe78] sm:$0xff]
        %v639 = vld [vmem:[#allocation2 + $0xe80] sm:$0xff]
        %v640 = vld [vmem:[#allocation2 + $0xe88] sm:$0xff]
        %v641 = vld [vmem:[#allocation2 + $0xe90] sm:$0xff]
        %v642 = vld [vmem:[#allocation2 + $0xe98] sm:$0xff]
        %v643 = vld [vmem:[#allocation2 + $0xea0] sm:$0xff]
        %v644 = vld [vmem:[#allocation2 + $0xea8] sm:$0xff]
        %v645 = vld [vmem:[#allocation2 + $0xeb0] sm:$0xff]
        %v646 = vld [vmem:[#allocation2 + $0xeb8] sm:$0xff]
        %v647 = vld [vmem:[#allocation2 + $0xec0] sm:$0xff]
        %v648 = vld [vmem:[#allocation2 + $0xec8] sm:$0xff]
        %v649 = vld [vmem:[#allocation2 + $0xed0] sm:$0xff]
        %v650 = vld [vmem:[#allocation2 + $0xed8] sm:$0xff]
        %v651 = vld [vmem:[#allocation2 + $0xee0] sm:$0xff]
        %v652 = vld [vmem:[#allocation2 + $0xee8] sm:$0xff]
        %v653 = vld [vmem:[#allocation2 + $0xef0] sm:$0xff]
        %v654 = vld [vmem:[#allocation2 + $0xef8] sm:$0xff]
        %v655 = vld [vmem:[#allocation2 + $0xf00] sm:$0xff]
        %v656 = vld [vmem:[#allocation2 + $0xf08] sm:$0xff]
        %v657 = vld [vmem:[#allocation2 + $0xf10] sm:$0xff]
        %v658 = vld [vmem:[#allocation2 + $0xf18] sm:$0xff]
        %v659 = vld [vmem:[#allocation2 + $0xf20] sm:$0xff]
        %v660 = vld [vmem:[#allocation2 + $0xf28] sm:$0xff]
        %v661 = vld [vmem:[#allocation2 + $0xf30] sm:$0xff]
        %v662 = vld [vmem:[#allocation2 + $0xf38] sm:$0xff]
        %v663 = vld [vmem:[#allocation2 + $0xf40] sm:$0xff]
        %v664 = vld [vmem:[#allocation2 + $0xf48] sm:$0xff]
        %v665 = vld [vmem:[#allocation2 + $0xf50] sm:$0xff]
        %v666 = vld [vmem:[#allocation2 + $0xf58] sm:$0xff]
        %v667 = vld [vmem:[#allocation2 + $0xf60] sm:$0xff]
        %v668 = vld [vmem:[#allocation2 + $0xf68] sm:$0xff]
        %v669 = vld [vmem:[#allocation2 + $0xf70] sm:$0xff]
        %v670 = vld [vmem:[#allocation2 + $0xf78] sm:$0xff]
        %v671 = vld [vmem:[#allocation2 + $0xf80] sm:$0xff]
        %v672 = vld [vmem:[#allocation2 + $0xf88] sm:$0xff]
        %v673 = vld [vmem:[#allocation2 + $0xf90] sm:$0xff]
        %v674 = vld [vmem:[#allocation2 + $0xf98] sm:$0xff]
        %v675 = vld [vmem:[#allocation2 + $0xfa0] sm:$0xff]
        %v676 = vld [vmem:[#allocation2 + $0xfa8] sm:$0xff]
        %v677 = vld [vmem:[#allocation2 + $0xfb0] sm:$0xff]
        %v678 = vld [vmem:[#allocation2 + $0xfb8] sm:$0xff]
        %v679 = vld [vmem:[#allocation2 + $0xfc0] sm:$0xff]
        %v680 = vld [vmem:[#allocation2 + $0xfc8] sm:$0xff]
        %v681 = vld [vmem:[#allocation2 + $0xfd0] sm:$0xff]
        %v682 = vld [vmem:[#allocation2 + $0xfd8] sm:$0xff]
        %v683 = vld [vmem:[#allocation2 + $0xfe0] sm:$0xff]
        %v684 = vld [vmem:[#allocation2 + $0xfe8] sm:$0xff]
        %v685 = vld [vmem:[#allocation2 + $0xff0] sm:$0xff]
        %v686 = vld [vmem:[#allocation2 + $0xff8] sm:$0xff]
        %v695 = vunpack.c.l.b16 %v167
        %v696 = vunpack.c.h.b16 %v167
        %v697 = vunpack.c.l.b16 %v168
        %v698 = vunpack.c.h.b16 %v168
        %v699 = vunpack.c.l.b16 %v169
        %v700 = vunpack.c.h.b16 %v169
        %v701 = vunpack.c.l.b16 %v170
        %v702 = vunpack.c.h.b16 %v170
        %v703 = vunpack.c.l.b16 %v171
        %v704 = vunpack.c.h.b16 %v171
        %v705 = vunpack.c.l.b16 %v172
        %v706 = vunpack.c.h.b16 %v172
        %v707 = vunpack.c.l.b16 %v173
        %v708 = vunpack.c.h.b16 %v173
        %v709 = vunpack.c.l.b16 %v174
        %v710 = vunpack.c.h.b16 %v174
        %v711 = vpack.c.b16 %v703, %v695
        %v712 = vpack.c.b16 %v704, %v696
        %v713 = vpack.c.b16 %v705, %v697
        %v714 = vpack.c.b16 %v706, %v698
        %v715 = vpack.c.b16 %v707, %v699
        %v716 = vpack.c.b16 %v708, %v700
        %v717 = vpack.c.b16 %v709, %v701
        %v718 = vpack.c.b16 %v710, %v702
        %v1239 = vunpack.c.l.b16 %v175
        %v1240 = vunpack.c.h.b16 %v175
        %v1241 = vunpack.c.l.b16 %v176
        %v1242 = vunpack.c.h.b16 %v176
        %v1243 = vunpack.c.l.b16 %v177
        %v1244 = vunpack.c.h.b16 %v177
        %v1245 = vunpack.c.l.b16 %v178
        %v1246 = vunpack.c.h.b16 %v178
        %v1247 = vunpack.c.l.b16 %v179
        %v1248 = vunpack.c.h.b16 %v179
        %v1249 = vunpack.c.l.b16 %v180
        %v1250 = vunpack.c.h.b16 %v180
        %v1251 = vunpack.c.l.b16 %v181
        %v1252 = vunpack.c.h.b16 %v181
        %v1253 = vunpack.c.l.b16 %v182
        %v1254 = vunpack.c.h.b16 %v182
        %v1255 = vunpack.c.l.b16 %v183
        %v1256 = vunpack.c.h.b16 %v183
        %v1257 = vunpack.c.l.b16 %v184
        %v1258 = vunpack.c.h.b16 %v184
        %v1259 = vunpack.c.l.b16 %v185
        %v1260 = vunpack.c.h.b16 %v185
        %v1261 = vunpack.c.l.b16 %v186
        %v1262 = vunpack.c.h.b16 %v186
        %v1263 = vunpack.c.l.b16 %v187
        %v1264 = vunpack.c.h.b16 %v187
        %v1265 = vunpack.c.l.b16 %v188
        %v1266 = vunpack.c.h.b16 %v188
        %v1267 = vunpack.c.l.b16 %v189
        %v1268 = vunpack.c.h.b16 %v189
        %v1269 = vunpack.c.l.b16 %v190
        %v1270 = vunpack.c.h.b16 %v190
        %v1271 = vunpack.c.l.b16 %v191
        %v1272 = vunpack.c.h.b16 %v191
        %v1273 = vunpack.c.l.b16 %v192
        %v1274 = vunpack.c.h.b16 %v192
        %v1275 = vunpack.c.l.b16 %v193
        %v1276 = vunpack.c.h.b16 %v193
        %v1277 = vunpack.c.l.b16 %v194
        %v1278 = vunpack.c.h.b16 %v194
        %v1279 = vunpack.c.l.b16 %v195
        %v1280 = vunpack.c.h.b16 %v195
        %v1281 = vunpack.c.l.b16 %v196
        %v1282 = vunpack.c.h.b16 %v196
        %v1283 = vunpack.c.l.b16 %v197
        %v1284 = vunpack.c.h.b16 %v197
        %v1285 = vunpack.c.l.b16 %v198
        %v1286 = vunpack.c.h.b16 %v198
        %v1287 = vunpack.c.l.b16 %v199
        %v1288 = vunpack.c.h.b16 %v199
        %v1289 = vunpack.c.l.b16 %v200
        %v1290 = vunpack.c.h.b16 %v200
        %v1291 = vunpack.c.l.b16 %v201
        %v1292 = vunpack.c.h.b16 %v201
        %v1293 = vunpack.c.l.b16 %v202
        %v1294 = vunpack.c.h.b16 %v202
        %v1295 = vunpack.c.l.b16 %v203
        %v1296 = vunpack.c.h.b16 %v203
        %v1297 = vunpack.c.l.b16 %v204
        %v1298 = vunpack.c.h.b16 %v204
        %v1299 = vunpack.c.l.b16 %v205
        %v1300 = vunpack.c.h.b16 %v205
        %v1301 = vunpack.c.l.b16 %v206
        %v1302 = vunpack.c.h.b16 %v206
        %v1303 = vunpack.c.l.b16 %v207
        %v1304 = vunpack.c.h.b16 %v207
        %v1305 = vunpack.c.l.b16 %v208
        %v1306 = vunpack.c.h.b16 %v208
        %v1307 = vunpack.c.l.b16 %v209
        %v1308 = vunpack.c.h.b16 %v209
        %v1309 = vunpack.c.l.b16 %v210
        %v1310 = vunpack.c.h.b16 %v210
        %v1311 = vunpack.c.l.b16 %v211
        %v1312 = vunpack.c.h.b16 %v211
        %v1313 = vunpack.c.l.b16 %v212
        %v1314 = vunpack.c.h.b16 %v212
        %v1315 = vunpack.c.l.b16 %v213
        %v1316 = vunpack.c.h.b16 %v213
        %v1317 = vunpack.c.l.b16 %v214
        %v1318 = vunpack.c.h.b16 %v214
        %v1319 = vunpack.c.l.b16 %v215
        %v1320 = vunpack.c.h.b16 %v215
        %v1321 = vunpack.c.l.b16 %v216
        %v1322 = vunpack.c.h.b16 %v216
        %v1323 = vunpack.c.l.b16 %v217
        %v1324 = vunpack.c.h.b16 %v217
        %v1325 = vunpack.c.l.b16 %v218
        %v1326 = vunpack.c.h.b16 %v218
        %v1327 = vunpack.c.l.b16 %v219
        %v1328 = vunpack.c.h.b16 %v219
        %v1329 = vunpack.c.l.b16 %v220
        %v1330 = vunpack.c.h.b16 %v220
        %v1331 = vunpack.c.l.b16 %v221
        %v1332 = vunpack.c.h.b16 %v221
        %v1333 = vunpack.c.l.b16 %v222
        %v1334 = vunpack.c.h.b16 %v222
        %v1335 = vunpack.c.l.b16 %v223
        %v1336 = vunpack.c.h.b16 %v223
        %v1337 = vunpack.c.l.b16 %v224
        %v1338 = vunpack.c.h.b16 %v224
        %v1339 = vunpack.c.l.b16 %v225
        %v1340 = vunpack.c.h.b16 %v225
        %v1341 = vunpack.c.l.b16 %v226
        %v1342 = vunpack.c.h.b16 %v226
        %v1343 = vunpack.c.l.b16 %v227
        %v1344 = vunpack.c.h.b16 %v227
        %v1345 = vunpack.c.l.b16 %v228
        %v1346 = vunpack.c.h.b16 %v228
        %v1347 = vunpack.c.l.b16 %v229
        %v1348 = vunpack.c.h.b16 %v229
        %v1349 = vunpack.c.l.b16 %v230
        %v1350 = vunpack.c.h.b16 %v230
        %v1351 = vunpack.c.l.b16 %v231
        %v1352 = vunpack.c.h.b16 %v231
        %v1353 = vunpack.c.l.b16 %v232
        %v1354 = vunpack.c.h.b16 %v232
        %v1355 = vunpack.c.l.b16 %v233
        %v1356 = vunpack.c.h.b16 %v233
        %v1357 = vunpack.c.l.b16 %v234
        %v1358 = vunpack.c.h.b16 %v234
        %v1359 = vunpack.c.l.b16 %v235
        %v1360 = vunpack.c.h.b16 %v235
        %v1361 = vunpack.c.l.b16 %v236
        %v1362 = vunpack.c.h.b16 %v236
        %v1363 = vunpack.c.l.b16 %v237
        %v1364 = vunpack.c.h.b16 %v237
        %v1365 = vunpack.c.l.b16 %v238
        %v1366 = vunpack.c.h.b16 %v238
        %v1367 = vunpack.c.l.b16 %v239
        %v1368 = vunpack.c.h.b16 %v239
        %v1369 = vunpack.c.l.b16 %v240
        %v1370 = vunpack.c.h.b16 %v240
        %v1371 = vunpack.c.l.b16 %v241
        %v1372 = vunpack.c.h.b16 %v241
        %v1373 = vunpack.c.l.b16 %v242
        %v1374 = vunpack.c.h.b16 %v242
        %v1375 = vunpack.c.l.b16 %v243
        %v1376 = vunpack.c.h.b16 %v243
        %v1377 = vunpack.c.l.b16 %v244
        %v1378 = vunpack.c.h.b16 %v244
        %v1379 = vunpack.c.l.b16 %v245
        %v1380 = vunpack.c.h.b16 %v245
        %v1381 = vunpack.c.l.b16 %v246
        %v1382 = vunpack.c.h.b16 %v246
        %v1383 = vunpack.c.l.b16 %v247
        %v1384 = vunpack.c.h.b16 %v247
        %v1385 = vunpack.c.l.b16 %v248
        %v1386 = vunpack.c.h.b16 %v248
        %v1387 = vunpack.c.l.b16 %v249
        %v1388 = vunpack.c.h.b16 %v249
        %v1389 = vunpack.c.l.b16 %v250
        %v1390 = vunpack.c.h.b16 %v250
        %v1391 = vunpack.c.l.b16 %v251
        %v1392 = vunpack.c.h.b16 %v251
        %v1393 = vunpack.c.l.b16 %v252
        %v1394 = vunpack.c.h.b16 %v252
        %v1395 = vunpack.c.l.b16 %v253
        %v1396 = vunpack.c.h.b16 %v253
        %v1397 = vunpack.c.l.b16 %v254
        %v1398 = vunpack.c.h.b16 %v254
        %v1399 = vunpack.c.l.b16 %v255
        %v1400 = vunpack.c.h.b16 %v255
        %v1401 = vunpack.c.l.b16 %v256
        %v1402 = vunpack.c.h.b16 %v256
        %v1403 = vunpack.c.l.b16 %v257
        %v1404 = vunpack.c.h.b16 %v257
        %v1405 = vunpack.c.l.b16 %v258
        %v1406 = vunpack.c.h.b16 %v258
        %v1407 = vunpack.c.l.b16 %v259
        %v1408 = vunpack.c.h.b16 %v259
        %v1409 = vunpack.c.l.b16 %v260
        %v1410 = vunpack.c.h.b16 %v260
        %v1411 = vunpack.c.l.b16 %v261
        %v1412 = vunpack.c.h.b16 %v261
        %v1413 = vunpack.c.l.b16 %v262
        %v1414 = vunpack.c.h.b16 %v262
        %v1415 = vunpack.c.l.b16 %v263
        %v1416 = vunpack.c.h.b16 %v263
        %v1417 = vunpack.c.l.b16 %v264
        %v1418 = vunpack.c.h.b16 %v264
        %v1419 = vunpack.c.l.b16 %v265
        %v1420 = vunpack.c.h.b16 %v265
        %v1421 = vunpack.c.l.b16 %v266
        %v1422 = vunpack.c.h.b16 %v266
        %v1423 = vunpack.c.l.b16 %v267
        %v1424 = vunpack.c.h.b16 %v267
        %v1425 = vunpack.c.l.b16 %v268
        %v1426 = vunpack.c.h.b16 %v268
        %v1427 = vunpack.c.l.b16 %v269
        %v1428 = vunpack.c.h.b16 %v269
        %v1429 = vunpack.c.l.b16 %v270
        %v1430 = vunpack.c.h.b16 %v270
        %v1431 = vunpack.c.l.b16 %v271
        %v1432 = vunpack.c.h.b16 %v271
        %v1433 = vunpack.c.l.b16 %v272
        %v1434 = vunpack.c.h.b16 %v272
        %v1435 = vunpack.c.l.b16 %v273
        %v1436 = vunpack.c.h.b16 %v273
        %v1437 = vunpack.c.l.b16 %v274
        %v1438 = vunpack.c.h.b16 %v274
        %v1439 = vunpack.c.l.b16 %v275
        %v1440 = vunpack.c.h.b16 %v275
        %v1441 = vunpack.c.l.b16 %v276
        %v1442 = vunpack.c.h.b16 %v276
        %v1443 = vunpack.c.l.b16 %v277
        %v1444 = vunpack.c.h.b16 %v277
        %v1445 = vunpack.c.l.b16 %v278
        %v1446 = vunpack.c.h.b16 %v278
        %v1447 = vunpack.c.l.b16 %v279
        %v1448 = vunpack.c.h.b16 %v279
        %v1449 = vunpack.c.l.b16 %v280
        %v1450 = vunpack.c.h.b16 %v280
        %v1451 = vunpack.c.l.b16 %v281
        %v1452 = vunpack.c.h.b16 %v281
        %v1453 = vunpack.c.l.b16 %v282
        %v1454 = vunpack.c.h.b16 %v282
        %v1455 = vunpack.c.l.b16 %v283
        %v1456 = vunpack.c.h.b16 %v283
        %v1457 = vunpack.c.l.b16 %v284
        %v1458 = vunpack.c.h.b16 %v284
        %v1459 = vunpack.c.l.b16 %v285
        %v1460 = vunpack.c.h.b16 %v285
        %v1461 = vunpack.c.l.b16 %v286
        %v1462 = vunpack.c.h.b16 %v286
        %v1463 = vunpack.c.l.b16 %v287
        %v1464 = vunpack.c.h.b16 %v287
        %v1465 = vunpack.c.l.b16 %v288
        %v1466 = vunpack.c.h.b16 %v288
        %v1467 = vunpack.c.l.b16 %v289
        %v1468 = vunpack.c.h.b16 %v289
        %v1469 = vunpack.c.l.b16 %v290
        %v1470 = vunpack.c.h.b16 %v290
        %v1471 = vunpack.c.l.b16 %v291
        %v1472 = vunpack.c.h.b16 %v291
        %v1473 = vunpack.c.l.b16 %v292
        %v1474 = vunpack.c.h.b16 %v292
        %v1475 = vunpack.c.l.b16 %v293
        %v1476 = vunpack.c.h.b16 %v293
        %v1477 = vunpack.c.l.b16 %v294
        %v1478 = vunpack.c.h.b16 %v294
        %v1479 = vunpack.c.l.b16 %v295
        %v1480 = vunpack.c.h.b16 %v295
        %v1481 = vunpack.c.l.b16 %v296
        %v1482 = vunpack.c.h.b16 %v296
        %v1483 = vunpack.c.l.b16 %v297
        %v1484 = vunpack.c.h.b16 %v297
        %v1485 = vunpack.c.l.b16 %v298
        %v1486 = vunpack.c.h.b16 %v298
        %v1487 = vunpack.c.l.b16 %v299
        %v1488 = vunpack.c.h.b16 %v299
        %v1489 = vunpack.c.l.b16 %v300
        %v1490 = vunpack.c.h.b16 %v300
        %v1491 = vunpack.c.l.b16 %v301
        %v1492 = vunpack.c.h.b16 %v301
        %v1493 = vunpack.c.l.b16 %v302
        %v1494 = vunpack.c.h.b16 %v302
        %v1495 = vunpack.c.l.b16 %v303
        %v1496 = vunpack.c.h.b16 %v303
        %v1497 = vunpack.c.l.b16 %v304
        %v1498 = vunpack.c.h.b16 %v304
        %v1499 = vunpack.c.l.b16 %v305
        %v1500 = vunpack.c.h.b16 %v305
        %v1501 = vunpack.c.l.b16 %v306
        %v1502 = vunpack.c.h.b16 %v306
        %v1503 = vunpack.c.l.b16 %v307
        %v1504 = vunpack.c.h.b16 %v307
        %v1505 = vunpack.c.l.b16 %v308
        %v1506 = vunpack.c.h.b16 %v308
        %v1507 = vunpack.c.l.b16 %v309
        %v1508 = vunpack.c.h.b16 %v309
        %v1509 = vunpack.c.l.b16 %v310
        %v1510 = vunpack.c.h.b16 %v310
        %v1511 = vunpack.c.l.b16 %v311
        %v1512 = vunpack.c.h.b16 %v311
        %v1513 = vunpack.c.l.b16 %v312
        %v1514 = vunpack.c.h.b16 %v312
        %v1515 = vunpack.c.l.b16 %v313
        %v1516 = vunpack.c.h.b16 %v313
        %v1517 = vunpack.c.l.b16 %v314
        %v1518 = vunpack.c.h.b16 %v314
        %v1519 = vunpack.c.l.b16 %v315
        %v1520 = vunpack.c.h.b16 %v315
        %v1521 = vunpack.c.l.b16 %v316
        %v1522 = vunpack.c.h.b16 %v316
        %v1523 = vunpack.c.l.b16 %v317
        %v1524 = vunpack.c.h.b16 %v317
        %v1525 = vunpack.c.l.b16 %v318
        %v1526 = vunpack.c.h.b16 %v318
        %v1527 = vunpack.c.l.b16 %v319
        %v1528 = vunpack.c.h.b16 %v319
        %v1529 = vunpack.c.l.b16 %v320
        %v1530 = vunpack.c.h.b16 %v320
        %v1531 = vunpack.c.l.b16 %v321
        %v1532 = vunpack.c.h.b16 %v321
        %v1533 = vunpack.c.l.b16 %v322
        %v1534 = vunpack.c.h.b16 %v322
        %v1535 = vunpack.c.l.b16 %v323
        %v1536 = vunpack.c.h.b16 %v323
        %v1537 = vunpack.c.l.b16 %v324
        %v1538 = vunpack.c.h.b16 %v324
        %v1539 = vunpack.c.l.b16 %v325
        %v1540 = vunpack.c.h.b16 %v325
        %v1541 = vunpack.c.l.b16 %v326
        %v1542 = vunpack.c.h.b16 %v326
        %v1543 = vunpack.c.l.b16 %v327
        %v1544 = vunpack.c.h.b16 %v327
        %v1545 = vunpack.c.l.b16 %v328
        %v1546 = vunpack.c.h.b16 %v328
        %v1547 = vunpack.c.l.b16 %v329
        %v1548 = vunpack.c.h.b16 %v329
        %v1549 = vunpack.c.l.b16 %v330
        %v1550 = vunpack.c.h.b16 %v330
        %v1551 = vunpack.c.l.b16 %v331
        %v1552 = vunpack.c.h.b16 %v331
        %v1553 = vunpack.c.l.b16 %v332
        %v1554 = vunpack.c.h.b16 %v332
        %v1555 = vunpack.c.l.b16 %v333
        %v1556 = vunpack.c.h.b16 %v333
        %v1557 = vunpack.c.l.b16 %v334
        %v1558 = vunpack.c.h.b16 %v334
        %v1559 = vunpack.c.l.b16 %v335
        %v1560 = vunpack.c.h.b16 %v335
        %v1561 = vunpack.c.l.b16 %v336
        %v1562 = vunpack.c.h.b16 %v336
        %v1563 = vunpack.c.l.b16 %v337
        %v1564 = vunpack.c.h.b16 %v337
        %v1565 = vunpack.c.l.b16 %v338
        %v1566 = vunpack.c.h.b16 %v338
        %v1567 = vunpack.c.l.b16 %v339
        %v1568 = vunpack.c.h.b16 %v339
        %v1569 = vunpack.c.l.b16 %v340
        %v1570 = vunpack.c.h.b16 %v340
        %v1571 = vunpack.c.l.b16 %v341
        %v1572 = vunpack.c.h.b16 %v341
        %v1573 = vunpack.c.l.b16 %v342
        %v1574 = vunpack.c.h.b16 %v342
        %v1575 = vunpack.c.l.b16 %v343
        %v1576 = vunpack.c.h.b16 %v343
        %v1577 = vunpack.c.l.b16 %v344
        %v1578 = vunpack.c.h.b16 %v344
        %v1579 = vunpack.c.l.b16 %v345
        %v1580 = vunpack.c.h.b16 %v345
        %v1581 = vunpack.c.l.b16 %v346
        %v1582 = vunpack.c.h.b16 %v346
        %v1583 = vunpack.c.l.b16 %v347
        %v1584 = vunpack.c.h.b16 %v347
        %v1585 = vunpack.c.l.b16 %v348
        %v1586 = vunpack.c.h.b16 %v348
        %v1587 = vunpack.c.l.b16 %v349
        %v1588 = vunpack.c.h.b16 %v349
        %v1589 = vunpack.c.l.b16 %v350
        %v1590 = vunpack.c.h.b16 %v350
        %v1591 = vunpack.c.l.b16 %v351
        %v1592 = vunpack.c.h.b16 %v351
        %v1593 = vunpack.c.l.b16 %v352
        %v1594 = vunpack.c.h.b16 %v352
        %v1595 = vunpack.c.l.b16 %v353
        %v1596 = vunpack.c.h.b16 %v353
        %v1597 = vunpack.c.l.b16 %v354
        %v1598 = vunpack.c.h.b16 %v354
        %v1599 = vunpack.c.l.b16 %v355
        %v1600 = vunpack.c.h.b16 %v355
        %v1601 = vunpack.c.l.b16 %v356
        %v1602 = vunpack.c.h.b16 %v356
        %v1603 = vunpack.c.l.b16 %v357
        %v1604 = vunpack.c.h.b16 %v357
        %v1605 = vunpack.c.l.b16 %v358
        %v1606 = vunpack.c.h.b16 %v358
        %v1607 = vunpack.c.l.b16 %v359
        %v1608 = vunpack.c.h.b16 %v359
        %v1609 = vunpack.c.l.b16 %v360
        %v1610 = vunpack.c.h.b16 %v360
        %v1611 = vunpack.c.l.b16 %v361
        %v1612 = vunpack.c.h.b16 %v361
        %v1613 = vunpack.c.l.b16 %v362
        %v1614 = vunpack.c.h.b16 %v362
        %v1615 = vunpack.c.l.b16 %v363
        %v1616 = vunpack.c.h.b16 %v363
        %v1617 = vunpack.c.l.b16 %v364
        %v1618 = vunpack.c.h.b16 %v364
        %v1619 = vunpack.c.l.b16 %v365
        %v1620 = vunpack.c.h.b16 %v365
        %v1621 = vunpack.c.l.b16 %v366
        %v1622 = vunpack.c.h.b16 %v366
        %v1623 = vunpack.c.l.b16 %v367
        %v1624 = vunpack.c.h.b16 %v367
        %v1625 = vunpack.c.l.b16 %v368
        %v1626 = vunpack.c.h.b16 %v368
        %v1627 = vunpack.c.l.b16 %v369
        %v1628 = vunpack.c.h.b16 %v369
        %v1629 = vunpack.c.l.b16 %v370
        %v1630 = vunpack.c.h.b16 %v370
        %v1631 = vunpack.c.l.b16 %v371
        %v1632 = vunpack.c.h.b16 %v371
        %v1633 = vunpack.c.l.b16 %v372
        %v1634 = vunpack.c.h.b16 %v372
        %v1635 = vunpack.c.l.b16 %v373
        %v1636 = vunpack.c.h.b16 %v373
        %v1637 = vunpack.c.l.b16 %v374
        %v1638 = vunpack.c.h.b16 %v374
        %v1639 = vunpack.c.l.b16 %v375
        %v1640 = vunpack.c.h.b16 %v375
        %v1641 = vunpack.c.l.b16 %v376
        %v1642 = vunpack.c.h.b16 %v376
        %v1643 = vunpack.c.l.b16 %v377
        %v1644 = vunpack.c.h.b16 %v377
        %v1645 = vunpack.c.l.b16 %v378
        %v1646 = vunpack.c.h.b16 %v378
        %v1647 = vunpack.c.l.b16 %v379
        %v1648 = vunpack.c.h.b16 %v379
        %v1649 = vunpack.c.l.b16 %v380
        %v1650 = vunpack.c.h.b16 %v380
        %v1651 = vunpack.c.l.b16 %v381
        %v1652 = vunpack.c.h.b16 %v381
        %v1653 = vunpack.c.l.b16 %v382
        %v1654 = vunpack.c.h.b16 %v382
        %v1655 = vunpack.c.l.b16 %v383
        %v1656 = vunpack.c.h.b16 %v383
        %v1657 = vunpack.c.l.b16 %v384
        %v1658 = vunpack.c.h.b16 %v384
        %v1659 = vunpack.c.l.b16 %v385
        %v1660 = vunpack.c.h.b16 %v385
        %v1661 = vunpack.c.l.b16 %v386
        %v1662 = vunpack.c.h.b16 %v386
        %v1663 = vunpack.c.l.b16 %v387
        %v1664 = vunpack.c.h.b16 %v387
        %v1665 = vunpack.c.l.b16 %v388
        %v1666 = vunpack.c.h.b16 %v388
        %v1667 = vunpack.c.l.b16 %v389
        %v1668 = vunpack.c.h.b16 %v389
        %v1669 = vunpack.c.l.b16 %v390
        %v1670 = vunpack.c.h.b16 %v390
        %v1671 = vunpack.c.l.b16 %v391
        %v1672 = vunpack.c.h.b16 %v391
        %v1673 = vunpack.c.l.b16 %v392
        %v1674 = vunpack.c.h.b16 %v392
        %v1675 = vunpack.c.l.b16 %v393
        %v1676 = vunpack.c.h.b16 %v393
        %v1677 = vunpack.c.l.b16 %v394
        %v1678 = vunpack.c.h.b16 %v394
        %v1679 = vunpack.c.l.b16 %v395
        %v1680 = vunpack.c.h.b16 %v395
        %v1681 = vunpack.c.l.b16 %v396
        %v1682 = vunpack.c.h.b16 %v396
        %v1683 = vunpack.c.l.b16 %v397
        %v1684 = vunpack.c.h.b16 %v397
        %v1685 = vunpack.c.l.b16 %v398
        %v1686 = vunpack.c.h.b16 %v398
        %v1687 = vunpack.c.l.b16 %v399
        %v1688 = vunpack.c.h.b16 %v399
        %v1689 = vunpack.c.l.b16 %v400
        %v1690 = vunpack.c.h.b16 %v400
        %v1691 = vunpack.c.l.b16 %v401
        %v1692 = vunpack.c.h.b16 %v401
        %v1693 = vunpack.c.l.b16 %v402
        %v1694 = vunpack.c.h.b16 %v402
        %v1695 = vunpack.c.l.b16 %v403
        %v1696 = vunpack.c.h.b16 %v403
        %v1697 = vunpack.c.l.b16 %v404
        %v1698 = vunpack.c.h.b16 %v404
        %v1699 = vunpack.c.l.b16 %v405
        %v1700 = vunpack.c.h.b16 %v405
        %v1701 = vunpack.c.l.b16 %v406
        %v1702 = vunpack.c.h.b16 %v406
        %v1703 = vunpack.c.l.b16 %v407
        %v1704 = vunpack.c.h.b16 %v407
        %v1705 = vunpack.c.l.b16 %v408
        %v1706 = vunpack.c.h.b16 %v408
        %v1707 = vunpack.c.l.b16 %v409
        %v1708 = vunpack.c.h.b16 %v409
        %v1709 = vunpack.c.l.b16 %v410
        %v1710 = vunpack.c.h.b16 %v410
        %v1711 = vunpack.c.l.b16 %v411
        %v1712 = vunpack.c.h.b16 %v411
        %v1713 = vunpack.c.l.b16 %v412
        %v1714 = vunpack.c.h.b16 %v412
        %v1715 = vunpack.c.l.b16 %v413
        %v1716 = vunpack.c.h.b16 %v413
        %v1717 = vunpack.c.l.b16 %v414
        %v1718 = vunpack.c.h.b16 %v414
        %v1719 = vunpack.c.l.b16 %v415
        %v1720 = vunpack.c.h.b16 %v415
        %v1721 = vunpack.c.l.b16 %v416
        %v1722 = vunpack.c.h.b16 %v416
        %v1723 = vunpack.c.l.b16 %v417
        %v1724 = vunpack.c.h.b16 %v417
        %v1725 = vunpack.c.l.b16 %v418
        %v1726 = vunpack.c.h.b16 %v418
        %v1727 = vunpack.c.l.b16 %v419
        %v1728 = vunpack.c.h.b16 %v419
        %v1729 = vunpack.c.l.b16 %v420
        %v1730 = vunpack.c.h.b16 %v420
        %v1731 = vunpack.c.l.b16 %v421
        %v1732 = vunpack.c.h.b16 %v421
        %v1733 = vunpack.c.l.b16 %v422
        %v1734 = vunpack.c.h.b16 %v422
        %v1735 = vunpack.c.l.b16 %v423
        %v1736 = vunpack.c.h.b16 %v423
        %v1737 = vunpack.c.l.b16 %v424
        %v1738 = vunpack.c.h.b16 %v424
        %v1739 = vunpack.c.l.b16 %v425
        %v1740 = vunpack.c.h.b16 %v425
        %v1741 = vunpack.c.l.b16 %v426
        %v1742 = vunpack.c.h.b16 %v426
        %v1743 = vunpack.c.l.b16 %v427
        %v1744 = vunpack.c.h.b16 %v427
        %v1745 = vunpack.c.l.b16 %v428
        %v1746 = vunpack.c.h.b16 %v428
        %v1747 = vunpack.c.l.b16 %v429
        %v1748 = vunpack.c.h.b16 %v429
        %v1749 = vunpack.c.l.b16 %v430
        %v1750 = vunpack.c.h.b16 %v430
        %v1751 = vunpack.c.l.b16 %v431
        %v1752 = vunpack.c.h.b16 %v431
        %v1753 = vunpack.c.l.b16 %v432
        %v1754 = vunpack.c.h.b16 %v432
        %v1755 = vunpack.c.l.b16 %v433
        %v1756 = vunpack.c.h.b16 %v433
        %v1757 = vunpack.c.l.b16 %v434
        %v1758 = vunpack.c.h.b16 %v434
        %v1759 = vunpack.c.l.b16 %v435
        %v1760 = vunpack.c.h.b16 %v435
        %v1761 = vunpack.c.l.b16 %v436
        %v1762 = vunpack.c.h.b16 %v436
        %v1763 = vunpack.c.l.b16 %v437
        %v1764 = vunpack.c.h.b16 %v437
        %v1765 = vunpack.c.l.b16 %v438
        %v1766 = vunpack.c.h.b16 %v438
        %v1767 = vunpack.c.l.b16 %v439
        %v1768 = vunpack.c.h.b16 %v439
        %v1769 = vunpack.c.l.b16 %v440
        %v1770 = vunpack.c.h.b16 %v440
        %v1771 = vunpack.c.l.b16 %v441
        %v1772 = vunpack.c.h.b16 %v441
        %v1773 = vunpack.c.l.b16 %v442
        %v1774 = vunpack.c.h.b16 %v442
        %v1775 = vunpack.c.l.b16 %v443
        %v1776 = vunpack.c.h.b16 %v443
        %v1777 = vunpack.c.l.b16 %v444
        %v1778 = vunpack.c.h.b16 %v444
        %v1779 = vunpack.c.l.b16 %v445
        %v1780 = vunpack.c.h.b16 %v445
        %v1781 = vunpack.c.l.b16 %v446
        %v1782 = vunpack.c.h.b16 %v446
        %v1783 = vunpack.c.l.b16 %v447
        %v1784 = vunpack.c.h.b16 %v447
        %v1785 = vunpack.c.l.b16 %v448
        %v1786 = vunpack.c.h.b16 %v448
        %v1787 = vunpack.c.l.b16 %v449
        %v1788 = vunpack.c.h.b16 %v449
        %v1789 = vunpack.c.l.b16 %v450
        %v1790 = vunpack.c.h.b16 %v450
        %v1791 = vunpack.c.l.b16 %v451
        %v1792 = vunpack.c.h.b16 %v451
        %v1793 = vunpack.c.l.b16 %v452
        %v1794 = vunpack.c.h.b16 %v452
        %v1795 = vunpack.c.l.b16 %v453
        %v1796 = vunpack.c.h.b16 %v453
        %v1797 = vunpack.c.l.b16 %v454
        %v1798 = vunpack.c.h.b16 %v454
        %v1799 = vunpack.c.l.b16 %v455
        %v1800 = vunpack.c.h.b16 %v455
        %v1801 = vunpack.c.l.b16 %v456
        %v1802 = vunpack.c.h.b16 %v456
        %v1803 = vunpack.c.l.b16 %v457
        %v1804 = vunpack.c.h.b16 %v457
        %v1805 = vunpack.c.l.b16 %v458
        %v1806 = vunpack.c.h.b16 %v458
        %v1807 = vunpack.c.l.b16 %v459
        %v1808 = vunpack.c.h.b16 %v459
        %v1809 = vunpack.c.l.b16 %v460
        %v1810 = vunpack.c.h.b16 %v460
        %v1811 = vunpack.c.l.b16 %v461
        %v1812 = vunpack.c.h.b16 %v461
        %v1813 = vunpack.c.l.b16 %v462
        %v1814 = vunpack.c.h.b16 %v462
        %v1815 = vunpack.c.l.b16 %v463
        %v1816 = vunpack.c.h.b16 %v463
        %v1817 = vunpack.c.l.b16 %v464
        %v1818 = vunpack.c.h.b16 %v464
        %v1819 = vunpack.c.l.b16 %v465
        %v1820 = vunpack.c.h.b16 %v465
        %v1821 = vunpack.c.l.b16 %v466
        %v1822 = vunpack.c.h.b16 %v466
        %v1823 = vunpack.c.l.b16 %v467
        %v1824 = vunpack.c.h.b16 %v467
        %v1825 = vunpack.c.l.b16 %v468
        %v1826 = vunpack.c.h.b16 %v468
        %v1827 = vunpack.c.l.b16 %v469
        %v1828 = vunpack.c.h.b16 %v469
        %v1829 = vunpack.c.l.b16 %v470
        %v1830 = vunpack.c.h.b16 %v470
        %v1831 = vunpack.c.l.b16 %v471
        %v1832 = vunpack.c.h.b16 %v471
        %v1833 = vunpack.c.l.b16 %v472
        %v1834 = vunpack.c.h.b16 %v472
        %v1835 = vunpack.c.l.b16 %v473
        %v1836 = vunpack.c.h.b16 %v473
        %v1837 = vunpack.c.l.b16 %v474
        %v1838 = vunpack.c.h.b16 %v474
        %v1839 = vunpack.c.l.b16 %v475
        %v1840 = vunpack.c.h.b16 %v475
        %v1841 = vunpack.c.l.b16 %v476
        %v1842 = vunpack.c.h.b16 %v476
        %v1843 = vunpack.c.l.b16 %v477
        %v1844 = vunpack.c.h.b16 %v477
        %v1845 = vunpack.c.l.b16 %v478
        %v1846 = vunpack.c.h.b16 %v478
        %v1847 = vunpack.c.l.b16 %v479
        %v1848 = vunpack.c.h.b16 %v479
        %v1849 = vunpack.c.l.b16 %v480
        %v1850 = vunpack.c.h.b16 %v480
        %v1851 = vunpack.c.l.b16 %v481
        %v1852 = vunpack.c.h.b16 %v481
        %v1853 = vunpack.c.l.b16 %v482
        %v1854 = vunpack.c.h.b16 %v482
        %v1855 = vunpack.c.l.b16 %v483
        %v1856 = vunpack.c.h.b16 %v483
        %v1857 = vunpack.c.l.b16 %v484
        %v1858 = vunpack.c.h.b16 %v484
        %v1859 = vunpack.c.l.b16 %v485
        %v1860 = vunpack.c.h.b16 %v485
        %v1861 = vunpack.c.l.b16 %v486
        %v1862 = vunpack.c.h.b16 %v486
        %v1863 = vunpack.c.l.b16 %v487
        %v1864 = vunpack.c.h.b16 %v487
        %v1865 = vunpack.c.l.b16 %v488
        %v1866 = vunpack.c.h.b16 %v488
        %v1867 = vunpack.c.l.b16 %v489
        %v1868 = vunpack.c.h.b16 %v489
        %v1869 = vunpack.c.l.b16 %v490
        %v1870 = vunpack.c.h.b16 %v490
        %v1871 = vunpack.c.l.b16 %v491
        %v1872 = vunpack.c.h.b16 %v491
        %v1873 = vunpack.c.l.b16 %v492
        %v1874 = vunpack.c.h.b16 %v492
        %v1875 = vunpack.c.l.b16 %v493
        %v1876 = vunpack.c.h.b16 %v493
        %v1877 = vunpack.c.l.b16 %v494
        %v1878 = vunpack.c.h.b16 %v494
        %v1879 = vunpack.c.l.b16 %v495
        %v1880 = vunpack.c.h.b16 %v495
        %v1881 = vunpack.c.l.b16 %v496
        %v1882 = vunpack.c.h.b16 %v496
        %v1883 = vunpack.c.l.b16 %v497
        %v1884 = vunpack.c.h.b16 %v497
        %v1885 = vunpack.c.l.b16 %v498
        %v1886 = vunpack.c.h.b16 %v498
        %v1887 = vunpack.c.l.b16 %v499
        %v1888 = vunpack.c.h.b16 %v499
        %v1889 = vunpack.c.l.b16 %v500
        %v1890 = vunpack.c.h.b16 %v500
        %v1891 = vunpack.c.l.b16 %v501
        %v1892 = vunpack.c.h.b16 %v501
        %v1893 = vunpack.c.l.b16 %v502
        %v1894 = vunpack.c.h.b16 %v502
        %v1895 = vunpack.c.l.b16 %v503
        %v1896 = vunpack.c.h.b16 %v503
        %v1897 = vunpack.c.l.b16 %v504
        %v1898 = vunpack.c.h.b16 %v504
        %v1899 = vunpack.c.l.b16 %v505
        %v1900 = vunpack.c.h.b16 %v505
        %v1901 = vunpack.c.l.b16 %v506
        %v1902 = vunpack.c.h.b16 %v506
        %v1903 = vunpack.c.l.b16 %v507
        %v1904 = vunpack.c.h.b16 %v507
        %v1905 = vunpack.c.l.b16 %v508
        %v1906 = vunpack.c.h.b16 %v508
        %v1907 = vunpack.c.l.b16 %v509
        %v1908 = vunpack.c.h.b16 %v509
        %v1909 = vunpack.c.l.b16 %v510
        %v1910 = vunpack.c.h.b16 %v510
        %v1911 = vunpack.c.l.b16 %v511
        %v1912 = vunpack.c.h.b16 %v511
        %v1913 = vunpack.c.l.b16 %v512
        %v1914 = vunpack.c.h.b16 %v512
        %v1915 = vunpack.c.l.b16 %v513
        %v1916 = vunpack.c.h.b16 %v513
        %v1917 = vunpack.c.l.b16 %v514
        %v1918 = vunpack.c.h.b16 %v514
        %v1919 = vunpack.c.l.b16 %v515
        %v1920 = vunpack.c.h.b16 %v515
        %v1921 = vunpack.c.l.b16 %v516
        %v1922 = vunpack.c.h.b16 %v516
        %v1923 = vunpack.c.l.b16 %v517
        %v1924 = vunpack.c.h.b16 %v517
        %v1925 = vunpack.c.l.b16 %v518
        %v1926 = vunpack.c.h.b16 %v518
        %v1927 = vunpack.c.l.b16 %v519
        %v1928 = vunpack.c.h.b16 %v519
        %v1929 = vunpack.c.l.b16 %v520
        %v1930 = vunpack.c.h.b16 %v520
        %v1931 = vunpack.c.l.b16 %v521
        %v1932 = vunpack.c.h.b16 %v521
        %v1933 = vunpack.c.l.b16 %v522
        %v1934 = vunpack.c.h.b16 %v522
        %v1935 = vunpack.c.l.b16 %v523
        %v1936 = vunpack.c.h.b16 %v523
        %v1937 = vunpack.c.l.b16 %v524
        %v1938 = vunpack.c.h.b16 %v524
        %v1939 = vunpack.c.l.b16 %v525
        %v1940 = vunpack.c.h.b16 %v525
        %v1941 = vunpack.c.l.b16 %v526
        %v1942 = vunpack.c.h.b16 %v526
        %v1943 = vunpack.c.l.b16 %v527
        %v1944 = vunpack.c.h.b16 %v527
        %v1945 = vunpack.c.l.b16 %v528
        %v1946 = vunpack.c.h.b16 %v528
        %v1947 = vunpack.c.l.b16 %v529
        %v1948 = vunpack.c.h.b16 %v529
        %v1949 = vunpack.c.l.b16 %v530
        %v1950 = vunpack.c.h.b16 %v530
        %v1951 = vunpack.c.l.b16 %v531
        %v1952 = vunpack.c.h.b16 %v531
        %v1953 = vunpack.c.l.b16 %v532
        %v1954 = vunpack.c.h.b16 %v532
        %v1955 = vunpack.c.l.b16 %v533
        %v1956 = vunpack.c.h.b16 %v533
        %v1957 = vunpack.c.l.b16 %v534
        %v1958 = vunpack.c.h.b16 %v534
        %v1959 = vunpack.c.l.b16 %v535
        %v1960 = vunpack.c.h.b16 %v535
        %v1961 = vunpack.c.l.b16 %v536
        %v1962 = vunpack.c.h.b16 %v536
        %v1963 = vunpack.c.l.b16 %v537
        %v1964 = vunpack.c.h.b16 %v537
        %v1965 = vunpack.c.l.b16 %v538
        %v1966 = vunpack.c.h.b16 %v538
        %v1967 = vunpack.c.l.b16 %v539
        %v1968 = vunpack.c.h.b16 %v539
        %v1969 = vunpack.c.l.b16 %v540
        %v1970 = vunpack.c.h.b16 %v540
        %v1971 = vunpack.c.l.b16 %v541
        %v1972 = vunpack.c.h.b16 %v541
        %v1973 = vunpack.c.l.b16 %v542
        %v1974 = vunpack.c.h.b16 %v542
        %v1975 = vunpack.c.l.b16 %v543
        %v1976 = vunpack.c.h.b16 %v543
        %v1977 = vunpack.c.l.b16 %v544
        %v1978 = vunpack.c.h.b16 %v544
        %v1979 = vunpack.c.l.b16 %v545
        %v1980 = vunpack.c.h.b16 %v545
        %v1981 = vunpack.c.l.b16 %v546
        %v1982 = vunpack.c.h.b16 %v546
        %v1983 = vunpack.c.l.b16 %v547
        %v1984 = vunpack.c.h.b16 %v547
        %v1985 = vunpack.c.l.b16 %v548
        %v1986 = vunpack.c.h.b16 %v548
        %v1987 = vunpack.c.l.b16 %v549
        %v1988 = vunpack.c.h.b16 %v549
        %v1989 = vunpack.c.l.b16 %v550
        %v1990 = vunpack.c.h.b16 %v550
        %v1991 = vunpack.c.l.b16 %v551
        %v1992 = vunpack.c.h.b16 %v551
        %v1993 = vunpack.c.l.b16 %v552
        %v1994 = vunpack.c.h.b16 %v552
        %v1995 = vunpack.c.l.b16 %v553
        %v1996 = vunpack.c.h.b16 %v553
        %v1997 = vunpack.c.l.b16 %v554
        %v1998 = vunpack.c.h.b16 %v554
        %v1999 = vunpack.c.l.b16 %v555
        %v2000 = vunpack.c.h.b16 %v555
        %v2001 = vunpack.c.l.b16 %v556
        %v2002 = vunpack.c.h.b16 %v556
        %v2003 = vunpack.c.l.b16 %v557
        %v2004 = vunpack.c.h.b16 %v557
        %v2005 = vunpack.c.l.b16 %v558
        %v2006 = vunpack.c.h.b16 %v558
        %v2007 = vunpack.c.l.b16 %v559
        %v2008 = vunpack.c.h.b16 %v559
        %v2009 = vunpack.c.l.b16 %v560
        %v2010 = vunpack.c.h.b16 %v560
        %v2011 = vunpack.c.l.b16 %v561
        %v2012 = vunpack.c.h.b16 %v561
        %v2013 = vunpack.c.l.b16 %v562
        %v2014 = vunpack.c.h.b16 %v562
        %v2015 = vunpack.c.l.b16 %v563
        %v2016 = vunpack.c.h.b16 %v563
        %v2017 = vunpack.c.l.b16 %v564
        %v2018 = vunpack.c.h.b16 %v564
        %v2019 = vunpack.c.l.b16 %v565
        %v2020 = vunpack.c.h.b16 %v565
        %v2021 = vunpack.c.l.b16 %v566
        %v2022 = vunpack.c.h.b16 %v566
        %v2023 = vunpack.c.l.b16 %v567
        %v2024 = vunpack.c.h.b16 %v567
        %v2025 = vunpack.c.l.b16 %v568
        %v2026 = vunpack.c.h.b16 %v568
        %v2027 = vunpack.c.l.b16 %v569
        %v2028 = vunpack.c.h.b16 %v569
        %v2029 = vunpack.c.l.b16 %v570
        %v2030 = vunpack.c.h.b16 %v570
        %v2031 = vunpack.c.l.b16 %v571
        %v2032 = vunpack.c.h.b16 %v571
        %v2033 = vunpack.c.l.b16 %v572
        %v2034 = vunpack.c.h.b16 %v572
        %v2035 = vunpack.c.l.b16 %v573
        %v2036 = vunpack.c.h.b16 %v573
        %v2037 = vunpack.c.l.b16 %v574
        %v2038 = vunpack.c.h.b16 %v574
        %v2039 = vunpack.c.l.b16 %v575
        %v2040 = vunpack.c.h.b16 %v575
        %v2041 = vunpack.c.l.b16 %v576
        %v2042 = vunpack.c.h.b16 %v576
        %v2043 = vunpack.c.l.b16 %v577
        %v2044 = vunpack.c.h.b16 %v577
        %v2045 = vunpack.c.l.b16 %v578
        %v2046 = vunpack.c.h.b16 %v578
        %v2047 = vunpack.c.l.b16 %v579
        %v2048 = vunpack.c.h.b16 %v579
        %v2049 = vunpack.c.l.b16 %v580
        %v2050 = vunpack.c.h.b16 %v580
        %v2051 = vunpack.c.l.b16 %v581
        %v2052 = vunpack.c.h.b16 %v581
        %v2053 = vunpack.c.l.b16 %v582
        %v2054 = vunpack.c.h.b16 %v582
        %v2055 = vunpack.c.l.b16 %v583
        %v2056 = vunpack.c.h.b16 %v583
        %v2057 = vunpack.c.l.b16 %v584
        %v2058 = vunpack.c.h.b16 %v584
        %v2059 = vunpack.c.l.b16 %v585
        %v2060 = vunpack.c.h.b16 %v585
        %v2061 = vunpack.c.l.b16 %v586
        %v2062 = vunpack.c.h.b16 %v586
        %v2063 = vunpack.c.l.b16 %v587
        %v2064 = vunpack.c.h.b16 %v587
        %v2065 = vunpack.c.l.b16 %v588
        %v2066 = vunpack.c.h.b16 %v588
        %v2067 = vunpack.c.l.b16 %v589
        %v2068 = vunpack.c.h.b16 %v589
        %v2069 = vunpack.c.l.b16 %v590
        %v2070 = vunpack.c.h.b16 %v590
        %v2071 = vunpack.c.l.b16 %v591
        %v2072 = vunpack.c.h.b16 %v591
        %v2073 = vunpack.c.l.b16 %v592
        %v2074 = vunpack.c.h.b16 %v592
        %v2075 = vunpack.c.l.b16 %v593
        %v2076 = vunpack.c.h.b16 %v593
        %v2077 = vunpack.c.l.b16 %v594
        %v2078 = vunpack.c.h.b16 %v594
        %v2079 = vunpack.c.l.b16 %v595
        %v2080 = vunpack.c.h.b16 %v595
        %v2081 = vunpack.c.l.b16 %v596
        %v2082 = vunpack.c.h.b16 %v596
        %v2083 = vunpack.c.l.b16 %v597
        %v2084 = vunpack.c.h.b16 %v597
        %v2085 = vunpack.c.l.b16 %v598
        %v2086 = vunpack.c.h.b16 %v598
        %v2087 = vunpack.c.l.b16 %v599
        %v2088 = vunpack.c.h.b16 %v599
        %v2089 = vunpack.c.l.b16 %v600
        %v2090 = vunpack.c.h.b16 %v600
        %v2091 = vunpack.c.l.b16 %v601
        %v2092 = vunpack.c.h.b16 %v601
        %v2093 = vunpack.c.l.b16 %v602
        %v2094 = vunpack.c.h.b16 %v602
        %v2095 = vunpack.c.l.b16 %v603
        %v2096 = vunpack.c.h.b16 %v603
        %v2097 = vunpack.c.l.b16 %v604
        %v2098 = vunpack.c.h.b16 %v604
        %v2099 = vunpack.c.l.b16 %v605
        %v2100 = vunpack.c.h.b16 %v605
        %v2101 = vunpack.c.l.b16 %v606
        %v2102 = vunpack.c.h.b16 %v606
        %v2103 = vunpack.c.l.b16 %v607
        %v2104 = vunpack.c.h.b16 %v607
        %v2105 = vunpack.c.l.b16 %v608
        %v2106 = vunpack.c.h.b16 %v608
        %v2107 = vunpack.c.l.b16 %v609
        %v2108 = vunpack.c.h.b16 %v609
        %v2109 = vunpack.c.l.b16 %v610
        %v2110 = vunpack.c.h.b16 %v610
        %v2111 = vunpack.c.l.b16 %v611
        %v2112 = vunpack.c.h.b16 %v611
        %v2113 = vunpack.c.l.b16 %v612
        %v2114 = vunpack.c.h.b16 %v612
        %v2115 = vunpack.c.l.b16 %v613
        %v2116 = vunpack.c.h.b16 %v613
        %v2117 = vunpack.c.l.b16 %v614
        %v2118 = vunpack.c.h.b16 %v614
        %v2119 = vunpack.c.l.b16 %v615
        %v2120 = vunpack.c.h.b16 %v615
        %v2121 = vunpack.c.l.b16 %v616
        %v2122 = vunpack.c.h.b16 %v616
        %v2123 = vunpack.c.l.b16 %v617
        %v2124 = vunpack.c.h.b16 %v617
        %v2125 = vunpack.c.l.b16 %v618
        %v2126 = vunpack.c.h.b16 %v618
        %v2127 = vunpack.c.l.b16 %v619
        %v2128 = vunpack.c.h.b16 %v619
        %v2129 = vunpack.c.l.b16 %v620
        %v2130 = vunpack.c.h.b16 %v620
        %v2131 = vunpack.c.l.b16 %v621
        %v2132 = vunpack.c.h.b16 %v621
        %v2133 = vunpack.c.l.b16 %v622
        %v2134 = vunpack.c.h.b16 %v622
        %v2135 = vunpack.c.l.b16 %v623
        %v2136 = vunpack.c.h.b16 %v623
        %v2137 = vunpack.c.l.b16 %v624
        %v2138 = vunpack.c.h.b16 %v624
        %v2139 = vunpack.c.l.b16 %v625
        %v2140 = vunpack.c.h.b16 %v625
        %v2141 = vunpack.c.l.b16 %v626
        %v2142 = vunpack.c.h.b16 %v626
        %v2143 = vunpack.c.l.b16 %v627
        %v2144 = vunpack.c.h.b16 %v627
        %v2145 = vunpack.c.l.b16 %v628
        %v2146 = vunpack.c.h.b16 %v628
        %v2147 = vunpack.c.l.b16 %v629
        %v2148 = vunpack.c.h.b16 %v629
        %v2149 = vunpack.c.l.b16 %v630
        %v2150 = vunpack.c.h.b16 %v630
        %v2151 = vunpack.c.l.b16 %v631
        %v2152 = vunpack.c.h.b16 %v631
        %v2153 = vunpack.c.l.b16 %v632
        %v2154 = vunpack.c.h.b16 %v632
        %v2155 = vunpack.c.l.b16 %v633
        %v2156 = vunpack.c.h.b16 %v633
        %v2157 = vunpack.c.l.b16 %v634
        %v2158 = vunpack.c.h.b16 %v634
        %v2159 = vunpack.c.l.b16 %v635
        %v2160 = vunpack.c.h.b16 %v635
        %v2161 = vunpack.c.l.b16 %v636
        %v2162 = vunpack.c.h.b16 %v636
        %v2163 = vunpack.c.l.b16 %v637
        %v2164 = vunpack.c.h.b16 %v637
        %v2165 = vunpack.c.l.b16 %v638
        %v2166 = vunpack.c.h.b16 %v638
        %v2167 = vunpack.c.l.b16 %v639
        %v2168 = vunpack.c.h.b16 %v639
        %v2169 = vunpack.c.l.b16 %v640
        %v2170 = vunpack.c.h.b16 %v640
        %v2171 = vunpack.c.l.b16 %v641
        %v2172 = vunpack.c.h.b16 %v641
        %v2173 = vunpack.c.l.b16 %v642
        %v2174 = vunpack.c.h.b16 %v642
        %v2175 = vunpack.c.l.b16 %v643
        %v2176 = vunpack.c.h.b16 %v643
        %v2177 = vunpack.c.l.b16 %v644
        %v2178 = vunpack.c.h.b16 %v644
        %v2179 = vunpack.c.l.b16 %v645
        %v2180 = vunpack.c.h.b16 %v645
        %v2181 = vunpack.c.l.b16 %v646
        %v2182 = vunpack.c.h.b16 %v646
        %v2183 = vunpack.c.l.b16 %v647
        %v2184 = vunpack.c.h.b16 %v647
        %v2185 = vunpack.c.l.b16 %v648
        %v2186 = vunpack.c.h.b16 %v648
        %v2187 = vunpack.c.l.b16 %v649
        %v2188 = vunpack.c.h.b16 %v649
        %v2189 = vunpack.c.l.b16 %v650
        %v2190 = vunpack.c.h.b16 %v650
        %v2191 = vunpack.c.l.b16 %v651
        %v2192 = vunpack.c.h.b16 %v651
        %v2193 = vunpack.c.l.b16 %v652
        %v2194 = vunpack.c.h.b16 %v652
        %v2195 = vunpack.c.l.b16 %v653
        %v2196 = vunpack.c.h.b16 %v653
        %v2197 = vunpack.c.l.b16 %v654
        %v2198 = vunpack.c.h.b16 %v654
        %v2199 = vunpack.c.l.b16 %v655
        %v2200 = vunpack.c.h.b16 %v655
        %v2201 = vunpack.c.l.b16 %v656
        %v2202 = vunpack.c.h.b16 %v656
        %v2203 = vunpack.c.l.b16 %v657
        %v2204 = vunpack.c.h.b16 %v657
        %v2205 = vunpack.c.l.b16 %v658
        %v2206 = vunpack.c.h.b16 %v658
        %v2207 = vunpack.c.l.b16 %v659
        %v2208 = vunpack.c.h.b16 %v659
        %v2209 = vunpack.c.l.b16 %v660
        %v2210 = vunpack.c.h.b16 %v660
        %v2211 = vunpack.c.l.b16 %v661
        %v2212 = vunpack.c.h.b16 %v661
        %v2213 = vunpack.c.l.b16 %v662
        %v2214 = vunpack.c.h.b16 %v662
        %v2215 = vunpack.c.l.b16 %v663
        %v2216 = vunpack.c.h.b16 %v663
        %v2217 = vunpack.c.l.b16 %v664
        %v2218 = vunpack.c.h.b16 %v664
        %v2219 = vunpack.c.l.b16 %v665
        %v2220 = vunpack.c.h.b16 %v665
        %v2221 = vunpack.c.l.b16 %v666
        %v2222 = vunpack.c.h.b16 %v666
        %v2223 = vunpack.c.l.b16 %v667
        %v2224 = vunpack.c.h.b16 %v667
        %v2225 = vunpack.c.l.b16 %v668
        %v2226 = vunpack.c.h.b16 %v668
        %v2227 = vunpack.c.l.b16 %v669
        %v2228 = vunpack.c.h.b16 %v669
        %v2229 = vunpack.c.l.b16 %v670
        %v2230 = vunpack.c.h.b16 %v670
        %v2231 = vunpack.c.l.b16 %v671
        %v2232 = vunpack.c.h.b16 %v671
        %v2233 = vunpack.c.l.b16 %v672
        %v2234 = vunpack.c.h.b16 %v672
        %v2235 = vunpack.c.l.b16 %v673
        %v2236 = vunpack.c.h.b16 %v673
        %v2237 = vunpack.c.l.b16 %v674
        %v2238 = vunpack.c.h.b16 %v674
        %v2239 = vunpack.c.l.b16 %v675
        %v2240 = vunpack.c.h.b16 %v675
        %v2241 = vunpack.c.l.b16 %v676
        %v2242 = vunpack.c.h.b16 %v676
        %v2243 = vunpack.c.l.b16 %v677
        %v2244 = vunpack.c.h.b16 %v677
        %v2245 = vunpack.c.l.b16 %v678
        %v2246 = vunpack.c.h.b16 %v678
        %v2247 = vunpack.c.l.b16 %v679
        %v2248 = vunpack.c.h.b16 %v679
        %v2249 = vunpack.c.l.b16 %v680
        %v2250 = vunpack.c.h.b16 %v680
        %v2251 = vunpack.c.l.b16 %v681
        %v2252 = vunpack.c.h.b16 %v681
        %v2253 = vunpack.c.l.b16 %v682
        %v2254 = vunpack.c.h.b16 %v682
        %v2255 = vunpack.c.l.b16 %v683
        %v2256 = vunpack.c.h.b16 %v683
        %v2257 = vunpack.c.l.b16 %v684
        %v2258 = vunpack.c.h.b16 %v684
        %v2259 = vunpack.c.l.b16 %v685
        %v2260 = vunpack.c.h.b16 %v685
        %v2261 = vunpack.c.l.b16 %v686
        %v2262 = vunpack.c.h.b16 %v686
        %v2263 = vpack.c.b16 %v1247, %v1239
        %v2264 = vpack.c.b16 %v1248, %v1240
        %v2265 = vpack.c.b16 %v1249, %v1241
        %v2266 = vpack.c.b16 %v1250, %v1242
        %v2267 = vpack.c.b16 %v1251, %v1243
        %v2268 = vpack.c.b16 %v1252, %v1244
        %v2269 = vpack.c.b16 %v1253, %v1245
        %v2270 = vpack.c.b16 %v1254, %v1246
        %v2271 = vpack.c.b16 %v1263, %v1255
        %v2272 = vpack.c.b16 %v1264, %v1256
        %v2273 = vpack.c.b16 %v1265, %v1257
        %v2274 = vpack.c.b16 %v1266, %v1258
        %v2275 = vpack.c.b16 %v1267, %v1259
        %v2276 = vpack.c.b16 %v1268, %v1260
        %v2277 = vpack.c.b16 %v1269, %v1261
        %v2278 = vpack.c.b16 %v1270, %v1262
        %v2279 = vpack.c.b16 %v1279, %v1271
        %v2280 = vpack.c.b16 %v1280, %v1272
        %v2281 = vpack.c.b16 %v1281, %v1273
        %v2282 = vpack.c.b16 %v1282, %v1274
        %v2283 = vpack.c.b16 %v1283, %v1275
        %v2284 = vpack.c.b16 %v1284, %v1276
        %v2285 = vpack.c.b16 %v1285, %v1277
        %v2286 = vpack.c.b16 %v1286, %v1278
        %v2287 = vpack.c.b16 %v1295, %v1287
        %v2288 = vpack.c.b16 %v1296, %v1288
        %v2289 = vpack.c.b16 %v1297, %v1289
        %v2290 = vpack.c.b16 %v1298, %v1290
        %v2291 = vpack.c.b16 %v1299, %v1291
        %v2292 = vpack.c.b16 %v1300, %v1292
        %v2293 = vpack.c.b16 %v1301, %v1293
        %v2294 = vpack.c.b16 %v1302, %v1294
        %v2295 = vpack.c.b16 %v1311, %v1303
        %v2296 = vpack.c.b16 %v1312, %v1304
        %v2297 = vpack.c.b16 %v1313, %v1305
        %v2298 = vpack.c.b16 %v1314, %v1306
        %v2299 = vpack.c.b16 %v1315, %v1307
        %v2300 = vpack.c.b16 %v1316, %v1308
        %v2301 = vpack.c.b16 %v1317, %v1309
        %v2302 = vpack.c.b16 %v1318, %v1310
        %v2303 = vpack.c.b16 %v1327, %v1319
        %v2304 = vpack.c.b16 %v1328, %v1320
        %v2305 = vpack.c.b16 %v1329, %v1321
        %v2306 = vpack.c.b16 %v1330, %v1322
        %v2307 = vpack.c.b16 %v1331, %v1323
        %v2308 = vpack.c.b16 %v1332, %v1324
        %v2309 = vpack.c.b16 %v1333, %v1325
        %v2310 = vpack.c.b16 %v1334, %v1326
        %v2311 = vpack.c.b16 %v1343, %v1335
        %v2312 = vpack.c.b16 %v1344, %v1336
        %v2313 = vpack.c.b16 %v1345, %v1337
        %v2314 = vpack.c.b16 %v1346, %v1338
        %v2315 = vpack.c.b16 %v1347, %v1339
        %v2316 = vpack.c.b16 %v1348, %v1340
        %v2317 = vpack.c.b16 %v1349, %v1341
        %v2318 = vpack.c.b16 %v1350, %v1342
        %v2319 = vpack.c.b16 %v1359, %v1351
        %v2320 = vpack.c.b16 %v1360, %v1352
        %v2321 = vpack.c.b16 %v1361, %v1353
        %v2322 = vpack.c.b16 %v1362, %v1354
        %v2323 = vpack.c.b16 %v1363, %v1355
        %v2324 = vpack.c.b16 %v1364, %v1356
        %v2325 = vpack.c.b16 %v1365, %v1357
        %v2326 = vpack.c.b16 %v1366, %v1358
        %v2327 = vpack.c.b16 %v1375, %v1367
        %v2328 = vpack.c.b16 %v1376, %v1368
        %v2329 = vpack.c.b16 %v1377, %v1369
        %v2330 = vpack.c.b16 %v1378, %v1370
        %v2331 = vpack.c.b16 %v1379, %v1371
        %v2332 = vpack.c.b16 %v1380, %v1372
        %v2333 = vpack.c.b16 %v1381, %v1373
        %v2334 = vpack.c.b16 %v1382, %v1374
        %v2335 = vpack.c.b16 %v1391, %v1383
        %v2336 = vpack.c.b16 %v1392, %v1384
        %v2337 = vpack.c.b16 %v1393, %v1385
        %v2338 = vpack.c.b16 %v1394, %v1386
        %v2339 = vpack.c.b16 %v1395, %v1387
        %v2340 = vpack.c.b16 %v1396, %v1388
        %v2341 = vpack.c.b16 %v1397, %v1389
        %v2342 = vpack.c.b16 %v1398, %v1390
        %v2343 = vpack.c.b16 %v1407, %v1399
        %v2344 = vpack.c.b16 %v1408, %v1400
        %v2345 = vpack.c.b16 %v1409, %v1401
        %v2346 = vpack.c.b16 %v1410, %v1402
        %v2347 = vpack.c.b16 %v1411, %v1403
        %v2348 = vpack.c.b16 %v1412, %v1404
        %v2349 = vpack.c.b16 %v1413, %v1405
        %v2350 = vpack.c.b16 %v1414, %v1406
        %v2351 = vpack.c.b16 %v1423, %v1415
        %v2352 = vpack.c.b16 %v1424, %v1416
        %v2353 = vpack.c.b16 %v1425, %v1417
        %v2354 = vpack.c.b16 %v1426, %v1418
        %v2355 = vpack.c.b16 %v1427, %v1419
        %v2356 = vpack.c.b16 %v1428, %v1420
        %v2357 = vpack.c.b16 %v1429, %v1421
        %v2358 = vpack.c.b16 %v1430, %v1422
        %v2359 = vpack.c.b16 %v1439, %v1431
        %v2360 = vpack.c.b16 %v1440, %v1432
        %v2361 = vpack.c.b16 %v1441, %v1433
        %v2362 = vpack.c.b16 %v1442, %v1434
        %v2363 = vpack.c.b16 %v1443, %v1435
        %v2364 = vpack.c.b16 %v1444, %v1436
        %v2365 = vpack.c.b16 %v1445, %v1437
        %v2366 = vpack.c.b16 %v1446, %v1438
        %v2367 = vpack.c.b16 %v1455, %v1447
        %v2368 = vpack.c.b16 %v1456, %v1448
        %v2369 = vpack.c.b16 %v1457, %v1449
        %v2370 = vpack.c.b16 %v1458, %v1450
        %v2371 = vpack.c.b16 %v1459, %v1451
        %v2372 = vpack.c.b16 %v1460, %v1452
        %v2373 = vpack.c.b16 %v1461, %v1453
        %v2374 = vpack.c.b16 %v1462, %v1454
        %v2375 = vpack.c.b16 %v1471, %v1463
        %v2376 = vpack.c.b16 %v1472, %v1464
        %v2377 = vpack.c.b16 %v1473, %v1465
        %v2378 = vpack.c.b16 %v1474, %v1466
        %v2379 = vpack.c.b16 %v1475, %v1467
        %v2380 = vpack.c.b16 %v1476, %v1468
        %v2381 = vpack.c.b16 %v1477, %v1469
        %v2382 = vpack.c.b16 %v1478, %v1470
        %v2383 = vpack.c.b16 %v1487, %v1479
        %v2384 = vpack.c.b16 %v1488, %v1480
        %v2385 = vpack.c.b16 %v1489, %v1481
        %v2386 = vpack.c.b16 %v1490, %v1482
        %v2387 = vpack.c.b16 %v1491, %v1483
        %v2388 = vpack.c.b16 %v1492, %v1484
        %v2389 = vpack.c.b16 %v1493, %v1485
        %v2390 = vpack.c.b16 %v1494, %v1486
        %v2391 = vpack.c.b16 %v1503, %v1495
        %v2392 = vpack.c.b16 %v1504, %v1496
        %v2393 = vpack.c.b16 %v1505, %v1497
        %v2394 = vpack.c.b16 %v1506, %v1498
        %v2395 = vpack.c.b16 %v1507, %v1499
        %v2396 = vpack.c.b16 %v1508, %v1500
        %v2397 = vpack.c.b16 %v1509, %v1501
        %v2398 = vpack.c.b16 %v1510, %v1502
        %v2399 = vpack.c.b16 %v1519, %v1511
        %v2400 = vpack.c.b16 %v1520, %v1512
        %v2401 = vpack.c.b16 %v1521, %v1513
        %v2402 = vpack.c.b16 %v1522, %v1514
        %v2403 = vpack.c.b16 %v1523, %v1515
        %v2404 = vpack.c.b16 %v1524, %v1516
        %v2405 = vpack.c.b16 %v1525, %v1517
        %v2406 = vpack.c.b16 %v1526, %v1518
        %v2407 = vpack.c.b16 %v1535, %v1527
        %v2408 = vpack.c.b16 %v1536, %v1528
        %v2409 = vpack.c.b16 %v1537, %v1529
        %v2410 = vpack.c.b16 %v1538, %v1530
        %v2411 = vpack.c.b16 %v1539, %v1531
        %v2412 = vpack.c.b16 %v1540, %v1532
        %v2413 = vpack.c.b16 %v1541, %v1533
        %v2414 = vpack.c.b16 %v1542, %v1534
        %v2415 = vpack.c.b16 %v1551, %v1543
        %v2416 = vpack.c.b16 %v1552, %v1544
        %v2417 = vpack.c.b16 %v1553, %v1545
        %v2418 = vpack.c.b16 %v1554, %v1546
        %v2419 = vpack.c.b16 %v1555, %v1547
        %v2420 = vpack.c.b16 %v1556, %v1548
        %v2421 = vpack.c.b16 %v1557, %v1549
        %v2422 = vpack.c.b16 %v1558, %v1550
        %v2423 = vpack.c.b16 %v1567, %v1559
        %v2424 = vpack.c.b16 %v1568, %v1560
        %v2425 = vpack.c.b16 %v1569, %v1561
        %v2426 = vpack.c.b16 %v1570, %v1562
        %v2427 = vpack.c.b16 %v1571, %v1563
        %v2428 = vpack.c.b16 %v1572, %v1564
        %v2429 = vpack.c.b16 %v1573, %v1565
        %v2430 = vpack.c.b16 %v1574, %v1566
        %v2431 = vpack.c.b16 %v1583, %v1575
        %v2432 = vpack.c.b16 %v1584, %v1576
        %v2433 = vpack.c.b16 %v1585, %v1577
        %v2434 = vpack.c.b16 %v1586, %v1578
        %v2435 = vpack.c.b16 %v1587, %v1579
        %v2436 = vpack.c.b16 %v1588, %v1580
        %v2437 = vpack.c.b16 %v1589, %v1581
        %v2438 = vpack.c.b16 %v1590, %v1582
        %v2439 = vpack.c.b16 %v1599, %v1591
        %v2440 = vpack.c.b16 %v1600, %v1592
        %v2441 = vpack.c.b16 %v1601, %v1593
        %v2442 = vpack.c.b16 %v1602, %v1594
        %v2443 = vpack.c.b16 %v1603, %v1595
        %v2444 = vpack.c.b16 %v1604, %v1596
        %v2445 = vpack.c.b16 %v1605, %v1597
        %v2446 = vpack.c.b16 %v1606, %v1598
        %v2447 = vpack.c.b16 %v1615, %v1607
        %v2448 = vpack.c.b16 %v1616, %v1608
        %v2449 = vpack.c.b16 %v1617, %v1609
        %v2450 = vpack.c.b16 %v1618, %v1610
        %v2451 = vpack.c.b16 %v1619, %v1611
        %v2452 = vpack.c.b16 %v1620, %v1612
        %v2453 = vpack.c.b16 %v1621, %v1613
        %v2454 = vpack.c.b16 %v1622, %v1614
        %v2455 = vpack.c.b16 %v1631, %v1623
        %v2456 = vpack.c.b16 %v1632, %v1624
        %v2457 = vpack.c.b16 %v1633, %v1625
        %v2458 = vpack.c.b16 %v1634, %v1626
        %v2459 = vpack.c.b16 %v1635, %v1627
        %v2460 = vpack.c.b16 %v1636, %v1628
        %v2461 = vpack.c.b16 %v1637, %v1629
        %v2462 = vpack.c.b16 %v1638, %v1630
        %v2463 = vpack.c.b16 %v1647, %v1639
        %v2464 = vpack.c.b16 %v1648, %v1640
        %v2465 = vpack.c.b16 %v1649, %v1641
        %v2466 = vpack.c.b16 %v1650, %v1642
        %v2467 = vpack.c.b16 %v1651, %v1643
        %v2468 = vpack.c.b16 %v1652, %v1644
        %v2469 = vpack.c.b16 %v1653, %v1645
        %v2470 = vpack.c.b16 %v1654, %v1646
        %v2471 = vpack.c.b16 %v1663, %v1655
        %v2472 = vpack.c.b16 %v1664, %v1656
        %v2473 = vpack.c.b16 %v1665, %v1657
        %v2474 = vpack.c.b16 %v1666, %v1658
        %v2475 = vpack.c.b16 %v1667, %v1659
        %v2476 = vpack.c.b16 %v1668, %v1660
        %v2477 = vpack.c.b16 %v1669, %v1661
        %v2478 = vpack.c.b16 %v1670, %v1662
        %v2479 = vpack.c.b16 %v1679, %v1671
        %v2480 = vpack.c.b16 %v1680, %v1672
        %v2481 = vpack.c.b16 %v1681, %v1673
        %v2482 = vpack.c.b16 %v1682, %v1674
        %v2483 = vpack.c.b16 %v1683, %v1675
        %v2484 = vpack.c.b16 %v1684, %v1676
        %v2485 = vpack.c.b16 %v1685, %v1677
        %v2486 = vpack.c.b16 %v1686, %v1678
        %v2487 = vpack.c.b16 %v1695, %v1687
        %v2488 = vpack.c.b16 %v1696, %v1688
        %v2489 = vpack.c.b16 %v1697, %v1689
        %v2490 = vpack.c.b16 %v1698, %v1690
        %v2491 = vpack.c.b16 %v1699, %v1691
        %v2492 = vpack.c.b16 %v1700, %v1692
        %v2493 = vpack.c.b16 %v1701, %v1693
        %v2494 = vpack.c.b16 %v1702, %v1694
        %v2495 = vpack.c.b16 %v1711, %v1703
        %v2496 = vpack.c.b16 %v1712, %v1704
        %v2497 = vpack.c.b16 %v1713, %v1705
        %v2498 = vpack.c.b16 %v1714, %v1706
        %v2499 = vpack.c.b16 %v1715, %v1707
        %v2500 = vpack.c.b16 %v1716, %v1708
        %v2501 = vpack.c.b16 %v1717, %v1709
        %v2502 = vpack.c.b16 %v1718, %v1710
        %v2503 = vpack.c.b16 %v1727, %v1719
        %v2504 = vpack.c.b16 %v1728, %v1720
        %v2505 = vpack.c.b16 %v1729, %v1721
        %v2506 = vpack.c.b16 %v1730, %v1722
        %v2507 = vpack.c.b16 %v1731, %v1723
        %v2508 = vpack.c.b16 %v1732, %v1724
        %v2509 = vpack.c.b16 %v1733, %v1725
        %v2510 = vpack.c.b16 %v1734, %v1726
        %v2511 = vpack.c.b16 %v1743, %v1735
        %v2512 = vpack.c.b16 %v1744, %v1736
        %v2513 = vpack.c.b16 %v1745, %v1737
        %v2514 = vpack.c.b16 %v1746, %v1738
        %v2515 = vpack.c.b16 %v1747, %v1739
        %v2516 = vpack.c.b16 %v1748, %v1740
        %v2517 = vpack.c.b16 %v1749, %v1741
        %v2518 = vpack.c.b16 %v1750, %v1742
        %v2519 = vpack.c.b16 %v1759, %v1751
        %v2520 = vpack.c.b16 %v1760, %v1752
        %v2521 = vpack.c.b16 %v1761, %v1753
        %v2522 = vpack.c.b16 %v1762, %v1754
        %v2523 = vpack.c.b16 %v1763, %v1755
        %v2524 = vpack.c.b16 %v1764, %v1756
        %v2525 = vpack.c.b16 %v1765, %v1757
        %v2526 = vpack.c.b16 %v1766, %v1758
        %v2527 = vpack.c.b16 %v1775, %v1767
        %v2528 = vpack.c.b16 %v1776, %v1768
        %v2529 = vpack.c.b16 %v1777, %v1769
        %v2530 = vpack.c.b16 %v1778, %v1770
        %v2531 = vpack.c.b16 %v1779, %v1771
        %v2532 = vpack.c.b16 %v1780, %v1772
        %v2533 = vpack.c.b16 %v1781, %v1773
        %v2534 = vpack.c.b16 %v1782, %v1774
        %v2535 = vpack.c.b16 %v1791, %v1783
        %v2536 = vpack.c.b16 %v1792, %v1784
        %v2537 = vpack.c.b16 %v1793, %v1785
        %v2538 = vpack.c.b16 %v1794, %v1786
        %v2539 = vpack.c.b16 %v1795, %v1787
        %v2540 = vpack.c.b16 %v1796, %v1788
        %v2541 = vpack.c.b16 %v1797, %v1789
        %v2542 = vpack.c.b16 %v1798, %v1790
        %v2543 = vpack.c.b16 %v1807, %v1799
        %v2544 = vpack.c.b16 %v1808, %v1800
        %v2545 = vpack.c.b16 %v1809, %v1801
        %v2546 = vpack.c.b16 %v1810, %v1802
        %v2547 = vpack.c.b16 %v1811, %v1803
        %v2548 = vpack.c.b16 %v1812, %v1804
        %v2549 = vpack.c.b16 %v1813, %v1805
        %v2550 = vpack.c.b16 %v1814, %v1806
        %v2551 = vpack.c.b16 %v1823, %v1815
        %v2552 = vpack.c.b16 %v1824, %v1816
        %v2553 = vpack.c.b16 %v1825, %v1817
        %v2554 = vpack.c.b16 %v1826, %v1818
        %v2555 = vpack.c.b16 %v1827, %v1819
        %v2556 = vpack.c.b16 %v1828, %v1820
        %v2557 = vpack.c.b16 %v1829, %v1821
        %v2558 = vpack.c.b16 %v1830, %v1822
        %v2559 = vpack.c.b16 %v1839, %v1831
        %v2560 = vpack.c.b16 %v1840, %v1832
        %v2561 = vpack.c.b16 %v1841, %v1833
        %v2562 = vpack.c.b16 %v1842, %v1834
        %v2563 = vpack.c.b16 %v1843, %v1835
        %v2564 = vpack.c.b16 %v1844, %v1836
        %v2565 = vpack.c.b16 %v1845, %v1837
        %v2566 = vpack.c.b16 %v1846, %v1838
        %v2567 = vpack.c.b16 %v1855, %v1847
        %v2568 = vpack.c.b16 %v1856, %v1848
        %v2569 = vpack.c.b16 %v1857, %v1849
        %v2570 = vpack.c.b16 %v1858, %v1850
        %v2571 = vpack.c.b16 %v1859, %v1851
        %v2572 = vpack.c.b16 %v1860, %v1852
        %v2573 = vpack.c.b16 %v1861, %v1853
        %v2574 = vpack.c.b16 %v1862, %v1854
        %v2575 = vpack.c.b16 %v1871, %v1863
        %v2576 = vpack.c.b16 %v1872, %v1864
        %v2577 = vpack.c.b16 %v1873, %v1865
        %v2578 = vpack.c.b16 %v1874, %v1866
        %v2579 = vpack.c.b16 %v1875, %v1867
        %v2580 = vpack.c.b16 %v1876, %v1868
        %v2581 = vpack.c.b16 %v1877, %v1869
        %v2582 = vpack.c.b16 %v1878, %v1870
        %v2583 = vpack.c.b16 %v1887, %v1879
        %v2584 = vpack.c.b16 %v1888, %v1880
        %v2585 = vpack.c.b16 %v1889, %v1881
        %v2586 = vpack.c.b16 %v1890, %v1882
        %v2587 = vpack.c.b16 %v1891, %v1883
        %v2588 = vpack.c.b16 %v1892, %v1884
        %v2589 = vpack.c.b16 %v1893, %v1885
        %v2590 = vpack.c.b16 %v1894, %v1886
        %v2591 = vpack.c.b16 %v1903, %v1895
        %v2592 = vpack.c.b16 %v1904, %v1896
        %v2593 = vpack.c.b16 %v1905, %v1897
        %v2594 = vpack.c.b16 %v1906, %v1898
        %v2595 = vpack.c.b16 %v1907, %v1899
        %v2596 = vpack.c.b16 %v1908, %v1900
        %v2597 = vpack.c.b16 %v1909, %v1901
        %v2598 = vpack.c.b16 %v1910, %v1902
        %v2599 = vpack.c.b16 %v1919, %v1911
        %v2600 = vpack.c.b16 %v1920, %v1912
        %v2601 = vpack.c.b16 %v1921, %v1913
        %v2602 = vpack.c.b16 %v1922, %v1914
        %v2603 = vpack.c.b16 %v1923, %v1915
        %v2604 = vpack.c.b16 %v1924, %v1916
        %v2605 = vpack.c.b16 %v1925, %v1917
        %v2606 = vpack.c.b16 %v1926, %v1918
        %v2607 = vpack.c.b16 %v1935, %v1927
        %v2608 = vpack.c.b16 %v1936, %v1928
        %v2609 = vpack.c.b16 %v1937, %v1929
        %v2610 = vpack.c.b16 %v1938, %v1930
        %v2611 = vpack.c.b16 %v1939, %v1931
        %v2612 = vpack.c.b16 %v1940, %v1932
        %v2613 = vpack.c.b16 %v1941, %v1933
        %v2614 = vpack.c.b16 %v1942, %v1934
        %v2615 = vpack.c.b16 %v1951, %v1943
        %v2616 = vpack.c.b16 %v1952, %v1944
        %v2617 = vpack.c.b16 %v1953, %v1945
        %v2618 = vpack.c.b16 %v1954, %v1946
        %v2619 = vpack.c.b16 %v1955, %v1947
        %v2620 = vpack.c.b16 %v1956, %v1948
        %v2621 = vpack.c.b16 %v1957, %v1949
        %v2622 = vpack.c.b16 %v1958, %v1950
        %v2623 = vpack.c.b16 %v1967, %v1959
        %v2624 = vpack.c.b16 %v1968, %v1960
        %v2625 = vpack.c.b16 %v1969, %v1961
        %v2626 = vpack.c.b16 %v1970, %v1962
        %v2627 = vpack.c.b16 %v1971, %v1963
        %v2628 = vpack.c.b16 %v1972, %v1964
        %v2629 = vpack.c.b16 %v1973, %v1965
        %v2630 = vpack.c.b16 %v1974, %v1966
        %v2631 = vpack.c.b16 %v1983, %v1975
        %v2632 = vpack.c.b16 %v1984, %v1976
        %v2633 = vpack.c.b16 %v1985, %v1977
        %v2634 = vpack.c.b16 %v1986, %v1978
        %v2635 = vpack.c.b16 %v1987, %v1979
        %v2636 = vpack.c.b16 %v1988, %v1980
        %v2637 = vpack.c.b16 %v1989, %v1981
        %v2638 = vpack.c.b16 %v1990, %v1982
        %v2639 = vpack.c.b16 %v1999, %v1991
        %v2640 = vpack.c.b16 %v2000, %v1992
        %v2641 = vpack.c.b16 %v2001, %v1993
        %v2642 = vpack.c.b16 %v2002, %v1994
        %v2643 = vpack.c.b16 %v2003, %v1995
        %v2644 = vpack.c.b16 %v2004, %v1996
        %v2645 = vpack.c.b16 %v2005, %v1997
        %v2646 = vpack.c.b16 %v2006, %v1998
        %v2647 = vpack.c.b16 %v2015, %v2007
        %v2648 = vpack.c.b16 %v2016, %v2008
        %v2649 = vpack.c.b16 %v2017, %v2009
        %v2650 = vpack.c.b16 %v2018, %v2010
        %v2651 = vpack.c.b16 %v2019, %v2011
        %v2652 = vpack.c.b16 %v2020, %v2012
        %v2653 = vpack.c.b16 %v2021, %v2013
        %v2654 = vpack.c.b16 %v2022, %v2014
        %v2655 = vpack.c.b16 %v2031, %v2023
        %v2656 = vpack.c.b16 %v2032, %v2024
        %v2657 = vpack.c.b16 %v2033, %v2025
        %v2658 = vpack.c.b16 %v2034, %v2026
        %v2659 = vpack.c.b16 %v2035, %v2027
        %v2660 = vpack.c.b16 %v2036, %v2028
        %v2661 = vpack.c.b16 %v2037, %v2029
        %v2662 = vpack.c.b16 %v2038, %v2030
        %v2663 = vpack.c.b16 %v2047, %v2039
        %v2664 = vpack.c.b16 %v2048, %v2040
        %v2665 = vpack.c.b16 %v2049, %v2041
        %v2666 = vpack.c.b16 %v2050, %v2042
        %v2667 = vpack.c.b16 %v2051, %v2043
        %v2668 = vpack.c.b16 %v2052, %v2044
        %v2669 = vpack.c.b16 %v2053, %v2045
        %v2670 = vpack.c.b16 %v2054, %v2046
        %v2671 = vpack.c.b16 %v2063, %v2055
        %v2672 = vpack.c.b16 %v2064, %v2056
        %v2673 = vpack.c.b16 %v2065, %v2057
        %v2674 = vpack.c.b16 %v2066, %v2058
        %v2675 = vpack.c.b16 %v2067, %v2059
        %v2676 = vpack.c.b16 %v2068, %v2060
        %v2677 = vpack.c.b16 %v2069, %v2061
        %v2678 = vpack.c.b16 %v2070, %v2062
        %v2679 = vpack.c.b16 %v2079, %v2071
        %v2680 = vpack.c.b16 %v2080, %v2072
        %v2681 = vpack.c.b16 %v2081, %v2073
        %v2682 = vpack.c.b16 %v2082, %v2074
        %v2683 = vpack.c.b16 %v2083, %v2075
        %v2684 = vpack.c.b16 %v2084, %v2076
        %v2685 = vpack.c.b16 %v2085, %v2077
        %v2686 = vpack.c.b16 %v2086, %v2078
        %v2687 = vpack.c.b16 %v2095, %v2087
        %v2688 = vpack.c.b16 %v2096, %v2088
        %v2689 = vpack.c.b16 %v2097, %v2089
        %v2690 = vpack.c.b16 %v2098, %v2090
        %v2691 = vpack.c.b16 %v2099, %v2091
        %v2692 = vpack.c.b16 %v2100, %v2092
        %v2693 = vpack.c.b16 %v2101, %v2093
        %v2694 = vpack.c.b16 %v2102, %v2094
        %v2695 = vpack.c.b16 %v2111, %v2103
        %v2696 = vpack.c.b16 %v2112, %v2104
        %v2697 = vpack.c.b16 %v2113, %v2105
        %v2698 = vpack.c.b16 %v2114, %v2106
        %v2699 = vpack.c.b16 %v2115, %v2107
        %v2700 = vpack.c.b16 %v2116, %v2108
        %v2701 = vpack.c.b16 %v2117, %v2109
        %v2702 = vpack.c.b16 %v2118, %v2110
        %v2703 = vpack.c.b16 %v2127, %v2119
        %v2704 = vpack.c.b16 %v2128, %v2120
        %v2705 = vpack.c.b16 %v2129, %v2121
        %v2706 = vpack.c.b16 %v2130, %v2122
        %v2707 = vpack.c.b16 %v2131, %v2123
        %v2708 = vpack.c.b16 %v2132, %v2124
        %v2709 = vpack.c.b16 %v2133, %v2125
        %v2710 = vpack.c.b16 %v2134, %v2126
        %v2711 = vpack.c.b16 %v2143, %v2135
        %v2712 = vpack.c.b16 %v2144, %v2136
        %v2713 = vpack.c.b16 %v2145, %v2137
        %v2714 = vpack.c.b16 %v2146, %v2138
        %v2715 = vpack.c.b16 %v2147, %v2139
        %v2716 = vpack.c.b16 %v2148, %v2140
        %v2717 = vpack.c.b16 %v2149, %v2141
        %v2718 = vpack.c.b16 %v2150, %v2142
        %v2719 = vpack.c.b16 %v2159, %v2151
        %v2720 = vpack.c.b16 %v2160, %v2152
        %v2721 = vpack.c.b16 %v2161, %v2153
        %v2722 = vpack.c.b16 %v2162, %v2154
        %v2723 = vpack.c.b16 %v2163, %v2155
        %v2724 = vpack.c.b16 %v2164, %v2156
        %v2725 = vpack.c.b16 %v2165, %v2157
        %v2726 = vpack.c.b16 %v2166, %v2158
        %v2727 = vpack.c.b16 %v2175, %v2167
        %v2728 = vpack.c.b16 %v2176, %v2168
        %v2729 = vpack.c.b16 %v2177, %v2169
        %v2730 = vpack.c.b16 %v2178, %v2170
        %v2731 = vpack.c.b16 %v2179, %v2171
        %v2732 = vpack.c.b16 %v2180, %v2172
        %v2733 = vpack.c.b16 %v2181, %v2173
        %v2734 = vpack.c.b16 %v2182, %v2174
        %v2735 = vpack.c.b16 %v2191, %v2183
        %v2736 = vpack.c.b16 %v2192, %v2184
        %v2737 = vpack.c.b16 %v2193, %v2185
        %v2738 = vpack.c.b16 %v2194, %v2186
        %v2739 = vpack.c.b16 %v2195, %v2187
        %v2740 = vpack.c.b16 %v2196, %v2188
        %v2741 = vpack.c.b16 %v2197, %v2189
        %v2742 = vpack.c.b16 %v2198, %v2190
        %v2743 = vpack.c.b16 %v2207, %v2199
        %v2744 = vpack.c.b16 %v2208, %v2200
        %v2745 = vpack.c.b16 %v2209, %v2201
        %v2746 = vpack.c.b16 %v2210, %v2202
        %v2747 = vpack.c.b16 %v2211, %v2203
        %v2748 = vpack.c.b16 %v2212, %v2204
        %v2749 = vpack.c.b16 %v2213, %v2205
        %v2750 = vpack.c.b16 %v2214, %v2206
        %v2751 = vpack.c.b16 %v2223, %v2215
        %v2752 = vpack.c.b16 %v2224, %v2216
        %v2753 = vpack.c.b16 %v2225, %v2217
        %v2754 = vpack.c.b16 %v2226, %v2218
        %v2755 = vpack.c.b16 %v2227, %v2219
        %v2756 = vpack.c.b16 %v2228, %v2220
        %v2757 = vpack.c.b16 %v2229, %v2221
        %v2758 = vpack.c.b16 %v2230, %v2222
        %v2759 = vpack.c.b16 %v2239, %v2231
        %v2760 = vpack.c.b16 %v2240, %v2232
        %v2761 = vpack.c.b16 %v2241, %v2233
        %v2762 = vpack.c.b16 %v2242, %v2234
        %v2763 = vpack.c.b16 %v2243, %v2235
        %v2764 = vpack.c.b16 %v2244, %v2236
        %v2765 = vpack.c.b16 %v2245, %v2237
        %v2766 = vpack.c.b16 %v2246, %v2238
        %v2767 = vpack.c.b16 %v2255, %v2247
        %v2768 = vpack.c.b16 %v2256, %v2248
        %v2769 = vpack.c.b16 %v2257, %v2249
        %v2770 = vpack.c.b16 %v2258, %v2250
        %v2771 = vpack.c.b16 %v2259, %v2251
        %v2772 = vpack.c.b16 %v2260, %v2252
        %v2773 = vpack.c.b16 %v2261, %v2253
        %v2774 = vpack.c.b16 %v2262, %v2254
        %3287 = vmatprep.subr.bf16.mxu0 %v2320
        %3288 = vmatpush1.bf16.msra.mxu0 %v2319
        %3289 = vmatprep.subr.bf16.mxu0 %v2312
        %3290 = vmatpush1.bf16.msra.mxu0 %v2311
        %3291 = vmatprep.subr.bf16.mxu0 %v2304
        %3292 = vmatpush1.bf16.msra.mxu0 %v2303
        %3293 = vmatprep.subr.bf16.mxu0 %v2296
        %3294 = vmatpush1.bf16.msra.mxu0 %v2295
        %3295 = vmatprep.subr.bf16.mxu0 %v2288
        %3296 = vmatpush1.bf16.msra.mxu0 %v2287
        %3297 = vmatprep.subr.bf16.mxu0 %v2280
        %3298 = vmatpush1.bf16.msra.mxu0 %v2279
        %3299 = vmatprep.subr.bf16.mxu0 %v2272
        %3300 = vmatpush1.bf16.msra.mxu0 %v2271
        %3301 = vmatprep.subr.bf16.mxu0 %v2264
        %3302 = vmatpush1.bf16.msra.mxu0 %v2263
        %3303 = vmatprep.subr.bf16.mxu0 %v2384
        %3304 = vmatpush2.bf16.msra.mxu0 %v2383
        %3305 = vmatprep.subr.bf16.mxu0 %v2376
        %3306 = vmatpush2.bf16.msra.mxu0 %v2375
        %3307 = vmatprep.subr.bf16.mxu0 %v2368
        %3308 = vmatpush2.bf16.msra.mxu0 %v2367
        %3309 = vmatprep.subr.bf16.mxu0 %v2360
        %3310 = vmatpush2.bf16.msra.mxu0 %v2359
        %3311 = vmatprep.subr.bf16.mxu0 %v2352
        %3312 = vmatpush2.bf16.msra.mxu0 %v2351
        %3313 = vmatprep.subr.bf16.mxu0 %v2344
        %3314 = vmatpush2.bf16.msra.mxu0 %v2343
        %3315 = vmatprep.subr.bf16.mxu0 %v2336
        %3316 = vmatpush2.bf16.msra.mxu0 %v2335
        %3317 = vmatprep.subr.bf16.mxu0 %v2328
        %3318 = vmatpush2.bf16.msra.mxu0 %v2327
        %3319 = vmatprep.mubr.bf16.mxu0 %v712
        %3320 = vmatmul.mubr.bf16.gmra.mxu0 %v711
        %v3321 = vpop.f32.mrf.mxu0
        %v3322 = vadd.f32 0.0, %v3321
        %v3323 = vpop.f32.mrf.mxu0
        %v3324 = vadd.f32 0.0, %v3323
        %v3325 = vpop.f32.mrf.mxu0
        %v3326 = vadd.f32 0.0, %v3325
        %v3327 = vpop.f32.mrf.mxu0
        %v3328 = vadd.f32 0.0, %v3327
        %3329 = vdwg.mxu0
        %3330 = vmatprep.subr.bf16.mxu0 %v2448
        %3331 = vmatpush1.bf16.msra.mxu0 %v2447
        %3332 = vmatprep.subr.bf16.mxu0 %v2440
        %3333 = vmatpush1.bf16.msra.mxu0 %v2439
        %3334 = vmatprep.subr.bf16.mxu0 %v2432
        %3335 = vmatpush1.bf16.msra.mxu0 %v2431
        %3336 = vmatprep.subr.bf16.mxu0 %v2424
        %3337 = vmatpush1.bf16.msra.mxu0 %v2423
        %3338 = vmatprep.subr.bf16.mxu0 %v2416
        %3339 = vmatpush1.bf16.msra.mxu0 %v2415
        %3340 = vmatprep.subr.bf16.mxu0 %v2408
        %3341 = vmatpush1.bf16.msra.mxu0 %v2407
        %3342 = vmatprep.subr.bf16.mxu0 %v2400
        %3343 = vmatpush1.bf16.msra.mxu0 %v2399
        %3344 = vmatprep.subr.bf16.mxu0 %v2392
        %3345 = vmatpush1.bf16.msra.mxu0 %v2391
        %3346 = vmatprep.subr.bf16.mxu0 %v2512
        %3347 = vmatpush2.bf16.msra.mxu0 %v2511
        %3348 = vmatprep.subr.bf16.mxu0 %v2504
        %3349 = vmatpush2.bf16.msra.mxu0 %v2503
        %3350 = vmatprep.subr.bf16.mxu0 %v2496
        %3351 = vmatpush2.bf16.msra.mxu0 %v2495
        %3352 = vmatprep.subr.bf16.mxu0 %v2488
        %3353 = vmatpush2.bf16.msra.mxu0 %v2487
        %3354 = vmatprep.subr.bf16.mxu0 %v2480
        %3355 = vmatpush2.bf16.msra.mxu0 %v2479
        %3356 = vmatprep.subr.bf16.mxu0 %v2472
        %3357 = vmatpush2.bf16.msra.mxu0 %v2471
        %3358 = vmatprep.subr.bf16.mxu0 %v2464
        %3359 = vmatpush2.bf16.msra.mxu0 %v2463
        %3360 = vmatprep.subr.bf16.mxu0 %v2456
        %3361 = vmatpush2.bf16.msra.mxu0 %v2455
        %3362 = vmatprep.mubr.bf16.mxu0 %v714
        %3363 = vmatmul.mubr.bf16.gmra.mxu0 %v713
        %v3364 = vpop.f32.mrf.mxu0
        %v3365 = vadd.f32 %v3322, %v3364
        %v3366 = vpop.f32.mrf.mxu0
        %v3367 = vadd.f32 %v3324, %v3366
        %v3368 = vpop.f32.mrf.mxu0
        %v3369 = vadd.f32 %v3326, %v3368
        %v3370 = vpop.f32.mrf.mxu0
        %v3371 = vadd.f32 %v3328, %v3370
        %3372 = vdwg.mxu0
        %3373 = vmatprep.subr.bf16.mxu0 %v2576
        %3374 = vmatpush1.bf16.msra.mxu0 %v2575
        %3375 = vmatprep.subr.bf16.mxu0 %v2568
        %3376 = vmatpush1.bf16.msra.mxu0 %v2567
        %3377 = vmatprep.subr.bf16.mxu0 %v2560
        %3378 = vmatpush1.bf16.msra.mxu0 %v2559
        %3379 = vmatprep.subr.bf16.mxu0 %v2552
        %3380 = vmatpush1.bf16.msra.mxu0 %v2551
        %3381 = vmatprep.subr.bf16.mxu0 %v2544
        %3382 = vmatpush1.bf16.msra.mxu0 %v2543
        %3383 = vmatprep.subr.bf16.mxu0 %v2536
        %3384 = vmatpush1.bf16.msra.mxu0 %v2535
        %3385 = vmatprep.subr.bf16.mxu0 %v2528
        %3386 = vmatpush1.bf16.msra.mxu0 %v2527
        %3387 = vmatprep.subr.bf16.mxu0 %v2520
        %3388 = vmatpush1.bf16.msra.mxu0 %v2519
        %3389 = vmatprep.subr.bf16.mxu0 %v2640
        %3390 = vmatpush2.bf16.msra.mxu0 %v2639
        %3391 = vmatprep.subr.bf16.mxu0 %v2632
        %3392 = vmatpush2.bf16.msra.mxu0 %v2631
        %3393 = vmatprep.subr.bf16.mxu0 %v2624
        %3394 = vmatpush2.bf16.msra.mxu0 %v2623
        %3395 = vmatprep.subr.bf16.mxu0 %v2616
        %3396 = vmatpush2.bf16.msra.mxu0 %v2615
        %3397 = vmatprep.subr.bf16.mxu0 %v2608
        %3398 = vmatpush2.bf16.msra.mxu0 %v2607
        %3399 = vmatprep.subr.bf16.mxu0 %v2600
        %3400 = vmatpush2.bf16.msra.mxu0 %v2599
        %3401 = vmatprep.subr.bf16.mxu0 %v2592
        %3402 = vmatpush2.bf16.msra.mxu0 %v2591
        %3403 = vmatprep.subr.bf16.mxu0 %v2584
        %3404 = vmatpush2.bf16.msra.mxu0 %v2583
        %3405 = vmatprep.mubr.bf16.mxu0 %v716
        %3406 = vmatmul.mubr.bf16.gmra.mxu0 %v715
        %v3407 = vpop.f32.mrf.mxu0
        %v3408 = vadd.f32 %v3365, %v3407
        %v3409 = vpop.f32.mrf.mxu0
        %v3410 = vadd.f32 %v3367, %v3409
        %v3411 = vpop.f32.mrf.mxu0
        %v3412 = vadd.f32 %v3369, %v3411
        %v3413 = vpop.f32.mrf.mxu0
        %v3414 = vadd.f32 %v3371, %v3413
        %3415 = vdwg.mxu0
        %3416 = vmatprep.subr.bf16.mxu0 %v2704
        %3417 = vmatpush1.bf16.msra.mxu0 %v2703
        %3418 = vmatprep.subr.bf16.mxu0 %v2696
        %3419 = vmatpush1.bf16.msra.mxu0 %v2695
        %3420 = vmatprep.subr.bf16.mxu0 %v2688
        %3421 = vmatpush1.bf16.msra.mxu0 %v2687
        %3422 = vmatprep.subr.bf16.mxu0 %v2680
        %3423 = vmatpush1.bf16.msra.mxu0 %v2679
        %3424 = vmatprep.subr.bf16.mxu0 %v2672
        %3425 = vmatpush1.bf16.msra.mxu0 %v2671
        %3426 = vmatprep.subr.bf16.mxu0 %v2664
        %3427 = vmatpush1.bf16.msra.mxu0 %v2663
        %3428 = vmatprep.subr.bf16.mxu0 %v2656
        %3429 = vmatpush1.bf16.msra.mxu0 %v2655
        %3430 = vmatprep.subr.bf16.mxu0 %v2648
        %3431 = vmatpush1.bf16.msra.mxu0 %v2647
        %3432 = vmatprep.subr.bf16.mxu0 %v2768
        %3433 = vmatpush2.bf16.msra.mxu0 %v2767
        %3434 = vmatprep.subr.bf16.mxu0 %v2760
        %3435 = vmatpush2.bf16.msra.mxu0 %v2759
        %3436 = vmatprep.subr.bf16.mxu0 %v2752
        %3437 = vmatpush2.bf16.msra.mxu0 %v2751
        %3438 = vmatprep.subr.bf16.mxu0 %v2744
        %3439 = vmatpush2.bf16.msra.mxu0 %v2743
        %3440 = vmatprep.subr.bf16.mxu0 %v2736
        %3441 = vmatpush2.bf16.msra.mxu0 %v2735
        %3442 = vmatprep.subr.bf16.mxu0 %v2728
        %3443 = vmatpush2.bf16.msra.mxu0 %v2727
        %3444 = vmatprep.subr.bf16.mxu0 %v2720
        %3445 = vmatpush2.bf16.msra.mxu0 %v2719
        %3446 = vmatprep.subr.bf16.mxu0 %v2712
        %3447 = vmatpush2.bf16.msra.mxu0 %v2711
        %3448 = vmatprep.mubr.bf16.mxu0 %v718
        %3449 = vmatmul.mubr.bf16.gmra.mxu0 %v717
        %v3450 = vpop.f32.mrf.mxu0
        %v3451 = vadd.f32 %v3408, %v3450
        %v3452 = vpop.f32.mrf.mxu0
        %v3453 = vadd.f32 %v3410, %v3452
        %v3454 = vpop.f32.mrf.mxu0
        %v3455 = vadd.f32 %v3412, %v3454
        %v3456 = vpop.f32.mrf.mxu0
        %v3457 = vadd.f32 %v3414, %v3456
        %3458 = vdwg.mxu0
        %3459 = vmatprep.subr.bf16.mxu0 %v2322
        %3460 = vmatpush1.bf16.msra.mxu0 %v2321
        %3461 = vmatprep.subr.bf16.mxu0 %v2314
        %3462 = vmatpush1.bf16.msra.mxu0 %v2313
        %3463 = vmatprep.subr.bf16.mxu0 %v2306
        %3464 = vmatpush1.bf16.msra.mxu0 %v2305
        %3465 = vmatprep.subr.bf16.mxu0 %v2298
        %3466 = vmatpush1.bf16.msra.mxu0 %v2297
        %3467 = vmatprep.subr.bf16.mxu0 %v2290
        %3468 = vmatpush1.bf16.msra.mxu0 %v2289
        %3469 = vmatprep.subr.bf16.mxu0 %v2282
        %3470 = vmatpush1.bf16.msra.mxu0 %v2281
        %3471 = vmatprep.subr.bf16.mxu0 %v2274
        %3472 = vmatpush1.bf16.msra.mxu0 %v2273
        %3473 = vmatprep.subr.bf16.mxu0 %v2266
        %3474 = vmatpush1.bf16.msra.mxu0 %v2265
        %3475 = vmatprep.subr.bf16.mxu0 %v2386
        %3476 = vmatpush2.bf16.msra.mxu0 %v2385
        %3477 = vmatprep.subr.bf16.mxu0 %v2378
        %3478 = vmatpush2.bf16.msra.mxu0 %v2377
        %3479 = vmatprep.subr.bf16.mxu0 %v2370
        %3480 = vmatpush2.bf16.msra.mxu0 %v2369
        %3481 = vmatprep.subr.bf16.mxu0 %v2362
        %3482 = vmatpush2.bf16.msra.mxu0 %v2361
        %3483 = vmatprep.subr.bf16.mxu0 %v2354
        %3484 = vmatpush2.bf16.msra.mxu0 %v2353
        %3485 = vmatprep.subr.bf16.mxu0 %v2346
        %3486 = vmatpush2.bf16.msra.mxu0 %v2345
        %3487 = vmatprep.subr.bf16.mxu0 %v2338
        %3488 = vmatpush2.bf16.msra.mxu0 %v2337
        %3489 = vmatprep.subr.bf16.mxu0 %v2330
        %3490 = vmatpush2.bf16.msra.mxu0 %v2329
        %3491 = vmatprep.mubr.bf16.mxu0 %v712
        %3492 = vmatmul.mubr.bf16.gmra.mxu0 %v711
        %v3493 = vpop.f32.mrf.mxu0
        %v3494 = vadd.f32 0.0, %v3493
        %v3495 = vpop.f32.mrf.mxu0
        %v3496 = vadd.f32 0.0, %v3495
        %v3497 = vpop.f32.mrf.mxu0
        %v3498 = vadd.f32 0.0, %v3497
        %v3499 = vpop.f32.mrf.mxu0
        %v3500 = vadd.f32 0.0, %v3499
        %3501 = vdwg.mxu0
        %3502 = vmatprep.subr.bf16.mxu0 %v2450
        %3503 = vmatpush1.bf16.msra.mxu0 %v2449
        %3504 = vmatprep.subr.bf16.mxu0 %v2442
        %3505 = vmatpush1.bf16.msra.mxu0 %v2441
        %3506 = vmatprep.subr.bf16.mxu0 %v2434
        %3507 = vmatpush1.bf16.msra.mxu0 %v2433
        %3508 = vmatprep.subr.bf16.mxu0 %v2426
        %3509 = vmatpush1.bf16.msra.mxu0 %v2425
        %3510 = vmatprep.subr.bf16.mxu0 %v2418
        %3511 = vmatpush1.bf16.msra.mxu0 %v2417
        %3512 = vmatprep.subr.bf16.mxu0 %v2410
        %3513 = vmatpush1.bf16.msra.mxu0 %v2409
        %3514 = vmatprep.subr.bf16.mxu0 %v2402
        %3515 = vmatpush1.bf16.msra.mxu0 %v2401
        %3516 = vmatprep.subr.bf16.mxu0 %v2394
        %3517 = vmatpush1.bf16.msra.mxu0 %v2393
        %3518 = vmatprep.subr.bf16.mxu0 %v2514
        %3519 = vmatpush2.bf16.msra.mxu0 %v2513
        %3520 = vmatprep.subr.bf16.mxu0 %v2506
        %3521 = vmatpush2.bf16.msra.mxu0 %v2505
        %3522 = vmatprep.subr.bf16.mxu0 %v2498
        %3523 = vmatpush2.bf16.msra.mxu0 %v2497
        %3524 = vmatprep.subr.bf16.mxu0 %v2490
        %3525 = vmatpush2.bf16.msra.mxu0 %v2489
        %3526 = vmatprep.subr.bf16.mxu0 %v2482
        %3527 = vmatpush2.bf16.msra.mxu0 %v2481
        %3528 = vmatprep.subr.bf16.mxu0 %v2474
        %3529 = vmatpush2.bf16.msra.mxu0 %v2473
        %3530 = vmatprep.subr.bf16.mxu0 %v2466
        %3531 = vmatpush2.bf16.msra.mxu0 %v2465
        %3532 = vmatprep.subr.bf16.mxu0 %v2458
        %3533 = vmatpush2.bf16.msra.mxu0 %v2457
        %3534 = vmatprep.mubr.bf16.mxu0 %v714
        %3535 = vmatmul.mubr.bf16.gmra.mxu0 %v713
        %v3536 = vpop.f32.mrf.mxu0
        %v3537 = vadd.f32 %v3494, %v3536
        %v3538 = vpop.f32.mrf.mxu0
        %v3539 = vadd.f32 %v3496, %v3538
        %v3540 = vpop.f32.mrf.mxu0
        %v3541 = vadd.f32 %v3498, %v3540
        %v3542 = vpop.f32.mrf.mxu0
        %v3543 = vadd.f32 %v3500, %v3542
        %3544 = vdwg.mxu0
        %3545 = vmatprep.subr.bf16.mxu0 %v2578
        %3546 = vmatpush1.bf16.msra.mxu0 %v2577
        %3547 = vmatprep.subr.bf16.mxu0 %v2570
        %3548 = vmatpush1.bf16.msra.mxu0 %v2569
        %3549 = vmatprep.subr.bf16.mxu0 %v2562
        %3550 = vmatpush1.bf16.msra.mxu0 %v2561
        %3551 = vmatprep.subr.bf16.mxu0 %v2554
        %3552 = vmatpush1.bf16.msra.mxu0 %v2553
        %3553 = vmatprep.subr.bf16.mxu0 %v2546
        %3554 = vmatpush1.bf16.msra.mxu0 %v2545
        %3555 = vmatprep.subr.bf16.mxu0 %v2538
        %3556 = vmatpush1.bf16.msra.mxu0 %v2537
        %3557 = vmatprep.subr.bf16.mxu0 %v2530
        %3558 = vmatpush1.bf16.msra.mxu0 %v2529
        %3559 = vmatprep.subr.bf16.mxu0 %v2522
        %3560 = vmatpush1.bf16.msra.mxu0 %v2521
        %3561 = vmatprep.subr.bf16.mxu0 %v2642
        %3562 = vmatpush2.bf16.msra.mxu0 %v2641
        %3563 = vmatprep.subr.bf16.mxu0 %v2634
        %3564 = vmatpush2.bf16.msra.mxu0 %v2633
        %3565 = vmatprep.subr.bf16.mxu0 %v2626
        %3566 = vmatpush2.bf16.msra.mxu0 %v2625
        %3567 = vmatprep.subr.bf16.mxu0 %v2618
        %3568 = vmatpush2.bf16.msra.mxu0 %v2617
        %3569 = vmatprep.subr.bf16.mxu0 %v2610
        %3570 = vmatpush2.bf16.msra.mxu0 %v2609
        %3571 = vmatprep.subr.bf16.mxu0 %v2602
        %3572 = vmatpush2.bf16.msra.mxu0 %v2601
        %3573 = vmatprep.subr.bf16.mxu0 %v2594
        %3574 = vmatpush2.bf16.msra.mxu0 %v2593
        %3575 = vmatprep.subr.bf16.mxu0 %v2586
        %3576 = vmatpush2.bf16.msra.mxu0 %v2585
        %3577 = vmatprep.mubr.bf16.mxu0 %v716
        %3578 = vmatmul.mubr.bf16.gmra.mxu0 %v715
        %v3579 = vpop.f32.mrf.mxu0
        %v3580 = vadd.f32 %v3537, %v3579
        %v3581 = vpop.f32.mrf.mxu0
        %v3582 = vadd.f32 %v3539, %v3581
        %v3583 = vpop.f32.mrf.mxu0
        %v3584 = vadd.f32 %v3541, %v3583
        %v3585 = vpop.f32.mrf.mxu0
        %v3586 = vadd.f32 %v3543, %v3585
        %3587 = vdwg.mxu0
        %3588 = vmatprep.subr.bf16.mxu0 %v2706
        %3589 = vmatpush1.bf16.msra.mxu0 %v2705
        %3590 = vmatprep.subr.bf16.mxu0 %v2698
        %3591 = vmatpush1.bf16.msra.mxu0 %v2697
        %3592 = vmatprep.subr.bf16.mxu0 %v2690
        %3593 = vmatpush1.bf16.msra.mxu0 %v2689
        %3594 = vmatprep.subr.bf16.mxu0 %v2682
        %3595 = vmatpush1.bf16.msra.mxu0 %v2681
        %3596 = vmatprep.subr.bf16.mxu0 %v2674
        %3597 = vmatpush1.bf16.msra.mxu0 %v2673
        %3598 = vmatprep.subr.bf16.mxu0 %v2666
        %3599 = vmatpush1.bf16.msra.mxu0 %v2665
        %3600 = vmatprep.subr.bf16.mxu0 %v2658
        %3601 = vmatpush1.bf16.msra.mxu0 %v2657
        %3602 = vmatprep.subr.bf16.mxu0 %v2650
        %3603 = vmatpush1.bf16.msra.mxu0 %v2649
        %3604 = vmatprep.subr.bf16.mxu0 %v2770
        %3605 = vmatpush2.bf16.msra.mxu0 %v2769
        %3606 = vmatprep.subr.bf16.mxu0 %v2762
        %3607 = vmatpush2.bf16.msra.mxu0 %v2761
        %3608 = vmatprep.subr.bf16.mxu0 %v2754
        %3609 = vmatpush2.bf16.msra.mxu0 %v2753
        %3610 = vmatprep.subr.bf16.mxu0 %v2746
        %3611 = vmatpush2.bf16.msra.mxu0 %v2745
        %3612 = vmatprep.subr.bf16.mxu0 %v2738
        %3613 = vmatpush2.bf16.msra.mxu0 %v2737
        %3614 = vmatprep.subr.bf16.mxu0 %v2730
        %3615 = vmatpush2.bf16.msra.mxu0 %v2729
        %3616 = vmatprep.subr.bf16.mxu0 %v2722
        %3617 = vmatpush2.bf16.msra.mxu0 %v2721
        %3618 = vmatprep.subr.bf16.mxu0 %v2714
        %3619 = vmatpush2.bf16.msra.mxu0 %v2713
        %3620 = vmatprep.mubr.bf16.mxu0 %v718
        %3621 = vmatmul.mubr.bf16.gmra.mxu0 %v717
        %v3622 = vpop.f32.mrf.mxu0
        %v3623 = vadd.f32 %v3580, %v3622
        %v3624 = vpop.f32.mrf.mxu0
        %v3625 = vadd.f32 %v3582, %v3624
        %v3626 = vpop.f32.mrf.mxu0
        %v3627 = vadd.f32 %v3584, %v3626
        %v3628 = vpop.f32.mrf.mxu0
        %v3629 = vadd.f32 %v3586, %v3628
        %3630 = vdwg.mxu0
        %3631 = vmatprep.subr.bf16.mxu0 %v2324
        %3632 = vmatpush1.bf16.msra.mxu0 %v2323
        %3633 = vmatprep.subr.bf16.mxu0 %v2316
        %3634 = vmatpush1.bf16.msra.mxu0 %v2315
        %3635 = vmatprep.subr.bf16.mxu0 %v2308
        %3636 = vmatpush1.bf16.msra.mxu0 %v2307
        %3637 = vmatprep.subr.bf16.mxu0 %v2300
        %3638 = vmatpush1.bf16.msra.mxu0 %v2299
        %3639 = vmatprep.subr.bf16.mxu0 %v2292
        %3640 = vmatpush1.bf16.msra.mxu0 %v2291
        %3641 = vmatprep.subr.bf16.mxu0 %v2284
        %3642 = vmatpush1.bf16.msra.mxu0 %v2283
        %3643 = vmatprep.subr.bf16.mxu0 %v2276
        %3644 = vmatpush1.bf16.msra.mxu0 %v2275
        %3645 = vmatprep.subr.bf16.mxu0 %v2268
        %3646 = vmatpush1.bf16.msra.mxu0 %v2267
        %3647 = vmatprep.subr.bf16.mxu0 %v2388
        %3648 = vmatpush2.bf16.msra.mxu0 %v2387
        %3649 = vmatprep.subr.bf16.mxu0 %v2380
        %3650 = vmatpush2.bf16.msra.mxu0 %v2379
        %3651 = vmatprep.subr.bf16.mxu0 %v2372
        %3652 = vmatpush2.bf16.msra.mxu0 %v2371
        %3653 = vmatprep.subr.bf16.mxu0 %v2364
        %3654 = vmatpush2.bf16.msra.mxu0 %v2363
        %3655 = vmatprep.subr.bf16.mxu0 %v2356
        %3656 = vmatpush2.bf16.msra.mxu0 %v2355
        %3657 = vmatprep.subr.bf16.mxu0 %v2348
        %3658 = vmatpush2.bf16.msra.mxu0 %v2347
        %3659 = vmatprep.subr.bf16.mxu0 %v2340
        %3660 = vmatpush2.bf16.msra.mxu0 %v2339
        %3661 = vmatprep.subr.bf16.mxu0 %v2332
        %3662 = vmatpush2.bf16.msra.mxu0 %v2331
        %3663 = vmatprep.mubr.bf16.mxu0 %v712
        %3664 = vmatmul.mubr.bf16.gmra.mxu0 %v711
        %v3665 = vpop.f32.mrf.mxu0
        %v3666 = vadd.f32 0.0, %v3665
        %v3667 = vpop.f32.mrf.mxu0
        %v3668 = vadd.f32 0.0, %v3667
        %v3669 = vpop.f32.mrf.mxu0
        %v3670 = vadd.f32 0.0, %v3669
        %v3671 = vpop.f32.mrf.mxu0
        %v3672 = vadd.f32 0.0, %v3671
        %3673 = vdwg.mxu0
        %3674 = vmatprep.subr.bf16.mxu0 %v2452
        %3675 = vmatpush1.bf16.msra.mxu0 %v2451
        %3676 = vmatprep.subr.bf16.mxu0 %v2444
        %3677 = vmatpush1.bf16.msra.mxu0 %v2443
        %3678 = vmatprep.subr.bf16.mxu0 %v2436
        %3679 = vmatpush1.bf16.msra.mxu0 %v2435
        %3680 = vmatprep.subr.bf16.mxu0 %v2428
        %3681 = vmatpush1.bf16.msra.mxu0 %v2427
        %3682 = vmatprep.subr.bf16.mxu0 %v2420
        %3683 = vmatpush1.bf16.msra.mxu0 %v2419
        %3684 = vmatprep.subr.bf16.mxu0 %v2412
        %3685 = vmatpush1.bf16.msra.mxu0 %v2411
        %3686 = vmatprep.subr.bf16.mxu0 %v2404
        %3687 = vmatpush1.bf16.msra.mxu0 %v2403
        %3688 = vmatprep.subr.bf16.mxu0 %v2396
        %3689 = vmatpush1.bf16.msra.mxu0 %v2395
        %3690 = vmatprep.subr.bf16.mxu0 %v2516
        %3691 = vmatpush2.bf16.msra.mxu0 %v2515
        %3692 = vmatprep.subr.bf16.mxu0 %v2508
        %3693 = vmatpush2.bf16.msra.mxu0 %v2507
        %3694 = vmatprep.subr.bf16.mxu0 %v2500
        %3695 = vmatpush2.bf16.msra.mxu0 %v2499
        %3696 = vmatprep.subr.bf16.mxu0 %v2492
        %3697 = vmatpush2.bf16.msra.mxu0 %v2491
        %3698 = vmatprep.subr.bf16.mxu0 %v2484
        %3699 = vmatpush2.bf16.msra.mxu0 %v2483
        %3700 = vmatprep.subr.bf16.mxu0 %v2476
        %3701 = vmatpush2.bf16.msra.mxu0 %v2475
        %3702 = vmatprep.subr.bf16.mxu0 %v2468
        %3703 = vmatpush2.bf16.msra.mxu0 %v2467
        %3704 = vmatprep.subr.bf16.mxu0 %v2460
        %3705 = vmatpush2.bf16.msra.mxu0 %v2459
        %3706 = vmatprep.mubr.bf16.mxu0 %v714
        %3707 = vmatmul.mubr.bf16.gmra.mxu0 %v713
        %v3708 = vpop.f32.mrf.mxu0
        %v3709 = vadd.f32 %v3666, %v3708
        %v3710 = vpop.f32.mrf.mxu0
        %v3711 = vadd.f32 %v3668, %v3710
        %v3712 = vpop.f32.mrf.mxu0
        %v3713 = vadd.f32 %v3670, %v3712
        %v3714 = vpop.f32.mrf.mxu0
        %v3715 = vadd.f32 %v3672, %v3714
        %3716 = vdwg.mxu0
        %3717 = vmatprep.subr.bf16.mxu0 %v2580
        %3718 = vmatpush1.bf16.msra.mxu0 %v2579
        %3719 = vmatprep.subr.bf16.mxu0 %v2572
        %3720 = vmatpush1.bf16.msra.mxu0 %v2571
        %3721 = vmatprep.subr.bf16.mxu0 %v2564
        %3722 = vmatpush1.bf16.msra.mxu0 %v2563
        %3723 = vmatprep.subr.bf16.mxu0 %v2556
        %3724 = vmatpush1.bf16.msra.mxu0 %v2555
        %3725 = vmatprep.subr.bf16.mxu0 %v2548
        %3726 = vmatpush1.bf16.msra.mxu0 %v2547
        %3727 = vmatprep.subr.bf16.mxu0 %v2540
        %3728 = vmatpush1.bf16.msra.mxu0 %v2539
        %3729 = vmatprep.subr.bf16.mxu0 %v2532
        %3730 = vmatpush1.bf16.msra.mxu0 %v2531
        %3731 = vmatprep.subr.bf16.mxu0 %v2524
        %3732 = vmatpush1.bf16.msra.mxu0 %v2523
        %3733 = vmatprep.subr.bf16.mxu0 %v2644
        %3734 = vmatpush2.bf16.msra.mxu0 %v2643
        %3735 = vmatprep.subr.bf16.mxu0 %v2636
        %3736 = vmatpush2.bf16.msra.mxu0 %v2635
        %3737 = vmatprep.subr.bf16.mxu0 %v2628
        %3738 = vmatpush2.bf16.msra.mxu0 %v2627
        %3739 = vmatprep.subr.bf16.mxu0 %v2620
        %3740 = vmatpush2.bf16.msra.mxu0 %v2619
        %3741 = vmatprep.subr.bf16.mxu0 %v2612
        %3742 = vmatpush2.bf16.msra.mxu0 %v2611
        %3743 = vmatprep.subr.bf16.mxu0 %v2604
        %3744 = vmatpush2.bf16.msra.mxu0 %v2603
        %3745 = vmatprep.subr.bf16.mxu0 %v2596
        %3746 = vmatpush2.bf16.msra.mxu0 %v2595
        %3747 = vmatprep.subr.bf16.mxu0 %v2588
        %3748 = vmatpush2.bf16.msra.mxu0 %v2587
        %3749 = vmatprep.mubr.bf16.mxu0 %v716
        %3750 = vmatmul.mubr.bf16.gmra.mxu0 %v715
        %v3751 = vpop.f32.mrf.mxu0
        %v3752 = vadd.f32 %v3709, %v3751
        %v3753 = vpop.f32.mrf.mxu0
        %v3754 = vadd.f32 %v3711, %v3753
        %v3755 = vpop.f32.mrf.mxu0
        %v3756 = vadd.f32 %v3713, %v3755
        %v3757 = vpop.f32.mrf.mxu0
        %v3758 = vadd.f32 %v3715, %v3757
        %3759 = vdwg.mxu0
        %3760 = vmatprep.subr.bf16.mxu0 %v2708
        %3761 = vmatpush1.bf16.msra.mxu0 %v2707
        %3762 = vmatprep.subr.bf16.mxu0 %v2700
        %3763 = vmatpush1.bf16.msra.mxu0 %v2699
        %3764 = vmatprep.subr.bf16.mxu0 %v2692
        %3765 = vmatpush1.bf16.msra.mxu0 %v2691
        %3766 = vmatprep.subr.bf16.mxu0 %v2684
        %3767 = vmatpush1.bf16.msra.mxu0 %v2683
        %3768 = vmatprep.subr.bf16.mxu0 %v2676
        %3769 = vmatpush1.bf16.msra.mxu0 %v2675
        %3770 = vmatprep.subr.bf16.mxu0 %v2668
        %3771 = vmatpush1.bf16.msra.mxu0 %v2667
        %3772 = vmatprep.subr.bf16.mxu0 %v2660
        %3773 = vmatpush1.bf16.msra.mxu0 %v2659
        %3774 = vmatprep.subr.bf16.mxu0 %v2652
        %3775 = vmatpush1.bf16.msra.mxu0 %v2651
        %3776 = vmatprep.subr.bf16.mxu0 %v2772
        %3777 = vmatpush2.bf16.msra.mxu0 %v2771
        %3778 = vmatprep.subr.bf16.mxu0 %v2764
        %3779 = vmatpush2.bf16.msra.mxu0 %v2763
        %3780 = vmatprep.subr.bf16.mxu0 %v2756
        %3781 = vmatpush2.bf16.msra.mxu0 %v2755
        %3782 = vmatprep.subr.bf16.mxu0 %v2748
        %3783 = vmatpush2.bf16.msra.mxu0 %v2747
        %3784 = vmatprep.subr.bf16.mxu0 %v2740
        %3785 = vmatpush2.bf16.msra.mxu0 %v2739
        %3786 = vmatprep.subr.bf16.mxu0 %v2732
        %3787 = vmatpush2.bf16.msra.mxu0 %v2731
        %3788 = vmatprep.subr.bf16.mxu0 %v2724
        %3789 = vmatpush2.bf16.msra.mxu0 %v2723
        %3790 = vmatprep.subr.bf16.mxu0 %v2716
        %3791 = vmatpush2.bf16.msra.mxu0 %v2715
        %3792 = vmatprep.mubr.bf16.mxu0 %v718
        %3793 = vmatmul.mubr.bf16.gmra.mxu0 %v717
        %v3794 = vpop.f32.mrf.mxu0
        %v3795 = vadd.f32 %v3752, %v3794
        %v3796 = vpop.f32.mrf.mxu0
        %v3797 = vadd.f32 %v3754, %v3796
        %v3798 = vpop.f32.mrf.mxu0
        %v3799 = vadd.f32 %v3756, %v3798
        %v3800 = vpop.f32.mrf.mxu0
        %v3801 = vadd.f32 %v3758, %v3800
        %3802 = vdwg.mxu0
        %3803 = vmatprep.subr.bf16.mxu0 %v2326
        %3804 = vmatpush1.bf16.msra.mxu0 %v2325
        %3805 = vmatprep.subr.bf16.mxu0 %v2318
        %3806 = vmatpush1.bf16.msra.mxu0 %v2317
        %3807 = vmatprep.subr.bf16.mxu0 %v2310
        %3808 = vmatpush1.bf16.msra.mxu0 %v2309
        %3809 = vmatprep.subr.bf16.mxu0 %v2302
        %3810 = vmatpush1.bf16.msra.mxu0 %v2301
        %3811 = vmatprep.subr.bf16.mxu0 %v2294
        %3812 = vmatpush1.bf16.msra.mxu0 %v2293
        %3813 = vmatprep.subr.bf16.mxu0 %v2286
        %3814 = vmatpush1.bf16.msra.mxu0 %v2285
        %3815 = vmatprep.subr.bf16.mxu0 %v2278
        %3816 = vmatpush1.bf16.msra.mxu0 %v2277
        %3817 = vmatprep.subr.bf16.mxu0 %v2270
        %3818 = vmatpush1.bf16.msra.mxu0 %v2269
        %3819 = vmatprep.subr.bf16.mxu0 %v2390
        %3820 = vmatpush2.bf16.msra.mxu0 %v2389
        %3821 = vmatprep.subr.bf16.mxu0 %v2382
        %3822 = vmatpush2.bf16.msra.mxu0 %v2381
        %3823 = vmatprep.subr.bf16.mxu0 %v2374
        %3824 = vmatpush2.bf16.msra.mxu0 %v2373
        %3825 = vmatprep.subr.bf16.mxu0 %v2366
        %3826 = vmatpush2.bf16.msra.mxu0 %v2365
        %3827 = vmatprep.subr.bf16.mxu0 %v2358
        %3828 = vmatpush2.bf16.msra.mxu0 %v2357
        %3829 = vmatprep.subr.bf16.mxu0 %v2350
        %3830 = vmatpush2.bf16.msra.mxu0 %v2349
        %3831 = vmatprep.subr.bf16.mxu0 %v2342
        %3832 = vmatpush2.bf16.msra.mxu0 %v2341
        %3833 = vmatprep.subr.bf16.mxu0 %v2334
        %3834 = vmatpush2.bf16.msra.mxu0 %v2333
        %3835 = vmatprep.mubr.bf16.mxu0 %v712
        %3836 = vmatmul.mubr.bf16.gmra.mxu0 %v711
        %v3837 = vpop.f32.mrf.mxu0
        %v3838 = vadd.f32 0.0, %v3837
        %v3839 = vpop.f32.mrf.mxu0
        %v3840 = vadd.f32 0.0, %v3839
        %v3841 = vpop.f32.mrf.mxu0
        %v3842 = vadd.f32 0.0, %v3841
        %v3843 = vpop.f32.mrf.mxu0
        %v3844 = vadd.f32 0.0, %v3843
        %3845 = vdwg.mxu0
        %3846 = vmatprep.subr.bf16.mxu0 %v2454
        %3847 = vmatpush1.bf16.msra.mxu0 %v2453
        %3848 = vmatprep.subr.bf16.mxu0 %v2446
        %3849 = vmatpush1.bf16.msra.mxu0 %v2445
        %3850 = vmatprep.subr.bf16.mxu0 %v2438
        %3851 = vmatpush1.bf16.msra.mxu0 %v2437
        %3852 = vmatprep.subr.bf16.mxu0 %v2430
        %3853 = vmatpush1.bf16.msra.mxu0 %v2429
        %3854 = vmatprep.subr.bf16.mxu0 %v2422
        %3855 = vmatpush1.bf16.msra.mxu0 %v2421
        %3856 = vmatprep.subr.bf16.mxu0 %v2414
        %3857 = vmatpush1.bf16.msra.mxu0 %v2413
        %3858 = vmatprep.subr.bf16.mxu0 %v2406
        %3859 = vmatpush1.bf16.msra.mxu0 %v2405
        %3860 = vmatprep.subr.bf16.mxu0 %v2398
        %3861 = vmatpush1.bf16.msra.mxu0 %v2397
        %3862 = vmatprep.subr.bf16.mxu0 %v2518
        %3863 = vmatpush2.bf16.msra.mxu0 %v2517
        %3864 = vmatprep.subr.bf16.mxu0 %v2510
        %3865 = vmatpush2.bf16.msra.mxu0 %v2509
        %3866 = vmatprep.subr.bf16.mxu0 %v2502
        %3867 = vmatpush2.bf16.msra.mxu0 %v2501
        %3868 = vmatprep.subr.bf16.mxu0 %v2494
        %3869 = vmatpush2.bf16.msra.mxu0 %v2493
        %3870 = vmatprep.subr.bf16.mxu0 %v2486
        %3871 = vmatpush2.bf16.msra.mxu0 %v2485
        %3872 = vmatprep.subr.bf16.mxu0 %v2478
        %3873 = vmatpush2.bf16.msra.mxu0 %v2477
        %3874 = vmatprep.subr.bf16.mxu0 %v2470
        %3875 = vmatpush2.bf16.msra.mxu0 %v2469
        %3876 = vmatprep.subr.bf16.mxu0 %v2462
        %3877 = vmatpush2.bf16.msra.mxu0 %v2461
        %3878 = vmatprep.mubr.bf16.mxu0 %v714
        %3879 = vmatmul.mubr.bf16.gmra.mxu0 %v713
        %v3880 = vpop.f32.mrf.mxu0
        %v3881 = vadd.f32 %v3838, %v3880
        %v3882 = vpop.f32.mrf.mxu0
        %v3883 = vadd.f32 %v3840, %v3882
        %v3884 = vpop.f32.mrf.mxu0
        %v3885 = vadd.f32 %v3842, %v3884
        %v3886 = vpop.f32.mrf.mxu0
        %v3887 = vadd.f32 %v3844, %v3886
        %3888 = vdwg.mxu0
        %3889 = vmatprep.subr.bf16.mxu0 %v2582
        %3890 = vmatpush1.bf16.msra.mxu0 %v2581
        %3891 = vmatprep.subr.bf16.mxu0 %v2574
        %3892 = vmatpush1.bf16.msra.mxu0 %v2573
        %3893 = vmatprep.subr.bf16.mxu0 %v2566
        %3894 = vmatpush1.bf16.msra.mxu0 %v2565
        %3895 = vmatprep.subr.bf16.mxu0 %v2558
        %3896 = vmatpush1.bf16.msra.mxu0 %v2557
        %3897 = vmatprep.subr.bf16.mxu0 %v2550
        %3898 = vmatpush1.bf16.msra.mxu0 %v2549
        %3899 = vmatprep.subr.bf16.mxu0 %v2542
        %3900 = vmatpush1.bf16.msra.mxu0 %v2541
        %3901 = vmatprep.subr.bf16.mxu0 %v2534
        %3902 = vmatpush1.bf16.msra.mxu0 %v2533
        %3903 = vmatprep.subr.bf16.mxu0 %v2526
        %3904 = vmatpush1.bf16.msra.mxu0 %v2525
        %3905 = vmatprep.subr.bf16.mxu0 %v2646
        %3906 = vmatpush2.bf16.msra.mxu0 %v2645
        %3907 = vmatprep.subr.bf16.mxu0 %v2638
        %3908 = vmatpush2.bf16.msra.mxu0 %v2637
        %3909 = vmatprep.subr.bf16.mxu0 %v2630
        %3910 = vmatpush2.bf16.msra.mxu0 %v2629
        %3911 = vmatprep.subr.bf16.mxu0 %v2622
        %3912 = vmatpush2.bf16.msra.mxu0 %v2621
        %3913 = vmatprep.subr.bf16.mxu0 %v2614
        %3914 = vmatpush2.bf16.msra.mxu0 %v2613
        %3915 = vmatprep.subr.bf16.mxu0 %v2606
        %3916 = vmatpush2.bf16.msra.mxu0 %v2605
        %3917 = vmatprep.subr.bf16.mxu0 %v2598
        %3918 = vmatpush2.bf16.msra.mxu0 %v2597
        %3919 = vmatprep.subr.bf16.mxu0 %v2590
        %3920 = vmatpush2.bf16.msra.mxu0 %v2589
        %3921 = vmatprep.mubr.bf16.mxu0 %v716
        %3922 = vmatmul.mubr.bf16.gmra.mxu0 %v715
        %v3923 = vpop.f32.mrf.mxu0
        %v3924 = vadd.f32 %v3881, %v3923
        %v3925 = vpop.f32.mrf.mxu0
        %v3926 = vadd.f32 %v3883, %v3925
        %v3927 = vpop.f32.mrf.mxu0
        %v3928 = vadd.f32 %v3885, %v3927
        %v3929 = vpop.f32.mrf.mxu0
        %v3930 = vadd.f32 %v3887, %v3929
        %3931 = vdwg.mxu0
        %3932 = vmatprep.subr.bf16.mxu0 %v2710
        %3933 = vmatpush1.bf16.msra.mxu0 %v2709
        %3934 = vmatprep.subr.bf16.mxu0 %v2702
        %3935 = vmatpush1.bf16.msra.mxu0 %v2701
        %3936 = vmatprep.subr.bf16.mxu0 %v2694
        %3937 = vmatpush1.bf16.msra.mxu0 %v2693
        %3938 = vmatprep.subr.bf16.mxu0 %v2686
        %3939 = vmatpush1.bf16.msra.mxu0 %v2685
        %3940 = vmatprep.subr.bf16.mxu0 %v2678
        %3941 = vmatpush1.bf16.msra.mxu0 %v2677
        %3942 = vmatprep.subr.bf16.mxu0 %v2670
        %3943 = vmatpush1.bf16.msra.mxu0 %v2669
        %3944 = vmatprep.subr.bf16.mxu0 %v2662
        %3945 = vmatpush1.bf16.msra.mxu0 %v2661
        %3946 = vmatprep.subr.bf16.mxu0 %v2654
        %3947 = vmatpush1.bf16.msra.mxu0 %v2653
        %3948 = vmatprep.subr.bf16.mxu0 %v2774
        %3949 = vmatpush2.bf16.msra.mxu0 %v2773
        %3950 = vmatprep.subr.bf16.mxu0 %v2766
        %3951 = vmatpush2.bf16.msra.mxu0 %v2765
        %3952 = vmatprep.subr.bf16.mxu0 %v2758
        %3953 = vmatpush2.bf16.msra.mxu0 %v2757
        %3954 = vmatprep.subr.bf16.mxu0 %v2750
        %3955 = vmatpush2.bf16.msra.mxu0 %v2749
        %3956 = vmatprep.subr.bf16.mxu0 %v2742
        %3957 = vmatpush2.bf16.msra.mxu0 %v2741
        %3958 = vmatprep.subr.bf16.mxu0 %v2734
        %3959 = vmatpush2.bf16.msra.mxu0 %v2733
        %3960 = vmatprep.subr.bf16.mxu0 %v2726
        %3961 = vmatpush2.bf16.msra.mxu0 %v2725
        %3962 = vmatprep.subr.bf16.mxu0 %v2718
        %3963 = vmatpush2.bf16.msra.mxu0 %v2717
        %3964 = vmatprep.mubr.bf16.mxu0 %v718
        %3965 = vmatmul.mubr.bf16.gmra.mxu0 %v717
        %v3966 = vpop.f32.mrf.mxu0
        %v3967 = vadd.f32 %v3924, %v3966
        %v3968 = vpop.f32.mrf.mxu0
        %v3969 = vadd.f32 %v3926, %v3968
        %v3970 = vpop.f32.mrf.mxu0
        %v3971 = vadd.f32 %v3928, %v3970
        %v3972 = vpop.f32.mrf.mxu0
        %v3973 = vadd.f32 %v3930, %v3972
        %3974 = vdwg.mxu0
        %v3975 = vpack.c.bf16 %v3455, %v3451
        %v3976 = vpack.c.bf16 %v3457, %v3453
        %v3977 = vpack.c.bf16 %v3627, %v3623
        %v3978 = vpack.c.bf16 %v3629, %v3625
        %v3979 = vpack.c.bf16 %v3799, %v3795
        %v3980 = vpack.c.bf16 %v3801, %v3797
        %v3981 = vpack.c.bf16 %v3971, %v3967
        %v3982 = vpack.c.bf16 %v3973, %v3969
        %v3991 = vunpack.c.l.b16 %v3975
        %v3992 = vunpack.c.l.b16 %v3976
        %v3993 = vunpack.c.l.b16 %v3977
        %v3994 = vunpack.c.l.b16 %v3978
        %v3995 = vunpack.c.l.b16 %v3979
        %v3996 = vunpack.c.l.b16 %v3980
        %v3997 = vunpack.c.l.b16 %v3981
        %v3998 = vunpack.c.l.b16 %v3982
        %v3999 = vunpack.c.h.b16 %v3975
        %v4000 = vunpack.c.h.b16 %v3976
        %v4001 = vunpack.c.h.b16 %v3977
        %v4002 = vunpack.c.h.b16 %v3978
        %v4003 = vunpack.c.h.b16 %v3979
        %v4004 = vunpack.c.h.b16 %v3980
        %v4005 = vunpack.c.h.b16 %v3981
        %v4006 = vunpack.c.h.b16 %v3982
        %v4007 = vpack.c.b16 %v3992, %v3991
        %v4008 = vpack.c.b16 %v3994, %v3993
        %v4009 = vpack.c.b16 %v3996, %v3995
        %v4010 = vpack.c.b16 %v3998, %v3997
        %v4011 = vpack.c.b16 %v4000, %v3999
        %v4012 = vpack.c.b16 %v4002, %v4001
        %v4013 = vpack.c.b16 %v4004, %v4003
        %v4014 = vpack.c.b16 %v4006, %v4005
        %4023 = vst [vmem:[%s165] sm:$0xff] %v4007
        %4024 = vst [vmem:[%s165 + $0x8] sm:$0xff] %v4008
        %4025 = vst [vmem:[%s165 + $0x10] sm:$0xff] %v4009
        %4026 = vst [vmem:[%s165 + $0x18] sm:$0xff] %v4010
        %4027 = vst [vmem:[%s165 + $0x20] sm:$0xff] %v4011
        %4028 = vst [vmem:[%s165 + $0x28] sm:$0xff] %v4012
        %4029 = vst [vmem:[%s165 + $0x30] sm:$0xff] %v4013
        %4030 = vst [vmem:[%s165 + $0x38] sm:$0xff] %v4014
        %s4031 = smul.u32 2, %s14
        %p4032 = scmp.lt.s32.totalorder %s4031, 3
        %s4033 = scalar_select %p4032, %s4031, 3
        %s4034 = smul.addr %s4033, 8
        %s4035 = smul.addr %s4034, 4
        %s4036 = scalar_lea.vmem %s2, %s4035
        // Predicated region
        $region33: #{multi_resolution_stft_loss.4} parent=27 // pred_check
          %p4037 = pneg %p79
        $region34: #{multi_resolution_stft_loss.4} parent=27 // pred_check_branch
          %4039 = sbr.rel (%p4037) target = $region36
        $region35: #{multi_resolution_stft_loss.4} parent=27 // pred_region
          %s4040 = smul.u32 2, %s14
        $region36: #{multi_resolution_stft_loss.4} parent=27 // pred_fallthru
          _
      $region28: #{multi_resolution_stft_loss.4} parent=5 // pred_fallthru
        _
      %p4041 = scmp.le.s32.totalorder 2, %s9
      // Predicated region
      $region37: #{multi_resolution_stft_loss.4} parent=5 // pred_check
        %p4042 = pneg %p4041
      $region38: #{multi_resolution_stft_loss.4} parent=5 // pred_check_branch
        %4044 = sbr.rel (%p4042) target = $region40
      $region39: #{multi_resolution_stft_loss.4} parent=5 // pred_region
        %s4045 = ssub.s32 %s9, 2
        // Predicated region
        $region41: #{multi_resolution_stft_loss.4} parent=39 // pred_check
          %p4046 = pneg %p85
        $region42: #{multi_resolution_stft_loss.4} parent=39 // pred_check_branch
          %4048 = sbr.rel (%p4046) target = $region44
        $region43: #{multi_resolution_stft_loss.4} parent=39 // pred_region
          %s4049 = smul.u32 2, %s15
          %p4050 = scmp.lt.s32.totalorder %s4049, 3
          %s4051 = scalar_select %p4050, %s4049, 3
          %s4052 = smul.addr %s4051, 8
          %s4053 = smul.addr %s4052, 4
          %s4054 = scalar_lea.vmem %s2, %s4053
        $region44: #{multi_resolution_stft_loss.4} parent=39 // pred_fallthru
          _
      $region40: #{multi_resolution_stft_loss.4} parent=5 // pred_fallthru
        _
    $region6: #{multi_resolution_stft_loss.4} parent=1 // loop_footer
      %s13 = sadd.s32 1, %s9
    $region7: #{multi_resolution_stft_loss.4} parent=1 // loop_footer_branch
      %8 = sbr.rel target = $region3
    $region8: #{multi_resolution_stft_loss.4} parent=1 // loop_exit
      _
    %4055 = vsyncpa [#allocation3], 1
    %s4056 = scalar_lea.sflag [#allocation3], 1
    %4057 = vsyncpa %s4056, 1

// kernel: multi_resolution_stft_loss.6
$region0: #{multi_resolution_stft_loss.6}
  #allocation0 [shape = 'u32[]', space=smem, size = 0x4, offset = 0x4, fixed_abs, tag = 'smem constant byte address 0x4 - core index']
  #allocation1 [shape = 'u32[144,128]{1,0:T(1,128)}', space=vmem, size = 0x12000, scoped, tag = 'internal scratch']
  %s0 = inlined_call_operand.vmem [shape: bf16[2,32,512], index: 0, kind: input, shape index: {}]
  %s1 = inlined_call_operand.vmem [shape: bf16[512,512], index: 1, kind: input, shape index: {}]
  %s2 = inlined_call_operand.vmem [shape: f32[2,8,256], index: 2, kind: output, shape index: {}]
  %s3 = sld [smem:[#allocation0]]
  $region64: #{multi_resolution_stft_loss.6} parent=0
    _
  %s5 = ssub.s32 1, %s3
  %s6 = scalar_select 0, %s5, %s3
  $region1: #{multi_resolution_stft_loss.6} parent=0
    #allocation2 [shape = 'u8[65536]{0}', space=vmem, size = 0x10000, scoped, tag = 'input window, operand 0']
    loop: start=0, step=1, limit=4
    $region2: #{multi_resolution_stft_loss.6} parent=1 // loop_pre_header
      _
    $region3: #{multi_resolution_stft_loss.6} parent=1 // loop_header
      %s8 = sphi 0, %s12
      %p9 = scmp.ge.s32.totalorder %s8, 4
      %s18 = sphi 0, %s20
      %s21 = sphi 0, %s18
      %s22 = sphi 0, %s21
      %s38 = sphi 0, %s22
      %s42 = sphi 0, %s42
      %s44 = sphi 0, %s42
      %s45 = sphi 0, %s44
      %s59 = sphi 0, %s45
      %s65 = sphi 0, %s67
      %s68 = sphi 0, %s65
      %s69 = sphi 0, %s68
      %s85 = sphi 0, %s69
    $region4: #{multi_resolution_stft_loss.6} parent=1 // loop_header_branch
      %11 = sbr.rel (%p9) target = $region8
    $region5: #{multi_resolution_stft_loss.6} parent=1 // loop_body
      %s13 = ssub.s32 %s8, 1
      %s14 = ssub.s32 %s8, 2
      %s15 = sadd.s32 %s8, 1
      %s16 = ssub.s32 %s8, %s15
      %p17 = scmp.eq.s32.totalorder %s16, 0
      %s19 = sadd.s32 %s18, 1
      %s20 = scalar_select %p17, %s18, %s19
      %p23 = pneg %p17
      %p24 = scmp.eq.s32.totalorder %s8, 1
      %p25 = por %p23, %p24
      %p26 = scmp.ne.s32.totalorder %s18, %s21
      %p27 = scmp.eq.s32.totalorder %s8, 0
      %p28 = por %p26, %p27
      %p29 = scmp.ne.s32.totalorder %s18, %s21
      %p30 = scmp.eq.s32.totalorder %s13, 1
      %p31 = por %p29, %p30
      %p32 = scmp.ne.s32.totalorder %s21, %s22
      %p33 = scmp.eq.s32.totalorder %s13, 0
      %p34 = por %p32, %p33
      %p35 = scmp.ne.s32.totalorder %s21, %s22
      %p36 = scmp.eq.s32.totalorder %s14, 1
      %p37 = por %p35, %p36
      %p39 = scmp.ne.s32.totalorder %s22, %s38
      %p40 = scmp.eq.s32.totalorder %s14, 0
      %p41 = por %p39, %p40
      %s43 = sadd.s32 %s42, 1
      %p46 = scmp.eq.s32.totalorder %s8, 1
      %p47 = scmp.ne.s32.totalorder %s42, %s44
      %p48 = scmp.eq.s32.totalorder %s8, 0
      %p49 = por %p47, %p48
      %p50 = scmp.ne.s32.totalorder %s42, %s44
      %p51 = scmp.eq.s32.totalorder %s13, 1
      %p52 = por %p50, %p51
      %p53 = scmp.ne.s32.totalorder %s44, %s45
      %p54 = scmp.eq.s32.totalorder %s13, 0
      %p55 = por %p53, %p54
      %p56 = scmp.ne.s32.totalorder %s44, %s45
      %p57 = scmp.eq.s32.totalorder %s14, 1
      %p58 = por %p56, %p57
      %p60 = scmp.ne.s32.totalorder %s45, %s59
      %p61 = scmp.eq.s32.totalorder %s14, 0
      %p62 = por %p60, %p61
      %s63 = ssub.s32 %s8, %s15
      %p64 = scmp.eq.s32.totalorder %s63, 0
      %s66 = sadd.s32 %s65, 1
      %s67 = scalar_select %p64, %s65, %s66
      %p70 = pneg %p64
      %p71 = scmp.eq.s32.totalorder %s8, 1
      %p72 = por %p70, %p71
      %p73 = scmp.ne.s32.totalorder %s65, %s68
      %p74 = scmp.eq.s32.totalorder %s8, 0
      %p75 = por %p73, %p74
      %p76 = scmp.ne.s32.totalorder %s65, %s68
      %p77 = scmp.eq.s32.totalorder %s13, 1
      %p78 = por %p76, %p77
      %p79 = scmp.ne.s32.totalorder %s68, %s69
      %p80 = scmp.eq.s32.totalorder %s13, 0
      %p81 = por %p79, %p80
      %p82 = scmp.ne.s32.totalorder %s68, %s69
      %p83 = scmp.eq.s32.totalorder %s14, 1
      %p84 = por %p82, %p83
      %p86 = scmp.ne.s32.totalorder %s69, %s85
      %p87 = scmp.eq.s32.totalorder %s14, 0
      %p88 = por %p86, %p87
      %p89 = scmp.le.s32.totalorder 1, %s8
      %p90 = scmp.lt.s32.totalorder %s8, 3
      %p91 = pnand %p89, %p90
      %p92 = pneg %p91
      // Predicated region
      $region9: #{multi_resolution_stft_loss.6} parent=5 // pred_check
        _
      $region10: #{multi_resolution_stft_loss.6} parent=5 // pred_check_branch
        %94 = sbr.rel (%p91) target = $region12
      $region11: #{multi_resolution_stft_loss.6} parent=5 // pred_region
        %s95 = ssub.s32 %s8, 1
        // Predicated region
        $region13: #{multi_resolution_stft_loss.6} parent=11 // pred_check
          %p96 = pneg %p55
        $region14: #{multi_resolution_stft_loss.6} parent=11 // pred_check_branch
          %98 = sbr.rel (%p96) target = $region16
        $region15: #{multi_resolution_stft_loss.6} parent=11 // pred_region
          _
        $region16: #{multi_resolution_stft_loss.6} parent=11 // pred_fallthru
          _
      $region12: #{multi_resolution_stft_loss.6} parent=5 // pred_fallthru
        _
      %p99 = scmp.lt.s32.totalorder %s8, 2
      // Predicated region
      $region17: #{multi_resolution_stft_loss.6} parent=5 // pred_check
        %p100 = pneg %p99
      $region18: #{multi_resolution_stft_loss.6} parent=5 // pred_check_branch
        %102 = sbr.rel (%p100) target = $region20
      $region19: #{multi_resolution_stft_loss.6} parent=5 // pred_region
        // Predicated region
        $region21: #{multi_resolution_stft_loss.6} parent=19 // pred_check
          %p103 = pneg %p28
        $region22: #{multi_resolution_stft_loss.6} parent=19 // pred_check_branch
          %105 = sbr.rel (%p103) target = $region24
        $region23: #{multi_resolution_stft_loss.6} parent=19 // pred_region
          %s106 = sand.u32 %s18, 1
          %s107 = sand.u32 %s18, 1
          %s108 = smul.addr %s107, 64
          %s109 = scalar_lea.vmem [#allocation2], %s108
          %s110 = smul.u32 2, %s8
          %s111 = smul.addr %s110, 4
          %s112 = smul.addr %s111, 4
          %s113 = scalar_lea.vmem %s0, %s112
          // Predicated region
          $region25: #{multi_resolution_stft_loss.6} parent=23 // pred_check
            _
          $region26: #{multi_resolution_stft_loss.6} parent=23 // pred_check_branch
            %115 = sbr.rel (0) target = $region28
          $region27: #{multi_resolution_stft_loss.6} parent=23 // pred_region
            // Predicated region
            $region29: #{multi_resolution_stft_loss.6} parent=27 // pred_check
              _
            $region30: #{multi_resolution_stft_loss.6} parent=27 // pred_check_branch
              %117 = sbr.rel (0) target = $region32
            $region31: #{multi_resolution_stft_loss.6} parent=27 // pred_region
              loop: start=0, step=1, limit=1
              $region33: #{multi_resolution_stft_loss.6} parent=31 // loop_pre_header
                _
              $region34: #{multi_resolution_stft_loss.6} parent=31 // loop_header
                %s119 = sphi 0, %s123
                %p120 = scmp.ge.s32.totalorder %s119, 1
                %s124 = sphi %s113, %s113
                %s125 = sphi %s109, %s109
              $region35: #{multi_resolution_stft_loss.6} parent=31 // loop_header_branch
                %122 = sbr.rel (%p120) target = $region39
              $region36: #{multi_resolution_stft_loss.6} parent=31 // loop_body
                %v126 = vld [vmem:[%s124] sm:$0xff]
                %127 = vst [vmem:[%s125] sm:$0xff] %v126
                %v128 = vld [vmem:[%s124 + $0x8] sm:$0xff]
                %129 = vst [vmem:[%s125 + $0x8] sm:$0xff] %v128
                %v130 = vld [vmem:[%s124 + $0x10] sm:$0xff]
                %131 = vst [vmem:[%s125 + $0x10] sm:$0xff] %v130
                %v132 = vld [vmem:[%s124 + $0x18] sm:$0xff]
                %133 = vst [vmem:[%s125 + $0x18] sm:$0xff] %v132
                %v134 = vld [vmem:[%s124 + $0x40] sm:$0xff]
                %135 = vst [vmem:[%s125 + $0x20] sm:$0xff] %v134
                %v136 = vld [vmem:[%s124 + $0x48] sm:$0xff]
                %137 = vst [vmem:[%s125 + $0x28] sm:$0xff] %v136
                %v138 = vld [vmem:[%s124 + $0x50] sm:$0xff]
                %139 = vst [vmem:[%s125 + $0x30] sm:$0xff] %v138
                %v140 = vld [vmem:[%s124 + $0x58] sm:$0xff]
                %141 = vst [vmem:[%s125 + $0x38] sm:$0xff] %v140
              $region37: #{multi_resolution_stft_loss.6} parent=31 // loop_footer
                %s123 = sadd.s32 1, %s119
              $region38: #{multi_resolution_stft_loss.6} parent=31 // loop_footer_branch
                %118 = sbr.rel target = $region34
              $region39: #{multi_resolution_stft_loss.6} parent=31 // loop_exit
                _
            $region32: #{multi_resolution_stft_loss.6} parent=27 // pred_fallthru
              _
            // Predicated region
            $region40: #{multi_resolution_stft_loss.6} parent=27 // pred_check
              _
            $region41: #{multi_resolution_stft_loss.6} parent=27 // pred_check_branch
              %143 = sbr.rel target = $region43
            $region42: #{multi_resolution_stft_loss.6} parent=27 // pred_region
              _
            $region43: #{multi_resolution_stft_loss.6} parent=27 // pred_fallthru
              _
          $region28: #{multi_resolution_stft_loss.6} parent=23 // pred_fallthru
            _
          %144 = vnop
        $region24: #{multi_resolution_stft_loss.6} parent=19 // pred_fallthru
          _
      $region20: #{multi_resolution_stft_loss.6} parent=5 // pred_fallthru
        _
      %p145 = scmp.le.s32.totalorder 1, %s8
      %p146 = scmp.lt.s32.totalorder %s8, 3
      %p147 = pnand %p145, %p146
      %p148 = pneg %p147
      // Predicated region
      $region44: #{multi_resolution_stft_loss.6} parent=5 // pred_check
        _
      $region45: #{multi_resolution_stft_loss.6} parent=5 // pred_check_branch
        %150 = sbr.rel (%p147) target = $region47
      $region46: #{multi_resolution_stft_loss.6} parent=5 // pred_region
        %s151 = ssub.s32 %s8, 1
        %s152 = sand.u32 %s21, 1
        %s153 = sand.u32 %s21, 1
        %s154 = smul.addr %s153, 64
        %s155 = scalar_lea.vmem [#allocation2], %s154
        // Predicated region
        $region48: #{multi_resolution_stft_loss.6} parent=46 // pred_check
          %p156 = pneg %p34
        $region49: #{multi_resolution_stft_loss.6} parent=46 // pred_check_branch
          %158 = sbr.rel (%p156) target = $region51
        $region50: #{multi_resolution_stft_loss.6} parent=46 // pred_region
          _
        $region51: #{multi_resolution_stft_loss.6} parent=46 // pred_fallthru
          _
        %s159 = sand.u32 %s21, 1
        %s160 = sand.u32 %s21, 1
        %s161 = smul.addr %s160, 64
        %s162 = scalar_lea.vmem [#allocation2], %s161
        %p163 = pneg %p34
        %p164 = pneg %p31
        %p165 = pneg %p55
        %p166 = pneg %p52
        %p167 = pneg %p81
        %p168 = pneg %p78
        %p169 = scmp.lt.s32.totalorder %s13, 1
        %s170 = scalar_select %p169, %s13, 1
        %s171 = smul.addr %s170, 2
        %s172 = smul.addr %s171, 8
        %s173 = scalar_lea.vmem %s2, %s172
        %s174 = smul.u32 2, %s13
        %p175 = scmp.lt.s32.totalorder %s13, 1
        %s176 = scalar_select %p175, %s13, 1
        %s177 = smul.addr %s176, 2
        %s178 = smul.addr %s177, 8
        %s179 = scalar_lea.vmem %s2, %s178
        %v180 = vld [vmem:[%s155] sm:$0xff]
        %v181 = vld [vmem:[%s155 + $0x8] sm:$0xff]
        %v182 = vld [vmem:[%s155 + $0x10] sm:$0xff]
        %v183 = vld [vmem:[%s155 + $0x18] sm:$0xff]
        %v184 = vld [vmem:[%s155 + $0x20] sm:$0xff]
        %v185 = vld [vmem:[%s155 + $0x28] sm:$0xff]
        %v186 = vld [vmem:[%s155 + $0x30] sm:$0xff]
        %v187 = vld [vmem:[%s155 + $0x38] sm:$0xff]
        %v188 = vld [vmem:[%s1] sm:$0xff]
        %v189 = vld [vmem:[%s1 + $0x8] sm:$0xff]
        %v190 = vld [vmem:[%s1 + $0x10] sm:$0xff]
        %v191 = vld [vmem:[%s1 + $0x18] sm:$0xff]
        %v192 = vld [vmem:[%s1 + $0x20] sm:$0xff]
        %v193 = vld [vmem:[%s1 + $0x28] sm:$0xff]
        %v194 = vld [vmem:[%s1 + $0x30] sm:$0xff]
        %v195 = vld [vmem:[%s1 + $0x38] sm:$0xff]
        %v196 = vld [vmem:[%s1 + $0x40] sm:$0xff]
        %v197 = vld [vmem:[%s1 + $0x48] sm:$0xff]
        %v198 = vld [vmem:[%s1 + $0x50] sm:$0xff]
        %v199 = vld [vmem:[%s1 + $0x58] sm:$0xff]
        %v200 = vld [vmem:[%s1 + $0x60] sm:$0xff]
        %v201 = vld [vmem:[%s1 + $0x68] sm:$0xff]
        %v202 = vld [vmem:[%s1 + $0x70] sm:$0xff]
        %v203 = vld [vmem:[%s1 + $0x78] sm:$0xff]
        %v204 = vld [vmem:[%s1 + $0x80] sm:$0xff]
        %v205 = vld [vmem:[%s1 + $0x88] sm:$0xff]
        %v206 = vld [vmem:[%s1 + $0x90] sm:$0xff]
        %v207 = vld [vmem:[%s1 + $0x98] sm:$0xff]
        %v208 = vld [vmem:[%s1 + $0xa0] sm:$0xff]
        %v209 = vld [vmem:[%s1 + $0xa8] sm:$0xff]
        %v210 = vld [vmem:[%s1 + $0xb0] sm:$0xff]
        %v211 = vld [vmem:[%s1 + $0xb8] sm:$0xff]
        %v212 = vld [vmem:[%s1 + $0xc0] sm:$0xff]
        %v213 = vld [vmem:[%s1 + $0xc8] sm:$0xff]
        %v214 = vld [vmem:[%s1 + $0xd0] sm:$0xff]
        %v215 = vld [vmem:[%s1 + $0xd8] sm:$0xff]
        %v216 = vld [vmem:[%s1 + $0xe0] sm:$0xff]
        %v217 = vld [vmem:[%s1 + $0xe8] sm:$0xff]
        %v218 = vld [vmem:[%s1 + $0xf0] sm:$0xff]
        %v219 = vld [vmem:[%s1 + $0xf8] sm:$0xff]
        %v220 = vld [vmem:[%s1 + $0x100] sm:$0xff]
        %v221 = vld [vmem:[%s1 + $0x108] sm:$0xff]
        %v222 = vld [vmem:[%s1 + $0x110] sm:$0xff]
        %v223 = vld [vmem:[%s1 + $0x118] sm:$0xff]
        %v224 = vld [vmem:[%s1 + $0x120] sm:$0xff]
        %v225 = vld [vmem:[%s1 + $0x128] sm:$0xff]
        %v226 = vld [vmem:[%s1 + $0x130] sm:$0xff]
        %v227 = vld [vmem:[%s1 + $0x138] sm:$0xff]
        %v228 = vld [vmem:[%s1 + $0x140] sm:$0xff]
        %v229 = vld [vmem:[%s1 + $0x148] sm:$0xff]
        %v230 = vld [vmem:[%s1 + $0x150] sm:$0xff]
        %v231 = vld [vmem:[%s1 + $0x158] sm:$0xff]
        %v232 = vld [vmem:[%s1 + $0x160] sm:$0xff]
        %v233 = vld [vmem:[%s1 + $0x168] sm:$0xff]
        %v234 = vld [vmem:[%s1 + $0x170] sm:$0xff]
        %v235 = vld [vmem:[%s1 + $0x178] sm:$0xff]
        %v236 = vld [vmem:[%s1 + $0x180] sm:$0xff]
        %v237 = vld [vmem:[%s1 + $0x188] sm:$0xff]
        %v238 = vld [vmem:[%s1 + $0x190] sm:$0xff]
        %v239 = vld [vmem:[%s1 + $0x198] sm:$0xff]
        %v240 = vld [vmem:[%s1 + $0x1a0] sm:$0xff]
        %v241 = vld [vmem:[%s1 + $0x1a8] sm:$0xff]
        %v242 = vld [vmem:[%s1 + $0x1b0] sm:$0xff]
        %v243 = vld [vmem:[%s1 + $0x1b8] sm:$0xff]
        %v244 = vld [vmem:[%s1 + $0x1c0] sm:$0xff]
        %v245 = vld [vmem:[%s1 + $0x1c8] sm:$0xff]
        %v246 = vld [vmem:[%s1 + $0x1d0] sm:$0xff]
        %v247 = vld [vmem:[%s1 + $0x1d8] sm:$0xff]
        %v248 = vld [vmem:[%s1 + $0x1e0] sm:$0xff]
        %v249 = vld [vmem:[%s1 + $0x1e8] sm:$0xff]
        %v250 = vld [vmem:[%s1 + $0x1f0] sm:$0xff]
        %v251 = vld [vmem:[%s1 + $0x1f8] sm:$0xff]
        %v252 = vld [vmem:[%s1 + $0x200] sm:$0xff]
        %v253 = vld [vmem:[%s1 + $0x208] sm:$0xff]
        %v254 = vld [vmem:[%s1 + $0x210] sm:$0xff]
        %v255 = vld [vmem:[%s1 + $0x218] sm:$0xff]
        %v256 = vld [vmem:[%s1 + $0x220] sm:$0xff]
        %v257 = vld [vmem:[%s1 + $0x228] sm:$0xff]
        %v258 = vld [vmem:[%s1 + $0x230] sm:$0xff]
        %v259 = vld [vmem:[%s1 + $0x238] sm:$0xff]
        %v260 = vld [vmem:[%s1 + $0x240] sm:$0xff]
        %v261 = vld [vmem:[%s1 + $0x248] sm:$0xff]
        %v262 = vld [vmem:[%s1 + $0x250] sm:$0xff]
        %v263 = vld [vmem:[%s1 + $0x258] sm:$0xff]
        %v264 = vld [vmem:[%s1 + $0x260] sm:$0xff]
        %v265 = vld [vmem:[%s1 + $0x268] sm:$0xff]
        %v266 = vld [vmem:[%s1 + $0x270] sm:$0xff]
        %v267 = vld [vmem:[%s1 + $0x278] sm:$0xff]
        %v268 = vld [vmem:[%s1 + $0x280] sm:$0xff]
        %v269 = vld [vmem:[%s1 + $0x288] sm:$0xff]
        %v270 = vld [vmem:[%s1 + $0x290] sm:$0xff]
        %v271 = vld [vmem:[%s1 + $0x298] sm:$0xff]
        %v272 = vld [vmem:[%s1 + $0x2a0] sm:$0xff]
        %v273 = vld [vmem:[%s1 + $0x2a8] sm:$0xff]
        %v274 = vld [vmem:[%s1 + $0x2b0] sm:$0xff]
        %v275 = vld [vmem:[%s1 + $0x2b8] sm:$0xff]
        %v276 = vld [vmem:[%s1 + $0x2c0] sm:$0xff]
        %v277 = vld [vmem:[%s1 + $0x2c8] sm:$0xff]
        %v278 = vld [vmem:[%s1 + $0x2d0] sm:$0xff]
        %v279 = vld [vmem:[%s1 + $0x2d8] sm:$0xff]
        %v280 = vld [vmem:[%s1 + $0x2e0] sm:$0xff]
        %v281 = vld [vmem:[%s1 + $0x2e8] sm:$0xff]
        %v282 = vld [vmem:[%s1 + $0x2f0] sm:$0xff]
        %v283 = vld [vmem:[%s1 + $0x2f8] sm:$0xff]
        %v284 = vld [vmem:[%s1 + $0x300] sm:$0xff]
        %v285 = vld [vmem:[%s1 + $0x308] sm:$0xff]
        %v286 = vld [vmem:[%s1 + $0x310] sm:$0xff]
        %v287 = vld [vmem:[%s1 + $0x318] sm:$0xff]
        %v288 = vld [vmem:[%s1 + $0x320] sm:$0xff]
        %v289 = vld [vmem:[%s1 + $0x328] sm:$0xff]
        %v290 = vld [vmem:[%s1 + $0x330] sm:$0xff]
        %v291 = vld [vmem:[%s1 + $0x338] sm:$0xff]
        %v292 = vld [vmem:[%s1 + $0x340] sm:$0xff]
        %v293 = vld [vmem:[%s1 + $0x348] sm:$0xff]
        %v294 = vld [vmem:[%s1 + $0x350] sm:$0xff]
        %v295 = vld [vmem:[%s1 + $0x358] sm:$0xff]
        %v296 = vld [vmem:[%s1 + $0x360] sm:$0xff]
        %v297 = vld [vmem:[%s1 + $0x368] sm:$0xff]
        %v298 = vld [vmem:[%s1 + $0x370] sm:$0xff]
        %v299 = vld [vmem:[%s1 + $0x378] sm:$0xff]
        %v300 = vld [vmem:[%s1 + $0x380] sm:$0xff]
        %v301 = vld [vmem:[%s1 + $0x388] sm:$0xff]
        %v302 = vld [vmem:[%s1 + $0x390] sm:$0xff]
        %v303 = vld [vmem:[%s1 + $0x398] sm:$0xff]
        %v304 = vld [vmem:[%s1 + $0x3a0] sm:$0xff]
        %v305 = vld [vmem:[%s1 + $0x3a8] sm:$0xff]
        %v306 = vld [vmem:[%s1 + $0x3b0] sm:$0xff]
        %v307 = vld [vmem:[%s1 + $0x3b8] sm:$0xff]
        %v308 = vld [vmem:[%s1 + $0x3c0] sm:$0xff]
        %v309 = vld [vmem:[%s1 + $0x3c8] sm:$0xff]
        %v310 = vld [vmem:[%s1 + $0x3d0] sm:$0xff]
        %v311 = vld [vmem:[%s1 + $0x3d8] sm:$0xff]
        %v312 = vld [vmem:[%s1 + $0x3e0] sm:$0xff]
        %v313 = vld [vmem:[%s1 + $0x3e8] sm:$0xff]
        %v314 = vld [vmem:[%s1 + $0x3f0] sm:$0xff]
        %v315 = vld [vmem:[%s1 + $0x3f8] sm:$0xff]
        %v324 = vunpack.c.l.b16 %v180
        %v325 = vunpack.c.h.b16 %v180
        %v326 = vunpack.c.l.b16 %v181
        %v327 = vunpack.c.h.b16 %v181
        %v328 = vunpack.c.l.b16 %v182
        %v329 = vunpack.c.h.b16 %v182
        %v330 = vunpack.c.l.b16 %v183
        %v331 = vunpack.c.h.b16 %v183
        %v332 = vunpack.c.l.b16 %v184
        %v333 = vunpack.c.h.b16 %v184
        %v334 = vunpack.c.l.b16 %v185
        %v335 = vunpack.c.h.b16 %v185
        %v336 = vunpack.c.l.b16 %v186
        %v337 = vunpack.c.h.b16 %v186
        %v338 = vunpack.c.l.b16 %v187
        %v339 = vunpack.c.h.b16 %v187
        %v340 = vpack.c.b16 %v328, %v324
        %v341 = vpack.c.b16 %v329, %v325
        %v342 = vpack.c.b16 %v330, %v326
        %v343 = vpack.c.b16 %v331, %v327
        %v344 = vpack.c.b16 %v336, %v332
        %v345 = vpack.c.b16 %v337, %v333
        %v346 = vpack.c.b16 %v338, %v334
        %v347 = vpack.c.b16 %v339, %v335
        %v484 = vunpack.c.l.b16 %v188
        %v485 = vunpack.c.h.b16 %v188
        %v486 = vunpack.c.l.b16 %v189
        %v487 = vunpack.c.h.b16 %v189
        %v488 = vunpack.c.l.b16 %v190
        %v489 = vunpack.c.h.b16 %v190
        %v490 = vunpack.c.l.b16 %v191
        %v491 = vunpack.c.h.b16 %v191
        %v492 = vunpack.c.l.b16 %v192
        %v493 = vunpack.c.h.b16 %v192
        %v494 = vunpack.c.l.b16 %v193
        %v495 = vunpack.c.h.b16 %v193
        %v496 = vunpack.c.l.b16 %v194
        %v497 = vunpack.c.h.b16 %v194
        %v498 = vunpack.c.l.b16 %v195
        %v499 = vunpack.c.h.b16 %v195
        %v500 = vunpack.c.l.b16 %v196
        %v501 = vunpack.c.h.b16 %v196
        %v502 = vunpack.c.l.b16 %v197
        %v503 = vunpack.c.h.b16 %v197
        %v504 = vunpack.c.l.b16 %v198
        %v505 = vunpack.c.h.b16 %v198
        %v506 = vunpack.c.l.b16 %v199
        %v507 = vunpack.c.h.b16 %v199
        %v508 = vunpack.c.l.b16 %v200
        %v509 = vunpack.c.h.b16 %v200
        %v510 = vunpack.c.l.b16 %v201
        %v511 = vunpack.c.h.b16 %v201
        %v512 = vunpack.c.l.b16 %v202
        %v513 = vunpack.c.h.b16 %v202
        %v514 = vunpack.c.l.b16 %v203
        %v515 = vunpack.c.h.b16 %v203
        %v516 = vunpack.c.l.b16 %v204
        %v517 = vunpack.c.h.b16 %v204
        %v518 = vunpack.c.l.b16 %v205
        %v519 = vunpack.c.h.b16 %v205
        %v520 = vunpack.c.l.b16 %v206
        %v521 = vunpack.c.h.b16 %v206
        %v522 = vunpack.c.l.b16 %v207
        %v523 = vunpack.c.h.b16 %v207
        %v524 = vunpack.c.l.b16 %v208
        %v525 = vunpack.c.h.b16 %v208
        %v526 = vunpack.c.l.b16 %v209
        %v527 = vunpack.c.h.b16 %v209
        %v528 = vunpack.c.l.b16 %v210
        %v529 = vunpack.c.h.b16 %v210
        %v530 = vunpack.c.l.b16 %v211
        %v531 = vunpack.c.h.b16 %v211
        %v532 = vunpack.c.l.b16 %v212
        %v533 = vunpack.c.h.b16 %v212
        %v534 = vunpack.c.l.b16 %v213
        %v535 = vunpack.c.h.b16 %v213
        %v536 = vunpack.c.l.b16 %v214
        %v537 = vunpack.c.h.b16 %v214
        %v538 = vunpack.c.l.b16 %v215
        %v539 = vunpack.c.h.b16 %v215
        %v540 = vunpack.c.l.b16 %v216
        %v541 = vunpack.c.h.b16 %v216
        %v542 = vunpack.c.l.b16 %v217
        %v543 = vunpack.c.h.b16 %v217
        %v544 = vunpack.c.l.b16 %v218
        %v545 = vunpack.c.h.b16 %v218
        %v546 = vunpack.c.l.b16 %v219
        %v547 = vunpack.c.h.b16 %v219
        %v548 = vunpack.c.l.b16 %v220
        %v549 = vunpack.c.h.b16 %v220
        %v550 = vunpack.c.l.b16 %v221
        %v551 = vunpack.c.h.b16 %v221
        %v552 = vunpack.c.l.b16 %v222
        %v553 = vunpack.c.h.b16 %v222
        %v554 = vunpack.c.l.b16 %v223
        %v555 = vunpack.c.h.b16 %v223
        %v556 = vunpack.c.l.b16 %v224
        %v557 = vunpack.c.h.b16 %v224
        %v558 = vunpack.c.l.b16 %v225
        %v559 = vunpack.c.h.b16 %v225
        %v560 = vunpack.c.l.b16 %v226
        %v561 = vunpack.c.h.b16 %v226
        %v562 = vunpack.c.l.b16 %v227
        %v563 = vunpack.c.h.b16 %v227
        %v564 = vunpack.c.l.b16 %v228
        %v565 = vunpack.c.h.b16 %v228
        %v566 = vunpack.c.l.b16 %v229
        %v567 = vunpack.c.h.b16 %v229
        %v568 = vunpack.c.l.b16 %v230
        %v569 = vunpack.c.h.b16 %v230
        %v570 = vunpack.c.l.b16 %v231
        %v571 = vunpack.c.h.b16 %v231
        %v572 = vunpack.c.l.b16 %v232
        %v573 = vunpack.c.h.b16 %v232
        %v574 = vunpack.c.l.b16 %v233
        %v575 = vunpack.c.h.b16 %v233
        %v576 = vunpack.c.l.b16 %v234
        %v577 = vunpack.c.h.b16 %v234
        %v578 = vunpack.c.l.b16 %v235
        %v579 = vunpack.c.h.b16 %v235
        %v580 = vunpack.c.l.b16 %v236
        %v581 = vunpack.c.h.b16 %v236
        %v582 = vunpack.c.l.b16 %v237
        %v583 = vunpack.c.h.b16 %v237
        %v584 = vunpack.c.l.b16 %v238
        %v585 = vunpack.c.h.b16 %v238
        %v586 = vunpack.c.l.b16 %v239
        %v587 = vunpack.c.h.b16 %v239
        %v588 = vunpack.c.l.b16 %v240
        %v589 = vunpack.c.h.b16 %v240
        %v590 = vunpack.c.l.b16 %v241
        %v591 = vunpack.c.h.b16 %v241
        %v592 = vunpack.c.l.b16 %v242
        %v593 = vunpack.c.h.b16 %v242
        %v594 = vunpack.c.l.b16 %v243
        %v595 = vunpack.c.h.b16 %v243
        %v596 = vunpack.c.l.b16 %v244
        %v597 = vunpack.c.h.b16 %v244
        %v598 = vunpack.c.l.b16 %v245
        %v599 = vunpack.c.h.b16 %v245
        %v600 = vunpack.c.l.b16 %v246
        %v601 = vunpack.c.h.b16 %v246
        %v602 = vunpack.c.l.b16 %v247
        %v603 = vunpack.c.h.b16 %v247
        %v604 = vunpack.c.l.b16 %v248
        %v605 = vunpack.c.h.b16 %v248
        %v606 = vunpack.c.l.b16 %v249
        %v607 = vunpack.c.h.b16 %v249
        %v608 = vunpack.c.l.b16 %v250
        %v609 = vunpack.c.h.b16 %v250
        %v610 = vunpack.c.l.b16 %v251
        %v611 = vunpack.c.h.b16 %v251
        %v612 = vunpack.c.l.b16 %v252
        %v613 = vunpack.c.h.b16 %v252
        %v614 = vunpack.c.l.b16 %v253
        %v615 = vunpack.c.h.b16 %v253
        %v616 = vunpack.c.l.b16 %v254
        %v617 = vunpack.c.h.b16 %v254
        %v618 = vunpack.c.l.b16 %v255
        %v619 = vunpack.c.h.b16 %v255
        %v620 = vunpack.c.l.b16 %v256
        %v621 = vunpack.c.h.b16 %v256
        %v622 = vunpack.c.l.b16 %v257
        %v623 = vunpack.c.h.b16 %v257
        %v624 = vunpack.c.l.b16 %v258
        %v625 = vunpack.c.h.b16 %v258
        %v626 = vunpack.c.l.b16 %v259
        %v627 = vunpack.c.h.b16 %v259
        %v628 = vunpack.c.l.b16 %v260
        %v629 = vunpack.c.h.b16 %v260
        %v630 = vunpack.c.l.b16 %v261
        %v631 = vunpack.c.h.b16 %v261
        %v632 = vunpack.c.l.b16 %v262
        %v633 = vunpack.c.h.b16 %v262
        %v634 = vunpack.c.l.b16 %v263
        %v635 = vunpack.c.h.b16 %v263
        %v636 = vunpack.c.l.b16 %v264
        %v637 = vunpack.c.h.b16 %v264
        %v638 = vunpack.c.l.b16 %v265
        %v639 = vunpack.c.h.b16 %v265
        %v640 = vunpack.c.l.b16 %v266
        %v641 = vunpack.c.h.b16 %v266
        %v642 = vunpack.c.l.b16 %v267
        %v643 = vunpack.c.h.b16 %v267
        %v644 = vunpack.c.l.b16 %v268
        %v645 = vunpack.c.h.b16 %v268
        %v646 = vunpack.c.l.b16 %v269
        %v647 = vunpack.c.h.b16 %v269
        %v648 = vunpack.c.l.b16 %v270
        %v649 = vunpack.c.h.b16 %v270
        %v650 = vunpack.c.l.b16 %v271
        %v651 = vunpack.c.h.b16 %v271
        %v652 = vunpack.c.l.b16 %v272
        %v653 = vunpack.c.h.b16 %v272
        %v654 = vunpack.c.l.b16 %v273
        %v655 = vunpack.c.h.b16 %v273
        %v656 = vunpack.c.l.b16 %v274
        %v657 = vunpack.c.h.b16 %v274
        %v658 = vunpack.c.l.b16 %v275
        %v659 = vunpack.c.h.b16 %v275
        %v660 = vunpack.c.l.b16 %v276
        %v661 = vunpack.c.h.b16 %v276
        %v662 = vunpack.c.l.b16 %v277
        %v663 = vunpack.c.h.b16 %v277
        %v664 = vunpack.c.l.b16 %v278
        %v665 = vunpack.c.h.b16 %v278
        %v666 = vunpack.c.l.b16 %v279
        %v667 = vunpack.c.h.b16 %v279
        %v668 = vunpack.c.l.b16 %v280
        %v669 = vunpack.c.h.b16 %v280
        %v670 = vunpack.c.l.b16 %v281
        %v671 = vunpack.c.h.b16 %v281
        %v672 = vunpack.c.l.b16 %v282
        %v673 = vunpack.c.h.b16 %v282
        %v674 = vunpack.c.l.b16 %v283
        %v675 = vunpack.c.h.b16 %v283
        %v676 = vunpack.c.l.b16 %v284
        %v677 = vunpack.c.h.b16 %v284
        %v678 = vunpack.c.l.b16 %v285
        %v679 = vunpack.c.h.b16 %v285
        %v680 = vunpack.c.l.b16 %v286
        %v681 = vunpack.c.h.b16 %v286
        %v682 = vunpack.c.l.b16 %v287
        %v683 = vunpack.c.h.b16 %v287
        %v684 = vunpack.c.l.b16 %v288
        %v685 = vunpack.c.h.b16 %v288
        %v686 = vunpack.c.l.b16 %v289
        %v687 = vunpack.c.h.b16 %v289
        %v688 = vunpack.c.l.b16 %v290
        %v689 = vunpack.c.h.b16 %v290
        %v690 = vunpack.c.l.b16 %v291
        %v691 = vunpack.c.h.b16 %v291
        %v692 = vunpack.c.l.b16 %v292
        %v693 = vunpack.c.h.b16 %v292
        %v694 = vunpack.c.l.b16 %v293
        %v695 = vunpack.c.h.b16 %v293
        %v696 = vunpack.c.l.b16 %v294
        %v697 = vunpack.c.h.b16 %v294
        %v698 = vunpack.c.l.b16 %v295
        %v699 = vunpack.c.h.b16 %v295
        %v700 = vunpack.c.l.b16 %v296
        %v701 = vunpack.c.h.b16 %v296
        %v702 = vunpack.c.l.b16 %v297
        %v703 = vunpack.c.h.b16 %v297
        %v704 = vunpack.c.l.b16 %v298
        %v705 = vunpack.c.h.b16 %v298
        %v706 = vunpack.c.l.b16 %v299
        %v707 = vunpack.c.h.b16 %v299
        %v708 = vunpack.c.l.b16 %v300
        %v709 = vunpack.c.h.b16 %v300
        %v710 = vunpack.c.l.b16 %v301
        %v711 = vunpack.c.h.b16 %v301
        %v712 = vunpack.c.l.b16 %v302
        %v713 = vunpack.c.h.b16 %v302
        %v714 = vunpack.c.l.b16 %v303
        %v715 = vunpack.c.h.b16 %v303
        %v716 = vunpack.c.l.b16 %v304
        %v717 = vunpack.c.h.b16 %v304
        %v718 = vunpack.c.l.b16 %v305
        %v719 = vunpack.c.h.b16 %v305
        %v720 = vunpack.c.l.b16 %v306
        %v721 = vunpack.c.h.b16 %v306
        %v722 = vunpack.c.l.b16 %v307
        %v723 = vunpack.c.h.b16 %v307
        %v724 = vunpack.c.l.b16 %v308
        %v725 = vunpack.c.h.b16 %v308
        %v726 = vunpack.c.l.b16 %v309
        %v727 = vunpack.c.h.b16 %v309
        %v728 = vunpack.c.l.b16 %v310
        %v729 = vunpack.c.h.b16 %v310
        %v730 = vunpack.c.l.b16 %v311
        %v731 = vunpack.c.h.b16 %v311
        %v732 = vunpack.c.l.b16 %v312
        %v733 = vunpack.c.h.b16 %v312
        %v734 = vunpack.c.l.b16 %v313
        %v735 = vunpack.c.h.b16 %v313
        %v736 = vunpack.c.l.b16 %v314
        %v737 = vunpack.c.h.b16 %v314
        %v738 = vunpack.c.l.b16 %v315
        %v739 = vunpack.c.h.b16 %v315
        %v740 = vpack.c.b16 %v488, %v484
        %v741 = vpack.c.b16 %v489, %v485
        %v742 = vpack.c.b16 %v490, %v486
        %v743 = vpack.c.b16 %v491, %v487
        %v744 = vpack.c.b16 %v496, %v492
        %v745 = vpack.c.b16 %v497, %v493
        %v746 = vpack.c.b16 %v498, %v494
        %v747 = vpack.c.b16 %v499, %v495
        %v748 = vpack.c.b16 %v504, %v500
        %v749 = vpack.c.b16 %v505, %v501
        %v750 = vpack.c.b16 %v506, %v502
        %v751 = vpack.c.b16 %v507, %v503
        %v752 = vpack.c.b16 %v512, %v508
        %v753 = vpack.c.b16 %v513, %v509
        %v754 = vpack.c.b16 %v514, %v510
        %v755 = vpack.c.b16 %v515, %v511
        %v756 = vpack.c.b16 %v520, %v516
        %v757 = vpack.c.b16 %v521, %v517
        %v758 = vpack.c.b16 %v522, %v518
        %v759 = vpack.c.b16 %v523, %v519
        %v760 = vpack.c.b16 %v528, %v524
        %v761 = vpack.c.b16 %v529, %v525
        %v762 = vpack.c.b16 %v530, %v526
        %v763 = vpack.c.b16 %v531, %v527
        %v764 = vpack.c.b16 %v536, %v532
        %v765 = vpack.c.b16 %v537, %v533
        %v766 = vpack.c.b16 %v538, %v534
        %v767 = vpack.c.b16 %v539, %v535
        %v768 = vpack.c.b16 %v544, %v540
        %v769 = vpack.c.b16 %v545, %v541
        %v770 = vpack.c.b16 %v546, %v542
        %v771 = vpack.c.b16 %v547, %v543
        %v772 = vpack.c.b16 %v552, %v548
        %v773 = vpack.c.b16 %v553, %v549
        %v774 = vpack.c.b16 %v554, %v550
        %v775 = vpack.c.b16 %v555, %v551
        %v776 = vpack.c.b16 %v560, %v556
        %v777 = vpack.c.b16 %v561, %v557
        %v778 = vpack.c.b16 %v562, %v558
        %v779 = vpack.c.b16 %v563, %v559
        %v780 = vpack.c.b16 %v568, %v564
        %v781 = vpack.c.b16 %v569, %v565
        %v782 = vpack.c.b16 %v570, %v566
        %v783 = vpack.c.b16 %v571, %v567
        %v784 = vpack.c.b16 %v576, %v572
        %v785 = vpack.c.b16 %v577, %v573
        %v786 = vpack.c.b16 %v578, %v574
        %v787 = vpack.c.b16 %v579, %v575
        %v788 = vpack.c.b16 %v584, %v580
        %v789 = vpack.c.b16 %v585, %v581
        %v790 = vpack.c.b16 %v586, %v582
        %v791 = vpack.c.b16 %v587, %v583
        %v792 = vpack.c.b16 %v592, %v588
        %v793 = vpack.c.b16 %v593, %v589
        %v794 = vpack.c.b16 %v594, %v590
        %v795 = vpack.c.b16 %v595, %v591
        %v796 = vpack.c.b16 %v600, %v596
        %v797 = vpack.c.b16 %v601, %v597
        %v798 = vpack.c.b16 %v602, %v598
        %v799 = vpack.c.b16 %v603, %v599
        %v800 = vpack.c.b16 %v608, %v604
        %v801 = vpack.c.b16 %v609, %v605
        %v802 = vpack.c.b16 %v610, %v606
        %v803 = vpack.c.b16 %v611, %v607
        %v804 = vpack.c.b16 %v616, %v612
        %v805 = vpack.c.b16 %v617, %v613
        %v806 = vpack.c.b16 %v618, %v614
        %v807 = vpack.c.b16 %v619, %v615
        %v808 = vpack.c.b16 %v624, %v620
        %v809 = vpack.c.b16 %v625, %v621
        %v810 = vpack.c.b16 %v626, %v622
        %v811 = vpack.c.b16 %v627, %v623
        %v812 = vpack.c.b16 %v632, %v628
        %v813 = vpack.c.b16 %v633, %v629
        %v814 = vpack.c.b16 %v634, %v630
        %v815 = vpack.c.b16 %v635, %v631
        %v816 = vpack.c.b16 %v640, %v636
        %v817 = vpack.c.b16 %v641, %v637
        %v818 = vpack.c.b16 %v642, %v638
        %v819 = vpack.c.b16 %v643, %v639
        %v820 = vpack.c.b16 %v648, %v644
        %v821 = vpack.c.b16 %v649, %v645
        %v822 = vpack.c.b16 %v650, %v646
        %v823 = vpack.c.b16 %v651, %v647
        %v824 = vpack.c.b16 %v656, %v652
        %v825 = vpack.c.b16 %v657, %v653
        %v826 = vpack.c.b16 %v658, %v654
        %v827 = vpack.c.b16 %v659, %v655
        %v828 = vpack.c.b16 %v664, %v660
        %v829 = vpack.c.b16 %v665, %v661
        %v830 = vpack.c.b16 %v666, %v662
        %v831 = vpack.c.b16 %v667, %v663
        %v832 = vpack.c.b16 %v672, %v668
        %v833 = vpack.c.b16 %v673, %v669
        %v834 = vpack.c.b16 %v674, %v670
        %v835 = vpack.c.b16 %v675, %v671
        %v836 = vpack.c.b16 %v680, %v676
        %v837 = vpack.c.b16 %v681, %v677
        %v838 = vpack.c.b16 %v682, %v678
        %v839 = vpack.c.b16 %v683, %v679
        %v840 = vpack.c.b16 %v688, %v684
        %v841 = vpack.c.b16 %v689, %v685
        %v842 = vpack.c.b16 %v690, %v686
        %v843 = vpack.c.b16 %v691, %v687
        %v844 = vpack.c.b16 %v696, %v692
        %v845 = vpack.c.b16 %v697, %v693
        %v846 = vpack.c.b16 %v698, %v694
        %v847 = vpack.c.b16 %v699, %v695
        %v848 = vpack.c.b16 %v704, %v700
        %v849 = vpack.c.b16 %v705, %v701
        %v850 = vpack.c.b16 %v706, %v702
        %v851 = vpack.c.b16 %v707, %v703
        %v852 = vpack.c.b16 %v712, %v708
        %v853 = vpack.c.b16 %v713, %v709
        %v854 = vpack.c.b16 %v714, %v710
        %v855 = vpack.c.b16 %v715, %v711
        %v856 = vpack.c.b16 %v720, %v716
        %v857 = vpack.c.b16 %v721, %v717
        %v858 = vpack.c.b16 %v722, %v718
        %v859 = vpack.c.b16 %v723, %v719
        %v860 = vpack.c.b16 %v728, %v724
        %v861 = vpack.c.b16 %v729, %v725
        %v862 = vpack.c.b16 %v730, %v726
        %v863 = vpack.c.b16 %v731, %v727
        %v864 = vpack.c.b16 %v736, %v732
        %v865 = vpack.c.b16 %v737, %v733
        %v866 = vpack.c.b16 %v738, %v734
        %v867 = vpack.c.b16 %v739, %v735
        %996 = vmatprep.subr.bf16.mxu0 %v769
        %997 = vmatpush1.bf16.msra.mxu0 %v768
        %998 = vmatprep.subr.bf16.mxu0 %v765
        %999 = vmatpush1.bf16.msra.mxu0 %v764
        %1000 = vmatprep.subr.bf16.mxu0 %v761
        %1001 = vmatpush1.bf16.msra.mxu0 %v760
        %1002 = vmatprep.subr.bf16.mxu0 %v757
        %1003 = vmatpush1.bf16.msra.mxu0 %v756
        %1004 = vmatprep.subr.bf16.mxu0 %v753
        %1005 = vmatpush1.bf16.msra.mxu0 %v752
        %1006 = vmatprep.subr.bf16.mxu0 %v749
        %1007 = vmatpush1.bf16.msra.mxu0 %v748
        %1008 = vmatprep.subr.bf16.mxu0 %v745
        %1009 = vmatpush1.bf16.msra.mxu0 %v744
        %1010 = vmatprep.subr.bf16.mxu0 %v741
        %1011 = vmatpush1.bf16.msra.mxu0 %v740
        %1012 = vmatprep.subr.bf16.mxu0 %v801
        %1013 = vmatpush2.bf16.msra.mxu0 %v800
        %1014 = vmatprep.subr.bf16.mxu0 %v797
        %1015 = vmatpush2.bf16.msra.mxu0 %v796
        %1016 = vmatprep.subr.bf16.mxu0 %v793
        %1017 = vmatpush2.bf16.msra.mxu0 %v792
        %1018 = vmatprep.subr.bf16.mxu0 %v789
        %1019 = vmatpush2.bf16.msra.mxu0 %v788
        %1020 = vmatprep.subr.bf16.mxu0 %v785
        %1021 = vmatpush2.bf16.msra.mxu0 %v784
        %1022 = vmatprep.subr.bf16.mxu0 %v781
        %1023 = vmatpush2.bf16.msra.mxu0 %v780
        %1024 = vmatprep.subr.bf16.mxu0 %v777
        %1025 = vmatpush2.bf16.msra.mxu0 %v776
        %1026 = vmatprep.subr.bf16.mxu0 %v773
        %1027 = vmatpush2.bf16.msra.mxu0 %v772
        %1028 = vmatprep.mubr.bf16.mxu0 %v341
        %1029 = vmatmul.mubr.bf16.gmra.mxu0 %v340
        %v1030 = vpop.f32.mrf.mxu0
        %v1031 = vadd.f32 0.0, %v1030
        %v1032 = vpop.f32.mrf.mxu0
        %v1033 = vadd.f32 0.0, %v1032
        %v1034 = vpop.f32.mrf.mxu0
        %v1035 = vadd.f32 0.0, %v1034
        %v1036 = vpop.f32.mrf.mxu0
        %v1037 = vadd.f32 0.0, %v1036
        %1038 = vmatprep.mubr.bf16.mxu0 %v345
        %1039 = vmatmul.mubr.bf16.gmra.mxu0 %v344
        %v1040 = vpop.f32.mrf.mxu0
        %v1041 = vadd.f32 0.0, %v1040
        %v1042 = vpop.f32.mrf.mxu0
        %v1043 = vadd.f32 0.0, %v1042
        %v1044 = vpop.f32.mrf.mxu0
        %v1045 = vadd.f32 0.0, %v1044
        %v1046 = vpop.f32.mrf.mxu0
        %v1047 = vadd.f32 0.0, %v1046
        %1048 = vdwg.mxu0
        %1049 = vmatprep.subr.bf16.mxu0 %v833
        %1050 = vmatpush1.bf16.msra.mxu0 %v832
        %1051 = vmatprep.subr.bf16.mxu0 %v829
        %1052 = vmatpush1.bf16.msra.mxu0 %v828
        %1053 = vmatprep.subr.bf16.mxu0 %v825
        %1054 = vmatpush1.bf16.msra.mxu0 %v824
        %1055 = vmatprep.subr.bf16.mxu0 %v821
        %1056 = vmatpush1.bf16.msra.mxu0 %v820
        %1057 = vmatprep.subr.bf16.mxu0 %v817
        %1058 = vmatpush1.bf16.msra.mxu0 %v816
        %1059 = vmatprep.subr.bf16.mxu0 %v813
        %1060 = vmatpush1.bf16.msra.mxu0 %v812
        %1061 = vmatprep.subr.bf16.mxu0 %v809
        %1062 = vmatpush1.bf16.msra.mxu0 %v808
        %1063 = vmatprep.subr.bf16.mxu0 %v805
        %1064 = vmatpush1.bf16.msra.mxu0 %v804
        %1065 = vmatprep.subr.bf16.mxu0 %v865
        %1066 = vmatpush2.bf16.msra.mxu0 %v864
        %1067 = vmatprep.subr.bf16.mxu0 %v861
        %1068 = vmatpush2.bf16.msra.mxu0 %v860
        %1069 = vmatprep.subr.bf16.mxu0 %v857
        %1070 = vmatpush2.bf16.msra.mxu0 %v856
        %1071 = vmatprep.subr.bf16.mxu0 %v853
        %1072 = vmatpush2.bf16.msra.mxu0 %v852
        %1073 = vmatprep.subr.bf16.mxu0 %v849
        %1074 = vmatpush2.bf16.msra.mxu0 %v848
        %1075 = vmatprep.subr.bf16.mxu0 %v845
        %1076 = vmatpush2.bf16.msra.mxu0 %v844
        %1077 = vmatprep.subr.bf16.mxu0 %v841
        %1078 = vmatpush2.bf16.msra.mxu0 %v840
        %1079 = vmatprep.subr.bf16.mxu0 %v837
        %1080 = vmatpush2.bf16.msra.mxu0 %v836
        %1081 = vmatprep.mubr.bf16.mxu0 %v343
        %1082 = vmatmul.mubr.bf16.gmra.mxu0 %v342
        %v1083 = vpop.f32.mrf.mxu0
        %v1084 = vadd.f32 %v1031, %v1083
        %v1085 = vpop.f32.mrf.mxu0
        %v1086 = vadd.f32 %v1033, %v1085
        %v1087 = vpop.f32.mrf.mxu0
        %v1088 = vadd.f32 %v1035, %v1087
        %v1089 = vpop.f32.mrf.mxu0
        %v1090 = vadd.f32 %v1037, %v1089
        %1091 = vmatprep.mubr.bf16.mxu0 %v347
        %1092 = vmatmul.mubr.bf16.gmra.mxu0 %v346
        %v1093 = vpop.f32.mrf.mxu0
        %v1094 = vadd.f32 %v1041, %v1093
        %v1095 = vpop.f32.mrf.mxu0
        %v1096 = vadd.f32 %v1043, %v1095
        %v1097 = vpop.f32.mrf.mxu0
        %v1098 = vadd.f32 %v1045, %v1097
        %v1099 = vpop.f32.mrf.mxu0
        %v1100 = vadd.f32 %v1047, %v1099
        %1101 = vdwg.mxu0
        %1102 = vmatprep.subr.bf16.mxu0 %v771
        %1103 = vmatpush1.bf16.msra.mxu0 %v770
        %1104 = vmatprep.subr.bf16.mxu0 %v767
        %1105 = vmatpush1.bf16.msra.mxu0 %v766
        %1106 = vmatprep.subr.bf16.mxu0 %v763
        %1107 = vmatpush1.bf16.msra.mxu0 %v762
        %1108 = vmatprep.subr.bf16.mxu0 %v759
        %1109 = vmatpush1.bf16.msra.mxu0 %v758
        %1110 = vmatprep.subr.bf16.mxu0 %v755
        %1111 = vmatpush1.bf16.msra.mxu0 %v754
        %1112 = vmatprep.subr.bf16.mxu0 %v751
        %1113 = vmatpush1.bf16.msra.mxu0 %v750
        %1114 = vmatprep.subr.bf16.mxu0 %v747
        %1115 = vmatpush1.bf16.msra.mxu0 %v746
        %1116 = vmatprep.subr.bf16.mxu0 %v743
        %1117 = vmatpush1.bf16.msra.mxu0 %v742
        %1118 = vmatprep.subr.bf16.mxu0 %v803
        %1119 = vmatpush2.bf16.msra.mxu0 %v802
        %1120 = vmatprep.subr.bf16.mxu0 %v799
        %1121 = vmatpush2.bf16.msra.mxu0 %v798
        %1122 = vmatprep.subr.bf16.mxu0 %v795
        %1123 = vmatpush2.bf16.msra.mxu0 %v794
        %1124 = vmatprep.subr.bf16.mxu0 %v791
        %1125 = vmatpush2.bf16.msra.mxu0 %v790
        %1126 = vmatprep.subr.bf16.mxu0 %v787
        %1127 = vmatpush2.bf16.msra.mxu0 %v786
        %1128 = vmatprep.subr.bf16.mxu0 %v783
        %1129 = vmatpush2.bf16.msra.mxu0 %v782
        %1130 = vmatprep.subr.bf16.mxu0 %v779
        %1131 = vmatpush2.bf16.msra.mxu0 %v778
        %1132 = vmatprep.subr.bf16.mxu0 %v775
        %1133 = vmatpush2.bf16.msra.mxu0 %v774
        %1134 = vmatprep.mubr.bf16.mxu0 %v341
        %1135 = vmatmul.mubr.bf16.gmra.mxu0 %v340
        %v1136 = vpop.f32.mrf.mxu0
        %v1137 = vadd.f32 0.0, %v1136
        %v1138 = vpop.f32.mrf.mxu0
        %v1139 = vadd.f32 0.0, %v1138
        %v1140 = vpop.f32.mrf.mxu0
        %v1141 = vadd.f32 0.0, %v1140
        %v1142 = vpop.f32.mrf.mxu0
        %v1143 = vadd.f32 0.0, %v1142
        %1144 = vmatprep.mubr.bf16.mxu0 %v345
        %1145 = vmatmul.mubr.bf16.gmra.mxu0 %v344
        %v1146 = vpop.f32.mrf.mxu0
        %v1147 = vadd.f32 0.0, %v1146
        %v1148 = vpop.f32.mrf.mxu0
        %v1149 = vadd.f32 0.0, %v1148
        %v1150 = vpop.f32.mrf.mxu0
        %v1151 = vadd.f32 0.0, %v1150
        %v1152 = vpop.f32.mrf.mxu0
        %v1153 = vadd.f32 0.0, %v1152
        %1154 = vdwg.mxu0
        %1155 = vmatprep.subr.bf16.mxu0 %v835
        %1156 = vmatpush1.bf16.msra.mxu0 %v834
        %1157 = vmatprep.subr.bf16.mxu0 %v831
        %1158 = vmatpush1.bf16.msra.mxu0 %v830
        %1159 = vmatprep.subr.bf16.mxu0 %v827
        %1160 = vmatpush1.bf16.msra.mxu0 %v826
        %1161 = vmatprep.subr.bf16.mxu0 %v823
        %1162 = vmatpush1.bf16.msra.mxu0 %v822
        %1163 = vmatprep.subr.bf16.mxu0 %v819
        %1164 = vmatpush1.bf16.msra.mxu0 %v818
        %1165 = vmatprep.subr.bf16.mxu0 %v815
        %1166 = vmatpush1.bf16.msra.mxu0 %v814
        %1167 = vmatprep.subr.bf16.mxu0 %v811
        %1168 = vmatpush1.bf16.msra.mxu0 %v810
        %1169 = vmatprep.subr.bf16.mxu0 %v807
        %1170 = vmatpush1.bf16.msra.mxu0 %v806
        %1171 = vmatprep.subr.bf16.mxu0 %v867
        %1172 = vmatpush2.bf16.msra.mxu0 %v866
        %1173 = vmatprep.subr.bf16.mxu0 %v863
        %1174 = vmatpush2.bf16.msra.mxu0 %v862
        %1175 = vmatprep.subr.bf16.mxu0 %v859
        %1176 = vmatpush2.bf16.msra.mxu0 %v858
        %1177 = vmatprep.subr.bf16.mxu0 %v855
        %1178 = vmatpush2.bf16.msra.mxu0 %v854
        %1179 = vmatprep.subr.bf16.mxu0 %v851
        %1180 = vmatpush2.bf16.msra.mxu0 %v850
        %1181 = vmatprep.subr.bf16.mxu0 %v847
        %1182 = vmatpush2.bf16.msra.mxu0 %v846
        %1183 = vmatprep.subr.bf16.mxu0 %v843
        %1184 = vmatpush2.bf16.msra.mxu0 %v842
        %1185 = vmatprep.subr.bf16.mxu0 %v839
        %1186 = vmatpush2.bf16.msra.mxu0 %v838
        %1187 = vmatprep.mubr.bf16.mxu0 %v343
        %1188 = vmatmul.mubr.bf16.gmra.mxu0 %v342
        %v1189 = vpop.f32.mrf.mxu0
        %v1190 = vadd.f32 %v1137, %v1189
        %v1191 = vpop.f32.mrf.mxu0
        %v1192 = vadd.f32 %v1139, %v1191
        %v1193 = vpop.f32.mrf.mxu0
        %v1194 = vadd.f32 %v1141, %v1193
        %v1195 = vpop.f32.mrf.mxu0
        %v1196 = vadd.f32 %v1143, %v1195
        %1197 = vmatprep.mubr.bf16.mxu0 %v347
        %1198 = vmatmul.mubr.bf16.gmra.mxu0 %v346
        %v1199 = vpop.f32.mrf.mxu0
        %v1200 = vadd.f32 %v1147, %v1199
        %v1201 = vpop.f32.mrf.mxu0
        %v1202 = vadd.f32 %v1149, %v1201
        %v1203 = vpop.f32.mrf.mxu0
        %v1204 = vadd.f32 %v1151, %v1203
        %v1205 = vpop.f32.mrf.mxu0
        %v1206 = vadd.f32 %v1153, %v1205
        %1207 = vdwg.mxu0
        %v1208 = vlaneseq
        %v1209 = vand.u32 %v1208, 127
        %v1210 = vadd.s32 %v1209, 128
        %vm1211 = vcmp.eq.s32.totalorder %v1209, 0
        %vm1212 = vcmp.eq.s32.totalorder %v1210, 0
        %v1213 = vand.u32 2147483647, %v1084
        %v1214 = vand.u32 2147483647, %v1086
        %v1215 = vand.u32 2147483647, %v1088
        %v1216 = vand.u32 2147483647, %v1090
        %v1217 = vmul.f32 %v1084, %v1084
        %v1218 = vmul.f32 %v1086, %v1086
        %v1219 = vmul.f32 %v1088, %v1088
        %v1220 = vmul.f32 %v1090, %v1090
        %v1221 = vmul.f32 %v1190, %v1190
        %v1222 = vmul.f32 %v1192, %v1192
        %v1223 = vmul.f32 %v1194, %v1194
        %v1224 = vmul.f32 %v1196, %v1196
        %v1225 = vadd.f32 %v1217, %v1221
        %v1226 = vadd.f32 %v1218, %v1222
        %v1227 = vadd.f32 %v1219, %v1223
        %v1228 = vadd.f32 %v1220, %v1224
        %v1229 = vrsqrt.pop %v1225
        %v1230 = vmul.f32 %v1225, %v1229
        %vm1231 = vcmp.eq.f32.partialorder %v1225, inf
        %v1232 = vsel %vm1231, %v1225, %v1230
        %vm1233 = vcmp.eq.f32.partialorder %v1225, 0.0
        %v1234 = vand.u32 %v1225, 2147483648
        %v1235 = vsel %vm1233, %v1234, %v1232
        %v1236 = vrsqrt.pop %v1226
        %v1237 = vmul.f32 %v1226, %v1236
        %vm1238 = vcmp.eq.f32.partialorder %v1226, inf
        %v1239 = vsel %vm1238, %v1226, %v1237
        %vm1240 = vcmp.eq.f32.partialorder %v1226, 0.0
        %v1241 = vand.u32 %v1226, 2147483648
        %v1242 = vsel %vm1240, %v1241, %v1239
        %v1243 = vrsqrt.pop %v1227
        %v1244 = vmul.f32 %v1227, %v1243
        %vm1245 = vcmp.eq.f32.partialorder %v1227, inf
        %v1246 = vsel %vm1245, %v1227, %v1244
        %vm1247 = vcmp.eq.f32.partialorder %v1227, 0.0
        %v1248 = vand.u32 %v1227, 2147483648
        %v1249 = vsel %vm1247, %v1248, %v1246
        %v1250 = vrsqrt.pop %v1228
        %v1251 = vmul.f32 %v1228, %v1250
        %vm1252 = vcmp.eq.f32.partialorder %v1228, inf
        %v1253 = vsel %vm1252, %v1228, %v1251
        %vm1254 = vcmp.eq.f32.partialorder %v1228, 0.0
        %v1255 = vand.u32 %v1228, 2147483648
        %v1256 = vsel %vm1254, %v1255, %v1253
        %v1257 = vsel %vm1211, %v1213, %v1235
        %v1258 = vsel %vm1212, %v1214, %v1242
        %v1259 = vsel %vm1211, %v1215, %v1249
        %v1260 = vsel %vm1212, %v1216, %v1256
        %v1261 = vand.u32 2147483647, %v1094
        %v1262 = vand.u32 2147483647, %v1096
        %v1263 = vand.u32 2147483647, %v1098
        %v1264 = vand.u32 2147483647, %v1100
        %v1265 = vmul.f32 %v1094, %v1094
        %v1266 = vmul.f32 %v1096, %v1096
        %v1267 = vmul.f32 %v1098, %v1098
        %v1268 = vmul.f32 %v1100, %v1100
        %v1269 = vmul.f32 %v1200, %v1200
        %v1270 = vmul.f32 %v1202, %v1202
        %v1271 = vmul.f32 %v1204, %v1204
        %v1272 = vmul.f32 %v1206, %v1206
        %v1273 = vadd.f32 %v1265, %v1269
        %v1274 = vadd.f32 %v1266, %v1270
        %v1275 = vadd.f32 %v1267, %v1271
        %v1276 = vadd.f32 %v1268, %v1272
        %v1277 = vrsqrt.pop %v1273
        %v1278 = vmul.f32 %v1273, %v1277
        %vm1279 = vcmp.eq.f32.partialorder %v1273, inf
        %v1280 = vsel %vm1279, %v1273, %v1278
        %vm1281 = vcmp.eq.f32.partialorder %v1273, 0.0
        %v1282 = vand.u32 %v1273, 2147483648
        %v1283 = vsel %vm1281, %v1282, %v1280
        %v1284 = vrsqrt.pop %v1274
        %v1285 = vmul.f32 %v1274, %v1284
        %vm1286 = vcmp.eq.f32.partialorder %v1274, inf
        %v1287 = vsel %vm1286, %v1274, %v1285
        %vm1288 = vcmp.eq.f32.partialorder %v1274, 0.0
        %v1289 = vand.u32 %v1274, 2147483648
        %v1290 = vsel %vm1288, %v1289, %v1287
        %v1291 = vrsqrt.pop %v1275
        %v1292 = vmul.f32 %v1275, %v1291
        %vm1293 = vcmp.eq.f32.partialorder %v1275, inf
        %v1294 = vsel %vm1293, %v1275, %v1292
        %vm1295 = vcmp.eq.f32.partialorder %v1275, 0.0
        %v1296 = vand.u32 %v1275, 2147483648
        %v1297 = vsel %vm1295, %v1296, %v1294
        %v1298 = vrsqrt.pop %v1276
        %v1299 = vmul.f32 %v1276, %v1298
        %vm1300 = vcmp.eq.f32.partialorder %v1276, inf
        %v1301 = vsel %vm1300, %v1276, %v1299
        %vm1302 = vcmp.eq.f32.partialorder %v1276, 0.0
        %v1303 = vand.u32 %v1276, 2147483648
        %v1304 = vsel %vm1302, %v1303, %v1301
        %v1305 = vsel %vm1211, %v1261, %v1283
        %v1306 = vsel %vm1212, %v1262, %v1290
        %v1307 = vsel %vm1211, %v1263, %v1297
        %v1308 = vsel %vm1212, %v1264, %v1304
        %v1309 = vsub.f32 %v1257, %v1305
        %v1310 = vsub.f32 %v1258, %v1306
        %v1311 = vsub.f32 %v1259, %v1307
        %v1312 = vsub.f32 %v1260, %v1308
        %v1313 = vand.u32 2147483647, %v1309
        %v1314 = vand.u32 2147483647, %v1310
        %v1315 = vand.u32 2147483647, %v1311
        %v1316 = vand.u32 2147483647, %v1312
        %v1317 = vand.u32 2147483647, %v1190
        %v1318 = vand.u32 2147483647, %v1194
        %v1319 = vand.u32 2147483647, %v1200
        %v1320 = vand.u32 2147483647, %v1204
        %v1321 = vsub.f32 %v1317, %v1319
        %v1322 = vsub.f32 %v1318, %v1320
        %v1323 = vand.u32 2147483647, %v1321
        %v1324 = vand.u32 2147483647, %v1322
        %1326 = vset.pattern.permute.xlu0 0
        %1327 = vperm.xlu0 %1326, %v1323
        %v1328 = vpop.permute.xlu0 %1327
        %1331 = vset.pattern.permute.xlu0 0
        %1332 = vperm.xlu0 %1331, %v1324
        %v1333 = vpop.permute.xlu0 %1332
        %v1335 = vsel %vm1211, %v1328, 0.0
        %v1336 = vsel %vm1212, %v1328, 0.0
        %v1337 = vsel %vm1211, %v1333, 0.0
        %v1338 = vsel %vm1212, %v1333, 0.0
        %v1339 = vadd.f32 %v1313, %v1335
        %v1340 = vadd.f32 %v1314, %v1336
        %v1341 = vadd.f32 %v1315, %v1337
        %v1342 = vadd.f32 %v1316, %v1338
        %v1343 = vadd.f32 %v1339, %v1341
        %v1344 = vadd.f32 %v1340, %v1342
        %1345 = vst [vmem:[%s179] sm:$0xff] %v1343
        %1346 = vst [vmem:[%s179 + $0x8] sm:$0xff] %v1344
        %p1347 = scmp.lt.s32.totalorder %s13, 1
        %s1348 = scalar_select %p1347, %s13, 1
        %s1349 = smul.addr %s1348, 2
        %s1350 = smul.addr %s1349, 8
        %s1351 = scalar_lea.vmem %s2, %s1350
        // Predicated region
        $region52: #{multi_resolution_stft_loss.6} parent=46 // pred_check
          %p1352 = pneg %p78
        $region53: #{multi_resolution_stft_loss.6} parent=46 // pred_check_branch
          %1354 = sbr.rel (%p1352) target = $region55
        $region54: #{multi_resolution_stft_loss.6} parent=46 // pred_region
          _
        $region55: #{multi_resolution_stft_loss.6} parent=46 // pred_fallthru
          _
      $region47: #{multi_resolution_stft_loss.6} parent=5 // pred_fallthru
        _
      %p1355 = scmp.le.s32.totalorder 2, %s8
      // Predicated region
      $region56: #{multi_resolution_stft_loss.6} parent=5 // pred_check
        %p1356 = pneg %p1355
      $region57: #{multi_resolution_stft_loss.6} parent=5 // pred_check_branch
        %1358 = sbr.rel (%p1356) target = $region59
      $region58: #{multi_resolution_stft_loss.6} parent=5 // pred_region
        %s1359 = ssub.s32 %s8, 2
        // Predicated region
        $region60: #{multi_resolution_stft_loss.6} parent=58 // pred_check
          %p1360 = pneg %p84
        $region61: #{multi_resolution_stft_loss.6} parent=58 // pred_check_branch
          %1362 = sbr.rel (%p1360) target = $region63
        $region62: #{multi_resolution_stft_loss.6} parent=58 // pred_region
          %p1363 = scmp.lt.s32.totalorder %s14, 1
          %s1364 = scalar_select %p1363, %s14, 1
          %s1365 = smul.addr %s1364, 2
          %s1366 = smul.addr %s1365, 8
          %s1367 = scalar_lea.vmem %s2, %s1366
        $region63: #{multi_resolution_stft_loss.6} parent=58 // pred_fallthru
          _
      $region59: #{multi_resolution_stft_loss.6} parent=5 // pred_fallthru
        _
    $region6: #{multi_resolution_stft_loss.6} parent=1 // loop_footer
      %s12 = sadd.s32 1, %s8
    $region7: #{multi_resolution_stft_loss.6} parent=1 // loop_footer_branch
      %7 = sbr.rel target = $region3
    $region8: #{multi_resolution_stft_loss.6} parent=1 // loop_exit
      _

// kernel: multi_resolution_stft_loss.7
$region0: #{multi_resolution_stft_loss.7}
  #allocation0 [shape = 'u32[]', space=smem, size = 0x4, offset = 0x4, fixed_abs, tag = 'smem constant byte address 0x4 - core index']
  #allocation1 [shape = 'u32[144,128]{1,0:T(1,128)}', space=vmem, size = 0x12000, scoped, tag = 'internal scratch']
  %s0 = inlined_call_operand.vmem [shape: bf16[2,32,1024], index: 0, kind: input, shape index: {}]
  %s1 = inlined_call_operand.vmem [shape: bf16[1024,1024], index: 1, kind: input, shape index: {}]
  %s2 = inlined_call_operand.vmem [shape: f32[2,8,512], index: 2, kind: output, shape index: {}]
  %s3 = sld [smem:[#allocation0]]
  $region64: #{multi_resolution_stft_loss.7} parent=0
    _
  %s5 = ssub.s32 1, %s3
  %s6 = scalar_select 0, %s5, %s3
  $region1: #{multi_resolution_stft_loss.7} parent=0
    #allocation2 [shape = 'u8[131072]{0}', space=vmem, size = 0x20000, scoped, tag = 'input window, operand 0']
    loop: start=0, step=1, limit=4
    $region2: #{multi_resolution_stft_loss.7} parent=1 // loop_pre_header
      _
    $region3: #{multi_resolution_stft_loss.7} parent=1 // loop_header
      %s8 = sphi 0, %s12
      %p9 = scmp.ge.s32.totalorder %s8, 4
      %s18 = sphi 0, %s20
      %s21 = sphi 0, %s18
      %s22 = sphi 0, %s21
      %s38 = sphi 0, %s22
      %s42 = sphi 0, %s42
      %s44 = sphi 0, %s42
      %s45 = sphi 0, %s44
      %s59 = sphi 0, %s45
      %s65 = sphi 0, %s67
      %s68 = sphi 0, %s65
      %s69 = sphi 0, %s68
      %s85 = sphi 0, %s69
    $region4: #{multi_resolution_stft_loss.7} parent=1 // loop_header_branch
      %11 = sbr.rel (%p9) target = $region8
    $region5: #{multi_resolution_stft_loss.7} parent=1 // loop_body
      %s13 = ssub.s32 %s8, 1
      %s14 = ssub.s32 %s8, 2
      %s15 = sadd.s32 %s8, 1
      %s16 = ssub.s32 %s8, %s15
      %p17 = scmp.eq.s32.totalorder %s16, 0
      %s19 = sadd.s32 %s18, 1
      %s20 = scalar_select %p17, %s18, %s19
      %p23 = pneg %p17
      %p24 = scmp.eq.s32.totalorder %s8, 1
      %p25 = por %p23, %p24
      %p26 = scmp.ne.s32.totalorder %s18, %s21
      %p27 = scmp.eq.s32.totalorder %s8, 0
      %p28 = por %p26, %p27
      %p29 = scmp.ne.s32.totalorder %s18, %s21
      %p30 = scmp.eq.s32.totalorder %s13, 1
      %p31 = por %p29, %p30
      %p32 = scmp.ne.s32.totalorder %s21, %s22
      %p33 = scmp.eq.s32.totalorder %s13, 0
      %p34 = por %p32, %p33
      %p35 = scmp.ne.s32.totalorder %s21, %s22
      %p36 = scmp.eq.s32.totalorder %s14, 1
      %p37 = por %p35, %p36
      %p39 = scmp.ne.s32.totalorder %s22, %s38
      %p40 = scmp.eq.s32.totalorder %s14, 0
      %p41 = por %p39, %p40
      %s43 = sadd.s32 %s42, 1
      %p46 = scmp.eq.s32.totalorder %s8, 1
      %p47 = scmp.ne.s32.totalorder %s42, %s44
      %p48 = scmp.eq.s32.totalorder %s8, 0
      %p49 = por %p47, %p48
      %p50 = scmp.ne.s32.totalorder %s42, %s44
      %p51 = scmp.eq.s32.totalorder %s13, 1
      %p52 = por %p50, %p51
      %p53 = scmp.ne.s32.totalorder %s44, %s45
      %p54 = scmp.eq.s32.totalorder %s13, 0
      %p55 = por %p53, %p54
      %p56 = scmp.ne.s32.totalorder %s44, %s45
      %p57 = scmp.eq.s32.totalorder %s14, 1
      %p58 = por %p56, %p57
      %p60 = scmp.ne.s32.totalorder %s45, %s59
      %p61 = scmp.eq.s32.totalorder %s14, 0
      %p62 = por %p60, %p61
      %s63 = ssub.s32 %s8, %s15
      %p64 = scmp.eq.s32.totalorder %s63, 0
      %s66 = sadd.s32 %s65, 1
      %s67 = scalar_select %p64, %s65, %s66
      %p70 = pneg %p64
      %p71 = scmp.eq.s32.totalorder %s8, 1
      %p72 = por %p70, %p71
      %p73 = scmp.ne.s32.totalorder %s65, %s68
      %p74 = scmp.eq.s32.totalorder %s8, 0
      %p75 = por %p73, %p74
      %p76 = scmp.ne.s32.totalorder %s65, %s68
      %p77 = scmp.eq.s32.totalorder %s13, 1
      %p78 = por %p76, %p77
      %p79 = scmp.ne.s32.totalorder %s68, %s69
      %p80 = scmp.eq.s32.totalorder %s13, 0
      %p81 = por %p79, %p80
      %p82 = scmp.ne.s32.totalorder %s68, %s69
      %p83 = scmp.eq.s32.totalorder %s14, 1
      %p84 = por %p82, %p83
      %p86 = scmp.ne.s32.totalorder %s69, %s85
      %p87 = scmp.eq.s32.totalorder %s14, 0
      %p88 = por %p86, %p87
      %p89 = scmp.le.s32.totalorder 1, %s8
      %p90 = scmp.lt.s32.totalorder %s8, 3
      %p91 = pnand %p89, %p90
      %p92 = pneg %p91
      // Predicated region
      $region9: #{multi_resolution_stft_loss.7} parent=5 // pred_check
        _
      $region10: #{multi_resolution_stft_loss.7} parent=5 // pred_check_branch
        %94 = sbr.rel (%p91) target = $region12
      $region11: #{multi_resolution_stft_loss.7} parent=5 // pred_region
        %s95 = ssub.s32 %s8, 1
        // Predicated region
        $region13: #{multi_resolution_stft_loss.7} parent=11 // pred_check
          %p96 = pneg %p55
        $region14: #{multi_resolution_stft_loss.7} parent=11 // pred_check_branch
          %98 = sbr.rel (%p96) target = $region16
        $region15: #{multi_resolution_stft_loss.7} parent=11 // pred_region
          _
        $region16: #{multi_resolution_stft_loss.7} parent=11 // pred_fallthru
          _
      $region12: #{multi_resolution_stft_loss.7} parent=5 // pred_fallthru
        _
      %p99 = scmp.lt.s32.totalorder %s8, 2
      // Predicated region
      $region17: #{multi_resolution_stft_loss.7} parent=5 // pred_check
        %p100 = pneg %p99
      $region18: #{multi_resolution_stft_loss.7} parent=5 // pred_check_branch
        %102 = sbr.rel (%p100) target = $region20
      $region19: #{multi_resolution_stft_loss.7} parent=5 // pred_region
        // Predicated region
        $region21: #{multi_resolution_stft_loss.7} parent=19 // pred_check
          %p103 = pneg %p28
        $region22: #{multi_resolution_stft_loss.7} parent=19 // pred_check_branch
          %105 = sbr.rel (%p103) target = $region24
        $region23: #{multi_resolution_stft_loss.7} parent=19 // pred_region
          %s106 = sand.u32 %s18, 1
          %s107 = sand.u32 %s18, 1
          %s108 = smul.addr %s107, 128
          %s109 = scalar_lea.vmem [#allocation2], %s108
          %s110 = smul.u32 2, %s8
          %s111 = smul.addr %s110, 8
          %s112 = smul.addr %s111, 4
          %s113 = scalar_lea.vmem %s0, %s112
          // Predicated region
          $region25: #{multi_resolution_stft_loss.7} parent=23 // pred_check
            _
          $region26: #{multi_resolution_stft_loss.7} parent=23 // pred_check_branch
            %115 = sbr.rel (0) target = $region28
          $region27: #{multi_resolution_stft_loss.7} parent=23 // pred_region
            // Predicated region
            $region29: #{multi_resolution_stft_loss.7} parent=27 // pred_check
              _
            $region30: #{multi_resolution_stft_loss.7} parent=27 // pred_check_branch
              %117 = sbr.rel (0) target = $region32
            $region31: #{multi_resolution_stft_loss.7} parent=27 // pred_region
              loop: start=0, step=1, limit=1
              $region33: #{multi_resolution_stft_loss.7} parent=31 // loop_pre_header
                _
              $region34: #{multi_resolution_stft_loss.7} parent=31 // loop_header
                %s119 = sphi 0, %s123
                %p120 = scmp.ge.s32.totalorder %s119, 1
                %s124 = sphi %s113, %s113
                %s125 = sphi %s109, %s109
              $region35: #{multi_resolution_stft_loss.7} parent=31 // loop_header_branch
                %122 = sbr.rel (%p120) target = $region39
              $region36: #{multi_resolution_stft_loss.7} parent=31 // loop_body
                %v126 = vld [vmem:[%s124] sm:$0xff]
                %127 = vst [vmem:[%s125] sm:$0xff] %v126
                %v128 = vld [vmem:[%s124 + $0x8] sm:$0xff]
                %129 = vst [vmem:[%s125 + $0x8] sm:$0xff] %v128
                %v130 = vld [vmem:[%s124 + $0x10] sm:$0xff]
                %131 = vst [vmem:[%s125 + $0x10] sm:$0xff] %v130
                %v132 = vld [vmem:[%s124 + $0x18] sm:$0xff]
                %133 = vst [vmem:[%s125 + $0x18] sm:$0xff] %v132
                %v134 = vld [vmem:[%s124 + $0x20] sm:$0xff]
                %135 = vst [vmem:[%s125 + $0x20] sm:$0xff] %v134
                %v136 = vld [vmem:[%s124 + $0x28] sm:$0xff]
                %137 = vst [vmem:[%s125 + $0x28] sm:$0xff] %v136
                %v138 = vld [vmem:[%s124 + $0x30] sm:$0xff]
                %139 = vst [vmem:[%s125 + $0x30] sm:$0xff] %v138
                %v140 = vld [vmem:[%s124 + $0x38] sm:$0xff]
                %141 = vst [vmem:[%s125 + $0x38] sm:$0xff] %v140
                %v142 = vld [vmem:[%s124 + $0x80] sm:$0xff]
                %143 = vst [vmem:[%s125 + $0x40] sm:$0xff] %v142
                %v144 = vld [vmem:[%s124 + $0x88] sm:$0xff]
                %145 = vst [vmem:[%s125 + $0x48] sm:$0xff] %v144
                %v146 = vld [vmem:[%s124 + $0x90] sm:$0xff]
                %147 = vst [vmem:[%s125 + $0x50] sm:$0xff] %v146
                %v148 = vld [vmem:[%s124 + $0x98] sm:$0xff]
                %149 = vst [vmem:[%s125 + $0x58] sm:$0xff] %v148
                %v150 = vld [vmem:[%s124 + $0xa0] sm:$0xff]
                %151 = vst [vmem:[%s125 + $0x60] sm:$0xff] %v150
                %v152 = vld [vmem:[%s124 + $0xa8] sm:$0xff]
                %153 = vst [vmem:[%s125 + $0x68] sm:$0xff] %v152
                %v154 = vld [vmem:[%s124 + $0xb0] sm:$0xff]
                %155 = vst [vmem:[%s125 + $0x70] sm:$0xff] %v154
                %v156 = vld [vmem:[%s124 + $0xb8] sm:$0xff]
                %157 = vst [vmem:[%s125 + $0x78] sm:$0xff] %v156
              $region37: #{multi_resolution_stft_loss.7} parent=31 // loop_footer
                %s123 = sadd.s32 1, %s119
              $region38: #{multi_resolution_stft_loss.7} parent=31 // loop_footer_branch
                %118 = sbr.rel target = $region34
              $region39: #{multi_resolution_stft_loss.7} parent=31 // loop_exit
                _
            $region32: #{multi_resolution_stft_loss.7} parent=27 // pred_fallthru
              _
            // Predicated region
            $region40: #{multi_resolution_stft_loss.7} parent=27 // pred_check
              _
            $region41: #{multi_resolution_stft_loss.7} parent=27 // pred_check_branch
              %159 = sbr.rel target = $region43
            $region42: #{multi_resolution_stft_loss.7} parent=27 // pred_region
              _
            $region43: #{multi_resolution_stft_loss.7} parent=27 // pred_fallthru
              _
          $region28: #{multi_resolution_stft_loss.7} parent=23 // pred_fallthru
            _
          %160 = vnop
        $region24: #{multi_resolution_stft_loss.7} parent=19 // pred_fallthru
          _
      $region20: #{multi_resolution_stft_loss.7} parent=5 // pred_fallthru
        _
      %p161 = scmp.le.s32.totalorder 1, %s8
      %p162 = scmp.lt.s32.totalorder %s8, 3
      %p163 = pnand %p161, %p162
      %p164 = pneg %p163
      // Predicated region
      $region44: #{multi_resolution_stft_loss.7} parent=5 // pred_check
        _
      $region45: #{multi_resolution_stft_loss.7} parent=5 // pred_check_branch
        %166 = sbr.rel (%p163) target = $region47
      $region46: #{multi_resolution_stft_loss.7} parent=5 // pred_region
        %s167 = ssub.s32 %s8, 1
        %s168 = sand.u32 %s21, 1
        %s169 = sand.u32 %s21, 1
        %s170 = smul.addr %s169, 128
        %s171 = scalar_lea.vmem [#allocation2], %s170
        // Predicated region
        $region48: #{multi_resolution_stft_loss.7} parent=46 // pred_check
          %p172 = pneg %p34
        $region49: #{multi_resolution_stft_loss.7} parent=46 // pred_check_branch
          %174 = sbr.rel (%p172) target = $region51
        $region50: #{multi_resolution_stft_loss.7} parent=46 // pred_region
          _
        $region51: #{multi_resolution_stft_loss.7} parent=46 // pred_fallthru
          _
        %s175 = sand.u32 %s21, 1
        %s176 = sand.u32 %s21, 1
        %s177 = smul.addr %s176, 128
        %s178 = scalar_lea.vmem [#allocation2], %s177
        %p179 = pneg %p34
        %p180 = pneg %p31
        %p181 = pneg %p55
        %p182 = pneg %p52
        %p183 = pneg %p81
        %p184 = pneg %p78
        %p185 = scmp.lt.s32.totalorder %s13, 1
        %s186 = scalar_select %p185, %s13, 1
        %s187 = smul.addr %s186, 4
        %s188 = smul.addr %s187, 8
        %s189 = scalar_lea.vmem %s2, %s188
        %s190 = smul.u32 2, %s13
        %p191 = scmp.lt.s32.totalorder %s13, 1
        %s192 = scalar_select %p191, %s13, 1
        %s193 = smul.addr %s192, 4
        %s194 = smul.addr %s193, 8
        %s195 = scalar_lea.vmem %s2, %s194
        %v196 = vld [vmem:[%s171] sm:$0xff]
        %v197 = vld [vmem:[%s171 + $0x8] sm:$0xff]
        %v198 = vld [vmem:[%s171 + $0x10] sm:$0xff]
        %v199 = vld [vmem:[%s171 + $0x18] sm:$0xff]
        %v200 = vld [vmem:[%s171 + $0x20] sm:$0xff]
        %v201 = vld [vmem:[%s171 + $0x28] sm:$0xff]
        %v202 = vld [vmem:[%s171 + $0x30] sm:$0xff]
        %v203 = vld [vmem:[%s171 + $0x38] sm:$0xff]
        %v204 = vld [vmem:[%s171 + $0x40] sm:$0xff]
        %v205 = vld [vmem:[%s171 + $0x48] sm:$0xff]
        %v206 = vld [vmem:[%s171 + $0x50] sm:$0xff]
        %v207 = vld [vmem:[%s171 + $0x58] sm:$0xff]
        %v208 = vld [vmem:[%s171 + $0x60] sm:$0xff]
        %v209 = vld [vmem:[%s171 + $0x68] sm:$0xff]
        %v210 = vld [vmem:[%s171 + $0x70] sm:$0xff]
        %v211 = vld [vmem:[%s171 + $0x78] sm:$0xff]
        %v212 = vld [vmem:[%s1] sm:$0xff]
        %v213 = vld [vmem:[%s1 + $0x8] sm:$0xff]
        %v214 = vld [vmem:[%s1 + $0x10] sm:$0xff]
        %v215 = vld [vmem:[%s1 + $0x18] sm:$0xff]
        %v216 = vld [vmem:[%s1 + $0x20] sm:$0xff]
        %v217 = vld [vmem:[%s1 + $0x28] sm:$0xff]
        %v218 = vld [vmem:[%s1 + $0x30] sm:$0xff]
        %v219 = vld [vmem:[%s1 + $0x38] sm:$0xff]
        %v220 = vld [vmem:[%s1 + $0x40] sm:$0xff]
        %v221 = vld [vmem:[%s1 + $0x48] sm:$0xff]
        %v222 = vld [vmem:[%s1 + $0x50] sm:$0xff]
        %v223 = vld [vmem:[%s1 + $0x58] sm:$0xff]
        %v224 = vld [vmem:[%s1 + $0x60] sm:$0xff]
        %v225 = vld [vmem:[%s1 + $0x68] sm:$0xff]
        %v226 = vld [vmem:[%s1 + $0x70] sm:$0xff]
        %v227 = vld [vmem:[%s1 + $0x78] sm:$0xff]
        %v228 = vld [vmem:[%s1 + $0x80] sm:$0xff]
        %v229 = vld [vmem:[%s1 + $0x88] sm:$0xff]
        %v230 = vld [vmem:[%s1 + $0x90] sm:$0xff]
        %v231 = vld [vmem:[%s1 + $0x98] sm:$0xff]
        %v232 = vld [vmem:[%s1 + $0xa0] sm:$0xff]
        %v233 = vld [vmem:[%s1 + $0xa8] sm:$0xff]
        %v234 = vld [vmem:[%s1 + $0xb0] sm:$0xff]
        %v235 = vld [vmem:[%s1 + $0xb8] sm:$0xff]
        %v236 = vld [vmem:[%s1 + $0xc0] sm:$0xff]
        %v237 = vld [vmem:[%s1 + $0xc8] sm:$0xff]
        %v238 = vld [vmem:[%s1 + $0xd0] sm:$0xff]
        %v239 = vld [vmem:[%s1 + $0xd8] sm:$0xff]
        %v240 = vld [vmem:[%s1 + $0xe0] sm:$0xff]
        %v241 = vld [vmem:[%s1 + $0xe8] sm:$0xff]
        %v242 = vld [vmem:[%s1 + $0xf0] sm:$0xff]
        %v243 = vld [vmem:[%s1 + $0xf8] sm:$0xff]
        %v244 = vld [vmem:[%s1 + $0x100] sm:$0xff]
        %v245 = vld [vmem:[%s1 + $0x108] sm:$0xff]
        %v246 = vld [vmem:[%s1 + $0x110] sm:$0xff]
        %v247 = vld [vmem:[%s1 + $0x118] sm:$0xff]
        %v248 = vld [vmem:[%s1 + $0x120] sm:$0xff]
        %v249 = vld [vmem:[%s1 + $0x128] sm:$0xff]
        %v250 = vld [vmem:[%s1 + $0x130] sm:$0xff]
        %v251 = vld [vmem:[%s1 + $0x138] sm:$0xff]
        %v252 = vld [vmem:[%s1 + $0x140] sm:$0xff]
        %v253 = vld [vmem:[%s1 + $0x148] sm:$0xff]
        %v254 = vld [vmem:[%s1 + $0x150] sm:$0xff]
        %v255 = vld [vmem:[%s1 + $0x158] sm:$0xff]
        %v256 = vld [vmem:[%s1 + $0x160] sm:$0xff]
        %v257 = vld [vmem:[%s1 + $0x168] sm:$0xff]
        %v258 = vld [vmem:[%s1 + $0x170] sm:$0xff]
        %v259 = vld [vmem:[%s1 + $0x178] sm:$0xff]
        %v260 = vld [vmem:[%s1 + $0x180] sm:$0xff]
        %v261 = vld [vmem:[%s1 + $0x188] sm:$0xff]
        %v262 = vld [vmem:[%s1 + $0x190] sm:$0xff]
        %v263 = vld [vmem:[%s1 + $0x198] sm:$0xff]
        %v264 = vld [vmem:[%s1 + $0x1a0] sm:$0xff]
        %v265 = vld [vmem:[%s1 + $0x1a8] sm:$0xff]
        %v266 = vld [vmem:[%s1 + $0x1b0] sm:$0xff]
        %v267 = vld [vmem:[%s1 + $0x1b8] sm:$0xff]
        %v268 = vld [vmem:[%s1 + $0x1c0] sm:$0xff]
        %v269 = vld [vmem:[%s1 + $0x1c8] sm:$0xff]
        %v270 = vld [vmem:[%s1 + $0x1d0] sm:$0xff]
        %v271 = vld [vmem:[%s1 + $0x1d8] sm:$0xff]
        %v272 = vld [vmem:[%s1 + $0x1e0] sm:$0xff]
        %v273 = vld [vmem:[%s1 + $0x1e8] sm:$0xff]
        %v274 = vld [vmem:[%s1 + $0x1f0] sm:$0xff]
        %v275 = vld [vmem:[%s1 + $0x1f8] sm:$0xff]
        %v276 = vld [vmem:[%s1 + $0x200] sm:$0xff]
        %v277 = vld [vmem:[%s1 + $0x208] sm:$0xff]
        %v278 = vld [vmem:[%s1 + $0x210] sm:$0xff]
        %v279 = vld [vmem:[%s1 + $0x218] sm:$0xff]
        %v280 = vld [vmem:[%s1 + $0x220] sm:$0xff]
        %v281 = vld [vmem:[%s1 + $0x228] sm:$0xff]
        %v282 = vld [vmem:[%s1 + $0x230] sm:$0xff]
        %v283 = vld [vmem:[%s1 + $0x238] sm:$0xff]
        %v284 = vld [vmem:[%s1 + $0x240] sm:$0xff]
        %v285 = vld [vmem:[%s1 + $0x248] sm:$0xff]
        %v286 = vld [vmem:[%s1 + $0x250] sm:$0xff]
        %v287 = vld [vmem:[%s1 + $0x258] sm:$0xff]
        %v288 = vld [vmem:[%s1 + $0x260] sm:$0xff]
        %v289 = vld [vmem:[%s1 + $0x268] sm:$0xff]
        %v290 = vld [vmem:[%s1 + $0x270] sm:$0xff]
        %v291 = vld [vmem:[%s1 + $0x278] sm:$0xff]
        %v292 = vld [vmem:[%s1 + $0x280] sm:$0xff]
        %v293 = vld [vmem:[%s1 + $0x288] sm:$0xff]
        %v294 = vld [vmem:[%s1 + $0x290] sm:$0xff]
        %v295 = vld [vmem:[%s1 + $0x298] sm:$0xff]
        %v296 = vld [vmem:[%s1 + $0x2a0] sm:$0xff]
        %v297 = vld [vmem:[%s1 + $0x2a8] sm:$0xff]
        %v298 = vld [vmem:[%s1 + $0x2b0] sm:$0xff]
        %v299 = vld [vmem:[%s1 + $0x2b8] sm:$0xff]
        %v300 = vld [vmem:[%s1 + $0x2c0] sm:$0xff]
        %v301 = vld [vmem:[%s1 + $0x2c8] sm:$0xff]
        %v302 = vld [vmem:[%s1 + $0x2d0] sm:$0xff]
        %v303 = vld [vmem:[%s1 + $0x2d8] sm:$0xff]
        %v304 = vld [vmem:[%s1 + $0x2e0] sm:$0xff]
        %v305 = vld [vmem:[%s1 + $0x2e8] sm:$0xff]
        %v306 = vld [vmem:[%s1 + $0x2f0] sm:$0xff]
        %v307 = vld [vmem:[%s1 + $0x2f8] sm:$0xff]
        %v308 = vld [vmem:[%s1 + $0x300] sm:$0xff]
        %v309 = vld [vmem:[%s1 + $0x308] sm:$0xff]
        %v310 = vld [vmem:[%s1 + $0x310] sm:$0xff]
        %v311 = vld [vmem:[%s1 + $0x318] sm:$0xff]
        %v312 = vld [vmem:[%s1 + $0x320] sm:$0xff]
        %v313 = vld [vmem:[%s1 + $0x328] sm:$0xff]
        %v314 = vld [vmem:[%s1 + $0x330] sm:$0xff]
        %v315 = vld [vmem:[%s1 + $0x338] sm:$0xff]
        %v316 = vld [vmem:[%s1 + $0x340] sm:$0xff]
        %v317 = vld [vmem:[%s1 + $0x348] sm:$0xff]
        %v318 = vld [vmem:[%s1 + $0x350] sm:$0xff]
        %v319 = vld [vmem:[%s1 + $0x358] sm:$0xff]
        %v320 = vld [vmem:[%s1 + $0x360] sm:$0xff]
        %v321 = vld [vmem:[%s1 + $0x368] sm:$0xff]
        %v322 = vld [vmem:[%s1 + $0x370] sm:$0xff]
        %v323 = vld [vmem:[%s1 + $0x378] sm:$0xff]
        %v324 = vld [vmem:[%s1 + $0x380] sm:$0xff]
        %v325 = vld [vmem:[%s1 + $0x388] sm:$0xff]
        %v326 = vld [vmem:[%s1 + $0x390] sm:$0xff]
        %v327 = vld [vmem:[%s1 + $0x398] sm:$0xff]
        %v328 = vld [vmem:[%s1 + $0x3a0] sm:$0xff]
        %v329 = vld [vmem:[%s1 + $0x3a8] sm:$0xff]
        %v330 = vld [vmem:[%s1 + $0x3b0] sm:$0xff]
        %v331 = vld [vmem:[%s1 + $0x3b8] sm:$0xff]
        %v332 = vld [vmem:[%s1 + $0x3c0] sm:$0xff]
        %v333 = vld [vmem:[%s1 + $0x3c8] sm:$0xff]
        %v334 = vld [vmem:[%s1 + $0x3d0] sm:$0xff]
        %v335 = vld [vmem:[%s1 + $0x3d8] sm:$0xff]
        %v336 = vld [vmem:[%s1 + $0x3e0] sm:$0xff]
        %v337 = vld [vmem:[%s1 + $0x3e8] sm:$0xff]
        %v338 = vld [vmem:[%s1 + $0x3f0] sm:$0xff]
        %v339 = vld [vmem:[%s1 + $0x3f8] sm:$0xff]
        %v340 = vld [vmem:[%s1 + $0x400] sm:$0xff]
        %v341 = vld [vmem:[%s1 + $0x408] sm:$0xff]
        %v342 = vld [vmem:[%s1 + $0x410] sm:$0xff]
        %v343 = vld [vmem:[%s1 + $0x418] sm:$0xff]
        %v344 = vld [vmem:[%s1 + $0x420] sm:$0xff]
        %v345 = vld [vmem:[%s1 + $0x428] sm:$0xff]
        %v346 = vld [vmem:[%s1 + $0x430] sm:$0xff]
        %v347 = vld [vmem:[%s1 + $0x438] sm:$0xff]
        %v348 = vld [vmem:[%s1 + $0x440] sm:$0xff]
        %v349 = vld [vmem:[%s1 + $0x448] sm:$0xff]
        %v350 = vld [vmem:[%s1 + $0x450] sm:$0xff]
        %v351 = vld [vmem:[%s1 + $0x458] sm:$0xff]
        %v352 = vld [vmem:[%s1 + $0x460] sm:$0xff]
        %v353 = vld [vmem:[%s1 + $0x468] sm:$0xff]
        %v354 = vld [vmem:[%s1 + $0x470] sm:$0xff]
        %v355 = vld [vmem:[%s1 + $0x478] sm:$0xff]
        %v356 = vld [vmem:[%s1 + $0x480] sm:$0xff]
        %v357 = vld [vmem:[%s1 + $0x488] sm:$0xff]
        %v358 = vld [vmem:[%s1 + $0x490] sm:$0xff]
        %v359 = vld [vmem:[%s1 + $0x498] sm:$0xff]
        %v360 = vld [vmem:[%s1 + $0x4a0] sm:$0xff]
        %v361 = vld [vmem:[%s1 + $0x4a8] sm:$0xff]
        %v362 = vld [vmem:[%s1 + $0x4b0] sm:$0xff]
        %v363 = vld [vmem:[%s1 + $0x4b8] sm:$0xff]
        %v364 = vld [vmem:[%s1 + $0x4c0] sm:$0xff]
        %v365 = vld [vmem:[%s1 + $0x4c8] sm:$0xff]
        %v366 = vld [vmem:[%s1 + $0x4d0] sm:$0xff]
        %v367 = vld [vmem:[%s1 + $0x4d8] sm:$0xff]
        %v368 = vld [vmem:[%s1 + $0x4e0] sm:$0xff]
        %v369 = vld [vmem:[%s1 + $0x4e8] sm:$0xff]
        %v370 = vld [vmem:[%s1 + $0x4f0] sm:$0xff]
        %v371 = vld [vmem:[%s1 + $0x4f8] sm:$0xff]
        %v372 = vld [vmem:[%s1 + $0x500] sm:$0xff]
        %v373 = vld [vmem:[%s1 + $0x508] sm:$0xff]
        %v374 = vld [vmem:[%s1 + $0x510] sm:$0xff]
        %v375 = vld [vmem:[%s1 + $0x518] sm:$0xff]
        %v376 = vld [vmem:[%s1 + $0x520] sm:$0xff]
        %v377 = vld [vmem:[%s1 + $0x528] sm:$0xff]
        %v378 = vld [vmem:[%s1 + $0x530] sm:$0xff]
        %v379 = vld [vmem:[%s1 + $0x538] sm:$0xff]
        %v380 = vld [vmem:[%s1 + $0x540] sm:$0xff]
        %v381 = vld [vmem:[%s1 + $0x548] sm:$0xff]
        %v382 = vld [vmem:[%s1 + $0x550] sm:$0xff]
        %v383 = vld [vmem:[%s1 + $0x558] sm:$0xff]
        %v384 = vld [vmem:[%s1 + $0x560] sm:$0xff]
        %v385 = vld [vmem:[%s1 + $0x568] sm:$0xff]
        %v386 = vld [vmem:[%s1 + $0x570] sm:$0xff]
        %v387 = vld [vmem:[%s1 + $0x578] sm:$0xff]
        %v388 = vld [vmem:[%s1 + $0x580] sm:$0xff]
        %v389 = vld [vmem:[%s1 + $0x588] sm:$0xff]
        %v390 = vld [vmem:[%s1 + $0x590] sm:$0xff]
        %v391 = vld [vmem:[%s1 + $0x598] sm:$0xff]
        %v392 = vld [vmem:[%s1 + $0x5a0] sm:$0xff]
        %v393 = vld [vmem:[%s1 + $0x5a8] sm:$0xff]
        %v394 = vld [vmem:[%s1 + $0x5b0] sm:$0xff]
        %v395 = vld [vmem:[%s1 + $0x5b8] sm:$0xff]
        %v396 = vld [vmem:[%s1 + $0x5c0] sm:$0xff]
        %v397 = vld [vmem:[%s1 + $0x5c8] sm:$0xff]
        %v398 = vld [vmem:[%s1 + $0x5d0] sm:$0xff]
        %v399 = vld [vmem:[%s1 + $0x5d8] sm:$0xff]
        %v400 = vld [vmem:[%s1 + $0x5e0] sm:$0xff]
        %v401 = vld [vmem:[%s1 + $0x5e8] sm:$0xff]
        %v402 = vld [vmem:[%s1 + $0x5f0] sm:$0xff]
        %v403 = vld [vmem:[%s1 + $0x5f8] sm:$0xff]
        %v404 = vld [vmem:[%s1 + $0x600] sm:$0xff]
        %v405 = vld [vmem:[%s1 + $0x608] sm:$0xff]
        %v406 = vld [vmem:[%s1 + $0x610] sm:$0xff]
        %v407 = vld [vmem:[%s1 + $0x618] sm:$0xff]
        %v408 = vld [vmem:[%s1 + $0x620] sm:$0xff]
        %v409 = vld [vmem:[%s1 + $0x628] sm:$0xff]
        %v410 = vld [vmem:[%s1 + $0x630] sm:$0xff]
        %v411 = vld [vmem:[%s1 + $0x638] sm:$0xff]
        %v412 = vld [vmem:[%s1 + $0x640] sm:$0xff]
        %v413 = vld [vmem:[%s1 + $0x648] sm:$0xff]
        %v414 = vld [vmem:[%s1 + $0x650] sm:$0xff]
        %v415 = vld [vmem:[%s1 + $0x658] sm:$0xff]
        %v416 = vld [vmem:[%s1 + $0x660] sm:$0xff]
        %v417 = vld [vmem:[%s1 + $0x668] sm:$0xff]
        %v418 = vld [vmem:[%s1 + $0x670] sm:$0xff]
        %v419 = vld [vmem:[%s1 + $0x678] sm:$0xff]
        %v420 = vld [vmem:[%s1 + $0x680] sm:$0xff]
        %v421 = vld [vmem:[%s1 + $0x688] sm:$0xff]
        %v422 = vld [vmem:[%s1 + $0x690] sm:$0xff]
        %v423 = vld [vmem:[%s1 + $0x698] sm:$0xff]
        %v424 = vld [vmem:[%s1 + $0x6a0] sm:$0xff]
        %v425 = vld [vmem:[%s1 + $0x6a8] sm:$0xff]
        %v426 = vld [vmem:[%s1 + $0x6b0] sm:$0xff]
        %v427 = vld [vmem:[%s1 + $0x6b8] sm:$0xff]
        %v428 = vld [vmem:[%s1 + $0x6c0] sm:$0xff]
        %v429 = vld [vmem:[%s1 + $0x6c8] sm:$0xff]
        %v430 = vld [vmem:[%s1 + $0x6d0] sm:$0xff]
        %v431 = vld [vmem:[%s1 + $0x6d8] sm:$0xff]
        %v432 = vld [vmem:[%s1 + $0x6e0] sm:$0xff]
        %v433 = vld [vmem:[%s1 + $0x6e8] sm:$0xff]
        %v434 = vld [vmem:[%s1 + $0x6f0] sm:$0xff]
        %v435 = vld [vmem:[%s1 + $0x6f8] sm:$0xff]
        %v436 = vld [vmem:[%s1 + $0x700] sm:$0xff]
        %v437 = vld [vmem:[%s1 + $0x708] sm:$0xff]
        %v438 = vld [vmem:[%s1 + $0x710] sm:$0xff]
        %v439 = vld [vmem:[%s1 + $0x718] sm:$0xff]
        %v440 = vld [vmem:[%s1 + $0x720] sm:$0xff]
        %v441 = vld [vmem:[%s1 + $0x728] sm:$0xff]
        %v442 = vld [vmem:[%s1 + $0x730] sm:$0xff]
        %v443 = vld [vmem:[%s1 + $0x738] sm:$0xff]
        %v444 = vld [vmem:[%s1 + $0x740] sm:$0xff]
        %v445 = vld [vmem:[%s1 + $0x748] sm:$0xff]
        %v446 = vld [vmem:[%s1 + $0x750] sm:$0xff]
        %v447 = vld [vmem:[%s1 + $0x758] sm:$0xff]
        %v448 = vld [vmem:[%s1 + $0x760] sm:$0xff]
        %v449 = vld [vmem:[%s1 + $0x768] sm:$0xff]
        %v450 = vld [vmem:[%s1 + $0x770] sm:$0xff]
        %v451 = vld [vmem:[%s1 + $0x778] sm:$0xff]
        %v452 = vld [vmem:[%s1 + $0x780] sm:$0xff]
        %v453 = vld [vmem:[%s1 + $0x788] sm:$0xff]
        %v454 = vld [vmem:[%s1 + $0x790] sm:$0xff]
        %v455 = vld [vmem:[%s1 + $0x798] sm:$0xff]
        %v456 = vld [vmem:[%s1 + $0x7a0] sm:$0xff]
        %v457 = vld [vmem:[%s1 + $0x7a8] sm:$0xff]
        %v458 = vld [vmem:[%s1 + $0x7b0] sm:$0xff]
        %v459 = vld [vmem:[%s1 + $0x7b8] sm:$0xff]
        %v460 = vld [vmem:[%s1 + $0x7c0] sm:$0xff]
        %v461 = vld [vmem:[%s1 + $0x7c8] sm:$0xff]
        %v462 = vld [vmem:[%s1 + $0x7d0] sm:$0xff]
        %v463 = vld [vmem:[%s1 + $0x7d8] sm:$0xff]
        %v464 = vld [vmem:[%s1 + $0x7e0] sm:$0xff]
        %v465 = vld [vmem:[%s1 + $0x7e8] sm:$0xff]
        %v466 = vld [vmem:[%s1 + $0x7f0] sm:$0xff]
        %v467 = vld [vmem:[%s1 + $0x7f8] sm:$0xff]
        %v468 = vld [vmem:[%s1 + $0x800] sm:$0xff]
        %v469 = vld [vmem:[%s1 + $0x808] sm:$0xff]
        %v470 = vld [vmem:[%s1 + $0x810] sm:$0xff]
        %v471 = vld [vmem:[%s1 + $0x818] sm:$0xff]
        %v472 = vld [vmem:[%s1 + $0x820] sm:$0xff]
        %v473 = vld [vmem:[%s1 + $0x828] sm:$0xff]
        %v474 = vld [vmem:[%s1 + $0x830] sm:$0xff]
        %v475 = vld [vmem:[%s1 + $0x838] sm:$0xff]
        %v476 = vld [vmem:[%s1 + $0x840] sm:$0xff]
        %v477 = vld [vmem:[%s1 + $0x848] sm:$0xff]
        %v478 = vld [vmem:[%s1 + $0x850] sm:$0xff]
        %v479 = vld [vmem:[%s1 + $0x858] sm:$0xff]
        %v480 = vld [vmem:[%s1 + $0x860] sm:$0xff]
        %v481 = vld [vmem:[%s1 + $0x868] sm:$0xff]
        %v482 = vld [vmem:[%s1 + $0x870] sm:$0xff]
        %v483 = vld [vmem:[%s1 + $0x878] sm:$0xff]
        %v484 = vld [vmem:[%s1 + $0x880] sm:$0xff]
        %v485 = vld [vmem:[%s1 + $0x888] sm:$0xff]
        %v486 = vld [vmem:[%s1 + $0x890] sm:$0xff]
        %v487 = vld [vmem:[%s1 + $0x898] sm:$0xff]
        %v488 = vld [vmem:[%s1 + $0x8a0] sm:$0xff]
        %v489 = vld [vmem:[%s1 + $0x8a8] sm:$0xff]
        %v490 = vld [vmem:[%s1 + $0x8b0] sm:$0xff]
        %v491 = vld [vmem:[%s1 + $0x8b8] sm:$0xff]
        %v492 = vld [vmem:[%s1 + $0x8c0] sm:$0xff]
        %v493 = vld [vmem:[%s1 + $0x8c8] sm:$0xff]
        %v494 = vld [vmem:[%s1 + $0x8d0] sm:$0xff]
        %v495 = vld [vmem:[%s1 + $0x8d8] sm:$0xff]
        %v496 = vld [vmem:[%s1 + $0x8e0] sm:$0xff]
        %v497 = vld [vmem:[%s1 + $0x8e8] sm:$0xff]
        %v498 = vld [vmem:[%s1 + $0x8f0] sm:$0xff]
        %v499 = vld [vmem:[%s1 + $0x8f8] sm:$0xff]
        %v500 = vld [vmem:[%s1 + $0x900] sm:$0xff]
        %v501 = vld [vmem:[%s1 + $0x908] sm:$0xff]
        %v502 = vld [vmem:[%s1 + $0x910] sm:$0xff]
        %v503 = vld [vmem:[%s1 + $0x918] sm:$0xff]
        %v504 = vld [vmem:[%s1 + $0x920] sm:$0xff]
        %v505 = vld [vmem:[%s1 + $0x928] sm:$0xff]
        %v506 = vld [vmem:[%s1 + $0x930] sm:$0xff]
        %v507 = vld [vmem:[%s1 + $0x938] sm:$0xff]
        %v508 = vld [vmem:[%s1 + $0x940] sm:$0xff]
        %v509 = vld [vmem:[%s1 + $0x948] sm:$0xff]
        %v510 = vld [vmem:[%s1 + $0x950] sm:$0xff]
        %v511 = vld [vmem:[%s1 + $0x958] sm:$0xff]
        %v512 = vld [vmem:[%s1 + $0x960] sm:$0xff]
        %v513 = vld [vmem:[%s1 + $0x968] sm:$0xff]
        %v514 = vld [vmem:[%s1 + $0x970] sm:$0xff]
        %v515 = vld [vmem:[%s1 + $0x978] sm:$0xff]
        %v516 = vld [vmem:[%s1 + $0x980] sm:$0xff]
        %v517 = vld [vmem:[%s1 + $0x988] sm:$0xff]
        %v518 = vld [vmem:[%s1 + $0x990] sm:$0xff]
        %v519 = vld [vmem:[%s1 + $0x998] sm:$0xff]
        %v520 = vld [vmem:[%s1 + $0x9a0] sm:$0xff]
        %v521 = vld [vmem:[%s1 + $0x9a8] sm:$0xff]
        %v522 = vld [vmem:[%s1 + $0x9b0] sm:$0xff]
        %v523 = vld [vmem:[%s1 + $0x9b8] sm:$0xff]
        %v524 = vld [vmem:[%s1 + $0x9c0] sm:$0xff]
        %v525 = vld [vmem:[%s1 + $0x9c8] sm:$0xff]
        %v526 = vld [vmem:[%s1 + $0x9d0] sm:$0xff]
        %v527 = vld [vmem:[%s1 + $0x9d8] sm:$0xff]
        %v528 = vld [vmem:[%s1 + $0x9e0] sm:$0xff]
        %v529 = vld [vmem:[%s1 + $0x9e8] sm:$0xff]
        %v530 = vld [vmem:[%s1 + $0x9f0] sm:$0xff]
        %v531 = vld [vmem:[%s1 + $0x9f8] sm:$0xff]
        %v532 = vld [vmem:[%s1 + $0xa00] sm:$0xff]
        %v533 = vld [vmem:[%s1 + $0xa08] sm:$0xff]
        %v534 = vld [vmem:[%s1 + $0xa10] sm:$0xff]
        %v535 = vld [vmem:[%s1 + $0xa18] sm:$0xff]
        %v536 = vld [vmem:[%s1 + $0xa20] sm:$0xff]
        %v537 = vld [vmem:[%s1 + $0xa28] sm:$0xff]
        %v538 = vld [vmem:[%s1 + $0xa30] sm:$0xff]
        %v539 = vld [vmem:[%s1 + $0xa38] sm:$0xff]
        %v540 = vld [vmem:[%s1 + $0xa40] sm:$0xff]
        %v541 = vld [vmem:[%s1 + $0xa48] sm:$0xff]
        %v542 = vld [vmem:[%s1 + $0xa50] sm:$0xff]
        %v543 = vld [vmem:[%s1 + $0xa58] sm:$0xff]
        %v544 = vld [vmem:[%s1 + $0xa60] sm:$0xff]
        %v545 = vld [vmem:[%s1 + $0xa68] sm:$0xff]
        %v546 = vld [vmem:[%s1 + $0xa70] sm:$0xff]
        %v547 = vld [vmem:[%s1 + $0xa78] sm:$0xff]
        %v548 = vld [vmem:[%s1 + $0xa80] sm:$0xff]
        %v549 = vld [vmem:[%s1 + $0xa88] sm:$0xff]
        %v550 = vld [vmem:[%s1 + $0xa90] sm:$0xff]
        %v551 = vld [vmem:[%s1 + $0xa98] sm:$0xff]
        %v552 = vld [vmem:[%s1 + $0xaa0] sm:$0xff]
        %v553 = vld [vmem:[%s1 + $0xaa8] sm:$0xff]
        %v554 = vld [vmem:[%s1 + $0xab0] sm:$0xff]
        %v555 = vld [vmem:[%s1 + $0xab8] sm:$0xff]
        %v556 = vld [vmem:[%s1 + $0xac0] sm:$0xff]
        %v557 = vld [vmem:[%s1 + $0xac8] sm:$0xff]
        %v558 = vld [vmem:[%s1 + $0xad0] sm:$0xff]
        %v559 = vld [vmem:[%s1 + $0xad8] sm:$0xff]
        %v560 = vld [vmem:[%s1 + $0xae0] sm:$0xff]
        %v561 = vld [vmem:[%s1 + $0xae8] sm:$0xff]
        %v562 = vld [vmem:[%s1 + $0xaf0] sm:$0xff]
        %v563 = vld [vmem:[%s1 + $0xaf8] sm:$0xff]
        %v564 = vld [vmem:[%s1 + $0xb00] sm:$0xff]
        %v565 = vld [vmem:[%s1 + $0xb08] sm:$0xff]
        %v566 = vld [vmem:[%s1 + $0xb10] sm:$0xff]
        %v567 = vld [vmem:[%s1 + $0xb18] sm:$0xff]
        %v568 = vld [vmem:[%s1 + $0xb20] sm:$0xff]
        %v569 = vld [vmem:[%s1 + $0xb28] sm:$0xff]
        %v570 = vld [vmem:[%s1 + $0xb30] sm:$0xff]
        %v571 = vld [vmem:[%s1 + $0xb38] sm:$0xff]
        %v572 = vld [vmem:[%s1 + $0xb40] sm:$0xff]
        %v573 = vld [vmem:[%s1 + $0xb48] sm:$0xff]
        %v574 = vld [vmem:[%s1 + $0xb50] sm:$0xff]
        %v575 = vld [vmem:[%s1 + $0xb58] sm:$0xff]
        %v576 = vld [vmem:[%s1 + $0xb60] sm:$0xff]
        %v577 = vld [vmem:[%s1 + $0xb68] sm:$0xff]
        %v578 = vld [vmem:[%s1 + $0xb70] sm:$0xff]
        %v579 = vld [vmem:[%s1 + $0xb78] sm:$0xff]
        %v580 = vld [vmem:[%s1 + $0xb80] sm:$0xff]
        %v581 = vld [vmem:[%s1 + $0xb88] sm:$0xff]
        %v582 = vld [vmem:[%s1 + $0xb90] sm:$0xff]
        %v583 = vld [vmem:[%s1 + $0xb98] sm:$0xff]
        %v584 = vld [vmem:[%s1 + $0xba0] sm:$0xff]
        %v585 = vld [vmem:[%s1 + $0xba8] sm:$0xff]
        %v586 = vld [vmem:[%s1 + $0xbb0] sm:$0xff]
        %v587 = vld [vmem:[%s1 + $0xbb8] sm:$0xff]
        %v588 = vld [vmem:[%s1 + $0xbc0] sm:$0xff]
        %v589 = vld [vmem:[%s1 + $0xbc8] sm:$0xff]
        %v590 = vld [vmem:[%s1 + $0xbd0] sm:$0xff]
        %v591 = vld [vmem:[%s1 + $0xbd8] sm:$0xff]
        %v592 = vld [vmem:[%s1 + $0xbe0] sm:$0xff]
        %v593 = vld [vmem:[%s1 + $0xbe8] sm:$0xff]
        %v594 = vld [vmem:[%s1 + $0xbf0] sm:$0xff]
        %v595 = vld [vmem:[%s1 + $0xbf8] sm:$0xff]
        %v596 = vld [vmem:[%s1 + $0xc00] sm:$0xff]
        %v597 = vld [vmem:[%s1 + $0xc08] sm:$0xff]
        %v598 = vld [vmem:[%s1 + $0xc10] sm:$0xff]
        %v599 = vld [vmem:[%s1 + $0xc18] sm:$0xff]
        %v600 = vld [vmem:[%s1 + $0xc20] sm:$0xff]
        %v601 = vld [vmem:[%s1 + $0xc28] sm:$0xff]
        %v602 = vld [vmem:[%s1 + $0xc30] sm:$0xff]
        %v603 = vld [vmem:[%s1 + $0xc38] sm:$0xff]
        %v604 = vld [vmem:[%s1 + $0xc40] sm:$0xff]
        %v605 = vld [vmem:[%s1 + $0xc48] sm:$0xff]
        %v606 = vld [vmem:[%s1 + $0xc50] sm:$0xff]
        %v607 = vld [vmem:[%s1 + $0xc58] sm:$0xff]
        %v608 = vld [vmem:[%s1 + $0xc60] sm:$0xff]
        %v609 = vld [vmem:[%s1 + $0xc68] sm:$0xff]
        %v610 = vld [vmem:[%s1 + $0xc70] sm:$0xff]
        %v611 = vld [vmem:[%s1 + $0xc78] sm:$0xff]
        %v612 = vld [vmem:[%s1 + $0xc80] sm:$0xff]
        %v613 = vld [vmem:[%s1 + $0xc88] sm:$0xff]
        %v614 = vld [vmem:[%s1 + $0xc90] sm:$0xff]
        %v615 = vld [vmem:[%s1 + $0xc98] sm:$0xff]
        %v616 = vld [vmem:[%s1 + $0xca0] sm:$0xff]
        %v617 = vld [vmem:[%s1 + $0xca8] sm:$0xff]
        %v618 = vld [vmem:[%s1 + $0xcb0] sm:$0xff]
        %v619 = vld [vmem:[%s1 + $0xcb8] sm:$0xff]
        %v620 = vld [vmem:[%s1 + $0xcc0] sm:$0xff]
        %v621 = vld [vmem:[%s1 + $0xcc8] sm:$0xff]
        %v622 = vld [vmem:[%s1 + $0xcd0] sm:$0xff]
        %v623 = vld [vmem:[%s1 + $0xcd8] sm:$0xff]
        %v624 = vld [vmem:[%s1 + $0xce0] sm:$0xff]
        %v625 = vld [vmem:[%s1 + $0xce8] sm:$0xff]
        %v626 = vld [vmem:[%s1 + $0xcf0] sm:$0xff]
        %v627 = vld [vmem:[%s1 + $0xcf8] sm:$0xff]
        %v628 = vld [vmem:[%s1 + $0xd00] sm:$0xff]
        %v629 = vld [vmem:[%s1 + $0xd08] sm:$0xff]
        %v630 = vld [vmem:[%s1 + $0xd10] sm:$0xff]
        %v631 = vld [vmem:[%s1 + $0xd18] sm:$0xff]
        %v632 = vld [vmem:[%s1 + $0xd20] sm:$0xff]
        %v633 = vld [vmem:[%s1 + $0xd28] sm:$0xff]
        %v634 = vld [vmem:[%s1 + $0xd30] sm:$0xff]
        %v635 = vld [vmem:[%s1 + $0xd38] sm:$0xff]
        %v636 = vld [vmem:[%s1 + $0xd40] sm:$0xff]
        %v637 = vld [vmem:[%s1 + $0xd48] sm:$0xff]
        %v638 = vld [vmem:[%s1 + $0xd50] sm:$0xff]
        %v639 = vld [vmem:[%s1 + $0xd58] sm:$0xff]
        %v640 = vld [vmem:[%s1 + $0xd60] sm:$0xff]
        %v641 = vld [vmem:[%s1 + $0xd68] sm:$0xff]
        %v642 = vld [vmem:[%s1 + $0xd70] sm:$0xff]
        %v643 = vld [vmem:[%s1 + $0xd78] sm:$0xff]
        %v644 = vld [vmem:[%s1 + $0xd80] sm:$0xff]
        %v645 = vld [vmem:[%s1 + $0xd88] sm:$0xff]
        %v646 = vld [vmem:[%s1 + $0xd90] sm:$0xff]
        %v647 = vld [vmem:[%s1 + $0xd98] sm:$0xff]
        %v648 = vld [vmem:[%s1 + $0xda0] sm:$0xff]
        %v649 = vld [vmem:[%s1 + $0xda8] sm:$0xff]
        %v650 = vld [vmem:[%s1 + $0xdb0] sm:$0xff]
        %v651 = vld [vmem:[%s1 + $0xdb8] sm:$0xff]
        %v652 = vld [vmem:[%s1 + $0xdc0] sm:$0xff]
        %v653 = vld [vmem:[%s1 + $0xdc8] sm:$0xff]
        %v654 = vld [vmem:[%s1 + $0xdd0] sm:$0xff]
        %v655 = vld [vmem:[%s1 + $0xdd8] sm:$0xff]
        %v656 = vld [vmem:[%s1 + $0xde0] sm:$0xff]
        %v657 = vld [vmem:[%s1 + $0xde8] sm:$0xff]
        %v658 = vld [vmem:[%s1 + $0xdf0] sm:$0xff]
        %v659 = vld [vmem:[%s1 + $0xdf8] sm:$0xff]
        %v660 = vld [vmem:[%s1 + $0xe00] sm:$0xff]
        %v661 = vld [vmem:[%s1 + $0xe08] sm:$0xff]
        %v662 = vld [vmem:[%s1 + $0xe10] sm:$0xff]
        %v663 = vld [vmem:[%s1 + $0xe18] sm:$0xff]
        %v664 = vld [vmem:[%s1 + $0xe20] sm:$0xff]
        %v665 = vld [vmem:[%s1 + $0xe28] sm:$0xff]
        %v666 = vld [vmem:[%s1 + $0xe30] sm:$0xff]
        %v667 = vld [vmem:[%s1 + $0xe38] sm:$0xff]
        %v668 = vld [vmem:[%s1 + $0xe40] sm:$0xff]
        %v669 = vld [vmem:[%s1 + $0xe48] sm:$0xff]
        %v670 = vld [vmem:[%s1 + $0xe50] sm:$0xff]
        %v671 = vld [vmem:[%s1 + $0xe58] sm:$0xff]
        %v672 = vld [vmem:[%s1 + $0xe60] sm:$0xff]
        %v673 = vld [vmem:[%s1 + $0xe68] sm:$0xff]
        %v674 = vld [vmem:[%s1 + $0xe70] sm:$0xff]
        %v675 = vld [vmem:[%s1 + $0xe78] sm:$0xff]
        %v676 = vld [vmem:[%s1 + $0xe80] sm:$0xff]
        %v677 = vld [vmem:[%s1 + $0xe88] sm:$0xff]
        %v678 = vld [vmem:[%s1 + $0xe90] sm:$0xff]
        %v679 = vld [vmem:[%s1 + $0xe98] sm:$0xff]
        %v680 = vld [vmem:[%s1 + $0xea0] sm:$0xff]
        %v681 = vld [vmem:[%s1 + $0xea8] sm:$0xff]
        %v682 = vld [vmem:[%s1 + $0xeb0] sm:$0xff]
        %v683 = vld [vmem:[%s1 + $0xeb8] sm:$0xff]
        %v684 = vld [vmem:[%s1 + $0xec0] sm:$0xff]
        %v685 = vld [vmem:[%s1 + $0xec8] sm:$0xff]
        %v686 = vld [vmem:[%s1 + $0xed0] sm:$0xff]
        %v687 = vld [vmem:[%s1 + $0xed8] sm:$0xff]
        %v688 = vld [vmem:[%s1 + $0xee0] sm:$0xff]
        %v689 = vld [vmem:[%s1 + $0xee8] sm:$0xff]
        %v690 = vld [vmem:[%s1 + $0xef0] sm:$0xff]
        %v691 = vld [vmem:[%s1 + $0xef8] sm:$0xff]
        %v692 = vld [vmem:[%s1 + $0xf00] sm:$0xff]
        %v693 = vld [vmem:[%s1 + $0xf08] sm:$0xff]
        %v694 = vld [vmem:[%s1 + $0xf10] sm:$0xff]
        %v695 = vld [vmem:[%s1 + $0xf18] sm:$0xff]
        %v696 = vld [vmem:[%s1 + $0xf20] sm:$0xff]
        %v697 = vld [vmem:[%s1 + $0xf28] sm:$0xff]
        %v698 = vld [vmem:[%s1 + $0xf30] sm:$0xff]
        %v699 = vld [vmem:[%s1 + $0xf38] sm:$0xff]
        %v700 = vld [vmem:[%s1 + $0xf40] sm:$0xff]
        %v701 = vld [vmem:[%s1 + $0xf48] sm:$0xff]
        %v702 = vld [vmem:[%s1 + $0xf50] sm:$0xff]
        %v703 = vld [vmem:[%s1 + $0xf58] sm:$0xff]
        %v704 = vld [vmem:[%s1 + $0xf60] sm:$0xff]
        %v705 = vld [vmem:[%s1 + $0xf68] sm:$0xff]
        %v706 = vld [vmem:[%s1 + $0xf70] sm:$0xff]
        %v707 = vld [vmem:[%s1 + $0xf78] sm:$0xff]
        %v708 = vld [vmem:[%s1 + $0xf80] sm:$0xff]
        %v709 = vld [vmem:[%s1 + $0xf88] sm:$0xff]
        %v710 = vld [vmem:[%s1 + $0xf90] sm:$0xff]
        %v711 = vld [vmem:[%s1 + $0xf98] sm:$0xff]
        %v712 = vld [vmem:[%s1 + $0xfa0] sm:$0xff]
        %v713 = vld [vmem:[%s1 + $0xfa8] sm:$0xff]
        %v714 = vld [vmem:[%s1 + $0xfb0] sm:$0xff]
        %v715 = vld [vmem:[%s1 + $0xfb8] sm:$0xff]
        %v716 = vld [vmem:[%s1 + $0xfc0] sm:$0xff]
        %v717 = vld [vmem:[%s1 + $0xfc8] sm:$0xff]
        %v718 = vld [vmem:[%s1 + $0xfd0] sm:$0xff]
        %v719 = vld [vmem:[%s1 + $0xfd8] sm:$0xff]
        %v720 = vld [vmem:[%s1 + $0xfe0] sm:$0xff]
        %v721 = vld [vmem:[%s1 + $0xfe8] sm:$0xff]
        %v722 = vld [vmem:[%s1 + $0xff0] sm:$0xff]
        %v723 = vld [vmem:[%s1 + $0xff8] sm:$0xff]
        %v740 = vunpack.c.l.b16 %v196
        %v741 = vunpack.c.h.b16 %v196
        %v742 = vunpack.c.l.b16 %v197
        %v743 = vunpack.c.h.b16 %v197
        %v744 = vunpack.c.l.b16 %v198
        %v745 = vunpack.c.h.b16 %v198
        %v746 = vunpack.c.l.b16 %v199
        %v747 = vunpack.c.h.b16 %v199
        %v748 = vunpack.c.l.b16 %v200
        %v749 = vunpack.c.h.b16 %v200
        %v750 = vunpack.c.l.b16 %v201
        %v751 = vunpack.c.h.b16 %v201
        %v752 = vunpack.c.l.b16 %v202
        %v753 = vunpack.c.h.b16 %v202
        %v754 = vunpack.c.l.b16 %v203
        %v755 = vunpack.c.h.b16 %v203
        %v756 = vunpack.c.l.b16 %v204
        %v757 = vunpack.c.h.b16 %v204
        %v758 = vunpack.c.l.b16 %v205
        %v759 = vunpack.c.h.b16 %v205
        %v760 = vunpack.c.l.b16 %v206
        %v761 = vunpack.c.h.b16 %v206
        %v762 = vunpack.c.l.b16 %v207
        %v763 = vunpack.c.h.b16 %v207
        %v764 = vunpack.c.l.b16 %v208
        %v765 = vunpack.c.h.b16 %v208
        %v766 = vunpack.c.l.b16 %v209
        %v767 = vunpack.c.h.b16 %v209
        %v768 = vunpack.c.l.b16 %v210
        %v769 = vunpack.c.h.b16 %v210
        %v770 = vunpack.c.l.b16 %v211
        %v771 = vunpack.c.h.b16 %v211
        %v772 = vpack.c.b16 %v748, %v740
        %v773 = vpack.c.b16 %v749, %v741
        %v774 = vpack.c.b16 %v750, %v742
        %v775 = vpack.c.b16 %v751, %v743
        %v776 = vpack.c.b16 %v752, %v744
        %v777 = vpack.c.b16 %v753, %v745
        %v778 = vpack.c.b16 %v754, %v746
        %v779 = vpack.c.b16 %v755, %v747
        %v780 = vpack.c.b16 %v764, %v756
        %v781 = vpack.c.b16 %v765, %v757
        %v782 = vpack.c.b16 %v766, %v758
        %v783 = vpack.c.b16 %v767, %v759
        %v784 = vpack.c.b16 %v768, %v760
        %v785 = vpack.c.b16 %v769, %v761
        %v786 = vpack.c.b16 %v770, %v762
        %v787 = vpack.c.b16 %v771, %v763
        %v1316 = vunpack.c.l.b16 %v212
        %v1317 = vunpack.c.h.b16 %v212
        %v1318 = vunpack.c.l.b16 %v213
        %v1319 = vunpack.c.h.b16 %v213
        %v1320 = vunpack.c.l.b16 %v214
        %v1321 = vunpack.c.h.b16 %v214
        %v1322 = vunpack.c.l.b16 %v215
        %v1323 = vunpack.c.h.b16 %v215
        %v1324 = vunpack.c.l.b16 %v216
        %v1325 = vunpack.c.h.b16 %v216
        %v1326 = vunpack.c.l.b16 %v217
        %v1327 = vunpack.c.h.b16 %v217
        %v1328 = vunpack.c.l.b16 %v218
        %v1329 = vunpack.c.h.b16 %v218
        %v1330 = vunpack.c.l.b16 %v219
        %v1331 = vunpack.c.h.b16 %v219
        %v1332 = vunpack.c.l.b16 %v220
        %v1333 = vunpack.c.h.b16 %v220
        %v1334 = vunpack.c.l.b16 %v221
        %v1335 = vunpack.c.h.b16 %v221
        %v1336 = vunpack.c.l.b16 %v222
        %v1337 = vunpack.c.h.b16 %v222
        %v1338 = vunpack.c.l.b16 %v223
        %v1339 = vunpack.c.h.b16 %v223
        %v1340 = vunpack.c.l.b16 %v224
        %v1341 = vunpack.c.h.b16 %v224
        %v1342 = vunpack.c.l.b16 %v225
        %v1343 = vunpack.c.h.b16 %v225
        %v1344 = vunpack.c.l.b16 %v226
        %v1345 = vunpack.c.h.b16 %v226
        %v1346 = vunpack.c.l.b16 %v227
        %v1347 = vunpack.c.h.b16 %v227
        %v1348 = vunpack.c.l.b16 %v228
        %v1349 = vunpack.c.h.b16 %v228
        %v1350 = vunpack.c.l.b16 %v229
        %v1351 = vunpack.c.h.b16 %v229
        %v1352 = vunpack.c.l.b16 %v230
        %v1353 = vunpack.c.h.b16 %v230
        %v1354 = vunpack.c.l.b16 %v231
        %v1355 = vunpack.c.h.b16 %v231
        %v1356 = vunpack.c.l.b16 %v232
        %v1357 = vunpack.c.h.b16 %v232
        %v1358 = vunpack.c.l.b16 %v233
        %v1359 = vunpack.c.h.b16 %v233
        %v1360 = vunpack.c.l.b16 %v234
        %v1361 = vunpack.c.h.b16 %v234
        %v1362 = vunpack.c.l.b16 %v235
        %v1363 = vunpack.c.h.b16 %v235
        %v1364 = vunpack.c.l.b16 %v236
        %v1365 = vunpack.c.h.b16 %v236
        %v1366 = vunpack.c.l.b16 %v237
        %v1367 = vunpack.c.h.b16 %v237
        %v1368 = vunpack.c.l.b16 %v238
        %v1369 = vunpack.c.h.b16 %v238
        %v1370 = vunpack.c.l.b16 %v239
        %v1371 = vunpack.c.h.b16 %v239
        %v1372 = vunpack.c.l.b16 %v240
        %v1373 = vunpack.c.h.b16 %v240
        %v1374 = vunpack.c.l.b16 %v241
        %v1375 = vunpack.c.h.b16 %v241
        %v1376 = vunpack.c.l.b16 %v242
        %v1377 = vunpack.c.h.b16 %v242
        %v1378 = vunpack.c.l.b16 %v243
        %v1379 = vunpack.c.h.b16 %v243
        %v1380 = vunpack.c.l.b16 %v244
        %v1381 = vunpack.c.h.b16 %v244
        %v1382 = vunpack.c.l.b16 %v245
        %v1383 = vunpack.c.h.b16 %v245
        %v1384 = vunpack.c.l.b16 %v246
        %v1385 = vunpack.c.h.b16 %v246
        %v1386 = vunpack.c.l.b16 %v247
        %v1387 = vunpack.c.h.b16 %v247
        %v1388 = vunpack.c.l.b16 %v248
        %v1389 = vunpack.c.h.b16 %v248
        %v1390 = vunpack.c.l.b16 %v249
        %v1391 = vunpack.c.h.b16 %v249
        %v1392 = vunpack.c.l.b16 %v250
        %v1393 = vunpack.c.h.b16 %v250
        %v1394 = vunpack.c.l.b16 %v251
        %v1395 = vunpack.c.h.b16 %v251
        %v1396 = vunpack.c.l.b16 %v252
        %v1397 = vunpack.c.h.b16 %v252
        %v1398 = vunpack.c.l.b16 %v253
        %v1399 = vunpack.c.h.b16 %v253
        %v1400 = vunpack.c.l.b16 %v254
        %v1401 = vunpack.c.h.b16 %v254
        %v1402 = vunpack.c.l.b16 %v255
        %v1403 = vunpack.c.h.b16 %v255
        %v1404 = vunpack.c.l.b16 %v256
        %v1405 = vunpack.c.h.b16 %v256
        %v1406 = vunpack.c.l.b16 %v257
        %v1407 = vunpack.c.h.b16 %v257
        %v1408 = vunpack.c.l.b16 %v258
        %v1409 = vunpack.c.h.b16 %v258
        %v1410 = vunpack.c.l.b16 %v259
        %v1411 = vunpack.c.h.b16 %v259
        %v1412 = vunpack.c.l.b16 %v260
        %v1413 = vunpack.c.h.b16 %v260
        %v1414 = vunpack.c.l.b16 %v261
        %v1415 = vunpack.c.h.b16 %v261
        %v1416 = vunpack.c.l.b16 %v262
        %v1417 = vunpack.c.h.b16 %v262
        %v1418 = vunpack.c.l.b16 %v263
        %v1419 = vunpack.c.h.b16 %v263
        %v1420 = vunpack.c.l.b16 %v264
        %v1421 = vunpack.c.h.b16 %v264
        %v1422 = vunpack.c.l.b16 %v265
        %v1423 = vunpack.c.h.b16 %v265
        %v1424 = vunpack.c.l.b16 %v266
        %v1425 = vunpack.c.h.b16 %v266
        %v1426 = vunpack.c.l.b16 %v267
        %v1427 = vunpack.c.h.b16 %v267
        %v1428 = vunpack.c.l.b16 %v268
        %v1429 = vunpack.c.h.b16 %v268
        %v1430 = vunpack.c.l.b16 %v269
        %v1431 = vunpack.c.h.b16 %v269
        %v1432 = vunpack.c.l.b16 %v270
        %v1433 = vunpack.c.h.b16 %v270
        %v1434 = vunpack.c.l.b16 %v271
        %v1435 = vunpack.c.h.b16 %v271
        %v1436 = vunpack.c.l.b16 %v272
        %v1437 = vunpack.c.h.b16 %v272
        %v1438 = vunpack.c.l.b16 %v273
        %v1439 = vunpack.c.h.b16 %v273
        %v1440 = vunpack.c.l.b16 %v274
        %v1441 = vunpack.c.h.b16 %v274
        %v1442 = vunpack.c.l.b16 %v275
        %v1443 = vunpack.c.h.b16 %v275
        %v1444 = vunpack.c.l.b16 %v276
        %v1445 = vunpack.c.h.b16 %v276
        %v1446 = vunpack.c.l.b16 %v277
        %v1447 = vunpack.c.h.b16 %v277
        %v1448 = vunpack.c.l.b16 %v278
        %v1449 = vunpack.c.h.b16 %v278
        %v1450 = vunpack.c.l.b16 %v279
        %v1451 = vunpack.c.h.b16 %v279
        %v1452 = vunpack.c.l.b16 %v280
        %v1453 = vunpack.c.h.b16 %v280
        %v1454 = vunpack.c.l.b16 %v281
        %v1455 = vunpack.c.h.b16 %v281
        %v1456 = vunpack.c.l.b16 %v282
        %v1457 = vunpack.c.h.b16 %v282
        %v1458 = vunpack.c.l.b16 %v283
        %v1459 = vunpack.c.h.b16 %v283
        %v1460 = vunpack.c.l.b16 %v284
        %v1461 = vunpack.c.h.b16 %v284
        %v1462 = vunpack.c.l.b16 %v285
        %v1463 = vunpack.c.h.b16 %v285
        %v1464 = vunpack.c.l.b16 %v286
        %v1465 = vunpack.c.h.b16 %v286
        %v1466 = vunpack.c.l.b16 %v287
        %v1467 = vunpack.c.h.b16 %v287
        %v1468 = vunpack.c.l.b16 %v288
        %v1469 = vunpack.c.h.b16 %v288
        %v1470 = vunpack.c.l.b16 %v289
        %v1471 = vunpack.c.h.b16 %v289
        %v1472 = vunpack.c.l.b16 %v290
        %v1473 = vunpack.c.h.b16 %v290
        %v1474 = vunpack.c.l.b16 %v291
        %v1475 = vunpack.c.h.b16 %v291
        %v1476 = vunpack.c.l.b16 %v292
        %v1477 = vunpack.c.h.b16 %v292
        %v1478 = vunpack.c.l.b16 %v293
        %v1479 = vunpack.c.h.b16 %v293
        %v1480 = vunpack.c.l.b16 %v294
        %v1481 = vunpack.c.h.b16 %v294
        %v1482 = vunpack.c.l.b16 %v295
        %v1483 = vunpack.c.h.b16 %v295
        %v1484 = vunpack.c.l.b16 %v296
        %v1485 = vunpack.c.h.b16 %v296
        %v1486 = vunpack.c.l.b16 %v297
        %v1487 = vunpack.c.h.b16 %v297
        %v1488 = vunpack.c.l.b16 %v298
        %v1489 = vunpack.c.h.b16 %v298
        %v1490 = vunpack.c.l.b16 %v299
        %v1491 = vunpack.c.h.b16 %v299
        %v1492 = vunpack.c.l.b16 %v300
        %v1493 = vunpack.c.h.b16 %v300
        %v1494 = vunpack.c.l.b16 %v301
        %v1495 = vunpack.c.h.b16 %v301
        %v1496 = vunpack.c.l.b16 %v302
        %v1497 = vunpack.c.h.b16 %v302
        %v1498 = vunpack.c.l.b16 %v303
        %v1499 = vunpack.c.h.b16 %v303
        %v1500 = vunpack.c.l.b16 %v304
        %v1501 = vunpack.c.h.b16 %v304
        %v1502 = vunpack.c.l.b16 %v305
        %v1503 = vunpack.c.h.b16 %v305
        %v1504 = vunpack.c.l.b16 %v306
        %v1505 = vunpack.c.h.b16 %v306
        %v1506 = vunpack.c.l.b16 %v307
        %v1507 = vunpack.c.h.b16 %v307
        %v1508 = vunpack.c.l.b16 %v308
        %v1509 = vunpack.c.h.b16 %v308
        %v1510 = vunpack.c.l.b16 %v309
        %v1511 = vunpack.c.h.b16 %v309
        %v1512 = vunpack.c.l.b16 %v310
        %v1513 = vunpack.c.h.b16 %v310
        %v1514 = vunpack.c.l.b16 %v311
        %v1515 = vunpack.c.h.b16 %v311
        %v1516 = vunpack.c.l.b16 %v312
        %v1517 = vunpack.c.h.b16 %v312
        %v1518 = vunpack.c.l.b16 %v313
        %v1519 = vunpack.c.h.b16 %v313
        %v1520 = vunpack.c.l.b16 %v314
        %v1521 = vunpack.c.h.b16 %v314
        %v1522 = vunpack.c.l.b16 %v315
        %v1523 = vunpack.c.h.b16 %v315
        %v1524 = vunpack.c.l.b16 %v316
        %v1525 = vunpack.c.h.b16 %v316
        %v1526 = vunpack.c.l.b16 %v317
        %v1527 = vunpack.c.h.b16 %v317
        %v1528 = vunpack.c.l.b16 %v318
        %v1529 = vunpack.c.h.b16 %v318
        %v1530 = vunpack.c.l.b16 %v319
        %v1531 = vunpack.c.h.b16 %v319
        %v1532 = vunpack.c.l.b16 %v320
        %v1533 = vunpack.c.h.b16 %v320
        %v1534 = vunpack.c.l.b16 %v321
        %v1535 = vunpack.c.h.b16 %v321
        %v1536 = vunpack.c.l.b16 %v322
        %v1537 = vunpack.c.h.b16 %v322
        %v1538 = vunpack.c.l.b16 %v323
        %v1539 = vunpack.c.h.b16 %v323
        %v1540 = vunpack.c.l.b16 %v324
        %v1541 = vunpack.c.h.b16 %v324
        %v1542 = vunpack.c.l.b16 %v325
        %v1543 = vunpack.c.h.b16 %v325
        %v1544 = vunpack.c.l.b16 %v326
        %v1545 = vunpack.c.h.b16 %v326
        %v1546 = vunpack.c.l.b16 %v327
        %v1547 = vunpack.c.h.b16 %v327
        %v1548 = vunpack.c.l.b16 %v328
        %v1549 = vunpack.c.h.b16 %v328
        %v1550 = vunpack.c.l.b16 %v329
        %v1551 = vunpack.c.h.b16 %v329
        %v1552 = vunpack.c.l.b16 %v330
        %v1553 = vunpack.c.h.b16 %v330
        %v1554 = vunpack.c.l.b16 %v331
        %v1555 = vunpack.c.h.b16 %v331
        %v1556 = vunpack.c.l.b16 %v332
        %v1557 = vunpack.c.h.b16 %v332
        %v1558 = vunpack.c.l.b16 %v333
        %v1559 = vunpack.c.h.b16 %v333
        %v1560 = vunpack.c.l.b16 %v334
        %v1561 = vunpack.c.h.b16 %v334
        %v1562 = vunpack.c.l.b16 %v335
        %v1563 = vunpack.c.h.b16 %v335
        %v1564 = vunpack.c.l.b16 %v336
        %v1565 = vunpack.c.h.b16 %v336
        %v1566 = vunpack.c.l.b16 %v337
        %v1567 = vunpack.c.h.b16 %v337
        %v1568 = vunpack.c.l.b16 %v338
        %v1569 = vunpack.c.h.b16 %v338
        %v1570 = vunpack.c.l.b16 %v339
        %v1571 = vunpack.c.h.b16 %v339
        %v1572 = vunpack.c.l.b16 %v340
        %v1573 = vunpack.c.h.b16 %v340
        %v1574 = vunpack.c.l.b16 %v341
        %v1575 = vunpack.c.h.b16 %v341
        %v1576 = vunpack.c.l.b16 %v342
        %v1577 = vunpack.c.h.b16 %v342
        %v1578 = vunpack.c.l.b16 %v343
        %v1579 = vunpack.c.h.b16 %v343
        %v1580 = vunpack.c.l.b16 %v344
        %v1581 = vunpack.c.h.b16 %v344
        %v1582 = vunpack.c.l.b16 %v345
        %v1583 = vunpack.c.h.b16 %v345
        %v1584 = vunpack.c.l.b16 %v346
        %v1585 = vunpack.c.h.b16 %v346
        %v1586 = vunpack.c.l.b16 %v347
        %v1587 = vunpack.c.h.b16 %v347
        %v1588 = vunpack.c.l.b16 %v348
        %v1589 = vunpack.c.h.b16 %v348
        %v1590 = vunpack.c.l.b16 %v349
        %v1591 = vunpack.c.h.b16 %v349
        %v1592 = vunpack.c.l.b16 %v350
        %v1593 = vunpack.c.h.b16 %v350
        %v1594 = vunpack.c.l.b16 %v351
        %v1595 = vunpack.c.h.b16 %v351
        %v1596 = vunpack.c.l.b16 %v352
        %v1597 = vunpack.c.h.b16 %v352
        %v1598 = vunpack.c.l.b16 %v353
        %v1599 = vunpack.c.h.b16 %v353
        %v1600 = vunpack.c.l.b16 %v354
        %v1601 = vunpack.c.h.b16 %v354
        %v1602 = vunpack.c.l.b16 %v355
        %v1603 = vunpack.c.h.b16 %v355
        %v1604 = vunpack.c.l.b16 %v356
        %v1605 = vunpack.c.h.b16 %v356
        %v1606 = vunpack.c.l.b16 %v357
        %v1607 = vunpack.c.h.b16 %v357
        %v1608 = vunpack.c.l.b16 %v358
        %v1609 = vunpack.c.h.b16 %v358
        %v1610 = vunpack.c.l.b16 %v359
        %v1611 = vunpack.c.h.b16 %v359
        %v1612 = vunpack.c.l.b16 %v360
        %v1613 = vunpack.c.h.b16 %v360
        %v1614 = vunpack.c.l.b16 %v361
        %v1615 = vunpack.c.h.b16 %v361
        %v1616 = vunpack.c.l.b16 %v362
        %v1617 = vunpack.c.h.b16 %v362
        %v1618 = vunpack.c.l.b16 %v363
        %v1619 = vunpack.c.h.b16 %v363
        %v1620 = vunpack.c.l.b16 %v364
        %v1621 = vunpack.c.h.b16 %v364
        %v1622 = vunpack.c.l.b16 %v365
        %v1623 = vunpack.c.h.b16 %v365
        %v1624 = vunpack.c.l.b16 %v366
        %v1625 = vunpack.c.h.b16 %v366
        %v1626 = vunpack.c.l.b16 %v367
        %v1627 = vunpack.c.h.b16 %v367
        %v1628 = vunpack.c.l.b16 %v368
        %v1629 = vunpack.c.h.b16 %v368
        %v1630 = vunpack.c.l.b16 %v369
        %v1631 = vunpack.c.h.b16 %v369
        %v1632 = vunpack.c.l.b16 %v370
        %v1633 = vunpack.c.h.b16 %v370
        %v1634 = vunpack.c.l.b16 %v371
        %v1635 = vunpack.c.h.b16 %v371
        %v1636 = vunpack.c.l.b16 %v372
        %v1637 = vunpack.c.h.b16 %v372
        %v1638 = vunpack.c.l.b16 %v373
        %v1639 = vunpack.c.h.b16 %v373
        %v1640 = vunpack.c.l.b16 %v374
        %v1641 = vunpack.c.h.b16 %v374
        %v1642 = vunpack.c.l.b16 %v375
        %v1643 = vunpack.c.h.b16 %v375
        %v1644 = vunpack.c.l.b16 %v376
        %v1645 = vunpack.c.h.b16 %v376
        %v1646 = vunpack.c.l.b16 %v377
        %v1647 = vunpack.c.h.b16 %v377
        %v1648 = vunpack.c.l.b16 %v378
        %v1649 = vunpack.c.h.b16 %v378
        %v1650 = vunpack.c.l.b16 %v379
        %v1651 = vunpack.c.h.b16 %v379
        %v1652 = vunpack.c.l.b16 %v380
        %v1653 = vunpack.c.h.b16 %v380
        %v1654 = vunpack.c.l.b16 %v381
        %v1655 = vunpack.c.h.b16 %v381
        %v1656 = vunpack.c.l.b16 %v382
        %v1657 = vunpack.c.h.b16 %v382
        %v1658 = vunpack.c.l.b16 %v383
        %v1659 = vunpack.c.h.b16 %v383
        %v1660 = vunpack.c.l.b16 %v384
        %v1661 = vunpack.c.h.b16 %v384
        %v1662 = vunpack.c.l.b16 %v385
        %v1663 = vunpack.c.h.b16 %v385
        %v1664 = vunpack.c.l.b16 %v386
        %v1665 = vunpack.c.h.b16 %v386
        %v1666 = vunpack.c.l.b16 %v387
        %v1667 = vunpack.c.h.b16 %v387
        %v1668 = vunpack.c.l.b16 %v388
        %v1669 = vunpack.c.h.b16 %v388
        %v1670 = vunpack.c.l.b16 %v389
        %v1671 = vunpack.c.h.b16 %v389
        %v1672 = vunpack.c.l.b16 %v390
        %v1673 = vunpack.c.h.b16 %v390
        %v1674 = vunpack.c.l.b16 %v391
        %v1675 = vunpack.c.h.b16 %v391
        %v1676 = vunpack.c.l.b16 %v392
        %v1677 = vunpack.c.h.b16 %v392
        %v1678 = vunpack.c.l.b16 %v393
        %v1679 = vunpack.c.h.b16 %v393
        %v1680 = vunpack.c.l.b16 %v394
        %v1681 = vunpack.c.h.b16 %v394
        %v1682 = vunpack.c.l.b16 %v395
        %v1683 = vunpack.c.h.b16 %v395
        %v1684 = vunpack.c.l.b16 %v396
        %v1685 = vunpack.c.h.b16 %v396
        %v1686 = vunpack.c.l.b16 %v397
        %v1687 = vunpack.c.h.b16 %v397
        %v1688 = vunpack.c.l.b16 %v398
        %v1689 = vunpack.c.h.b16 %v398
        %v1690 = vunpack.c.l.b16 %v399
        %v1691 = vunpack.c.h.b16 %v399
        %v1692 = vunpack.c.l.b16 %v400
        %v1693 = vunpack.c.h.b16 %v400
        %v1694 = vunpack.c.l.b16 %v401
        %v1695 = vunpack.c.h.b16 %v401
        %v1696 = vunpack.c.l.b16 %v402
        %v1697 = vunpack.c.h.b16 %v402
        %v1698 = vunpack.c.l.b16 %v403
        %v1699 = vunpack.c.h.b16 %v403
        %v1700 = vunpack.c.l.b16 %v404
        %v1701 = vunpack.c.h.b16 %v404
        %v1702 = vunpack.c.l.b16 %v405
        %v1703 = vunpack.c.h.b16 %v405
        %v1704 = vunpack.c.l.b16 %v406
        %v1705 = vunpack.c.h.b16 %v406
        %v1706 = vunpack.c.l.b16 %v407
        %v1707 = vunpack.c.h.b16 %v407
        %v1708 = vunpack.c.l.b16 %v408
        %v1709 = vunpack.c.h.b16 %v408
        %v1710 = vunpack.c.l.b16 %v409
        %v1711 = vunpack.c.h.b16 %v409
        %v1712 = vunpack.c.l.b16 %v410
        %v1713 = vunpack.c.h.b16 %v410
        %v1714 = vunpack.c.l.b16 %v411
        %v1715 = vunpack.c.h.b16 %v411
        %v1716 = vunpack.c.l.b16 %v412
        %v1717 = vunpack.c.h.b16 %v412
        %v1718 = vunpack.c.l.b16 %v413
        %v1719 = vunpack.c.h.b16 %v413
        %v1720 = vunpack.c.l.b16 %v414
        %v1721 = vunpack.c.h.b16 %v414
        %v1722 = vunpack.c.l.b16 %v415
        %v1723 = vunpack.c.h.b16 %v415
        %v1724 = vunpack.c.l.b16 %v416
        %v1725 = vunpack.c.h.b16 %v416
        %v1726 = vunpack.c.l.b16 %v417
        %v1727 = vunpack.c.h.b16 %v417
        %v1728 = vunpack.c.l.b16 %v418
        %v1729 = vunpack.c.h.b16 %v418
        %v1730 = vunpack.c.l.b16 %v419
        %v1731 = vunpack.c.h.b16 %v419
        %v1732 = vunpack.c.l.b16 %v420
        %v1733 = vunpack.c.h.b16 %v420
        %v1734 = vunpack.c.l.b16 %v421
        %v1735 = vunpack.c.h.b16 %v421
        %v1736 = vunpack.c.l.b16 %v422
        %v1737 = vunpack.c.h.b16 %v422
        %v1738 = vunpack.c.l.b16 %v423
        %v1739 = vunpack.c.h.b16 %v423
        %v1740 = vunpack.c.l.b16 %v424
        %v1741 = vunpack.c.h.b16 %v424
        %v1742 = vunpack.c.l.b16 %v425
        %v1743 = vunpack.c.h.b16 %v425
        %v1744 = vunpack.c.l.b16 %v426
        %v1745 = vunpack.c.h.b16 %v426
        %v1746 = vunpack.c.l.b16 %v427
        %v1747 = vunpack.c.h.b16 %v427
        %v1748 = vunpack.c.l.b16 %v428
        %v1749 = vunpack.c.h.b16 %v428
        %v1750 = vunpack.c.l.b16 %v429
        %v1751 = vunpack.c.h.b16 %v429
        %v1752 = vunpack.c.l.b16 %v430
        %v1753 = vunpack.c.h.b16 %v430
        %v1754 = vunpack.c.l.b16 %v431
        %v1755 = vunpack.c.h.b16 %v431
        %v1756 = vunpack.c.l.b16 %v432
        %v1757 = vunpack.c.h.b16 %v432
        %v1758 = vunpack.c.l.b16 %v433
        %v1759 = vunpack.c.h.b16 %v433
        %v1760 = vunpack.c.l.b16 %v434
        %v1761 = vunpack.c.h.b16 %v434
        %v1762 = vunpack.c.l.b16 %v435
        %v1763 = vunpack.c.h.b16 %v435
        %v1764 = vunpack.c.l.b16 %v436
        %v1765 = vunpack.c.h.b16 %v436
        %v1766 = vunpack.c.l.b16 %v437
        %v1767 = vunpack.c.h.b16 %v437
        %v1768 = vunpack.c.l.b16 %v438
        %v1769 = vunpack.c.h.b16 %v438
        %v1770 = vunpack.c.l.b16 %v439
        %v1771 = vunpack.c.h.b16 %v439
        %v1772 = vunpack.c.l.b16 %v440
        %v1773 = vunpack.c.h.b16 %v440
        %v1774 = vunpack.c.l.b16 %v441
        %v1775 = vunpack.c.h.b16 %v441
        %v1776 = vunpack.c.l.b16 %v442
        %v1777 = vunpack.c.h.b16 %v442
        %v1778 = vunpack.c.l.b16 %v443
        %v1779 = vunpack.c.h.b16 %v443
        %v1780 = vunpack.c.l.b16 %v444
        %v1781 = vunpack.c.h.b16 %v444
        %v1782 = vunpack.c.l.b16 %v445
        %v1783 = vunpack.c.h.b16 %v445
        %v1784 = vunpack.c.l.b16 %v446
        %v1785 = vunpack.c.h.b16 %v446
        %v1786 = vunpack.c.l.b16 %v447
        %v1787 = vunpack.c.h.b16 %v447
        %v1788 = vunpack.c.l.b16 %v448
        %v1789 = vunpack.c.h.b16 %v448
        %v1790 = vunpack.c.l.b16 %v449
        %v1791 = vunpack.c.h.b16 %v449
        %v1792 = vunpack.c.l.b16 %v450
        %v1793 = vunpack.c.h.b16 %v450
        %v1794 = vunpack.c.l.b16 %v451
        %v1795 = vunpack.c.h.b16 %v451
        %v1796 = vunpack.c.l.b16 %v452
        %v1797 = vunpack.c.h.b16 %v452
        %v1798 = vunpack.c.l.b16 %v453
        %v1799 = vunpack.c.h.b16 %v453
        %v1800 = vunpack.c.l.b16 %v454
        %v1801 = vunpack.c.h.b16 %v454
        %v1802 = vunpack.c.l.b16 %v455
        %v1803 = vunpack.c.h.b16 %v455
        %v1804 = vunpack.c.l.b16 %v456
        %v1805 = vunpack.c.h.b16 %v456
        %v1806 = vunpack.c.l.b16 %v457
        %v1807 = vunpack.c.h.b16 %v457
        %v1808 = vunpack.c.l.b16 %v458
        %v1809 = vunpack.c.h.b16 %v458
        %v1810 = vunpack.c.l.b16 %v459
        %v1811 = vunpack.c.h.b16 %v459
        %v1812 = vunpack.c.l.b16 %v460
        %v1813 = vunpack.c.h.b16 %v460
        %v1814 = vunpack.c.l.b16 %v461
        %v1815 = vunpack.c.h.b16 %v461
        %v1816 = vunpack.c.l.b16 %v462
        %v1817 = vunpack.c.h.b16 %v462
        %v1818 = vunpack.c.l.b16 %v463
        %v1819 = vunpack.c.h.b16 %v463
        %v1820 = vunpack.c.l.b16 %v464
        %v1821 = vunpack.c.h.b16 %v464
        %v1822 = vunpack.c.l.b16 %v465
        %v1823 = vunpack.c.h.b16 %v465
        %v1824 = vunpack.c.l.b16 %v466
        %v1825 = vunpack.c.h.b16 %v466
        %v1826 = vunpack.c.l.b16 %v467
        %v1827 = vunpack.c.h.b16 %v467
        %v1828 = vunpack.c.l.b16 %v468
        %v1829 = vunpack.c.h.b16 %v468
        %v1830 = vunpack.c.l.b16 %v469
        %v1831 = vunpack.c.h.b16 %v469
        %v1832 = vunpack.c.l.b16 %v470
        %v1833 = vunpack.c.h.b16 %v470
        %v1834 = vunpack.c.l.b16 %v471
        %v1835 = vunpack.c.h.b16 %v471
        %v1836 = vunpack.c.l.b16 %v472
        %v1837 = vunpack.c.h.b16 %v472
        %v1838 = vunpack.c.l.b16 %v473
        %v1839 = vunpack.c.h.b16 %v473
        %v1840 = vunpack.c.l.b16 %v474
        %v1841 = vunpack.c.h.b16 %v474
        %v1842 = vunpack.c.l.b16 %v475
        %v1843 = vunpack.c.h.b16 %v475
        %v1844 = vunpack.c.l.b16 %v476
        %v1845 = vunpack.c.h.b16 %v476
        %v1846 = vunpack.c.l.b16 %v477
        %v1847 = vunpack.c.h.b16 %v477
        %v1848 = vunpack.c.l.b16 %v478
        %v1849 = vunpack.c.h.b16 %v478
        %v1850 = vunpack.c.l.b16 %v479
        %v1851 = vunpack.c.h.b16 %v479
        %v1852 = vunpack.c.l.b16 %v480
        %v1853 = vunpack.c.h.b16 %v480
        %v1854 = vunpack.c.l.b16 %v481
        %v1855 = vunpack.c.h.b16 %v481
        %v1856 = vunpack.c.l.b16 %v482
        %v1857 = vunpack.c.h.b16 %v482
        %v1858 = vunpack.c.l.b16 %v483
        %v1859 = vunpack.c.h.b16 %v483
        %v1860 = vunpack.c.l.b16 %v484
        %v1861 = vunpack.c.h.b16 %v484
        %v1862 = vunpack.c.l.b16 %v485
        %v1863 = vunpack.c.h.b16 %v485
        %v1864 = vunpack.c.l.b16 %v486
        %v1865 = vunpack.c.h.b16 %v486
        %v1866 = vunpack.c.l.b16 %v487
        %v1867 = vunpack.c.h.b16 %v487
        %v1868 = vunpack.c.l.b16 %v488
        %v1869 = vunpack.c.h.b16 %v488
        %v1870 = vunpack.c.l.b16 %v489
        %v1871 = vunpack.c.h.b16 %v489
        %v1872 = vunpack.c.l.b16 %v490
        %v1873 = vunpack.c.h.b16 %v490
        %v1874 = vunpack.c.l.b16 %v491
        %v1875 = vunpack.c.h.b16 %v491
        %v1876 = vunpack.c.l.b16 %v492
        %v1877 = vunpack.c.h.b16 %v492
        %v1878 = vunpack.c.l.b16 %v493
        %v1879 = vunpack.c.h.b16 %v493
        %v1880 = vunpack.c.l.b16 %v494
        %v1881 = vunpack.c.h.b16 %v494
        %v1882 = vunpack.c.l.b16 %v495
        %v1883 = vunpack.c.h.b16 %v495
        %v1884 = vunpack.c.l.b16 %v496
        %v1885 = vunpack.c.h.b16 %v496
        %v1886 = vunpack.c.l.b16 %v497
        %v1887 = vunpack.c.h.b16 %v497
        %v1888 = vunpack.c.l.b16 %v498
        %v1889 = vunpack.c.h.b16 %v498
        %v1890 = vunpack.c.l.b16 %v499
        %v1891 = vunpack.c.h.b16 %v499
        %v1892 = vunpack.c.l.b16 %v500
        %v1893 = vunpack.c.h.b16 %v500
        %v1894 = vunpack.c.l.b16 %v501
        %v1895 = vunpack.c.h.b16 %v501
        %v1896 = vunpack.c.l.b16 %v502
        %v1897 = vunpack.c.h.b16 %v502
        %v1898 = vunpack.c.l.b16 %v503
        %v1899 = vunpack.c.h.b16 %v503
        %v1900 = vunpack.c.l.b16 %v504
        %v1901 = vunpack.c.h.b16 %v504
        %v1902 = vunpack.c.l.b16 %v505
        %v1903 = vunpack.c.h.b16 %v505
        %v1904 = vunpack.c.l.b16 %v506
        %v1905 = vunpack.c.h.b16 %v506
        %v1906 = vunpack.c.l.b16 %v507
        %v1907 = vunpack.c.h.b16 %v507
        %v1908 = vunpack.c.l.b16 %v508
        %v1909 = vunpack.c.h.b16 %v508
        %v1910 = vunpack.c.l.b16 %v509
        %v1911 = vunpack.c.h.b16 %v509
        %v1912 = vunpack.c.l.b16 %v510
        %v1913 = vunpack.c.h.b16 %v510
        %v1914 = vunpack.c.l.b16 %v511
        %v1915 = vunpack.c.h.b16 %v511
        %v1916 = vunpack.c.l.b16 %v512
        %v1917 = vunpack.c.h.b16 %v512
        %v1918 = vunpack.c.l.b16 %v513
        %v1919 = vunpack.c.h.b16 %v513
        %v1920 = vunpack.c.l.b16 %v514
        %v1921 = vunpack.c.h.b16 %v514
        %v1922 = vunpack.c.l.b16 %v515
        %v1923 = vunpack.c.h.b16 %v515
        %v1924 = vunpack.c.l.b16 %v516
        %v1925 = vunpack.c.h.b16 %v516
        %v1926 = vunpack.c.l.b16 %v517
        %v1927 = vunpack.c.h.b16 %v517
        %v1928 = vunpack.c.l.b16 %v518
        %v1929 = vunpack.c.h.b16 %v518
        %v1930 = vunpack.c.l.b16 %v519
        %v1931 = vunpack.c.h.b16 %v519
        %v1932 = vunpack.c.l.b16 %v520
        %v1933 = vunpack.c.h.b16 %v520
        %v1934 = vunpack.c.l.b16 %v521
        %v1935 = vunpack.c.h.b16 %v521
        %v1936 = vunpack.c.l.b16 %v522
        %v1937 = vunpack.c.h.b16 %v522
        %v1938 = vunpack.c.l.b16 %v523
        %v1939 = vunpack.c.h.b16 %v523
        %v1940 = vunpack.c.l.b16 %v524
        %v1941 = vunpack.c.h.b16 %v524
        %v1942 = vunpack.c.l.b16 %v525
        %v1943 = vunpack.c.h.b16 %v525
        %v1944 = vunpack.c.l.b16 %v526
        %v1945 = vunpack.c.h.b16 %v526
        %v1946 = vunpack.c.l.b16 %v527
        %v1947 = vunpack.c.h.b16 %v527
        %v1948 = vunpack.c.l.b16 %v528
        %v1949 = vunpack.c.h.b16 %v528
        %v1950 = vunpack.c.l.b16 %v529
        %v1951 = vunpack.c.h.b16 %v529
        %v1952 = vunpack.c.l.b16 %v530
        %v1953 = vunpack.c.h.b16 %v530
        %v1954 = vunpack.c.l.b16 %v531
        %v1955 = vunpack.c.h.b16 %v531
        %v1956 = vunpack.c.l.b16 %v532
        %v1957 = vunpack.c.h.b16 %v532
        %v1958 = vunpack.c.l.b16 %v533
        %v1959 = vunpack.c.h.b16 %v533
        %v1960 = vunpack.c.l.b16 %v534
        %v1961 = vunpack.c.h.b16 %v534
        %v1962 = vunpack.c.l.b16 %v535
        %v1963 = vunpack.c.h.b16 %v535
        %v1964 = vunpack.c.l.b16 %v536
        %v1965 = vunpack.c.h.b16 %v536
        %v1966 = vunpack.c.l.b16 %v537
        %v1967 = vunpack.c.h.b16 %v537
        %v1968 = vunpack.c.l.b16 %v538
        %v1969 = vunpack.c.h.b16 %v538
        %v1970 = vunpack.c.l.b16 %v539
        %v1971 = vunpack.c.h.b16 %v539
        %v1972 = vunpack.c.l.b16 %v540
        %v1973 = vunpack.c.h.b16 %v540
        %v1974 = vunpack.c.l.b16 %v541
        %v1975 = vunpack.c.h.b16 %v541
        %v1976 = vunpack.c.l.b16 %v542
        %v1977 = vunpack.c.h.b16 %v542
        %v1978 = vunpack.c.l.b16 %v543
        %v1979 = vunpack.c.h.b16 %v543
        %v1980 = vunpack.c.l.b16 %v544
        %v1981 = vunpack.c.h.b16 %v544
        %v1982 = vunpack.c.l.b16 %v545
        %v1983 = vunpack.c.h.b16 %v545
        %v1984 = vunpack.c.l.b16 %v546
        %v1985 = vunpack.c.h.b16 %v546
        %v1986 = vunpack.c.l.b16 %v547
        %v1987 = vunpack.c.h.b16 %v547
        %v1988 = vunpack.c.l.b16 %v548
        %v1989 = vunpack.c.h.b16 %v548
        %v1990 = vunpack.c.l.b16 %v549
        %v1991 = vunpack.c.h.b16 %v549
        %v1992 = vunpack.c.l.b16 %v550
        %v1993 = vunpack.c.h.b16 %v550
        %v1994 = vunpack.c.l.b16 %v551
        %v1995 = vunpack.c.h.b16 %v551
        %v1996 = vunpack.c.l.b16 %v552
        %v1997 = vunpack.c.h.b16 %v552
        %v1998 = vunpack.c.l.b16 %v553
        %v1999 = vunpack.c.h.b16 %v553
        %v2000 = vunpack.c.l.b16 %v554
        %v2001 = vunpack.c.h.b16 %v554
        %v2002 = vunpack.c.l.b16 %v555
        %v2003 = vunpack.c.h.b16 %v555
        %v2004 = vunpack.c.l.b16 %v556
        %v2005 = vunpack.c.h.b16 %v556
        %v2006 = vunpack.c.l.b16 %v557
        %v2007 = vunpack.c.h.b16 %v557
        %v2008 = vunpack.c.l.b16 %v558
        %v2009 = vunpack.c.h.b16 %v558
        %v2010 = vunpack.c.l.b16 %v559
        %v2011 = vunpack.c.h.b16 %v559
        %v2012 = vunpack.c.l.b16 %v560
        %v2013 = vunpack.c.h.b16 %v560
        %v2014 = vunpack.c.l.b16 %v561
        %v2015 = vunpack.c.h.b16 %v561
        %v2016 = vunpack.c.l.b16 %v562
        %v2017 = vunpack.c.h.b16 %v562
        %v2018 = vunpack.c.l.b16 %v563
        %v2019 = vunpack.c.h.b16 %v563
        %v2020 = vunpack.c.l.b16 %v564
        %v2021 = vunpack.c.h.b16 %v564
        %v2022 = vunpack.c.l.b16 %v565
        %v2023 = vunpack.c.h.b16 %v565
        %v2024 = vunpack.c.l.b16 %v566
        %v2025 = vunpack.c.h.b16 %v566
        %v2026 = vunpack.c.l.b16 %v567
        %v2027 = vunpack.c.h.b16 %v567
        %v2028 = vunpack.c.l.b16 %v568
        %v2029 = vunpack.c.h.b16 %v568
        %v2030 = vunpack.c.l.b16 %v569
        %v2031 = vunpack.c.h.b16 %v569
        %v2032 = vunpack.c.l.b16 %v570
        %v2033 = vunpack.c.h.b16 %v570
        %v2034 = vunpack.c.l.b16 %v571
        %v2035 = vunpack.c.h.b16 %v571
        %v2036 = vunpack.c.l.b16 %v572
        %v2037 = vunpack.c.h.b16 %v572
        %v2038 = vunpack.c.l.b16 %v573
        %v2039 = vunpack.c.h.b16 %v573
        %v2040 = vunpack.c.l.b16 %v574
        %v2041 = vunpack.c.h.b16 %v574
        %v2042 = vunpack.c.l.b16 %v575
        %v2043 = vunpack.c.h.b16 %v575
        %v2044 = vunpack.c.l.b16 %v576
        %v2045 = vunpack.c.h.b16 %v576
        %v2046 = vunpack.c.l.b16 %v577
        %v2047 = vunpack.c.h.b16 %v577
        %v2048 = vunpack.c.l.b16 %v578
        %v2049 = vunpack.c.h.b16 %v578
        %v2050 = vunpack.c.l.b16 %v579
        %v2051 = vunpack.c.h.b16 %v579
        %v2052 = vunpack.c.l.b16 %v580
        %v2053 = vunpack.c.h.b16 %v580
        %v2054 = vunpack.c.l.b16 %v581
        %v2055 = vunpack.c.h.b16 %v581
        %v2056 = vunpack.c.l.b16 %v582
        %v2057 = vunpack.c.h.b16 %v582
        %v2058 = vunpack.c.l.b16 %v583
        %v2059 = vunpack.c.h.b16 %v583
        %v2060 = vunpack.c.l.b16 %v584
        %v2061 = vunpack.c.h.b16 %v584
        %v2062 = vunpack.c.l.b16 %v585
        %v2063 = vunpack.c.h.b16 %v585
        %v2064 = vunpack.c.l.b16 %v586
        %v2065 = vunpack.c.h.b16 %v586
        %v2066 = vunpack.c.l.b16 %v587
        %v2067 = vunpack.c.h.b16 %v587
        %v2068 = vunpack.c.l.b16 %v588
        %v2069 = vunpack.c.h.b16 %v588
        %v2070 = vunpack.c.l.b16 %v589
        %v2071 = vunpack.c.h.b16 %v589
        %v2072 = vunpack.c.l.b16 %v590
        %v2073 = vunpack.c.h.b16 %v590
        %v2074 = vunpack.c.l.b16 %v591
        %v2075 = vunpack.c.h.b16 %v591
        %v2076 = vunpack.c.l.b16 %v592
        %v2077 = vunpack.c.h.b16 %v592
        %v2078 = vunpack.c.l.b16 %v593
        %v2079 = vunpack.c.h.b16 %v593
        %v2080 = vunpack.c.l.b16 %v594
        %v2081 = vunpack.c.h.b16 %v594
        %v2082 = vunpack.c.l.b16 %v595
        %v2083 = vunpack.c.h.b16 %v595
        %v2084 = vunpack.c.l.b16 %v596
        %v2085 = vunpack.c.h.b16 %v596
        %v2086 = vunpack.c.l.b16 %v597
        %v2087 = vunpack.c.h.b16 %v597
        %v2088 = vunpack.c.l.b16 %v598
        %v2089 = vunpack.c.h.b16 %v598
        %v2090 = vunpack.c.l.b16 %v599
        %v2091 = vunpack.c.h.b16 %v599
        %v2092 = vunpack.c.l.b16 %v600
        %v2093 = vunpack.c.h.b16 %v600
        %v2094 = vunpack.c.l.b16 %v601
        %v2095 = vunpack.c.h.b16 %v601
        %v2096 = vunpack.c.l.b16 %v602
        %v2097 = vunpack.c.h.b16 %v602
        %v2098 = vunpack.c.l.b16 %v603
        %v2099 = vunpack.c.h.b16 %v603
        %v2100 = vunpack.c.l.b16 %v604
        %v2101 = vunpack.c.h.b16 %v604
        %v2102 = vunpack.c.l.b16 %v605
        %v2103 = vunpack.c.h.b16 %v605
        %v2104 = vunpack.c.l.b16 %v606
        %v2105 = vunpack.c.h.b16 %v606
        %v2106 = vunpack.c.l.b16 %v607
        %v2107 = vunpack.c.h.b16 %v607
        %v2108 = vunpack.c.l.b16 %v608
        %v2109 = vunpack.c.h.b16 %v608
        %v2110 = vunpack.c.l.b16 %v609
        %v2111 = vunpack.c.h.b16 %v609
        %v2112 = vunpack.c.l.b16 %v610
        %v2113 = vunpack.c.h.b16 %v610
        %v2114 = vunpack.c.l.b16 %v611
        %v2115 = vunpack.c.h.b16 %v611
        %v2116 = vunpack.c.l.b16 %v612
        %v2117 = vunpack.c.h.b16 %v612
        %v2118 = vunpack.c.l.b16 %v613
        %v2119 = vunpack.c.h.b16 %v613
        %v2120 = vunpack.c.l.b16 %v614
        %v2121 = vunpack.c.h.b16 %v614
        %v2122 = vunpack.c.l.b16 %v615
        %v2123 = vunpack.c.h.b16 %v615
        %v2124 = vunpack.c.l.b16 %v616
        %v2125 = vunpack.c.h.b16 %v616
        %v2126 = vunpack.c.l.b16 %v617
        %v2127 = vunpack.c.h.b16 %v617
        %v2128 = vunpack.c.l.b16 %v618
        %v2129 = vunpack.c.h.b16 %v618
        %v2130 = vunpack.c.l.b16 %v619
        %v2131 = vunpack.c.h.b16 %v619
        %v2132 = vunpack.c.l.b16 %v620
        %v2133 = vunpack.c.h.b16 %v620
        %v2134 = vunpack.c.l.b16 %v621
        %v2135 = vunpack.c.h.b16 %v621
        %v2136 = vunpack.c.l.b16 %v622
        %v2137 = vunpack.c.h.b16 %v622
        %v2138 = vunpack.c.l.b16 %v623
        %v2139 = vunpack.c.h.b16 %v623
        %v2140 = vunpack.c.l.b16 %v624
        %v2141 = vunpack.c.h.b16 %v624
        %v2142 = vunpack.c.l.b16 %v625
        %v2143 = vunpack.c.h.b16 %v625
        %v2144 = vunpack.c.l.b16 %v626
        %v2145 = vunpack.c.h.b16 %v626
        %v2146 = vunpack.c.l.b16 %v627
        %v2147 = vunpack.c.h.b16 %v627
        %v2148 = vunpack.c.l.b16 %v628
        %v2149 = vunpack.c.h.b16 %v628
        %v2150 = vunpack.c.l.b16 %v629
        %v2151 = vunpack.c.h.b16 %v629
        %v2152 = vunpack.c.l.b16 %v630
        %v2153 = vunpack.c.h.b16 %v630
        %v2154 = vunpack.c.l.b16 %v631
        %v2155 = vunpack.c.h.b16 %v631
        %v2156 = vunpack.c.l.b16 %v632
        %v2157 = vunpack.c.h.b16 %v632
        %v2158 = vunpack.c.l.b16 %v633
        %v2159 = vunpack.c.h.b16 %v633
        %v2160 = vunpack.c.l.b16 %v634
        %v2161 = vunpack.c.h.b16 %v634
        %v2162 = vunpack.c.l.b16 %v635
        %v2163 = vunpack.c.h.b16 %v635
        %v2164 = vunpack.c.l.b16 %v636
        %v2165 = vunpack.c.h.b16 %v636
        %v2166 = vunpack.c.l.b16 %v637
        %v2167 = vunpack.c.h.b16 %v637
        %v2168 = vunpack.c.l.b16 %v638
        %v2169 = vunpack.c.h.b16 %v638
        %v2170 = vunpack.c.l.b16 %v639
        %v2171 = vunpack.c.h.b16 %v639
        %v2172 = vunpack.c.l.b16 %v640
        %v2173 = vunpack.c.h.b16 %v640
        %v2174 = vunpack.c.l.b16 %v641
        %v2175 = vunpack.c.h.b16 %v641
        %v2176 = vunpack.c.l.b16 %v642
        %v2177 = vunpack.c.h.b16 %v642
        %v2178 = vunpack.c.l.b16 %v643
        %v2179 = vunpack.c.h.b16 %v643
        %v2180 = vunpack.c.l.b16 %v644
        %v2181 = vunpack.c.h.b16 %v644
        %v2182 = vunpack.c.l.b16 %v645
        %v2183 = vunpack.c.h.b16 %v645
        %v2184 = vunpack.c.l.b16 %v646
        %v2185 = vunpack.c.h.b16 %v646
        %v2186 = vunpack.c.l.b16 %v647
        %v2187 = vunpack.c.h.b16 %v647
        %v2188 = vunpack.c.l.b16 %v648
        %v2189 = vunpack.c.h.b16 %v648
        %v2190 = vunpack.c.l.b16 %v649
        %v2191 = vunpack.c.h.b16 %v649
        %v2192 = vunpack.c.l.b16 %v650
        %v2193 = vunpack.c.h.b16 %v650
        %v2194 = vunpack.c.l.b16 %v651
        %v2195 = vunpack.c.h.b16 %v651
        %v2196 = vunpack.c.l.b16 %v652
        %v2197 = vunpack.c.h.b16 %v652
        %v2198 = vunpack.c.l.b16 %v653
        %v2199 = vunpack.c.h.b16 %v653
        %v2200 = vunpack.c.l.b16 %v654
        %v2201 = vunpack.c.h.b16 %v654
        %v2202 = vunpack.c.l.b16 %v655
        %v2203 = vunpack.c.h.b16 %v655
        %v2204 = vunpack.c.l.b16 %v656
        %v2205 = vunpack.c.h.b16 %v656
        %v2206 = vunpack.c.l.b16 %v657
        %v2207 = vunpack.c.h.b16 %v657
        %v2208 = vunpack.c.l.b16 %v658
        %v2209 = vunpack.c.h.b16 %v658
        %v2210 = vunpack.c.l.b16 %v659
        %v2211 = vunpack.c.h.b16 %v659
        %v2212 = vunpack.c.l.b16 %v660
        %v2213 = vunpack.c.h.b16 %v660
        %v2214 = vunpack.c.l.b16 %v661
        %v2215 = vunpack.c.h.b16 %v661
        %v2216 = vunpack.c.l.b16 %v662
        %v2217 = vunpack.c.h.b16 %v662
        %v2218 = vunpack.c.l.b16 %v663
        %v2219 = vunpack.c.h.b16 %v663
        %v2220 = vunpack.c.l.b16 %v664
        %v2221 = vunpack.c.h.b16 %v664
        %v2222 = vunpack.c.l.b16 %v665
        %v2223 = vunpack.c.h.b16 %v665
        %v2224 = vunpack.c.l.b16 %v666
        %v2225 = vunpack.c.h.b16 %v666
        %v2226 = vunpack.c.l.b16 %v667
        %v2227 = vunpack.c.h.b16 %v667
        %v2228 = vunpack.c.l.b16 %v668
        %v2229 = vunpack.c.h.b16 %v668
        %v2230 = vunpack.c.l.b16 %v669
        %v2231 = vunpack.c.h.b16 %v669
        %v2232 = vunpack.c.l.b16 %v670
        %v2233 = vunpack.c.h.b16 %v670
        %v2234 = vunpack.c.l.b16 %v671
        %v2235 = vunpack.c.h.b16 %v671
        %v2236 = vunpack.c.l.b16 %v672
        %v2237 = vunpack.c.h.b16 %v672
        %v2238 = vunpack.c.l.b16 %v673
        %v2239 = vunpack.c.h.b16 %v673
        %v2240 = vunpack.c.l.b16 %v674
        %v2241 = vunpack.c.h.b16 %v674
        %v2242 = vunpack.c.l.b16 %v675
        %v2243 = vunpack.c.h.b16 %v675
        %v2244 = vunpack.c.l.b16 %v676
        %v2245 = vunpack.c.h.b16 %v676
        %v2246 = vunpack.c.l.b16 %v677
        %v2247 = vunpack.c.h.b16 %v677
        %v2248 = vunpack.c.l.b16 %v678
        %v2249 = vunpack.c.h.b16 %v678
        %v2250 = vunpack.c.l.b16 %v679
        %v2251 = vunpack.c.h.b16 %v679
        %v2252 = vunpack.c.l.b16 %v680
        %v2253 = vunpack.c.h.b16 %v680
        %v2254 = vunpack.c.l.b16 %v681
        %v2255 = vunpack.c.h.b16 %v681
        %v2256 = vunpack.c.l.b16 %v682
        %v2257 = vunpack.c.h.b16 %v682
        %v2258 = vunpack.c.l.b16 %v683
        %v2259 = vunpack.c.h.b16 %v683
        %v2260 = vunpack.c.l.b16 %v684
        %v2261 = vunpack.c.h.b16 %v684
        %v2262 = vunpack.c.l.b16 %v685
        %v2263 = vunpack.c.h.b16 %v685
        %v2264 = vunpack.c.l.b16 %v686
        %v2265 = vunpack.c.h.b16 %v686
        %v2266 = vunpack.c.l.b16 %v687
        %v2267 = vunpack.c.h.b16 %v687
        %v2268 = vunpack.c.l.b16 %v688
        %v2269 = vunpack.c.h.b16 %v688
        %v2270 = vunpack.c.l.b16 %v689
        %v2271 = vunpack.c.h.b16 %v689
        %v2272 = vunpack.c.l.b16 %v690
        %v2273 = vunpack.c.h.b16 %v690
        %v2274 = vunpack.c.l.b16 %v691
        %v2275 = vunpack.c.h.b16 %v691
        %v2276 = vunpack.c.l.b16 %v692
        %v2277 = vunpack.c.h.b16 %v692
        %v2278 = vunpack.c.l.b16 %v693
        %v2279 = vunpack.c.h.b16 %v693
        %v2280 = vunpack.c.l.b16 %v694
        %v2281 = vunpack.c.h.b16 %v694
        %v2282 = vunpack.c.l.b16 %v695
        %v2283 = vunpack.c.h.b16 %v695
        %v2284 = vunpack.c.l.b16 %v696
        %v2285 = vunpack.c.h.b16 %v696
        %v2286 = vunpack.c.l.b16 %v697
        %v2287 = vunpack.c.h.b16 %v697
        %v2288 = vunpack.c.l.b16 %v698
        %v2289 = vunpack.c.h.b16 %v698
        %v2290 = vunpack.c.l.b16 %v699
        %v2291 = vunpack.c.h.b16 %v699
        %v2292 = vunpack.c.l.b16 %v700
        %v2293 = vunpack.c.h.b16 %v700
        %v2294 = vunpack.c.l.b16 %v701
        %v2295 = vunpack.c.h.b16 %v701
        %v2296 = vunpack.c.l.b16 %v702
        %v2297 = vunpack.c.h.b16 %v702
        %v2298 = vunpack.c.l.b16 %v703
        %v2299 = vunpack.c.h.b16 %v703
        %v2300 = vunpack.c.l.b16 %v704
        %v2301 = vunpack.c.h.b16 %v704
        %v2302 = vunpack.c.l.b16 %v705
        %v2303 = vunpack.c.h.b16 %v705
        %v2304 = vunpack.c.l.b16 %v706
        %v2305 = vunpack.c.h.b16 %v706
        %v2306 = vunpack.c.l.b16 %v707
        %v2307 = vunpack.c.h.b16 %v707
        %v2308 = vunpack.c.l.b16 %v708
        %v2309 = vunpack.c.h.b16 %v708
        %v2310 = vunpack.c.l.b16 %v709
        %v2311 = vunpack.c.h.b16 %v709
        %v2312 = vunpack.c.l.b16 %v710
        %v2313 = vunpack.c.h.b16 %v710
        %v2314 = vunpack.c.l.b16 %v711
        %v2315 = vunpack.c.h.b16 %v711
        %v2316 = vunpack.c.l.b16 %v712
        %v2317 = vunpack.c.h.b16 %v712
        %v2318 = vunpack.c.l.b16 %v713
        %v2319 = vunpack.c.h.b16 %v713
        %v2320 = vunpack.c.l.b16 %v714
        %v2321 = vunpack.c.h.b16 %v714
        %v2322 = vunpack.c.l.b16 %v715
        %v2323 = vunpack.c.h.b16 %v715
        %v2324 = vunpack.c.l.b16 %v716
        %v2325 = vunpack.c.h.b16 %v716
        %v2326 = vunpack.c.l.b16 %v717
        %v2327 = vunpack.c.h.b16 %v717
        %v2328 = vunpack.c.l.b16 %v718
        %v2329 = vunpack.c.h.b16 %v718
        %v2330 = vunpack.c.l.b16 %v719
        %v2331 = vunpack.c.h.b16 %v719
        %v2332 = vunpack.c.l.b16 %v720
        %v2333 = vunpack.c.h.b16 %v720
        %v2334 = vunpack.c.l.b16 %v721
        %v2335 = vunpack.c.h.b16 %v721
        %v2336 = vunpack.c.l.b16 %v722
        %v2337 = vunpack.c.h.b16 %v722
        %v2338 = vunpack.c.l.b16 %v723
        %v2339 = vunpack.c.h.b16 %v723
        %v2340 = vpack.c.b16 %v1324, %v1316
        %v2341 = vpack.c.b16 %v1325, %v1317
        %v2342 = vpack.c.b16 %v1326, %v1318
        %v2343 = vpack.c.b16 %v1327, %v1319
        %v2344 = vpack.c.b16 %v1328, %v1320
        %v2345 = vpack.c.b16 %v1329, %v1321
        %v2346 = vpack.c.b16 %v1330, %v1322
        %v2347 = vpack.c.b16 %v1331, %v1323
        %v2348 = vpack.c.b16 %v1340, %v1332
        %v2349 = vpack.c.b16 %v1341, %v1333
        %v2350 = vpack.c.b16 %v1342, %v1334
        %v2351 = vpack.c.b16 %v1343, %v1335
        %v2352 = vpack.c.b16 %v1344, %v1336
        %v2353 = vpack.c.b16 %v1345, %v1337
        %v2354 = vpack.c.b16 %v1346, %v1338
        %v2355 = vpack.c.b16 %v1347, %v1339
        %v2356 = vpack.c.b16 %v1356, %v1348
        %v2357 = vpack.c.b16 %v1357, %v1349
        %v2358 = vpack.c.b16 %v1358, %v1350
        %v2359 = vpack.c.b16 %v1359, %v1351
        %v2360 = vpack.c.b16 %v1360, %v1352
        %v2361 = vpack.c.b16 %v1361, %v1353
        %v2362 = vpack.c.b16 %v1362, %v1354
        %v2363 = vpack.c.b16 %v1363, %v1355
        %v2364 = vpack.c.b16 %v1372, %v1364
        %v2365 = vpack.c.b16 %v1373, %v1365
        %v2366 = vpack.c.b16 %v1374, %v1366
        %v2367 = vpack.c.b16 %v1375, %v1367
        %v2368 = vpack.c.b16 %v1376, %v1368
        %v2369 = vpack.c.b16 %v1377, %v1369
        %v2370 = vpack.c.b16 %v1378, %v1370
        %v2371 = vpack.c.b16 %v1379, %v1371
        %v2372 = vpack.c.b16 %v1388, %v1380
        %v2373 = vpack.c.b16 %v1389, %v1381
        %v2374 = vpack.c.b16 %v1390, %v1382
        %v2375 = vpack.c.b16 %v1391, %v1383
        %v2376 = vpack.c.b16 %v1392, %v1384
        %v2377 = vpack.c.b16 %v1393, %v1385
        %v2378 = vpack.c.b16 %v1394, %v1386
        %v2379 = vpack.c.b16 %v1395, %v1387
        %v2380 = vpack.c.b16 %v1404, %v1396
        %v2381 = vpack.c.b16 %v1405, %v1397
        %v2382 = vpack.c.b16 %v1406, %v1398
        %v2383 = vpack.c.b16 %v1407, %v1399
        %v2384 = vpack.c.b16 %v1408, %v1400
        %v2385 = vpack.c.b16 %v1409, %v1401
        %v2386 = vpack.c.b16 %v1410, %v1402
        %v2387 = vpack.c.b16 %v1411, %v1403
        %v2388 = vpack.c.b16 %v1420, %v1412
        %v2389 = vpack.c.b16 %v1421, %v1413
        %v2390 = vpack.c.b16 %v1422, %v1414
        %v2391 = vpack.c.b16 %v1423, %v1415
        %v2392 = vpack.c.b16 %v1424, %v1416
        %v2393 = vpack.c.b16 %v1425, %v1417
        %v2394 = vpack.c.b16 %v1426, %v1418
        %v2395 = vpack.c.b16 %v1427, %v1419
        %v2396 = vpack.c.b16 %v1436, %v1428
        %v2397 = vpack.c.b16 %v1437, %v1429
        %v2398 = vpack.c.b16 %v1438, %v1430
        %v2399 = vpack.c.b16 %v1439, %v1431
        %v2400 = vpack.c.b16 %v1440, %v1432
        %v2401 = vpack.c.b16 %v1441, %v1433
        %v2402 = vpack.c.b16 %v1442, %v1434
        %v2403 = vpack.c.b16 %v1443, %v1435
        %v2404 = vpack.c.b16 %v1452, %v1444
        %v2405 = vpack.c.b16 %v1453, %v1445
        %v2406 = vpack.c.b16 %v1454, %v1446
        %v2407 = vpack.c.b16 %v1455, %v1447
        %v2408 = vpack.c.b16 %v1456, %v1448
        %v2409 = vpack.c.b16 %v1457, %v1449
        %v2410 = vpack.c.b16 %v1458, %v1450
        %v2411 = vpack.c.b16 %v1459, %v1451
        %v2412 = vpack.c.b16 %v1468, %v1460
        %v2413 = vpack.c.b16 %v1469, %v1461
        %v2414 = vpack.c.b16 %v1470, %v1462
        %v2415 = vpack.c.b16 %v1471, %v1463
        %v2416 = vpack.c.b16 %v1472, %v1464
        %v2417 = vpack.c.b16 %v1473, %v1465
        %v2418 = vpack.c.b16 %v1474, %v1466
        %v2419 = vpack.c.b16 %v1475, %v1467
        %v2420 = vpack.c.b16 %v1484, %v1476
        %v2421 = vpack.c.b16 %v1485, %v1477
        %v2422 = vpack.c.b16 %v1486, %v1478
        %v2423 = vpack.c.b16 %v1487, %v1479
        %v2424 = vpack.c.b16 %v1488, %v1480
        %v2425 = vpack.c.b16 %v1489, %v1481
        %v2426 = vpack.c.b16 %v1490, %v1482
        %v2427 = vpack.c.b16 %v1491, %v1483
        %v2428 = vpack.c.b16 %v1500, %v1492
        %v2429 = vpack.c.b16 %v1501, %v1493
        %v2430 = vpack.c.b16 %v1502, %v1494
        %v2431 = vpack.c.b16 %v1503, %v1495
        %v2432 = vpack.c.b16 %v1504, %v1496
        %v2433 = vpack.c.b16 %v1505, %v1497
        %v2434 = vpack.c.b16 %v1506, %v1498
        %v2435 = vpack.c.b16 %v1507, %v1499
        %v2436 = vpack.c.b16 %v1516, %v1508
        %v2437 = vpack.c.b16 %v1517, %v1509
        %v2438 = vpack.c.b16 %v1518, %v1510
        %v2439 = vpack.c.b16 %v1519, %v1511
        %v2440 = vpack.c.b16 %v1520, %v1512
        %v2441 = vpack.c.b16 %v1521, %v1513
        %v2442 = vpack.c.b16 %v1522, %v1514
        %v2443 = vpack.c.b16 %v1523, %v1515
        %v2444 = vpack.c.b16 %v1532, %v1524
        %v2445 = vpack.c.b16 %v1533, %v1525
        %v2446 = vpack.c.b16 %v1534, %v1526
        %v2447 = vpack.c.b16 %v1535, %v1527
        %v2448 = vpack.c.b16 %v1536, %v1528
        %v2449 = vpack.c.b16 %v1537, %v1529
        %v2450 = vpack.c.b16 %v1538, %v1530
        %v2451 = vpack.c.b16 %v1539, %v1531
        %v2452 = vpack.c.b16 %v1548, %v1540
        %v2453 = vpack.c.b16 %v1549, %v1541
        %v2454 = vpack.c.b16 %v1550, %v1542
        %v2455 = vpack.c.b16 %v1551, %v1543
        %v2456 = vpack.c.b16 %v1552, %v1544
        %v2457 = vpack.c.b16 %v1553, %v1545
        %v2458 = vpack.c.b16 %v1554, %v1546
        %v2459 = vpack.c.b16 %v1555, %v1547
        %v2460 = vpack.c.b16 %v1564, %v1556
        %v2461 = vpack.c.b16 %v1565, %v1557
        %v2462 = vpack.c.b16 %v1566, %v1558
        %v2463 = vpack.c.b16 %v1567, %v1559
        %v2464 = vpack.c.b16 %v1568, %v1560
        %v2465 = vpack.c.b16 %v1569, %v1561
        %v2466 = vpack.c.b16 %v1570, %v1562
        %v2467 = vpack.c.b16 %v1571, %v1563
        %v2468 = vpack.c.b16 %v1580, %v1572
        %v2469 = vpack.c.b16 %v1581, %v1573
        %v2470 = vpack.c.b16 %v1582, %v1574
        %v2471 = vpack.c.b16 %v1583, %v1575
        %v2472 = vpack.c.b16 %v1584, %v1576
        %v2473 = vpack.c.b16 %v1585, %v1577
        %v2474 = vpack.c.b16 %v1586, %v1578
        %v2475 = vpack.c.b16 %v1587, %v1579
        %v2476 = vpack.c.b16 %v1596, %v1588
        %v2477 = vpack.c.b16 %v1597, %v1589
        %v2478 = vpack.c.b16 %v1598, %v1590
        %v2479 = vpack.c.b16 %v1599, %v1591
        %v2480 = vpack.c.b16 %v1600, %v1592
        %v2481 = vpack.c.b16 %v1601, %v1593
        %v2482 = vpack.c.b16 %v1602, %v1594
        %v2483 = vpack.c.b16 %v1603, %v1595
        %v2484 = vpack.c.b16 %v1612, %v1604
        %v2485 = vpack.c.b16 %v1613, %v1605
        %v2486 = vpack.c.b16 %v1614, %v1606
        %v2487 = vpack.c.b16 %v1615, %v1607
        %v2488 = vpack.c.b16 %v1616, %v1608
        %v2489 = vpack.c.b16 %v1617, %v1609
        %v2490 = vpack.c.b16 %v1618, %v1610
        %v2491 = vpack.c.b16 %v1619, %v1611
        %v2492 = vpack.c.b16 %v1628, %v1620
        %v2493 = vpack.c.b16 %v1629, %v1621
        %v2494 = vpack.c.b16 %v1630, %v1622
        %v2495 = vpack.c.b16 %v1631, %v1623
        %v2496 = vpack.c.b16 %v1632, %v1624
        %v2497 = vpack.c.b16 %v1633, %v1625
        %v2498 = vpack.c.b16 %v1634, %v1626
        %v2499 = vpack.c.b16 %v1635, %v1627
        %v2500 = vpack.c.b16 %v1644, %v1636
        %v2501 = vpack.c.b16 %v1645, %v1637
        %v2502 = vpack.c.b16 %v1646, %v1638
        %v2503 = vpack.c.b16 %v1647, %v1639
        %v2504 = vpack.c.b16 %v1648, %v1640
        %v2505 = vpack.c.b16 %v1649, %v1641
        %v2506 = vpack.c.b16 %v1650, %v1642
        %v2507 = vpack.c.b16 %v1651, %v1643
        %v2508 = vpack.c.b16 %v1660, %v1652
        %v2509 = vpack.c.b16 %v1661, %v1653
        %v2510 = vpack.c.b16 %v1662, %v1654
        %v2511 = vpack.c.b16 %v1663, %v1655
        %v2512 = vpack.c.b16 %v1664, %v1656
        %v2513 = vpack.c.b16 %v1665, %v1657
        %v2514 = vpack.c.b16 %v1666, %v1658
        %v2515 = vpack.c.b16 %v1667, %v1659
        %v2516 = vpack.c.b16 %v1676, %v1668
        %v2517 = vpack.c.b16 %v1677, %v1669
        %v2518 = vpack.c.b16 %v1678, %v1670
        %v2519 = vpack.c.b16 %v1679, %v1671
        %v2520 = vpack.c.b16 %v1680, %v1672
        %v2521 = vpack.c.b16 %v1681, %v1673
        %v2522 = vpack.c.b16 %v1682, %v1674
        %v2523 = vpack.c.b16 %v1683, %v1675
        %v2524 = vpack.c.b16 %v1692, %v1684
        %v2525 = vpack.c.b16 %v1693, %v1685
        %v2526 = vpack.c.b16 %v1694, %v1686
        %v2527 = vpack.c.b16 %v1695, %v1687
        %v2528 = vpack.c.b16 %v1696, %v1688
        %v2529 = vpack.c.b16 %v1697, %v1689
        %v2530 = vpack.c.b16 %v1698, %v1690
        %v2531 = vpack.c.b16 %v1699, %v1691
        %v2532 = vpack.c.b16 %v1708, %v1700
        %v2533 = vpack.c.b16 %v1709, %v1701
        %v2534 = vpack.c.b16 %v1710, %v1702
        %v2535 = vpack.c.b16 %v1711, %v1703
        %v2536 = vpack.c.b16 %v1712, %v1704
        %v2537 = vpack.c.b16 %v1713, %v1705
        %v2538 = vpack.c.b16 %v1714, %v1706
        %v2539 = vpack.c.b16 %v1715, %v1707
        %v2540 = vpack.c.b16 %v1724, %v1716
        %v2541 = vpack.c.b16 %v1725, %v1717
        %v2542 = vpack.c.b16 %v1726, %v1718
        %v2543 = vpack.c.b16 %v1727, %v1719
        %v2544 = vpack.c.b16 %v1728, %v1720
        %v2545 = vpack.c.b16 %v1729, %v1721
        %v2546 = vpack.c.b16 %v1730, %v1722
        %v2547 = vpack.c.b16 %v1731, %v1723
        %v2548 = vpack.c.b16 %v1740, %v1732
        %v2549 = vpack.c.b16 %v1741, %v1733
        %v2550 = vpack.c.b16 %v1742, %v1734
        %v2551 = vpack.c.b16 %v1743, %v1735
        %v2552 = vpack.c.b16 %v1744, %v1736
        %v2553 = vpack.c.b16 %v1745, %v1737
        %v2554 = vpack.c.b16 %v1746, %v1738
        %v2555 = vpack.c.b16 %v1747, %v1739
        %v2556 = vpack.c.b16 %v1756, %v1748
        %v2557 = vpack.c.b16 %v1757, %v1749
        %v2558 = vpack.c.b16 %v1758, %v1750
        %v2559 = vpack.c.b16 %v1759, %v1751
        %v2560 = vpack.c.b16 %v1760, %v1752
        %v2561 = vpack.c.b16 %v1761, %v1753
        %v2562 = vpack.c.b16 %v1762, %v1754
        %v2563 = vpack.c.b16 %v1763, %v1755
        %v2564 = vpack.c.b16 %v1772, %v1764
        %v2565 = vpack.c.b16 %v1773, %v1765
        %v2566 = vpack.c.b16 %v1774, %v1766
        %v2567 = vpack.c.b16 %v1775, %v1767
        %v2568 = vpack.c.b16 %v1776, %v1768
        %v2569 = vpack.c.b16 %v1777, %v1769
        %v2570 = vpack.c.b16 %v1778, %v1770
        %v2571 = vpack.c.b16 %v1779, %v1771
        %v2572 = vpack.c.b16 %v1788, %v1780
        %v2573 = vpack.c.b16 %v1789, %v1781
        %v2574 = vpack.c.b16 %v1790, %v1782
        %v2575 = vpack.c.b16 %v1791, %v1783
        %v2576 = vpack.c.b16 %v1792, %v1784
        %v2577 = vpack.c.b16 %v1793, %v1785
        %v2578 = vpack.c.b16 %v1794, %v1786
        %v2579 = vpack.c.b16 %v1795, %v1787
        %v2580 = vpack.c.b16 %v1804, %v1796
        %v2581 = vpack.c.b16 %v1805, %v1797
        %v2582 = vpack.c.b16 %v1806, %v1798
        %v2583 = vpack.c.b16 %v1807, %v1799
        %v2584 = vpack.c.b16 %v1808, %v1800
        %v2585 = vpack.c.b16 %v1809, %v1801
        %v2586 = vpack.c.b16 %v1810, %v1802
        %v2587 = vpack.c.b16 %v1811, %v1803
        %v2588 = vpack.c.b16 %v1820, %v1812
        %v2589 = vpack.c.b16 %v1821, %v1813
        %v2590 = vpack.c.b16 %v1822, %v1814
        %v2591 = vpack.c.b16 %v1823, %v1815
        %v2592 = vpack.c.b16 %v1824, %v1816
        %v2593 = vpack.c.b16 %v1825, %v1817
        %v2594 = vpack.c.b16 %v1826, %v1818
        %v2595 = vpack.c.b16 %v1827, %v1819
        %v2596 = vpack.c.b16 %v1836, %v1828
        %v2597 = vpack.c.b16 %v1837, %v1829
        %v2598 = vpack.c.b16 %v1838, %v1830
        %v2599 = vpack.c.b16 %v1839, %v1831
        %v2600 = vpack.c.b16 %v1840, %v1832
        %v2601 = vpack.c.b16 %v1841, %v1833
        %v2602 = vpack.c.b16 %v1842, %v1834
        %v2603 = vpack.c.b16 %v1843, %v1835
        %v2604 = vpack.c.b16 %v1852, %v1844
        %v2605 = vpack.c.b16 %v1853, %v1845
        %v2606 = vpack.c.b16 %v1854, %v1846
        %v2607 = vpack.c.b16 %v1855, %v1847
        %v2608 = vpack.c.b16 %v1856, %v1848
        %v2609 = vpack.c.b16 %v1857, %v1849
        %v2610 = vpack.c.b16 %v1858, %v1850
        %v2611 = vpack.c.b16 %v1859, %v1851
        %v2612 = vpack.c.b16 %v1868, %v1860
        %v2613 = vpack.c.b16 %v1869, %v1861
        %v2614 = vpack.c.b16 %v1870, %v1862
        %v2615 = vpack.c.b16 %v1871, %v1863
        %v2616 = vpack.c.b16 %v1872, %v1864
        %v2617 = vpack.c.b16 %v1873, %v1865
        %v2618 = vpack.c.b16 %v1874, %v1866
        %v2619 = vpack.c.b16 %v1875, %v1867
        %v2620 = vpack.c.b16 %v1884, %v1876
        %v2621 = vpack.c.b16 %v1885, %v1877
        %v2622 = vpack.c.b16 %v1886, %v1878
        %v2623 = vpack.c.b16 %v1887, %v1879
        %v2624 = vpack.c.b16 %v1888, %v1880
        %v2625 = vpack.c.b16 %v1889, %v1881
        %v2626 = vpack.c.b16 %v1890, %v1882
        %v2627 = vpack.c.b16 %v1891, %v1883
        %v2628 = vpack.c.b16 %v1900, %v1892
        %v2629 = vpack.c.b16 %v1901, %v1893
        %v2630 = vpack.c.b16 %v1902, %v1894
        %v2631 = vpack.c.b16 %v1903, %v1895
        %v2632 = vpack.c.b16 %v1904, %v1896
        %v2633 = vpack.c.b16 %v1905, %v1897
        %v2634 = vpack.c.b16 %v1906, %v1898
        %v2635 = vpack.c.b16 %v1907, %v1899
        %v2636 = vpack.c.b16 %v1916, %v1908
        %v2637 = vpack.c.b16 %v1917, %v1909
        %v2638 = vpack.c.b16 %v1918, %v1910
        %v2639 = vpack.c.b16 %v1919, %v1911
        %v2640 = vpack.c.b16 %v1920, %v1912
        %v2641 = vpack.c.b16 %v1921, %v1913
        %v2642 = vpack.c.b16 %v1922, %v1914
        %v2643 = vpack.c.b16 %v1923, %v1915
        %v2644 = vpack.c.b16 %v1932, %v1924
        %v2645 = vpack.c.b16 %v1933, %v1925
        %v2646 = vpack.c.b16 %v1934, %v1926
        %v2647 = vpack.c.b16 %v1935, %v1927
        %v2648 = vpack.c.b16 %v1936, %v1928
        %v2649 = vpack.c.b16 %v1937, %v1929
        %v2650 = vpack.c.b16 %v1938, %v1930
        %v2651 = vpack.c.b16 %v1939, %v1931
        %v2652 = vpack.c.b16 %v1948, %v1940
        %v2653 = vpack.c.b16 %v1949, %v1941
        %v2654 = vpack.c.b16 %v1950, %v1942
        %v2655 = vpack.c.b16 %v1951, %v1943
        %v2656 = vpack.c.b16 %v1952, %v1944
        %v2657 = vpack.c.b16 %v1953, %v1945
        %v2658 = vpack.c.b16 %v1954, %v1946
        %v2659 = vpack.c.b16 %v1955, %v1947
        %v2660 = vpack.c.b16 %v1964, %v1956
        %v2661 = vpack.c.b16 %v1965, %v1957
        %v2662 = vpack.c.b16 %v1966, %v1958
        %v2663 = vpack.c.b16 %v1967, %v1959
        %v2664 = vpack.c.b16 %v1968, %v1960
        %v2665 = vpack.c.b16 %v1969, %v1961
        %v2666 = vpack.c.b16 %v1970, %v1962
        %v2667 = vpack.c.b16 %v1971, %v1963
        %v2668 = vpack.c.b16 %v1980, %v1972
        %v2669 = vpack.c.b16 %v1981, %v1973
        %v2670 = vpack.c.b16 %v1982, %v1974
        %v2671 = vpack.c.b16 %v1983, %v1975
        %v2672 = vpack.c.b16 %v1984, %v1976
        %v2673 = vpack.c.b16 %v1985, %v1977
        %v2674 = vpack.c.b16 %v1986, %v1978
        %v2675 = vpack.c.b16 %v1987, %v1979
        %v2676 = vpack.c.b16 %v1996, %v1988
        %v2677 = vpack.c.b16 %v1997, %v1989
        %v2678 = vpack.c.b16 %v1998, %v1990
        %v2679 = vpack.c.b16 %v1999, %v1991
        %v2680 = vpack.c.b16 %v2000, %v1992
        %v2681 = vpack.c.b16 %v2001, %v1993
        %v2682 = vpack.c.b16 %v2002, %v1994
        %v2683 = vpack.c.b16 %v2003, %v1995
        %v2684 = vpack.c.b16 %v2012, %v2004
        %v2685 = vpack.c.b16 %v2013, %v2005
        %v2686 = vpack.c.b16 %v2014, %v2006
        %v2687 = vpack.c.b16 %v2015, %v2007
        %v2688 = vpack.c.b16 %v2016, %v2008
        %v2689 = vpack.c.b16 %v2017, %v2009
        %v2690 = vpack.c.b16 %v2018, %v2010
        %v2691 = vpack.c.b16 %v2019, %v2011
        %v2692 = vpack.c.b16 %v2028, %v2020
        %v2693 = vpack.c.b16 %v2029, %v2021
        %v2694 = vpack.c.b16 %v2030, %v2022
        %v2695 = vpack.c.b16 %v2031, %v2023
        %v2696 = vpack.c.b16 %v2032, %v2024
        %v2697 = vpack.c.b16 %v2033, %v2025
        %v2698 = vpack.c.b16 %v2034, %v2026
        %v2699 = vpack.c.b16 %v2035, %v2027
        %v2700 = vpack.c.b16 %v2044, %v2036
        %v2701 = vpack.c.b16 %v2045, %v2037
        %v2702 = vpack.c.b16 %v2046, %v2038
        %v2703 = vpack.c.b16 %v2047, %v2039
        %v2704 = vpack.c.b16 %v2048, %v2040
        %v2705 = vpack.c.b16 %v2049, %v2041
        %v2706 = vpack.c.b16 %v2050, %v2042
        %v2707 = vpack.c.b16 %v2051, %v2043
        %v2708 = vpack.c.b16 %v2060, %v2052
        %v2709 = vpack.c.b16 %v2061, %v2053
        %v2710 = vpack.c.b16 %v2062, %v2054
        %v2711 = vpack.c.b16 %v2063, %v2055
        %v2712 = vpack.c.b16 %v2064, %v2056
        %v2713 = vpack.c.b16 %v2065, %v2057
        %v2714 = vpack.c.b16 %v2066, %v2058
        %v2715 = vpack.c.b16 %v2067, %v2059
        %v2716 = vpack.c.b16 %v2076, %v2068
        %v2717 = vpack.c.b16 %v2077, %v2069
        %v2718 = vpack.c.b16 %v2078, %v2070
        %v2719 = vpack.c.b16 %v2079, %v2071
        %v2720 = vpack.c.b16 %v2080, %v2072
        %v2721 = vpack.c.b16 %v2081, %v2073
        %v2722 = vpack.c.b16 %v2082, %v2074
        %v2723 = vpack.c.b16 %v2083, %v2075
        %v2724 = vpack.c.b16 %v2092, %v2084
        %v2725 = vpack.c.b16 %v2093, %v2085
        %v2726 = vpack.c.b16 %v2094, %v2086
        %v2727 = vpack.c.b16 %v2095, %v2087
        %v2728 = vpack.c.b16 %v2096, %v2088
        %v2729 = vpack.c.b16 %v2097, %v2089
        %v2730 = vpack.c.b16 %v2098, %v2090
        %v2731 = vpack.c.b16 %v2099, %v2091
        %v2732 = vpack.c.b16 %v2108, %v2100
        %v2733 = vpack.c.b16 %v2109, %v2101
        %v2734 = vpack.c.b16 %v2110, %v2102
        %v2735 = vpack.c.b16 %v2111, %v2103
        %v2736 = vpack.c.b16 %v2112, %v2104
        %v2737 = vpack.c.b16 %v2113, %v2105
        %v2738 = vpack.c.b16 %v2114, %v2106
        %v2739 = vpack.c.b16 %v2115, %v2107
        %v2740 = vpack.c.b16 %v2124, %v2116
        %v2741 = vpack.c.b16 %v2125, %v2117
        %v2742 = vpack.c.b16 %v2126, %v2118
        %v2743 = vpack.c.b16 %v2127, %v2119
        %v2744 = vpack.c.b16 %v2128, %v2120
        %v2745 = vpack.c.b16 %v2129, %v2121
        %v2746 = vpack.c.b16 %v2130, %v2122
        %v2747 = vpack.c.b16 %v2131, %v2123
        %v2748 = vpack.c.b16 %v2140, %v2132
        %v2749 = vpack.c.b16 %v2141, %v2133
        %v2750 = vpack.c.b16 %v2142, %v2134
        %v2751 = vpack.c.b16 %v2143, %v2135
        %v2752 = vpack.c.b16 %v2144, %v2136
        %v2753 = vpack.c.b16 %v2145, %v2137
        %v2754 = vpack.c.b16 %v2146, %v2138
        %v2755 = vpack.c.b16 %v2147, %v2139
        %v2756 = vpack.c.b16 %v2156, %v2148
        %v2757 = vpack.c.b16 %v2157, %v2149
        %v2758 = vpack.c.b16 %v2158, %v2150
        %v2759 = vpack.c.b16 %v2159, %v2151
        %v2760 = vpack.c.b16 %v2160, %v2152
        %v2761 = vpack.c.b16 %v2161, %v2153
        %v2762 = vpack.c.b16 %v2162, %v2154
        %v2763 = vpack.c.b16 %v2163, %v2155
        %v2764 = vpack.c.b16 %v2172, %v2164
        %v2765 = vpack.c.b16 %v2173, %v2165
        %v2766 = vpack.c.b16 %v2174, %v2166
        %v2767 = vpack.c.b16 %v2175, %v2167
        %v2768 = vpack.c.b16 %v2176, %v2168
        %v2769 = vpack.c.b16 %v2177, %v2169
        %v2770 = vpack.c.b16 %v2178, %v2170
        %v2771 = vpack.c.b16 %v2179, %v2171
        %v2772 = vpack.c.b16 %v2188, %v2180
        %v2773 = vpack.c.b16 %v2189, %v2181
        %v2774 = vpack.c.b16 %v2190, %v2182
        %v2775 = vpack.c.b16 %v2191, %v2183
        %v2776 = vpack.c.b16 %v2192, %v2184
        %v2777 = vpack.c.b16 %v2193, %v2185
        %v2778 = vpack.c.b16 %v2194, %v2186
        %v2779 = vpack.c.b16 %v2195, %v2187
        %v2780 = vpack.c.b16 %v2204, %v2196
        %v2781 = vpack.c.b16 %v2205, %v2197
        %v2782 = vpack.c.b16 %v2206, %v2198
        %v2783 = vpack.c.b16 %v2207, %v2199
        %v2784 = vpack.c.b16 %v2208, %v2200
        %v2785 = vpack.c.b16 %v2209, %v2201
        %v2786 = vpack.c.b16 %v2210, %v2202
        %v2787 = vpack.c.b16 %v2211, %v2203
        %v2788 = vpack.c.b16 %v2220, %v2212
        %v2789 = vpack.c.b16 %v2221, %v2213
        %v2790 = vpack.c.b16 %v2222, %v2214
        %v2791 = vpack.c.b16 %v2223, %v2215
        %v2792 = vpack.c.b16 %v2224, %v2216
        %v2793 = vpack.c.b16 %v2225, %v2217
        %v2794 = vpack.c.b16 %v2226, %v2218
        %v2795 = vpack.c.b16 %v2227, %v2219
        %v2796 = vpack.c.b16 %v2236, %v2228
        %v2797 = vpack.c.b16 %v2237, %v2229
        %v2798 = vpack.c.b16 %v2238, %v2230
        %v2799 = vpack.c.b16 %v2239, %v2231
        %v2800 = vpack.c.b16 %v2240, %v2232
        %v2801 = vpack.c.b16 %v2241, %v2233
        %v2802 = vpack.c.b16 %v2242, %v2234
        %v2803 = vpack.c.b16 %v2243, %v2235
        %v2804 = vpack.c.b16 %v2252, %v2244
        %v2805 = vpack.c.b16 %v2253, %v2245
        %v2806 = vpack.c.b16 %v2254, %v2246
        %v2807 = vpack.c.b16 %v2255, %v2247
        %v2808 = vpack.c.b16 %v2256, %v2248
        %v2809 = vpack.c.b16 %v2257, %v2249
        %v2810 = vpack.c.b16 %v2258, %v2250
        %v2811 = vpack.c.b16 %v2259, %v2251
        %v2812 = vpack.c.b16 %v2268, %v2260
        %v2813 = vpack.c.b16 %v2269, %v2261
        %v2814 = vpack.c.b16 %v2270, %v2262
        %v2815 = vpack.c.b16 %v2271, %v2263
        %v2816 = vpack.c.b16 %v2272, %v2264
        %v2817 = vpack.c.b16 %v2273, %v2265
        %v2818 = vpack.c.b16 %v2274, %v2266
        %v2819 = vpack.c.b16 %v2275, %v2267
        %v2820 = vpack.c.b16 %v2284, %v2276
        %v2821 = vpack.c.b16 %v2285, %v2277
        %v2822 = vpack.c.b16 %v2286, %v2278
        %v2823 = vpack.c.b16 %v2287, %v2279
        %v2824 = vpack.c.b16 %v2288, %v2280
        %v2825 = vpack.c.b16 %v2289, %v2281
        %v2826 = vpack.c.b16 %v2290, %v2282
        %v2827 = vpack.c.b16 %v2291, %v2283
        %v2828 = vpack.c.b16 %v2300, %v2292
        %v2829 = vpack.c.b16 %v2301, %v2293
        %v2830 = vpack.c.b16 %v2302, %v2294
        %v2831 = vpack.c.b16 %v2303, %v2295
        %v2832 = vpack.c.b16 %v2304, %v2296
        %v2833 = vpack.c.b16 %v2305, %v2297
        %v2834 = vpack.c.b16 %v2306, %v2298
        %v2835 = vpack.c.b16 %v2307, %v2299
        %v2836 = vpack.c.b16 %v2316, %v2308
        %v2837 = vpack.c.b16 %v2317, %v2309
        %v2838 = vpack.c.b16 %v2318, %v2310
        %v2839 = vpack.c.b16 %v2319, %v2311
        %v2840 = vpack.c.b16 %v2320, %v2312
        %v2841 = vpack.c.b16 %v2321, %v2313
        %v2842 = vpack.c.b16 %v2322, %v2314
        %v2843 = vpack.c.b16 %v2323, %v2315
        %v2844 = vpack.c.b16 %v2332, %v2324
        %v2845 = vpack.c.b16 %v2333, %v2325
        %v2846 = vpack.c.b16 %v2334, %v2326
        %v2847 = vpack.c.b16 %v2335, %v2327
        %v2848 = vpack.c.b16 %v2336, %v2328
        %v2849 = vpack.c.b16 %v2337, %v2329
        %v2850 = vpack.c.b16 %v2338, %v2330
        %v2851 = vpack.c.b16 %v2339, %v2331
        %3364 = vmatprep.subr.bf16.mxu0 %v2397
        %3365 = vmatpush1.bf16.msra.mxu0 %v2396
        %3366 = vmatprep.subr.bf16.mxu0 %v2389
        %3367 = vmatpush1.bf16.msra.mxu0 %v2388
        %3368 = vmatprep.subr.bf16.mxu0 %v2381
        %3369 = vmatpush1.bf16.msra.mxu0 %v2380
        %3370 = vmatprep.subr.bf16.mxu0 %v2373
        %3371 = vmatpush1.bf16.msra.mxu0 %v2372
        %3372 = vmatprep.subr.bf16.mxu0 %v2365
        %3373 = vmatpush1.bf16.msra.mxu0 %v2364
        %3374 = vmatprep.subr.bf16.mxu0 %v2357
        %3375 = vmatpush1.bf16.msra.mxu0 %v2356
        %3376 = vmatprep.subr.bf16.mxu0 %v2349
        %3377 = vmatpush1.bf16.msra.mxu0 %v2348
        %3378 = vmatprep.subr.bf16.mxu0 %v2341
        %3379 = vmatpush1.bf16.msra.mxu0 %v2340
        %3380 = vmatprep.subr.bf16.mxu0 %v2461
        %3381 = vmatpush2.bf16.msra.mxu0 %v2460
        %3382 = vmatprep.subr.bf16.mxu0 %v2453
        %3383 = vmatpush2.bf16.msra.mxu0 %v2452
        %3384 = vmatprep.subr.bf16.mxu0 %v2445
        %3385 = vmatpush2.bf16.msra.mxu0 %v2444
        %3386 = vmatprep.subr.bf16.mxu0 %v2437
        %3387 = vmatpush2.bf16.msra.mxu0 %v2436
        %3388 = vmatprep.subr.bf16.mxu0 %v2429
        %3389 = vmatpush2.bf16.msra.mxu0 %v2428
        %3390 = vmatprep.subr.bf16.mxu0 %v2421
        %3391 = vmatpush2.bf16.msra.mxu0 %v2420
        %3392 = vmatprep.subr.bf16.mxu0 %v2413
        %3393 = vmatpush2.bf16.msra.mxu0 %v2412
        %3394 = vmatprep.subr.bf16.mxu0 %v2405
        %3395 = vmatpush2.bf16.msra.mxu0 %v2404
        %3396 = vmatprep.mubr.bf16.mxu0 %v773
        %3397 = vmatmul.mubr.bf16.gmra.mxu0 %v772
        %v3398 = vpop.f32.mrf.mxu0
        %v3399 = vadd.f32 0.0, %v3398
        %v3400 = vpop.f32.mrf.mxu0
        %v3401 = vadd.f32 0.0, %v3400
        %v3402 = vpop.f32.mrf.mxu0
        %v3403 = vadd.f32 0.0, %v3402
        %v3404 = vpop.f32.mrf.mxu0
        %v3405 = vadd.f32 0.0, %v3404
        %3406 = vmatprep.mubr.bf16.mxu0 %v781
        %3407 = vmatmul.mubr.bf16.gmra.mxu0 %v780
        %v3408 = vpop.f32.mrf.mxu0
        %v3409 = vadd.f32 0.0, %v3408
        %v3410 = vpop.f32.mrf.mxu0
        %v3411 = vadd.f32 0.0, %v3410
        %v3412 = vpop.f32.mrf.mxu0
        %v3413 = vadd.f32 0.0, %v3412
        %v3414 = vpop.f32.mrf.mxu0
        %v3415 = vadd.f32 0.0, %v3414
        %3416 = vdwg.mxu0
        %3417 = vmatprep.subr.bf16.mxu0 %v2525
        %3418 = vmatpush1.bf16.msra.mxu0 %v2524
        %3419 = vmatprep.subr.bf16.mxu0 %v2517
        %3420 = vmatpush1.bf16.msra.mxu0 %v2516
        %3421 = vmatprep.subr.bf16.mxu0 %v2509
        %3422 = vmatpush1.bf16.msra.mxu0 %v2508
        %3423 = vmatprep.subr.bf16.mxu0 %v2501
        %3424 = vmatpush1.bf16.msra.mxu0 %v2500
        %3425 = vmatprep.subr.bf16.mxu0 %v2493
        %3426 = vmatpush1.bf16.msra.mxu0 %v2492
        %3427 = vmatprep.subr.bf16.mxu0 %v2485
        %3428 = vmatpush1.bf16.msra.mxu0 %v2484
        %3429 = vmatprep.subr.bf16.mxu0 %v2477
        %3430 = vmatpush1.bf16.msra.mxu0 %v2476
        %3431 = vmatprep.subr.bf16.mxu0 %v2469
        %3432 = vmatpush1.bf16.msra.mxu0 %v2468
        %3433 = vmatprep.subr.bf16.mxu0 %v2589
        %3434 = vmatpush2.bf16.msra.mxu0 %v2588
        %3435 = vmatprep.subr.bf16.mxu0 %v2581
        %3436 = vmatpush2.bf16.msra.mxu0 %v2580
        %3437 = vmatprep.subr.bf16.mxu0 %v2573
        %3438 = vmatpush2.bf16.msra.mxu0 %v2572
        %3439 = vmatprep.subr.bf16.mxu0 %v2565
        %3440 = vmatpush2.bf16.msra.mxu0 %v2564
        %3441 = vmatprep.subr.bf16.mxu0 %v2557
        %3442 = vmatpush2.bf16.msra.mxu0 %v2556
        %3443 = vmatprep.subr.bf16.mxu0 %v2549
        %3444 = vmatpush2.bf16.msra.mxu0 %v2548
        %3445 = vmatprep.subr.bf16.mxu0 %v2541
        %3446 = vmatpush2.bf16.msra.mxu0 %v2540
        %3447 = vmatprep.subr.bf16.mxu0 %v2533
        %3448 = vmatpush2.bf16.msra.mxu0 %v2532
        %3449 = vmatprep.mubr.bf16.mxu0 %v775
        %3450 = vmatmul.mubr.bf16.gmra.mxu0 %v774
        %v3451 = vpop.f32.mrf.mxu0
        %v3452 = vadd.f32 %v3399, %v3451
        %v3453 = vpop.f32.mrf.mxu0
        %v3454 = vadd.f32 %v3401, %v3453
        %v3455 = vpop.f32.mrf.mxu0
        %v3456 = vadd.f32 %v3403, %v3455
        %v3457 = vpop.f32.mrf.mxu0
        %v3458 = vadd.f32 %v3405, %v3457
        %3459 = vmatprep.mubr.bf16.mxu0 %v783
        %3460 = vmatmul.mubr.bf16.gmra.mxu0 %v782
        %v3461 = vpop.f32.mrf.mxu0
        %v3462 = vadd.f32 %v3409, %v3461
        %v3463 = vpop.f32.mrf.mxu0
        %v3464 = vadd.f32 %v3411, %v3463
        %v3465 = vpop.f32.mrf.mxu0
        %v3466 = vadd.f32 %v3413, %v3465
        %v3467 = vpop.f32.mrf.mxu0
        %v3468 = vadd.f32 %v3415, %v3467
        %3469 = vdwg.mxu0
        %3470 = vmatprep.subr.bf16.mxu0 %v2653
        %3471 = vmatpush1.bf16.msra.mxu0 %v2652
        %3472 = vmatprep.subr.bf16.mxu0 %v2645
        %3473 = vmatpush1.bf16.msra.mxu0 %v2644
        %3474 = vmatprep.subr.bf16.mxu0 %v2637
        %3475 = vmatpush1.bf16.msra.mxu0 %v2636
        %3476 = vmatprep.subr.bf16.mxu0 %v2629
        %3477 = vmatpush1.bf16.msra.mxu0 %v2628
        %3478 = vmatprep.subr.bf16.mxu0 %v2621
        %3479 = vmatpush1.bf16.msra.mxu0 %v2620
        %3480 = vmatprep.subr.bf16.mxu0 %v2613
        %3481 = vmatpush1.bf16.msra.mxu0 %v2612
        %3482 = vmatprep.subr.bf16.mxu0 %v2605
        %3483 = vmatpush1.bf16.msra.mxu0 %v2604
        %3484 = vmatprep.subr.bf16.mxu0 %v2597
        %3485 = vmatpush1.bf16.msra.mxu0 %v2596
        %3486 = vmatprep.subr.bf16.mxu0 %v2717
        %3487 = vmatpush2.bf16.msra.mxu0 %v2716
        %3488 = vmatprep.subr.bf16.mxu0 %v2709
        %3489 = vmatpush2.bf16.msra.mxu0 %v2708
        %3490 = vmatprep.subr.bf16.mxu0 %v2701
        %3491 = vmatpush2.bf16.msra.mxu0 %v2700
        %3492 = vmatprep.subr.bf16.mxu0 %v2693
        %3493 = vmatpush2.bf16.msra.mxu0 %v2692
        %3494 = vmatprep.subr.bf16.mxu0 %v2685
        %3495 = vmatpush2.bf16.msra.mxu0 %v2684
        %3496 = vmatprep.subr.bf16.mxu0 %v2677
        %3497 = vmatpush2.bf16.msra.mxu0 %v2676
        %3498 = vmatprep.subr.bf16.mxu0 %v2669
        %3499 = vmatpush2.bf16.msra.mxu0 %v2668
        %3500 = vmatprep.subr.bf16.mxu0 %v2661
        %3501 = vmatpush2.bf16.msra.mxu0 %v2660
        %3502 = vmatprep.mubr.bf16.mxu0 %v777
        %3503 = vmatmul.mubr.bf16.gmra.mxu0 %v776
        %v3504 = vpop.f32.mrf.mxu0
        %v3505 = vadd.f32 %v3452, %v3504
        %v3506 = vpop.f32.mrf.mxu0
        %v3507 = vadd.f32 %v3454, %v3506
        %v3508 = vpop.f32.mrf.mxu0
        %v3509 = vadd.f32 %v3456, %v3508
        %v3510 = vpop.f32.mrf.mxu0
        %v3511 = vadd.f32 %v3458, %v3510
        %3512 = vmatprep.mubr.bf16.mxu0 %v785
        %3513 = vmatmul.mubr.bf16.gmra.mxu0 %v784
        %v3514 = vpop.f32.mrf.mxu0
        %v3515 = vadd.f32 %v3462, %v3514
        %v3516 = vpop.f32.mrf.mxu0
        %v3517 = vadd.f32 %v3464, %v3516
        %v3518 = vpop.f32.mrf.mxu0
        %v3519 = vadd.f32 %v3466, %v3518
        %v3520 = vpop.f32.mrf.mxu0
        %v3521 = vadd.f32 %v3468, %v3520
        %3522 = vdwg.mxu0
        %3523 = vmatprep.subr.bf16.mxu0 %v2781
        %3524 = vmatpush1.bf16.msra.mxu0 %v2780
        %3525 = vmatprep.subr.bf16.mxu0 %v2773
        %3526 = vmatpush1.bf16.msra.mxu0 %v2772
        %3527 = vmatprep.subr.bf16.mxu0 %v2765
        %3528 = vmatpush1.bf16.msra.mxu0 %v2764
        %3529 = vmatprep.subr.bf16.mxu0 %v2757
        %3530 = vmatpush1.bf16.msra.mxu0 %v2756
        %3531 = vmatprep.subr.bf16.mxu0 %v2749
        %3532 = vmatpush1.bf16.msra.mxu0 %v2748
        %3533 = vmatprep.subr.bf16.mxu0 %v2741
        %3534 = vmatpush1.bf16.msra.mxu0 %v2740
        %3535 = vmatprep.subr.bf16.mxu0 %v2733
        %3536 = vmatpush1.bf16.msra.mxu0 %v2732
        %3537 = vmatprep.subr.bf16.mxu0 %v2725
        %3538 = vmatpush1.bf16.msra.mxu0 %v2724
        %3539 = vmatprep.subr.bf16.mxu0 %v2845
        %3540 = vmatpush2.bf16.msra.mxu0 %v2844
        %3541 = vmatprep.subr.bf16.mxu0 %v2837
        %3542 = vmatpush2.bf16.msra.mxu0 %v2836
        %3543 = vmatprep.subr.bf16.mxu0 %v2829
        %3544 = vmatpush2.bf16.msra.mxu0 %v2828
        %3545 = vmatprep.subr.bf16.mxu0 %v2821
        %3546 = vmatpush2.bf16.msra.mxu0 %v2820
        %3547 = vmatprep.subr.bf16.mxu0 %v2813
        %3548 = vmatpush2.bf16.msra.mxu0 %v2812
        %3549 = vmatprep.subr.bf16.mxu0 %v2805
        %3550 = vmatpush2.bf16.msra.mxu0 %v2804
        %3551 = vmatprep.subr.bf16.mxu0 %v2797
        %3552 = vmatpush2.bf16.msra.mxu0 %v2796
        %3553 = vmatprep.subr.bf16.mxu0 %v2789
        %3554 = vmatpush2.bf16.msra.mxu0 %v2788
        %3555 = vmatprep.mubr.bf16.mxu0 %v779
        %3556 = vmatmul.mubr.bf16.gmra.mxu0 %v778
        %v3557 = vpop.f32.mrf.mxu0
        %v3558 = vadd.f32 %v3505, %v3557
        %v3559 = vpop.f32.mrf.mxu0
        %v3560 = vadd.f32 %v3507, %v3559
        %v3561 = vpop.f32.mrf.mxu0
        %v3562 = vadd.f32 %v3509, %v3561
        %v3563 = vpop.f32.mrf.mxu0
        %v3564 = vadd.f32 %v3511, %v3563
        %3565 = vmatprep.mubr.bf16.mxu0 %v787
        %3566 = vmatmul.mubr.bf16.gmra.mxu0 %v786
        %v3567 = vpop.f32.mrf.mxu0
        %v3568 = vadd.f32 %v3515, %v3567
        %v3569 = vpop.f32.mrf.mxu0
        %v3570 = vadd.f32 %v3517, %v3569
        %v3571 = vpop.f32.mrf.mxu0
        %v3572 = vadd.f32 %v3519, %v3571
        %v3573 = vpop.f32.mrf.mxu0
        %v3574 = vadd.f32 %v3521, %v3573
        %3575 = vdwg.mxu0
        %3576 = vmatprep.subr.bf16.mxu0 %v2399
        %3577 = vmatpush1.bf16.msra.mxu0 %v2398
        %3578 = vmatprep.subr.bf16.mxu0 %v2391
        %3579 = vmatpush1.bf16.msra.mxu0 %v2390
        %3580 = vmatprep.subr.bf16.mxu0 %v2383
        %3581 = vmatpush1.bf16.msra.mxu0 %v2382
        %3582 = vmatprep.subr.bf16.mxu0 %v2375
        %3583 = vmatpush1.bf16.msra.mxu0 %v2374
        %3584 = vmatprep.subr.bf16.mxu0 %v2367
        %3585 = vmatpush1.bf16.msra.mxu0 %v2366
        %3586 = vmatprep.subr.bf16.mxu0 %v2359
        %3587 = vmatpush1.bf16.msra.mxu0 %v2358
        %3588 = vmatprep.subr.bf16.mxu0 %v2351
        %3589 = vmatpush1.bf16.msra.mxu0 %v2350
        %3590 = vmatprep.subr.bf16.mxu0 %v2343
        %3591 = vmatpush1.bf16.msra.mxu0 %v2342
        %3592 = vmatprep.subr.bf16.mxu0 %v2463
        %3593 = vmatpush2.bf16.msra.mxu0 %v2462
        %3594 = vmatprep.subr.bf16.mxu0 %v2455
        %3595 = vmatpush2.bf16.msra.mxu0 %v2454
        %3596 = vmatprep.subr.bf16.mxu0 %v2447
        %3597 = vmatpush2.bf16.msra.mxu0 %v2446
        %3598 = vmatprep.subr.bf16.mxu0 %v2439
        %3599 = vmatpush2.bf16.msra.mxu0 %v2438
        %3600 = vmatprep.subr.bf16.mxu0 %v2431
        %3601 = vmatpush2.bf16.msra.mxu0 %v2430
        %3602 = vmatprep.subr.bf16.mxu0 %v2423
        %3603 = vmatpush2.bf16.msra.mxu0 %v2422
        %3604 = vmatprep.subr.bf16.mxu0 %v2415
        %3605 = vmatpush2.bf16.msra.mxu0 %v2414
        %3606 = vmatprep.subr.bf16.mxu0 %v2407
        %3607 = vmatpush2.bf16.msra.mxu0 %v2406
        %3608 = vmatprep.mubr.bf16.mxu0 %v773
        %3609 = vmatmul.mubr.bf16.gmra.mxu0 %v772
        %v3610 = vpop.f32.mrf.mxu0
        %v3611 = vadd.f32 0.0, %v3610
        %v3612 = vpop.f32.mrf.mxu0
        %v3613 = vadd.f32 0.0, %v3612
        %v3614 = vpop.f32.mrf.mxu0
        %v3615 = vadd.f32 0.0, %v3614
        %v3616 = vpop.f32.mrf.mxu0
        %v3617 = vadd.f32 0.0, %v3616
        %3618 = vmatprep.mubr.bf16.mxu0 %v781
        %3619 = vmatmul.mubr.bf16.gmra.mxu0 %v780
        %v3620 = vpop.f32.mrf.mxu0
        %v3621 = vadd.f32 0.0, %v3620
        %v3622 = vpop.f32.mrf.mxu0
        %v3623 = vadd.f32 0.0, %v3622
        %v3624 = vpop.f32.mrf.mxu0
        %v3625 = vadd.f32 0.0, %v3624
        %v3626 = vpop.f32.mrf.mxu0
        %v3627 = vadd.f32 0.0, %v3626
        %3628 = vdwg.mxu0
        %3629 = vmatprep.subr.bf16.mxu0 %v2527
        %3630 = vmatpush1.bf16.msra.mxu0 %v2526
        %3631 = vmatprep.subr.bf16.mxu0 %v2519
        %3632 = vmatpush1.bf16.msra.mxu0 %v2518
        %3633 = vmatprep.subr.bf16.mxu0 %v2511
        %3634 = vmatpush1.bf16.msra.mxu0 %v2510
        %3635 = vmatprep.subr.bf16.mxu0 %v2503
        %3636 = vmatpush1.bf16.msra.mxu0 %v2502
        %3637 = vmatprep.subr.bf16.mxu0 %v2495
        %3638 = vmatpush1.bf16.msra.mxu0 %v2494
        %3639 = vmatprep.subr.bf16.mxu0 %v2487
        %3640 = vmatpush1.bf16.msra.mxu0 %v2486
        %3641 = vmatprep.subr.bf16.mxu0 %v2479
        %3642 = vmatpush1.bf16.msra.mxu0 %v2478
        %3643 = vmatprep.subr.bf16.mxu0 %v2471
        %3644 = vmatpush1.bf16.msra.mxu0 %v2470
        %3645 = vmatprep.subr.bf16.mxu0 %v2591
        %3646 = vmatpush2.bf16.msra.mxu0 %v2590
        %3647 = vmatprep.subr.bf16.mxu0 %v2583
        %3648 = vmatpush2.bf16.msra.mxu0 %v2582
        %3649 = vmatprep.subr.bf16.mxu0 %v2575
        %3650 = vmatpush2.bf16.msra.mxu0 %v2574
        %3651 = vmatprep.subr.bf16.mxu0 %v2567
        %3652 = vmatpush2.bf16.msra.mxu0 %v2566
        %3653 = vmatprep.subr.bf16.mxu0 %v2559
        %3654 = vmatpush2.bf16.msra.mxu0 %v2558
        %3655 = vmatprep.subr.bf16.mxu0 %v2551
        %3656 = vmatpush2.bf16.msra.mxu0 %v2550
        %3657 = vmatprep.subr.bf16.mxu0 %v2543
        %3658 = vmatpush2.bf16.msra.mxu0 %v2542
        %3659 = vmatprep.subr.bf16.mxu0 %v2535
        %3660 = vmatpush2.bf16.msra.mxu0 %v2534
        %3661 = vmatprep.mubr.bf16.mxu0 %v775
        %3662 = vmatmul.mubr.bf16.gmra.mxu0 %v774
        %v3663 = vpop.f32.mrf.mxu0
        %v3664 = vadd.f32 %v3611, %v3663
        %v3665 = vpop.f32.mrf.mxu0
        %v3666 = vadd.f32 %v3613, %v3665
        %v3667 = vpop.f32.mrf.mxu0
        %v3668 = vadd.f32 %v3615, %v3667
        %v3669 = vpop.f32.mrf.mxu0
        %v3670 = vadd.f32 %v3617, %v3669
        %3671 = vmatprep.mubr.bf16.mxu0 %v783
        %3672 = vmatmul.mubr.bf16.gmra.mxu0 %v782
        %v3673 = vpop.f32.mrf.mxu0
        %v3674 = vadd.f32 %v3621, %v3673
        %v3675 = vpop.f32.mrf.mxu0
        %v3676 = vadd.f32 %v3623, %v3675
        %v3677 = vpop.f32.mrf.mxu0
        %v3678 = vadd.f32 %v3625, %v3677
        %v3679 = vpop.f32.mrf.mxu0
        %v3680 = vadd.f32 %v3627, %v3679
        %3681 = vdwg.mxu0
        %3682 = vmatprep.subr.bf16.mxu0 %v2655
        %3683 = vmatpush1.bf16.msra.mxu0 %v2654
        %3684 = vmatprep.subr.bf16.mxu0 %v2647
        %3685 = vmatpush1.bf16.msra.mxu0 %v2646
        %3686 = vmatprep.subr.bf16.mxu0 %v2639
        %3687 = vmatpush1.bf16.msra.mxu0 %v2638
        %3688 = vmatprep.subr.bf16.mxu0 %v2631
        %3689 = vmatpush1.bf16.msra.mxu0 %v2630
        %3690 = vmatprep.subr.bf16.mxu0 %v2623
        %3691 = vmatpush1.bf16.msra.mxu0 %v2622
        %3692 = vmatprep.subr.bf16.mxu0 %v2615
        %3693 = vmatpush1.bf16.msra.mxu0 %v2614
        %3694 = vmatprep.subr.bf16.mxu0 %v2607
        %3695 = vmatpush1.bf16.msra.mxu0 %v2606
        %3696 = vmatprep.subr.bf16.mxu0 %v2599
        %3697 = vmatpush1.bf16.msra.mxu0 %v2598
        %3698 = vmatprep.subr.bf16.mxu0 %v2719
        %3699 = vmatpush2.bf16.msra.mxu0 %v2718
        %3700 = vmatprep.subr.bf16.mxu0 %v2711
        %3701 = vmatpush2.bf16.msra.mxu0 %v2710
        %3702 = vmatprep.subr.bf16.mxu0 %v2703
        %3703 = vmatpush2.bf16.msra.mxu0 %v2702
        %3704 = vmatprep.subr.bf16.mxu0 %v2695
        %3705 = vmatpush2.bf16.msra.mxu0 %v2694
        %3706 = vmatprep.subr.bf16.mxu0 %v2687
        %3707 = vmatpush2.bf16.msra.mxu0 %v2686
        %3708 = vmatprep.subr.bf16.mxu0 %v2679
        %3709 = vmatpush2.bf16.msra.mxu0 %v2678
        %3710 = vmatprep.subr.bf16.mxu0 %v2671
        %3711 = vmatpush2.bf16.msra.mxu0 %v2670
        %3712 = vmatprep.subr.bf16.mxu0 %v2663
        %3713 = vmatpush2.bf16.msra.mxu0 %v2662
        %3714 = vmatprep.mubr.bf16.mxu0 %v777
        %3715 = vmatmul.mubr.bf16.gmra.mxu0 %v776
        %v3716 = vpop.f32.mrf.mxu0
        %v3717 = vadd.f32 %v3664, %v3716
        %v3718 = vpop.f32.mrf.mxu0
        %v3719 = vadd.f32 %v3666, %v3718
        %v3720 = vpop.f32.mrf.mxu0
        %v3721 = vadd.f32 %v3668, %v3720
        %v3722 = vpop.f32.mrf.mxu0
        %v3723 = vadd.f32 %v3670, %v3722
        %3724 = vmatprep.mubr.bf16.mxu0 %v785
        %3725 = vmatmul.mubr.bf16.gmra.mxu0 %v784
        %v3726 = vpop.f32.mrf.mxu0
        %v3727 = vadd.f32 %v3674, %v3726
        %v3728 = vpop.f32.mrf.mxu0
        %v3729 = vadd.f32 %v3676, %v3728
        %v3730 = vpop.f32.mrf.mxu0
        %v3731 = vadd.f32 %v3678, %v3730
        %v3732 = vpop.f32.mrf.mxu0
        %v3733 = vadd.f32 %v3680, %v3732
        %3734 = vdwg.mxu0
        %3735 = vmatprep.subr.bf16.mxu0 %v2783
        %3736 = vmatpush1.bf16.msra.mxu0 %v2782
        %3737 = vmatprep.subr.bf16.mxu0 %v2775
        %3738 = vmatpush1.bf16.msra.mxu0 %v2774
        %3739 = vmatprep.subr.bf16.mxu0 %v2767
        %3740 = vmatpush1.bf16.msra.mxu0 %v2766
        %3741 = vmatprep.subr.bf16.mxu0 %v2759
        %3742 = vmatpush1.bf16.msra.mxu0 %v2758
        %3743 = vmatprep.subr.bf16.mxu0 %v2751
        %3744 = vmatpush1.bf16.msra.mxu0 %v2750
        %3745 = vmatprep.subr.bf16.mxu0 %v2743
        %3746 = vmatpush1.bf16.msra.mxu0 %v2742
        %3747 = vmatprep.subr.bf16.mxu0 %v2735
        %3748 = vmatpush1.bf16.msra.mxu0 %v2734
        %3749 = vmatprep.subr.bf16.mxu0 %v2727
        %3750 = vmatpush1.bf16.msra.mxu0 %v2726
        %3751 = vmatprep.subr.bf16.mxu0 %v2847
        %3752 = vmatpush2.bf16.msra.mxu0 %v2846
        %3753 = vmatprep.subr.bf16.mxu0 %v2839
        %3754 = vmatpush2.bf16.msra.mxu0 %v2838
        %3755 = vmatprep.subr.bf16.mxu0 %v2831
        %3756 = vmatpush2.bf16.msra.mxu0 %v2830
        %3757 = vmatprep.subr.bf16.mxu0 %v2823
        %3758 = vmatpush2.bf16.msra.mxu0 %v2822
        %3759 = vmatprep.subr.bf16.mxu0 %v2815
        %3760 = vmatpush2.bf16.msra.mxu0 %v2814
        %3761 = vmatprep.subr.bf16.mxu0 %v2807
        %3762 = vmatpush2.bf16.msra.mxu0 %v2806
        %3763 = vmatprep.subr.bf16.mxu0 %v2799
        %3764 = vmatpush2.bf16.msra.mxu0 %v2798
        %3765 = vmatprep.subr.bf16.mxu0 %v2791
        %3766 = vmatpush2.bf16.msra.mxu0 %v2790
        %3767 = vmatprep.mubr.bf16.mxu0 %v779
        %3768 = vmatmul.mubr.bf16.gmra.mxu0 %v778
        %v3769 = vpop.f32.mrf.mxu0
        %v3770 = vadd.f32 %v3717, %v3769
        %v3771 = vpop.f32.mrf.mxu0
        %v3772 = vadd.f32 %v3719, %v3771
        %v3773 = vpop.f32.mrf.mxu0
        %v3774 = vadd.f32 %v3721, %v3773
        %v3775 = vpop.f32.mrf.mxu0
        %v3776 = vadd.f32 %v3723, %v3775
        %3777 = vmatprep.mubr.bf16.mxu0 %v787
        %3778 = vmatmul.mubr.bf16.gmra.mxu0 %v786
        %v3779 = vpop.f32.mrf.mxu0
        %v3780 = vadd.f32 %v3727, %v3779
        %v3781 = vpop.f32.mrf.mxu0
        %v3782 = vadd.f32 %v3729, %v3781
        %v3783 = vpop.f32.mrf.mxu0
        %v3784 = vadd.f32 %v3731, %v3783
        %v3785 = vpop.f32.mrf.mxu0
        %v3786 = vadd.f32 %v3733, %v3785
        %3787 = vdwg.mxu0
        %3788 = vmatprep.subr.bf16.mxu0 %v2401
        %3789 = vmatpush1.bf16.msra.mxu0 %v2400
        %3790 = vmatprep.subr.bf16.mxu0 %v2393
        %3791 = vmatpush1.bf16.msra.mxu0 %v2392
        %3792 = vmatprep.subr.bf16.mxu0 %v2385
        %3793 = vmatpush1.bf16.msra.mxu0 %v2384
        %3794 = vmatprep.subr.bf16.mxu0 %v2377
        %3795 = vmatpush1.bf16.msra.mxu0 %v2376
        %3796 = vmatprep.subr.bf16.mxu0 %v2369
        %3797 = vmatpush1.bf16.msra.mxu0 %v2368
        %3798 = vmatprep.subr.bf16.mxu0 %v2361
        %3799 = vmatpush1.bf16.msra.mxu0 %v2360
        %3800 = vmatprep.subr.bf16.mxu0 %v2353
        %3801 = vmatpush1.bf16.msra.mxu0 %v2352
        %3802 = vmatprep.subr.bf16.mxu0 %v2345
        %3803 = vmatpush1.bf16.msra.mxu0 %v2344
        %3804 = vmatprep.subr.bf16.mxu0 %v2465
        %3805 = vmatpush2.bf16.msra.mxu0 %v2464
        %3806 = vmatprep.subr.bf16.mxu0 %v2457
        %3807 = vmatpush2.bf16.msra.mxu0 %v2456
        %3808 = vmatprep.subr.bf16.mxu0 %v2449
        %3809 = vmatpush2.bf16.msra.mxu0 %v2448
        %3810 = vmatprep.subr.bf16.mxu0 %v2441
        %3811 = vmatpush2.bf16.msra.mxu0 %v2440
        %3812 = vmatprep.subr.bf16.mxu0 %v2433
        %3813 = vmatpush2.bf16.msra.mxu0 %v2432
        %3814 = vmatprep.subr.bf16.mxu0 %v2425
        %3815 = vmatpush2.bf16.msra.mxu0 %v2424
        %3816 = vmatprep.subr.bf16.mxu0 %v2417
        %3817 = vmatpush2.bf16.msra.mxu0 %v2416
        %3818 = vmatprep.subr.bf16.mxu0 %v2409
        %3819 = vmatpush2.bf16.msra.mxu0 %v2408
        %3820 = vmatprep.mubr.bf16.mxu0 %v773
        %3821 = vmatmul.mubr.bf16.gmra.mxu0 %v772
        %v3822 = vpop.f32.mrf.mxu0
        %v3823 = vadd.f32 0.0, %v3822
        %v3824 = vpop.f32.mrf.mxu0
        %v3825 = vadd.f32 0.0, %v3824
        %v3826 = vpop.f32.mrf.mxu0
        %v3827 = vadd.f32 0.0, %v3826
        %v3828 = vpop.f32.mrf.mxu0
        %v3829 = vadd.f32 0.0, %v3828
        %3830 = vmatprep.mubr.bf16.mxu0 %v781
        %3831 = vmatmul.mubr.bf16.gmra.mxu0 %v780
        %v3832 = vpop.f32.mrf.mxu0
        %v3833 = vadd.f32 0.0, %v3832
        %v3834 = vpop.f32.mrf.mxu0
        %v3835 = vadd.f32 0.0, %v3834
        %v3836 = vpop.f32.mrf.mxu0
        %v3837 = vadd.f32 0.0, %v3836
        %v3838 = vpop.f32.mrf.mxu0
        %v3839 = vadd.f32 0.0, %v3838
        %3840 = vdwg.mxu0
        %3841 = vmatprep.subr.bf16.mxu0 %v2529
        %3842 = vmatpush1.bf16.msra.mxu0 %v2528
        %3843 = vmatprep.subr.bf16.mxu0 %v2521
        %3844 = vmatpush1.bf16.msra.mxu0 %v2520
        %3845 = vmatprep.subr.bf16.mxu0 %v2513
        %3846 = vmatpush1.bf16.msra.mxu0 %v2512
        %3847 = vmatprep.subr.bf16.mxu0 %v2505
        %3848 = vmatpush1.bf16.msra.mxu0 %v2504
        %3849 = vmatprep.subr.bf16.mxu0 %v2497
        %3850 = vmatpush1.bf16.msra.mxu0 %v2496
        %3851 = vmatprep.subr.bf16.mxu0 %v2489
        %3852 = vmatpush1.bf16.msra.mxu0 %v2488
        %3853 = vmatprep.subr.bf16.mxu0 %v2481
        %3854 = vmatpush1.bf16.msra.mxu0 %v2480
        %3855 = vmatprep.subr.bf16.mxu0 %v2473
        %3856 = vmatpush1.bf16.msra.mxu0 %v2472
        %3857 = vmatprep.subr.bf16.mxu0 %v2593
        %3858 = vmatpush2.bf16.msra.mxu0 %v2592
        %3859 = vmatprep.subr.bf16.mxu0 %v2585
        %3860 = vmatpush2.bf16.msra.mxu0 %v2584
        %3861 = vmatprep.subr.bf16.mxu0 %v2577
        %3862 = vmatpush2.bf16.msra.mxu0 %v2576
        %3863 = vmatprep.subr.bf16.mxu0 %v2569
        %3864 = vmatpush2.bf16.msra.mxu0 %v2568
        %3865 = vmatprep.subr.bf16.mxu0 %v2561
        %3866 = vmatpush2.bf16.msra.mxu0 %v2560
        %3867 = vmatprep.subr.bf16.mxu0 %v2553
        %3868 = vmatpush2.bf16.msra.mxu0 %v2552
        %3869 = vmatprep.subr.bf16.mxu0 %v2545
        %3870 = vmatpush2.bf16.msra.mxu0 %v2544
        %3871 = vmatprep.subr.bf16.mxu0 %v2537
        %3872 = vmatpush2.bf16.msra.mxu0 %v2536
        %3873 = vmatprep.mubr.bf16.mxu0 %v775
        %3874 = vmatmul.mubr.bf16.gmra.mxu0 %v774
        %v3875 = vpop.f32.mrf.mxu0
        %v3876 = vadd.f32 %v3823, %v3875
        %v3877 = vpop.f32.mrf.mxu0
        %v3878 = vadd.f32 %v3825, %v3877
        %v3879 = vpop.f32.mrf.mxu0
        %v3880 = vadd.f32 %v3827, %v3879
        %v3881 = vpop.f32.mrf.mxu0
        %v3882 = vadd.f32 %v3829, %v3881
        %3883 = vmatprep.mubr.bf16.mxu0 %v783
        %3884 = vmatmul.mubr.bf16.gmra.mxu0 %v782
        %v3885 = vpop.f32.mrf.mxu0
        %v3886 = vadd.f32 %v3833, %v3885
        %v3887 = vpop.f32.mrf.mxu0
        %v3888 = vadd.f32 %v3835, %v3887
        %v3889 = vpop.f32.mrf.mxu0
        %v3890 = vadd.f32 %v3837, %v3889
        %v3891 = vpop.f32.mrf.mxu0
        %v3892 = vadd.f32 %v3839, %v3891
        %3893 = vdwg.mxu0
        %3894 = vmatprep.subr.bf16.mxu0 %v2657
        %3895 = vmatpush1.bf16.msra.mxu0 %v2656
        %3896 = vmatprep.subr.bf16.mxu0 %v2649
        %3897 = vmatpush1.bf16.msra.mxu0 %v2648
        %3898 = vmatprep.subr.bf16.mxu0 %v2641
        %3899 = vmatpush1.bf16.msra.mxu0 %v2640
        %3900 = vmatprep.subr.bf16.mxu0 %v2633
        %3901 = vmatpush1.bf16.msra.mxu0 %v2632
        %3902 = vmatprep.subr.bf16.mxu0 %v2625
        %3903 = vmatpush1.bf16.msra.mxu0 %v2624
        %3904 = vmatprep.subr.bf16.mxu0 %v2617
        %3905 = vmatpush1.bf16.msra.mxu0 %v2616
        %3906 = vmatprep.subr.bf16.mxu0 %v2609
        %3907 = vmatpush1.bf16.msra.mxu0 %v2608
        %3908 = vmatprep.subr.bf16.mxu0 %v2601
        %3909 = vmatpush1.bf16.msra.mxu0 %v2600
        %3910 = vmatprep.subr.bf16.mxu0 %v2721
        %3911 = vmatpush2.bf16.msra.mxu0 %v2720
        %3912 = vmatprep.subr.bf16.mxu0 %v2713
        %3913 = vmatpush2.bf16.msra.mxu0 %v2712
        %3914 = vmatprep.subr.bf16.mxu0 %v2705
        %3915 = vmatpush2.bf16.msra.mxu0 %v2704
        %3916 = vmatprep.subr.bf16.mxu0 %v2697
        %3917 = vmatpush2.bf16.msra.mxu0 %v2696
        %3918 = vmatprep.subr.bf16.mxu0 %v2689
        %3919 = vmatpush2.bf16.msra.mxu0 %v2688
        %3920 = vmatprep.subr.bf16.mxu0 %v2681
        %3921 = vmatpush2.bf16.msra.mxu0 %v2680
        %3922 = vmatprep.subr.bf16.mxu0 %v2673
        %3923 = vmatpush2.bf16.msra.mxu0 %v2672
        %3924 = vmatprep.subr.bf16.mxu0 %v2665
        %3925 = vmatpush2.bf16.msra.mxu0 %v2664
        %3926 = vmatprep.mubr.bf16.mxu0 %v777
        %3927 = vmatmul.mubr.bf16.gmra.mxu0 %v776
        %v3928 = vpop.f32.mrf.mxu0
        %v3929 = vadd.f32 %v3876, %v3928
        %v3930 = vpop.f32.mrf.mxu0
        %v3931 = vadd.f32 %v3878, %v3930
        %v3932 = vpop.f32.mrf.mxu0
        %v3933 = vadd.f32 %v3880, %v3932
        %v3934 = vpop.f32.mrf.mxu0
        %v3935 = vadd.f32 %v3882, %v3934
        %3936 = vmatprep.mubr.bf16.mxu0 %v785
        %3937 = vmatmul.mubr.bf16.gmra.mxu0 %v784
        %v3938 = vpop.f32.mrf.mxu0
        %v3939 = vadd.f32 %v3886, %v3938
        %v3940 = vpop.f32.mrf.mxu0
        %v3941 = vadd.f32 %v3888, %v3940
        %v3942 = vpop.f32.mrf.mxu0
        %v3943 = vadd.f32 %v3890, %v3942
        %v3944 = vpop.f32.mrf.mxu0
        %v3945 = vadd.f32 %v3892, %v3944
        %3946 = vdwg.mxu0
        %3947 = vmatprep.subr.bf16.mxu0 %v2785
        %3948 = vmatpush1.bf16.msra.mxu0 %v2784
        %3949 = vmatprep.subr.bf16.mxu0 %v2777
        %3950 = vmatpush1.bf16.msra.mxu0 %v2776
        %3951 = vmatprep.subr.bf16.mxu0 %v2769
        %3952 = vmatpush1.bf16.msra.mxu0 %v2768
        %3953 = vmatprep.subr.bf16.mxu0 %v2761
        %3954 = vmatpush1.bf16.msra.mxu0 %v2760
        %3955 = vmatprep.subr.bf16.mxu0 %v2753
        %3956 = vmatpush1.bf16.msra.mxu0 %v2752
        %3957 = vmatprep.subr.bf16.mxu0 %v2745
        %3958 = vmatpush1.bf16.msra.mxu0 %v2744
        %3959 = vmatprep.subr.bf16.mxu0 %v2737
        %3960 = vmatpush1.bf16.msra.mxu0 %v2736
        %3961 = vmatprep.subr.bf16.mxu0 %v2729
        %3962 = vmatpush1.bf16.msra.mxu0 %v2728
        %3963 = vmatprep.subr.bf16.mxu0 %v2849
        %3964 = vmatpush2.bf16.msra.mxu0 %v2848
        %3965 = vmatprep.subr.bf16.mxu0 %v2841
        %3966 = vmatpush2.bf16.msra.mxu0 %v2840
        %3967 = vmatprep.subr.bf16.mxu0 %v2833
        %3968 = vmatpush2.bf16.msra.mxu0 %v2832
        %3969 = vmatprep.subr.bf16.mxu0 %v2825
        %3970 = vmatpush2.bf16.msra.mxu0 %v2824
        %3971 = vmatprep.subr.bf16.mxu0 %v2817
        %3972 = vmatpush2.bf16.msra.mxu0 %v2816
        %3973 = vmatprep.subr.bf16.mxu0 %v2809
        %3974 = vmatpush2.bf16.msra.mxu0 %v2808
        %3975 = vmatprep.subr.bf16.mxu0 %v2801
        %3976 = vmatpush2.bf16.msra.mxu0 %v2800
        %3977 = vmatprep.subr.bf16.mxu0 %v2793
        %3978 = vmatpush2.bf16.msra.mxu0 %v2792
        %3979 = vmatprep.mubr.bf16.mxu0 %v779
        %3980 = vmatmul.mubr.bf16.gmra.mxu0 %v778
        %v3981 = vpop.f32.mrf.mxu0
        %v3982 = vadd.f32 %v3929, %v3981
        %v3983 = vpop.f32.mrf.mxu0
        %v3984 = vadd.f32 %v3931, %v3983
        %v3985 = vpop.f32.mrf.mxu0
        %v3986 = vadd.f32 %v3933, %v3985
        %v3987 = vpop.f32.mrf.mxu0
        %v3988 = vadd.f32 %v3935, %v3987
        %3989 = vmatprep.mubr.bf16.mxu0 %v787
        %3990 = vmatmul.mubr.bf16.gmra.mxu0 %v786
        %v3991 = vpop.f32.mrf.mxu0
        %v3992 = vadd.f32 %v3939, %v3991
        %v3993 = vpop.f32.mrf.mxu0
        %v3994 = vadd.f32 %v3941, %v3993
        %v3995 = vpop.f32.mrf.mxu0
        %v3996 = vadd.f32 %v3943, %v3995
        %v3997 = vpop.f32.mrf.mxu0
        %v3998 = vadd.f32 %v3945, %v3997
        %3999 = vdwg.mxu0
        %4000 = vmatprep.subr.bf16.mxu0 %v2403
        %4001 = vmatpush1.bf16.msra.mxu0 %v2402
        %4002 = vmatprep.subr.bf16.mxu0 %v2395
        %4003 = vmatpush1.bf16.msra.mxu0 %v2394
        %4004 = vmatprep.subr.bf16.mxu0 %v2387
        %4005 = vmatpush1.bf16.msra.mxu0 %v2386
        %4006 = vmatprep.subr.bf16.mxu0 %v2379
        %4007 = vmatpush1.bf16.msra.mxu0 %v2378
        %4008 = vmatprep.subr.bf16.mxu0 %v2371
        %4009 = vmatpush1.bf16.msra.mxu0 %v2370
        %4010 = vmatprep.subr.bf16.mxu0 %v2363
        %4011 = vmatpush1.bf16.msra.mxu0 %v2362
        %4012 = vmatprep.subr.bf16.mxu0 %v2355
        %4013 = vmatpush1.bf16.msra.mxu0 %v2354
        %4014 = vmatprep.subr.bf16.mxu0 %v2347
        %4015 = vmatpush1.bf16.msra.mxu0 %v2346
        %4016 = vmatprep.subr.bf16.mxu0 %v2467
        %4017 = vmatpush2.bf16.msra.mxu0 %v2466
        %4018 = vmatprep.subr.bf16.mxu0 %v2459
        %4019 = vmatpush2.bf16.msra.mxu0 %v2458
        %4020 = vmatprep.subr.bf16.mxu0 %v2451
        %4021 = vmatpush2.bf16.msra.mxu0 %v2450
        %4022 = vmatprep.subr.bf16.mxu0 %v2443
        %4023 = vmatpush2.bf16.msra.mxu0 %v2442
        %4024 = vmatprep.subr.bf16.mxu0 %v2435
        %4025 = vmatpush2.bf16.msra.mxu0 %v2434
        %4026 = vmatprep.subr.bf16.mxu0 %v2427
        %4027 = vmatpush2.bf16.msra.mxu0 %v2426
        %4028 = vmatprep.subr.bf16.mxu0 %v2419
        %4029 = vmatpush2.bf16.msra.mxu0 %v2418
        %4030 = vmatprep.subr.bf16.mxu0 %v2411
        %4031 = vmatpush2.bf16.msra.mxu0 %v2410
        %4032 = vmatprep.mubr.bf16.mxu0 %v773
        %4033 = vmatmul.mubr.bf16.gmra.mxu0 %v772
        %v4034 = vpop.f32.mrf.mxu0
        %v4035 = vadd.f32 0.0, %v4034
        %v4036 = vpop.f32.mrf.mxu0
        %v4037 = vadd.f32 0.0, %v4036
        %v4038 = vpop.f32.mrf.mxu0
        %v4039 = vadd.f32 0.0, %v4038
        %v4040 = vpop.f32.mrf.mxu0
        %v4041 = vadd.f32 0.0, %v4040
        %4042 = vmatprep.mubr.bf16.mxu0 %v781
        %4043 = vmatmul.mubr.bf16.gmra.mxu0 %v780
        %v4044 = vpop.f32.mrf.mxu0
        %v4045 = vadd.f32 0.0, %v4044
        %v4046 = vpop.f32.mrf.mxu0
        %v4047 = vadd.f32 0.0, %v4046
        %v4048 = vpop.f32.mrf.mxu0
        %v4049 = vadd.f32 0.0, %v4048
        %v4050 = vpop.f32.mrf.mxu0
        %v4051 = vadd.f32 0.0, %v4050
        %4052 = vdwg.mxu0
        %4053 = vmatprep.subr.bf16.mxu0 %v2531
        %4054 = vmatpush1.bf16.msra.mxu0 %v2530
        %4055 = vmatprep.subr.bf16.mxu0 %v2523
        %4056 = vmatpush1.bf16.msra.mxu0 %v2522
        %4057 = vmatprep.subr.bf16.mxu0 %v2515
        %4058 = vmatpush1.bf16.msra.mxu0 %v2514
        %4059 = vmatprep.subr.bf16.mxu0 %v2507
        %4060 = vmatpush1.bf16.msra.mxu0 %v2506
        %4061 = vmatprep.subr.bf16.mxu0 %v2499
        %4062 = vmatpush1.bf16.msra.mxu0 %v2498
        %4063 = vmatprep.subr.bf16.mxu0 %v2491
        %4064 = vmatpush1.bf16.msra.mxu0 %v2490
        %4065 = vmatprep.subr.bf16.mxu0 %v2483
        %4066 = vmatpush1.bf16.msra.mxu0 %v2482
        %4067 = vmatprep.subr.bf16.mxu0 %v2475
        %4068 = vmatpush1.bf16.msra.mxu0 %v2474
        %4069 = vmatprep.subr.bf16.mxu0 %v2595
        %4070 = vmatpush2.bf16.msra.mxu0 %v2594
        %4071 = vmatprep.subr.bf16.mxu0 %v2587
        %4072 = vmatpush2.bf16.msra.mxu0 %v2586
        %4073 = vmatprep.subr.bf16.mxu0 %v2579
        %4074 = vmatpush2.bf16.msra.mxu0 %v2578
        %4075 = vmatprep.subr.bf16.mxu0 %v2571
        %4076 = vmatpush2.bf16.msra.mxu0 %v2570
        %4077 = vmatprep.subr.bf16.mxu0 %v2563
        %4078 = vmatpush2.bf16.msra.mxu0 %v2562
        %4079 = vmatprep.subr.bf16.mxu0 %v2555
        %4080 = vmatpush2.bf16.msra.mxu0 %v2554
        %4081 = vmatprep.subr.bf16.mxu0 %v2547
        %4082 = vmatpush2.bf16.msra.mxu0 %v2546
        %4083 = vmatprep.subr.bf16.mxu0 %v2539
        %4084 = vmatpush2.bf16.msra.mxu0 %v2538
        %4085 = vmatprep.mubr.bf16.mxu0 %v775
        %4086 = vmatmul.mubr.bf16.gmra.mxu0 %v774
        %v4087 = vpop.f32.mrf.mxu0
        %v4088 = vadd.f32 %v4035, %v4087
        %v4089 = vpop.f32.mrf.mxu0
        %v4090 = vadd.f32 %v4037, %v4089
        %v4091 = vpop.f32.mrf.mxu0
        %v4092 = vadd.f32 %v4039, %v4091
        %v4093 = vpop.f32.mrf.mxu0
        %v4094 = vadd.f32 %v4041, %v4093
        %4095 = vmatprep.mubr.bf16.mxu0 %v783
        %4096 = vmatmul.mubr.bf16.gmra.mxu0 %v782
        %v4097 = vpop.f32.mrf.mxu0
        %v4098 = vadd.f32 %v4045, %v4097
        %v4099 = vpop.f32.mrf.mxu0
        %v4100 = vadd.f32 %v4047, %v4099
        %v4101 = vpop.f32.mrf.mxu0
        %v4102 = vadd.f32 %v4049, %v4101
        %v4103 = vpop.f32.mrf.mxu0
        %v4104 = vadd.f32 %v4051, %v4103
        %4105 = vdwg.mxu0
        %4106 = vmatprep.subr.bf16.mxu0 %v2659
        %4107 = vmatpush1.bf16.msra.mxu0 %v2658
        %4108 = vmatprep.subr.bf16.mxu0 %v2651
        %4109 = vmatpush1.bf16.msra.mxu0 %v2650
        %4110 = vmatprep.subr.bf16.mxu0 %v2643
        %4111 = vmatpush1.bf16.msra.mxu0 %v2642
        %4112 = vmatprep.subr.bf16.mxu0 %v2635
        %4113 = vmatpush1.bf16.msra.mxu0 %v2634
        %4114 = vmatprep.subr.bf16.mxu0 %v2627
        %4115 = vmatpush1.bf16.msra.mxu0 %v2626
        %4116 = vmatprep.subr.bf16.mxu0 %v2619
        %4117 = vmatpush1.bf16.msra.mxu0 %v2618
        %4118 = vmatprep.subr.bf16.mxu0 %v2611
        %4119 = vmatpush1.bf16.msra.mxu0 %v2610
        %4120 = vmatprep.subr.bf16.mxu0 %v2603
        %4121 = vmatpush1.bf16.msra.mxu0 %v2602
        %4122 = vmatprep.subr.bf16.mxu0 %v2723
        %4123 = vmatpush2.bf16.msra.mxu0 %v2722
        %4124 = vmatprep.subr.bf16.mxu0 %v2715
        %4125 = vmatpush2.bf16.msra.mxu0 %v2714
        %4126 = vmatprep.subr.bf16.mxu0 %v2707
        %4127 = vmatpush2.bf16.msra.mxu0 %v2706
        %4128 = vmatprep.subr.bf16.mxu0 %v2699
        %4129 = vmatpush2.bf16.msra.mxu0 %v2698
        %4130 = vmatprep.subr.bf16.mxu0 %v2691
        %4131 = vmatpush2.bf16.msra.mxu0 %v2690
        %4132 = vmatprep.subr.bf16.mxu0 %v2683
        %4133 = vmatpush2.bf16.msra.mxu0 %v2682
        %4134 = vmatprep.subr.bf16.mxu0 %v2675
        %4135 = vmatpush2.bf16.msra.mxu0 %v2674
        %4136 = vmatprep.subr.bf16.mxu0 %v2667
        %4137 = vmatpush2.bf16.msra.mxu0 %v2666
        %4138 = vmatprep.mubr.bf16.mxu0 %v777
        %4139 = vmatmul.mubr.bf16.gmra.mxu0 %v776
        %v4140 = vpop.f32.mrf.mxu0
        %v4141 = vadd.f32 %v4088, %v4140
        %v4142 = vpop.f32.mrf.mxu0
        %v4143 = vadd.f32 %v4090, %v4142
        %v4144 = vpop.f32.mrf.mxu0
        %v4145 = vadd.f32 %v4092, %v4144
        %v4146 = vpop.f32.mrf.mxu0
        %v4147 = vadd.f32 %v4094, %v4146
        %4148 = vmatprep.mubr.bf16.mxu0 %v785
        %4149 = vmatmul.mubr.bf16.gmra.mxu0 %v784
        %v4150 = vpop.f32.mrf.mxu0
        %v4151 = vadd.f32 %v4098, %v4150
        %v4152 = vpop.f32.mrf.mxu0
        %v4153 = vadd.f32 %v4100, %v4152
        %v4154 = vpop.f32.mrf.mxu0
        %v4155 = vadd.f32 %v4102, %v4154
        %v4156 = vpop.f32.mrf.mxu0
        %v4157 = vadd.f32 %v4104, %v4156
        %4158 = vdwg.mxu0
        %4159 = vmatprep.subr.bf16.mxu0 %v2787
        %4160 = vmatpush1.bf16.msra.mxu0 %v2786
        %4161 = vmatprep.subr.bf16.mxu0 %v2779
        %4162 = vmatpush1.bf16.msra.mxu0 %v2778
        %4163 = vmatprep.subr.bf16.mxu0 %v2771
        %4164 = vmatpush1.bf16.msra.mxu0 %v2770
        %4165 = vmatprep.subr.bf16.mxu0 %v2763
        %4166 = vmatpush1.bf16.msra.mxu0 %v2762
        %4167 = vmatprep.subr.bf16.mxu0 %v2755
        %4168 = vmatpush1.bf16.msra.mxu0 %v2754
        %4169 = vmatprep.subr.bf16.mxu0 %v2747
        %4170 = vmatpush1.bf16.msra.mxu0 %v2746
        %4171 = vmatprep.subr.bf16.mxu0 %v2739
        %4172 = vmatpush1.bf16.msra.mxu0 %v2738
        %4173 = vmatprep.subr.bf16.mxu0 %v2731
        %4174 = vmatpush1.bf16.msra.mxu0 %v2730
        %4175 = vmatprep.subr.bf16.mxu0 %v2851
        %4176 = vmatpush2.bf16.msra.mxu0 %v2850
        %4177 = vmatprep.subr.bf16.mxu0 %v2843
        %4178 = vmatpush2.bf16.msra.mxu0 %v2842
        %4179 = vmatprep.subr.bf16.mxu0 %v2835
        %4180 = vmatpush2.bf16.msra.mxu0 %v2834
        %4181 = vmatprep.subr.bf16.mxu0 %v2827
        %4182 = vmatpush2.bf16.msra.mxu0 %v2826
        %4183 = vmatprep.subr.bf16.mxu0 %v2819
        %4184 = vmatpush2.bf16.msra.mxu0 %v2818
        %4185 = vmatprep.subr.bf16.mxu0 %v2811
        %4186 = vmatpush2.bf16.msra.mxu0 %v2810
        %4187 = vmatprep.subr.bf16.mxu0 %v2803
        %4188 = vmatpush2.bf16.msra.mxu0 %v2802
        %4189 = vmatprep.subr.bf16.mxu0 %v2795
        %4190 = vmatpush2.bf16.msra.mxu0 %v2794
        %4191 = vmatprep.mubr.bf16.mxu0 %v779
        %4192 = vmatmul.mubr.bf16.gmra.mxu0 %v778
        %v4193 = vpop.f32.mrf.mxu0
        %v4194 = vadd.f32 %v4141, %v4193
        %v4195 = vpop.f32.mrf.mxu0
        %v4196 = vadd.f32 %v4143, %v4195
        %v4197 = vpop.f32.mrf.mxu0
        %v4198 = vadd.f32 %v4145, %v4197
        %v4199 = vpop.f32.mrf.mxu0
        %v4200 = vadd.f32 %v4147, %v4199
        %4201 = vmatprep.mubr.bf16.mxu0 %v787
        %4202 = vmatmul.mubr.bf16.gmra.mxu0 %v786
        %v4203 = vpop.f32.mrf.mxu0
        %v4204 = vadd.f32 %v4151, %v4203
        %v4205 = vpop.f32.mrf.mxu0
        %v4206 = vadd.f32 %v4153, %v4205
        %v4207 = vpop.f32.mrf.mxu0
        %v4208 = vadd.f32 %v4155, %v4207
        %v4209 = vpop.f32.mrf.mxu0
        %v4210 = vadd.f32 %v4157, %v4209
        %4211 = vdwg.mxu0
        %v4212 = vlaneseq
        %v4213 = vand.u32 %v4212, 127
        %v4214 = vadd.s32 %v4213, 128
        %v4215 = vadd.s32 %v4213, 256
        %v4216 = vadd.s32 %v4213, 384
        %vm4217 = vcmp.eq.s32.totalorder %v4213, 0
        %vm4218 = vcmp.eq.s32.totalorder %v4214, 0
        %vm4219 = vcmp.eq.s32.totalorder %v4215, 0
        %vm4220 = vcmp.eq.s32.totalorder %v4216, 0
        %v4221 = vand.u32 2147483647, %v3558
        %v4222 = vand.u32 2147483647, %v3560
        %v4223 = vand.u32 2147483647, %v3770
        %v4224 = vand.u32 2147483647, %v3772
        %v4225 = vand.u32 2147483647, %v3562
        %v4226 = vand.u32 2147483647, %v3564
        %v4227 = vand.u32 2147483647, %v3774
        %v4228 = vand.u32 2147483647, %v3776
        %v4229 = vmul.f32 %v3558, %v3558
        %v4230 = vmul.f32 %v3560, %v3560
        %v4231 = vmul.f32 %v3770, %v3770
        %v4232 = vmul.f32 %v3772, %v3772
        %v4233 = vmul.f32 %v3562, %v3562
        %v4234 = vmul.f32 %v3564, %v3564
        %v4235 = vmul.f32 %v3774, %v3774
        %v4236 = vmul.f32 %v3776, %v3776
        %v4237 = vmul.f32 %v3982, %v3982
        %v4238 = vmul.f32 %v3984, %v3984
        %v4239 = vmul.f32 %v4194, %v4194
        %v4240 = vmul.f32 %v4196, %v4196
        %v4241 = vmul.f32 %v3986, %v3986
        %v4242 = vmul.f32 %v3988, %v3988
        %v4243 = vmul.f32 %v4198, %v4198
        %v4244 = vmul.f32 %v4200, %v4200
        %v4245 = vadd.f32 %v4229, %v4237
        %v4246 = vadd.f32 %v4230, %v4238
        %v4247 = vadd.f32 %v4231, %v4239
        %v4248 = vadd.f32 %v4232, %v4240
        %v4249 = vadd.f32 %v4233, %v4241
        %v4250 = vadd.f32 %v4234, %v4242
        %v4251 = vadd.f32 %v4235, %v4243
        %v4252 = vadd.f32 %v4236, %v4244
        %v4253 = vrsqrt.pop %v4245
        %v4254 = vmul.f32 %v4245, %v4253
        %vm4255 = vcmp.eq.f32.partialorder %v4245, inf
        %v4256 = vsel %vm4255, %v4245, %v4254
        %vm4257 = vcmp.eq.f32.partialorder %v4245, 0.0
        %v4258 = vand.u32 %v4245, 2147483648
        %v4259 = vsel %vm4257, %v4258, %v4256
        %v4260 = vrsqrt.pop %v4246
        %v4261 = vmul.f32 %v4246, %v4260
        %vm4262 = vcmp.eq.f32.partialorder %v4246, inf
        %v4263 = vsel %vm4262, %v4246, %v4261
        %vm4264 = vcmp.eq.f32.partialorder %v4246, 0.0
        %v4265 = vand.u32 %v4246, 2147483648
        %v4266 = vsel %vm4264, %v4265, %v4263
        %v4267 = vrsqrt.pop %v4247
        %v4268 = vmul.f32 %v4247, %v4267
        %vm4269 = vcmp.eq.f32.partialorder %v4247, inf
        %v4270 = vsel %vm4269, %v4247, %v4268
        %vm4271 = vcmp.eq.f32.partialorder %v4247, 0.0
        %v4272 = vand.u32 %v4247, 2147483648
        %v4273 = vsel %vm4271, %v4272, %v4270
        %v4274 = vrsqrt.pop %v4248
        %v4275 = vmul.f32 %v4248, %v4274
        %vm4276 = vcmp.eq.f32.partialorder %v4248, inf
        %v4277 = vsel %vm4276, %v4248, %v4275
        %vm4278 = vcmp.eq.f32.partialorder %v4248, 0.0
        %v4279 = vand.u32 %v4248, 2147483648
        %v4280 = vsel %vm4278, %v4279, %v4277
        %v4281 = vrsqrt.pop %v4249
        %v4282 = vmul.f32 %v4249, %v4281
        %vm4283 = vcmp.eq.f32.partialorder %v4249, inf
        %v4284 = vsel %vm4283, %v4249, %v4282
        %vm4285 = vcmp.eq.f32.partialorder %v4249, 0.0
        %v4286 = vand.u32 %v4249, 2147483648
        %v4287 = vsel %vm4285, %v4286, %v4284
        %v4288 = vrsqrt.pop %v4250
        %v4289 = vmul.f32 %v4250, %v4288
        %vm4290 = vcmp.eq.f32.partialorder %v4250, inf
        %v4291 = vsel %vm4290, %v4250, %v4289
        %vm4292 = vcmp.eq.f32.partialorder %v4250, 0.0
        %v4293 = vand.u32 %v4250, 2147483648
        %v4294 = vsel %vm4292, %v4293, %v4291
        %v4295 = vrsqrt.pop %v4251
        %v4296 = vmul.f32 %v4251, %v4295
        %vm4297 = vcmp.eq.f32.partialorder %v4251, inf
        %v4298 = vsel %vm4297, %v4251, %v4296
        %vm4299 = vcmp.eq.f32.partialorder %v4251, 0.0
        %v4300 = vand.u32 %v4251, 2147483648
        %v4301 = vsel %vm4299, %v4300, %v4298
        %v4302 = vrsqrt.pop %v4252
        %v4303 = vmul.f32 %v4252, %v4302
        %vm4304 = vcmp.eq.f32.partialorder %v4252, inf
        %v4305 = vsel %vm4304, %v4252, %v4303
        %vm4306 = vcmp.eq.f32.partialorder %v4252, 0.0
        %v4307 = vand.u32 %v4252, 2147483648
        %v4308 = vsel %vm4306, %v4307, %v4305
        %v4309 = vsel %vm4217, %v4221, %v4259
        %v4310 = vsel %vm4218, %v4222, %v4266
        %v4311 = vsel %vm4219, %v4223, %v4273
        %v4312 = vsel %vm4220, %v4224, %v4280
        %v4313 = vsel %vm4217, %v4225, %v4287
        %v4314 = vsel %vm4218, %v4226, %v4294
        %v4315 = vsel %vm4219, %v4227, %v4301
        %v4316 = vsel %vm4220, %v4228, %v4308
        %v4317 = vand.u32 2147483647, %v3568
        %v4318 = vand.u32 2147483647, %v3570
        %v4319 = vand.u32 2147483647, %v3780
        %v4320 = vand.u32 2147483647, %v3782
        %v4321 = vand.u32 2147483647, %v3572
        %v4322 = vand.u32 2147483647, %v3574
        %v4323 = vand.u32 2147483647, %v3784
        %v4324 = vand.u32 2147483647, %v3786
        %v4325 = vmul.f32 %v3568, %v3568
        %v4326 = vmul.f32 %v3570, %v3570
        %v4327 = vmul.f32 %v3780, %v3780
        %v4328 = vmul.f32 %v3782, %v3782
        %v4329 = vmul.f32 %v3572, %v3572
        %v4330 = vmul.f32 %v3574, %v3574
        %v4331 = vmul.f32 %v3784, %v3784
        %v4332 = vmul.f32 %v3786, %v3786
        %v4333 = vmul.f32 %v3992, %v3992
        %v4334 = vmul.f32 %v3994, %v3994
        %v4335 = vmul.f32 %v4204, %v4204
        %v4336 = vmul.f32 %v4206, %v4206
        %v4337 = vmul.f32 %v3996, %v3996
        %v4338 = vmul.f32 %v3998, %v3998
        %v4339 = vmul.f32 %v4208, %v4208
        %v4340 = vmul.f32 %v4210, %v4210
        %v4341 = vadd.f32 %v4325, %v4333
        %v4342 = vadd.f32 %v4326, %v4334
        %v4343 = vadd.f32 %v4327, %v4335
        %v4344 = vadd.f32 %v4328, %v4336
        %v4345 = vadd.f32 %v4329, %v4337
        %v4346 = vadd.f32 %v4330, %v4338
        %v4347 = vadd.f32 %v4331, %v4339
        %v4348 = vadd.f32 %v4332, %v4340
        %v4349 = vrsqrt.pop %v4341
        %v4350 = vmul.f32 %v4341, %v4349
        %vm4351 = vcmp.eq.f32.partialorder %v4341, inf
        %v4352 = vsel %vm4351, %v4341, %v4350
        %vm4353 = vcmp.eq.f32.partialorder %v4341, 0.0
        %v4354 = vand.u32 %v4341, 2147483648
        %v4355 = vsel %vm4353, %v4354, %v4352
        %v4356 = vrsqrt.pop %v4342
        %v4357 = vmul.f32 %v4342, %v4356
        %vm4358 = vcmp.eq.f32.partialorder %v4342, inf
        %v4359 = vsel %vm4358, %v4342, %v4357
        %vm4360 = vcmp.eq.f32.partialorder %v4342, 0.0
        %v4361 = vand.u32 %v4342, 2147483648
        %v4362 = vsel %vm4360, %v4361, %v4359
        %v4363 = vrsqrt.pop %v4343
        %v4364 = vmul.f32 %v4343, %v4363
        %vm4365 = vcmp.eq.f32.partialorder %v4343, inf
        %v4366 = vsel %vm4365, %v4343, %v4364
        %vm4367 = vcmp.eq.f32.partialorder %v4343, 0.0
        %v4368 = vand.u32 %v4343, 2147483648
        %v4369 = vsel %vm4367, %v4368, %v4366
        %v4370 = vrsqrt.pop %v4344
        %v4371 = vmul.f32 %v4344, %v4370
        %vm4372 = vcmp.eq.f32.partialorder %v4344, inf
        %v4373 = vsel %vm4372, %v4344, %v4371
        %vm4374 = vcmp.eq.f32.partialorder %v4344, 0.0
        %v4375 = vand.u32 %v4344, 2147483648
        %v4376 = vsel %vm4374, %v4375, %v4373
        %v4377 = vrsqrt.pop %v4345
        %v4378 = vmul.f32 %v4345, %v4377
        %vm4379 = vcmp.eq.f32.partialorder %v4345, inf
        %v4380 = vsel %vm4379, %v4345, %v4378
        %vm4381 = vcmp.eq.f32.partialorder %v4345, 0.0
        %v4382 = vand.u32 %v4345, 2147483648
        %v4383 = vsel %vm4381, %v4382, %v4380
        %v4384 = vrsqrt.pop %v4346
        %v4385 = vmul.f32 %v4346, %v4384
        %vm4386 = vcmp.eq.f32.partialorder %v4346, inf
        %v4387 = vsel %vm4386, %v4346, %v4385
        %vm4388 = vcmp.eq.f32.partialorder %v4346, 0.0
        %v4389 = vand.u32 %v4346, 2147483648
        %v4390 = vsel %vm4388, %v4389, %v4387
        %v4391 = vrsqrt.pop %v4347
        %v4392 = vmul.f32 %v4347, %v4391
        %vm4393 = vcmp.eq.f32.partialorder %v4347, inf
        %v4394 = vsel %vm4393, %v4347, %v4392
        %vm4395 = vcmp.eq.f32.partialorder %v4347, 0.0
        %v4396 = vand.u32 %v4347, 2147483648
        %v4397 = vsel %vm4395, %v4396, %v4394
        %v4398 = vrsqrt.pop %v4348
        %v4399 = vmul.f32 %v4348, %v4398
        %vm4400 = vcmp.eq.f32.partialorder %v4348, inf
        %v4401 = vsel %vm4400, %v4348, %v4399
        %vm4402 = vcmp.eq.f32.partialorder %v4348, 0.0
        %v4403 = vand.u32 %v4348, 2147483648
        %v4404 = vsel %vm4402, %v4403, %v4401
        %v4405 = vsel %vm4217, %v4317, %v4355
        %v4406 = vsel %vm4218, %v4318, %v4362
        %v4407 = vsel %vm4219, %v4319, %v4369
        %v4408 = vsel %vm4220, %v4320, %v4376
        %v4409 = vsel %vm4217, %v4321, %v4383
        %v4410 = vsel %vm4218, %v4322, %v4390
        %v4411 = vsel %vm4219, %v4323, %v4397
        %v4412 = vsel %vm4220, %v4324, %v4404
        %v4413 = vsub.f32 %v4309, %v4405
        %v4414 = vsub.f32 %v4310, %v4406
        %v4415 = vsub.f32 %v4311, %v4407
        %v4416 = vsub.f32 %v4312, %v4408
        %v4417 = vsub.f32 %v4313, %v4409
        %v4418 = vsub.f32 %v4314, %v4410
        %v4419 = vsub.f32 %v4315, %v4411
        %v4420 = vsub.f32 %v4316, %v4412
        %v4421 = vand.u32 2147483647, %v4413
        %v4422 = vand.u32 2147483647, %v4414
        %v4423 = vand.u32 2147483647, %v4415
        %v4424 = vand.u32 2147483647, %v4416
        %v4425 = vand.u32 2147483647, %v4417
        %v4426 = vand.u32 2147483647, %v4418
        %v4427 = vand.u32 2147483647, %v4419
        %v4428 = vand.u32 2147483647, %v4420
        %v4429 = vand.u32 2147483647, %v3982
        %v4430 = vand.u32 2147483647, %v3986
        %v4431 = vand.u32 2147483647, %v3992
        %v4432 = vand.u32 2147483647, %v3996
        %v4433 = vsub.f32 %v4429, %v4431
        %v4434 = vsub.f32 %v4430, %v4432
        %v4435 = vand.u32 2147483647, %v4433
        %v4436 = vand.u32 2147483647, %v4434
        %4438 = vset.pattern.permute.xlu0 0
        %4439 = vperm.xlu0 %4438, %v4435
        %v4440 = vpop.permute.xlu0 %4439
        %4443 = vset.pattern.permute.xlu0 0
        %4444 = vperm.xlu0 %4443, %v4436
        %v4445 = vpop.permute.xlu0 %4444
        %v4447 = vsel %vm4217, %v4440, 0.0
        %v4448 = vsel %vm4218, %v4440, 0.0
        %v4449 = vsel %vm4219, %v4440, 0.0
        %v4450 = vsel %vm4220, %v4440, 0.0
        %v4451 = vsel %vm4217, %v4445, 0.0
        %v4452 = vsel %vm4218, %v4445, 0.0
        %v4453 = vsel %vm4219, %v4445, 0.0
        %v4454 = vsel %vm4220, %v4445, 0.0
        %v4455 = vadd.f32 %v4421, %v4447
        %v4456 = vadd.f32 %v4422, %v4448
        %v4457 = vadd.f32 %v4423, %v4449
        %v4458 = vadd.f32 %v4424, %v4450
        %v4459 = vadd.f32 %v4425, %v4451
        %v4460 = vadd.f32 %v4426, %v4452
        %v4461 = vadd.f32 %v4427, %v4453
        %v4462 = vadd.f32 %v4428, %v4454
        %v4463 = vadd.f32 %v4455, %v4459
        %v4464 = vadd.f32 %v4456, %v4460
        %v4465 = vadd.f32 %v4457, %v4461
        %v4466 = vadd.f32 %v4458, %v4462
        %4467 = vst [vmem:[%s195] sm:$0xff] %v4463
        %4468 = vst [vmem:[%s195 + $0x8] sm:$0xff] %v4464
        %4469 = vst [vmem:[%s195 + $0x10] sm:$0xff] %v4465
        %4470 = vst [vmem:[%s195 + $0x18] sm:$0xff] %v4466
        %p4471 = scmp.lt.s32.totalorder %s13, 1
        %s4472 = scalar_select %p4471, %s13, 1
        %s4473 = smul.addr %s4472, 4
        %s4474 = smul.addr %s4473, 8
        %s4475 = scalar_lea.vmem %s2, %s4474
        // Predicated region
        $region52: #{multi_resolution_stft_loss.7} parent=46 // pred_check
          %p4476 = pneg %p78
        $region53: #{multi_resolution_stft_loss.7} parent=46 // pred_check_branch
          %4478 = sbr.rel (%p4476) target = $region55
        $region54: #{multi_resolution_stft_loss.7} parent=46 // pred_region
          _
        $region55: #{multi_resolution_stft_loss.7} parent=46 // pred_fallthru
          _
      $region47: #{multi_resolution_stft_loss.7} parent=5 // pred_fallthru
        _
      %p4479 = scmp.le.s32.totalorder 2, %s8
      // Predicated region
      $region56: #{multi_resolution_stft_loss.7} parent=5 // pred_check
        %p4480 = pneg %p4479
      $region57: #{multi_resolution_stft_loss.7} parent=5 // pred_check_branch
        %4482 = sbr.rel (%p4480) target = $region59
      $region58: #{multi_resolution_stft_loss.7} parent=5 // pred_region
        %s4483 = ssub.s32 %s8, 2
        // Predicated region
        $region60: #{multi_resolution_stft_loss.7} parent=58 // pred_check
          %p4484 = pneg %p84
        $region61: #{multi_resolution_stft_loss.7} parent=58 // pred_check_branch
          %4486 = sbr.rel (%p4484) target = $region63
        $region62: #{multi_resolution_stft_loss.7} parent=58 // pred_region
          %p4487 = scmp.lt.s32.totalorder %s14, 1
          %s4488 = scalar_select %p4487, %s14, 1
          %s4489 = smul.addr %s4488, 4
          %s4490 = smul.addr %s4489, 8
          %s4491 = scalar_lea.vmem %s2, %s4490
        $region63: #{multi_resolution_stft_loss.7} parent=58 // pred_fallthru
          _
      $region59: #{multi_resolution_stft_loss.7} parent=5 // pred_fallthru
        _
    $region6: #{multi_resolution_stft_loss.7} parent=1 // loop_footer
      %s12 = sadd.s32 1, %s8
    $region7: #{multi_resolution_stft_loss.7} parent=1 // loop_footer_branch
      %7 = sbr.rel target = $region3
    $region8: #{multi_resolution_stft_loss.7} parent=1 // loop_exit
      _

</llo_original>
